<compile_context>
chip_gen: v5e
topology: v5e:2x2
jax: 0.10.0
libtpu: 0.0.40
codegen_flags: <defaults>
</compile_context>

<pallas_src>
import math
import functools

import jax
import jax.numpy as jnp
from jax.experimental import pallas as pl
from jax.experimental.pallas import tpu as pltpu

# ----------------------------------------------------------------------------
# Configuration (mirrors EEGConformer(args) at small synthetic sizes)
# ----------------------------------------------------------------------------
B, C_EEG, T_LEN = 2, 8, 16        # input x: (batch, eeg_channels, time)
K_MODEL = 32                      # args.eeg_conformer_k  (d_model)
N_HEADS = 4                       # args.eeg_conformer_nheads
N_LAYERS = 2                      # args.eeg_conformer_nlayers
D_HEAD = K_MODEL // N_HEADS
FF_DIM = 2048                     # TransformerEncoderLayer default dim_feedforward
TEMPORAL_CH = 64                  # temporal conv output channels
H_OUT = C_EEG - 3                 # spatial conv output height: (C+2)+2-8+1
PE_LEN = 20


# ----------------------------------------------------------------------------
# Positional encoding (parameter setup, plain jnp glue)
# ----------------------------------------------------------------------------
def positionalencoding1d(d_model, length):
    assert d_model % 2 == 0
    pos = jnp.arange(length, dtype=jnp.float32)[:, None]
    div = jnp.exp(jnp.arange(0, d_model, 2, dtype=jnp.float32)
                  * -(math.log(10000.0) / d_model))
    pe = jnp.zeros((length, d_model), jnp.float32)
    pe = pe.at[:, 0::2].set(jnp.sin(pos * div))
    pe = pe.at[:, 1::2].set(jnp.cos(pos * div))
    return pe


# ----------------------------------------------------------------------------
# Fused forward kernel
# ----------------------------------------------------------------------------
def _layer_norm(v, w, b, eps=1e-5):
    mu = jnp.mean(v, axis=-1, keepdims=True)
    d = v - mu
    var = jnp.mean(d * d, axis=-1, keepdims=True)
    return d * jax.lax.rsqrt(var + eps) * w + b


def _eeg_conformer_kernel(
        xt_ref, w1_ref, w2_ref, pe_ref, mask_ref, pool_ref,
        wattn_ref, battn_ref, wff1_ref, wff2_ref, bff1_ref, out_ref, *,
        bsz, c_eeg, t_len, h_out, n_layers, n_heads, d_head):
    f32 = jnp.float32

    # --- temporal conv (1x3 over time): im2col matmul + exact-erf GELU -------
    pre = jnp.dot(xt_ref[...], w1_ref[...], preferred_element_type=f32)  # (B*C*T, 64)
    g = 0.5 * pre * (1.0 + jax.lax.erf(pre * (1.0 / math.sqrt(2.0))))

    # --- sum over time per (b, c): one MXU matmul with a 0/1 pooling matrix --
    s = jnp.dot(pool_ref[...], g, preferred_element_type=f32)            # (B*C, 64)

    # --- spatial conv (8x1 over channels): 8-tap im2col -> single matmul -----
    #     The 2 H-padding zero rows of each conv are explicit zero rows
    #     (GELU(0)=0, no conv biases).
    zeros2 = jnp.zeros((2, TEMPORAL_CH), f32)
    blocks = []
    for bb in range(bsz):
        sb = s[bb * c_eeg:(bb + 1) * c_eeg, :]                           # (C, 64)
        spad = jnp.concatenate([zeros2, sb, zeros2], axis=0)             # (C+4, 64)
        blocks.append(jnp.concatenate(
            [spad[r:r + h_out, :] for r in range(8)], axis=-1))          # (h_out, 512)
    im2col = jnp.concatenate(blocks, axis=0)                             # (NS, 512)

    # conv2 output width = T + 2*padW - kW + 1 = T + 2  (the mean divisor)
    mean_div = t_len + 2 * 1 - 1 + 1
    tok = (jnp.dot(im2col, w2_ref[...], preferred_element_type=f32)
           * (1.0 / mean_div) + pe_ref[...])                             # (NS, K)

    # --- transformer encoder: all layers fused, packed weights in VMEM -------
    mask = mask_ref[...]                       # (NS, NS) additive: 0 / -1e30
    scale = 1.0 / math.sqrt(d_head)
    for l in range(n_layers):                  # static loop, distinct weights/layer
        bl = battn_ref[l]                      # (9, K): bq bk bv bo ln1w ln1b ln2w ln2b bff2
        bq, bk, bv, bo = bl[0:1], bl[1:2], bl[2:3], bl[3:4]
        ln1w, ln1b = bl[4:5], bl[5:6]
        ln2w, ln2b = bl[6:7], bl[7:8]
        bff2 = bl[8:9]

        q = jnp.dot(tok, wattn_ref[4 * l + 0], preferred_element_type=f32) + bq
        k = jnp.dot(tok, wattn_ref[4 * l + 1], preferred_element_type=f32) + bk
        v = jnp.dot(tok, wattn_ref[4 * l + 2], preferred_element_type=f32) + bv
        heads = []
        for h in range(n_heads):
            cols = slice(h * d_head, (h + 1) * d_head)
            qh, kh, vh = q[:, cols], k[:, cols], v[:, cols]
            sc = jax.lax.dot_general(qh, kh, (((1,), (1,)), ((), ())),
                                     preferred_element_type=f32) * scale + mask
            sc = sc - jnp.max(sc, axis=-1, keepdims=True)
            p = jnp.exp(sc)
            p = p / jnp.sum(p, axis=-1, keepdims=True)
            heads.append(jnp.dot(p, vh, preferred_element_type=f32))
        ctx = jnp.concatenate(heads, axis=-1)                            # (NS, K)
        attn = jnp.dot(ctx, wattn_ref[4 * l + 3], preferred_element_type=f32) + bo
        y = _layer_norm(tok + attn, ln1w, ln1b)
        hff = jnp.maximum(
            jnp.dot(y, wff1_ref[l], preferred_element_type=f32) + bff1_ref[l], 0.0)
        ff = jnp.dot(hff, wff2_ref[l], preferred_element_type=f32) + bff2
        tok = _layer_norm(y + ff, ln2w, ln2b)

    out_ref[...] = tok


# ----------------------------------------------------------------------------
# Wrapper: layout plumbing in XLA, one pallas_call for the whole forward
# ----------------------------------------------------------------------------
def eeg_conformer_forward(x, conv_params, layer_params, pe):
    b, c, t = x.shape
    h_out = c - 3
    ns = b * h_out
    bc = b * c
    w1r, w2r = conv_params
    wattn, battn, wff1, wff2, bff1 = layer_params

    # time-im2col for the 1x3 temporal conv (pure layout plumbing, no math)
    xpad = jnp.pad(x, ((0, 0), (0, 0), (1, 1))).reshape(bc, t + 2)       # (B*C, T+2)
    x_taps = jnp.stack([xpad[:, 0:t], xpad[:, 1:t + 1], xpad[:, 2:t + 2]],
                       axis=-1).reshape(bc * t, 3)                       # (B*C*T, 3)
    # 0/1 pooling matrix: sums each group of T consecutive rows (const-folded)
    pool = (jnp.arange(bc)[:, None] == (jnp.arange(bc * t)[None, :] // t)
            ).astype(jnp.float32)                                        # (B*C, B*C*T)
    # positional encoding expanded to token layout (row = b*h_out + h -> pe[h])
    pe_tok = jnp.tile(pe[:h_out, :K_MODEL], (b, 1))                      # (NS, K)
    # additive attention-group mask: token i, j attend iff same channel h
    grp = jnp.arange(ns, dtype=jnp.int32) % h_out
    attn_mask = jnp.where(grp[:, None] == grp[None, :], 0.0, -1e30
                          ).astype(jnp.float32)                          # (NS, NS)

    kernel = functools.partial(
        _eeg_conformer_kernel, bsz=b, c_eeg=c, t_len=t, h_out=h_out,
        n_layers=N_LAYERS, n_heads=N_HEADS, d_head=D_HEAD)
    vmem = pl.BlockSpec(memory_space=pltpu.MemorySpace.VMEM)
    args = (x_taps, w1r, w2r, pe_tok, attn_mask, pool,
            wattn, battn, wff1, wff2, bff1)

    tok = pl.pallas_call(
        kernel,
        out_shape=jax.ShapeDtypeStruct((ns, K_MODEL), jnp.float32),
        in_specs=[vmem] * len(args),
        out_specs=vmem,
    )(*args)

    # rows are already ordered (b, h): free reshape to the PyTorch (B, C-3, K)
    return tok.reshape(b, h_out, K_MODEL)


# ----------------------------------------------------------------------------
# Deterministic parameter initialization (synthetic; no checkpoint load)
# ----------------------------------------------------------------------------
def init_params(key):
    ks = jax.random.split(key, 10)
    w_temporal = jax.random.normal(ks[0], (TEMPORAL_CH, 1, 1, 3),
                                   jnp.float32) * (1.0 / math.sqrt(3.0))
    w_spatial = jax.random.normal(ks[1], (K_MODEL, TEMPORAL_CH, 8, 1),
                                  jnp.float32) * (1.0 / math.sqrt(TEMPORAL_CH * 8))
    # kernel-friendly layouts
    w1r = jnp.transpose(w_temporal.reshape(TEMPORAL_CH, 3), (1, 0))      # (3, 64)
    w2r = jnp.transpose(w_spatial[:, :, :, 0], (2, 1, 0)
                        ).reshape(8 * TEMPORAL_CH, K_MODEL)              # (512, K)

    e, f = K_MODEL, FF_DIM
    in_proj_w = jax.random.normal(ks[2], (3 * e, e), jnp.float32) * (1.0 / math.sqrt(e))
    in_proj_b = jax.random.normal(ks[3], (3 * e,), jnp.float32) * 0.02
    wo = jax.random.normal(ks[4], (e, e), jnp.float32) * (1.0 / math.sqrt(e))
    bo = jax.random.normal(ks[5], (e,), jnp.float32) * 0.02
    wff1 = jax.random.normal(ks[6], (f, e), jnp.float32) * (1.0 / math.sqrt(e))
    bff1 = jax.random.normal(ks[7], (f,), jnp.float32) * 0.02
    wff2 = jax.random.normal(ks[8], (e, f), jnp.float32) * (1.0 / math.sqrt(f))
    bff2 = jax.random.normal(ks[9], (e,), jnp.float32) * 0.02
    ln1w = jnp.ones((e,), jnp.float32); ln1b = jnp.zeros((e,), jnp.float32)
    ln2w = jnp.ones((e,), jnp.float32); ln2b = jnp.zeros((e,), jnp.float32)

    # Per-layer packed operands.  nn.TransformerEncoder deep-copies one layer
    # => identical initial weights; the stacks still support distinct weights.
    wattn_l = jnp.stack([in_proj_w[0:e].T, in_proj_w[e:2 * e].T,
                         in_proj_w[2 * e:].T, wo.T], axis=0)             # (4, e, e)
    battn_l = jnp.stack([in_proj_b[0:e], in_proj_b[e:2 * e], in_proj_b[2 * e:],
                         bo, ln1w, ln1b, ln2w, ln2b, bff2], axis=0)      # (9, e)
    wff1_l = wff1.T                                                      # (e, f)
    wff2_l = wff2.T                                                      # (f, e)
    bff1_l = bff1[None, :]                                               # (1, f)

    def stack(a):
        return jnp.stack([a] * N_LAYERS, axis=0)

    layer_params = (
        jnp.concatenate([wattn_l] * N_LAYERS, axis=0),   # (4*L, e, e)
        stack(battn_l),                                  # (L, 9, e)
        stack(wff1_l),                                   # (L, e, f)
        stack(wff2_l),                                   # (L, f, e)
        stack(bff1_l),                                   # (L, 1, f)
    )
    return (w1r, w2r), layer_params


if __name__ == "__main__":
    key = jax.random.PRNGKey(0)
    k_in, k_par = jax.random.split(key)
    x = jax.random.normal(k_in, (B, C_EEG, T_LEN), dtype=jnp.float32)

    conv_params, layer_params = init_params(k_par)
    pe = positionalencoding1d(K_MODEL, PE_LEN)

    fwd = jax.jit(eeg_conformer_forward)
    out = fwd(x, conv_params, layer_params, pe)
    out = jax.block_until_ready(out)

    assert out.shape == (B, C_EEG - 3, K_MODEL), out.shape
    assert bool(jnp.all(jnp.isfinite(out)))
    print("KERNEL_OK")
</pallas_src>

<mosaic_0001>
module attributes {stable_mosaic.version = 11 : i64} {
  func.func @_eeg_conformer_kernel(%arg0: memref<256x3xf32, #tpu.memory_space<vmem>>, %arg1: memref<3x64xf32, #tpu.memory_space<vmem>>, %arg2: memref<512x32xf32, #tpu.memory_space<vmem>>, %arg3: memref<10x32xf32, #tpu.memory_space<vmem>>, %arg4: memref<10x10xf32, #tpu.memory_space<vmem>>, %arg5: memref<16x256xf32, #tpu.memory_space<vmem>>, %arg6: memref<8x32x32xf32, #tpu.memory_space<vmem>>, %arg7: memref<2x9x32xf32, #tpu.memory_space<vmem>>, %arg8: memref<2x32x2048xf32, #tpu.memory_space<vmem>>, %arg9: memref<2x2048x32xf32, #tpu.memory_space<vmem>>, %arg10: memref<2x1x2048xf32, #tpu.memory_space<vmem>>, %arg11: memref<10x32xf32, #tpu.memory_space<vmem>>) attributes {dimension_semantics = [], scalar_prefetch = 0 : i64, scratch_operands = 0 : i64, tpu.core_type = #tpu.core_type<tc>} {
    %c0 = arith.constant 0 : index
    %c0_0 = arith.constant 0 : index
    %0 = vector.load %arg0[%c0, %c0_0] : memref<256x3xf32, #tpu.memory_space<vmem>>, vector<256x3xf32>
    %c0_1 = arith.constant 0 : index
    %c0_2 = arith.constant 0 : index
    %1 = vector.load %arg1[%c0_1, %c0_2] : memref<3x64xf32, #tpu.memory_space<vmem>>, vector<3x64xf32>
    %cst = arith.constant dense<0.000000e+00> : vector<256x64xf32>
    %2 = tpu.matmul %0, %1, %cst {dimension_numbers = #tpu.dot_dimension_numbers<[1], [0], [0], [1], [0, 0, 1, 1], [], []>} : vector<256x3xf32>, vector<3x64xf32>, vector<256x64xf32> -> vector<256x64xf32>
    %cst_3 = arith.constant 5.000000e-01 : f32
    %3 = vector.broadcast %cst_3 : f32 to vector<256x64xf32>
    %4 = arith.mulf %3, %2 : vector<256x64xf32>
    %cst_4 = arith.constant 0.707106769 : f32
    %5 = vector.broadcast %cst_4 : f32 to vector<256x64xf32>
    %6 = arith.mulf %2, %5 : vector<256x64xf32>
    %7 = math.erf %6 : vector<256x64xf32>
    %cst_5 = arith.constant 1.000000e+00 : f32
    %8 = vector.broadcast %cst_5 : f32 to vector<256x64xf32>
    %9 = arith.addf %8, %7 : vector<256x64xf32>
    %10 = arith.mulf %4, %9 : vector<256x64xf32>
    %c0_6 = arith.constant 0 : index
    %c0_7 = arith.constant 0 : index
    %11 = vector.load %arg5[%c0_6, %c0_7] : memref<16x256xf32, #tpu.memory_space<vmem>>, vector<16x256xf32>
    %cst_8 = arith.constant dense<0.000000e+00> : vector<16x64xf32>
    %12 = tpu.matmul %11, %10, %cst_8 {dimension_numbers = #tpu.dot_dimension_numbers<[1], [0], [0], [1], [0, 0, 1, 1], [], []>} : vector<16x256xf32>, vector<256x64xf32>, vector<16x64xf32> -> vector<16x64xf32>
    %cst_9 = arith.constant 0.000000e+00 : f32
    %13 = vector.broadcast %cst_9 : f32 to vector<2x64xf32>
    %14 = vector.extract_strided_slice %12 {offsets = [0, 0], sizes = [8, 64], strides = [1, 1]} : vector<16x64xf32> to vector<8x64xf32>
    %15 = tpu.concatenate %13, %14, %13 in 0 : vector<2x64xf32>, vector<8x64xf32>, vector<2x64xf32> -> vector<12x64xf32>
    %16 = vector.extract_strided_slice %15 {offsets = [0, 0], sizes = [5, 64], strides = [1, 1]} : vector<12x64xf32> to vector<5x64xf32>
    %17 = vector.extract_strided_slice %15 {offsets = [1, 0], sizes = [5, 64], strides = [1, 1]} : vector<12x64xf32> to vector<5x64xf32>
    %18 = vector.extract_strided_slice %15 {offsets = [2, 0], sizes = [5, 64], strides = [1, 1]} : vector<12x64xf32> to vector<5x64xf32>
    %19 = vector.extract_strided_slice %15 {offsets = [3, 0], sizes = [5, 64], strides = [1, 1]} : vector<12x64xf32> to vector<5x64xf32>
    %20 = vector.extract_strided_slice %15 {offsets = [4, 0], sizes = [5, 64], strides = [1, 1]} : vector<12x64xf32> to vector<5x64xf32>
    %21 = vector.extract_strided_slice %15 {offsets = [5, 0], sizes = [5, 64], strides = [1, 1]} : vector<12x64xf32> to vector<5x64xf32>
    %22 = vector.extract_strided_slice %15 {offsets = [6, 0], sizes = [5, 64], strides = [1, 1]} : vector<12x64xf32> to vector<5x64xf32>
    %23 = vector.extract_strided_slice %15 {offsets = [7, 0], sizes = [5, 64], strides = [1, 1]} : vector<12x64xf32> to vector<5x64xf32>
    %24 = tpu.concatenate %16, %17, %18, %19, %20, %21, %22, %23 in 1 : vector<5x64xf32>, vector<5x64xf32>, vector<5x64xf32>, vector<5x64xf32>, vector<5x64xf32>, vector<5x64xf32>, vector<5x64xf32>, vector<5x64xf32> -> vector<5x512xf32>
    %25 = vector.extract_strided_slice %12 {offsets = [8, 0], sizes = [8, 64], strides = [1, 1]} : vector<16x64xf32> to vector<8x64xf32>
    %26 = tpu.concatenate %13, %25, %13 in 0 : vector<2x64xf32>, vector<8x64xf32>, vector<2x64xf32> -> vector<12x64xf32>
    %27 = vector.extract_strided_slice %26 {offsets = [0, 0], sizes = [5, 64], strides = [1, 1]} : vector<12x64xf32> to vector<5x64xf32>
    %28 = vector.extract_strided_slice %26 {offsets = [1, 0], sizes = [5, 64], strides = [1, 1]} : vector<12x64xf32> to vector<5x64xf32>
    %29 = vector.extract_strided_slice %26 {offsets = [2, 0], sizes = [5, 64], strides = [1, 1]} : vector<12x64xf32> to vector<5x64xf32>
    %30 = vector.extract_strided_slice %26 {offsets = [3, 0], sizes = [5, 64], strides = [1, 1]} : vector<12x64xf32> to vector<5x64xf32>
    %31 = vector.extract_strided_slice %26 {offsets = [4, 0], sizes = [5, 64], strides = [1, 1]} : vector<12x64xf32> to vector<5x64xf32>
    %32 = vector.extract_strided_slice %26 {offsets = [5, 0], sizes = [5, 64], strides = [1, 1]} : vector<12x64xf32> to vector<5x64xf32>
    %33 = vector.extract_strided_slice %26 {offsets = [6, 0], sizes = [5, 64], strides = [1, 1]} : vector<12x64xf32> to vector<5x64xf32>
    %34 = vector.extract_strided_slice %26 {offsets = [7, 0], sizes = [5, 64], strides = [1, 1]} : vector<12x64xf32> to vector<5x64xf32>
    %35 = tpu.concatenate %27, %28, %29, %30, %31, %32, %33, %34 in 1 : vector<5x64xf32>, vector<5x64xf32>, vector<5x64xf32>, vector<5x64xf32>, vector<5x64xf32>, vector<5x64xf32>, vector<5x64xf32>, vector<5x64xf32> -> vector<5x512xf32>
    %36 = tpu.concatenate %24, %35 in 0 : vector<5x512xf32>, vector<5x512xf32> -> vector<10x512xf32>
    %c0_10 = arith.constant 0 : index
    %c0_11 = arith.constant 0 : index
    %37 = vector.load %arg2[%c0_10, %c0_11] : memref<512x32xf32, #tpu.memory_space<vmem>>, vector<512x32xf32>
    %cst_12 = arith.constant dense<0.000000e+00> : vector<10x32xf32>
    %38 = tpu.matmul %36, %37, %cst_12 {dimension_numbers = #tpu.dot_dimension_numbers<[1], [0], [0], [1], [0, 0, 1, 1], [], []>} : vector<10x512xf32>, vector<512x32xf32>, vector<10x32xf32> -> vector<10x32xf32>
    %cst_13 = arith.constant 0.055555556 : f32
    %39 = vector.broadcast %cst_13 : f32 to vector<10x32xf32>
    %40 = arith.mulf %38, %39 : vector<10x32xf32>
    %c0_14 = arith.constant 0 : index
    %c0_15 = arith.constant 0 : index
    %41 = vector.load %arg3[%c0_14, %c0_15] : memref<10x32xf32, #tpu.memory_space<vmem>>, vector<10x32xf32>
    %42 = arith.addf %40, %41 : vector<10x32xf32>
    %c0_16 = arith.constant 0 : index
    %c0_17 = arith.constant 0 : index
    %43 = vector.load %arg4[%c0_16, %c0_17] : memref<10x10xf32, #tpu.memory_space<vmem>>, vector<10x10xf32>
    %c0_18 = arith.constant 0 : index
    %c0_19 = arith.constant 0 : index
    %c0_20 = arith.constant 0 : index
    %44 = vector.load %arg7[%c0_18, %c0_19, %c0_20] : memref<2x9x32xf32, #tpu.memory_space<vmem>>, vector<1x9x32xf32>
    %45 = vector.shape_cast %44 : vector<1x9x32xf32> to vector<9x32xf32>
    %46 = vector.extract_strided_slice %45 {offsets = [0, 0], sizes = [1, 32], strides = [1, 1]} : vector<9x32xf32> to vector<1x32xf32>
    %47 = vector.extract_strided_slice %45 {offsets = [1, 0], sizes = [1, 32], strides = [1, 1]} : vector<9x32xf32> to vector<1x32xf32>
    %48 = vector.extract_strided_slice %45 {offsets = [2, 0], sizes = [1, 32], strides = [1, 1]} : vector<9x32xf32> to vector<1x32xf32>
    %49 = vector.extract_strided_slice %45 {offsets = [3, 0], sizes = [1, 32], strides = [1, 1]} : vector<9x32xf32> to vector<1x32xf32>
    %50 = vector.extract_strided_slice %45 {offsets = [4, 0], sizes = [1, 32], strides = [1, 1]} : vector<9x32xf32> to vector<1x32xf32>
    %51 = vector.extract_strided_slice %45 {offsets = [5, 0], sizes = [1, 32], strides = [1, 1]} : vector<9x32xf32> to vector<1x32xf32>
    %52 = vector.extract_strided_slice %45 {offsets = [6, 0], sizes = [1, 32], strides = [1, 1]} : vector<9x32xf32> to vector<1x32xf32>
    %53 = vector.extract_strided_slice %45 {offsets = [7, 0], sizes = [1, 32], strides = [1, 1]} : vector<9x32xf32> to vector<1x32xf32>
    %54 = vector.extract_strided_slice %45 {offsets = [8, 0], sizes = [1, 32], strides = [1, 1]} : vector<9x32xf32> to vector<1x32xf32>
    %c0_21 = arith.constant 0 : index
    %c0_22 = arith.constant 0 : index
    %c0_23 = arith.constant 0 : index
    %55 = vector.load %arg6[%c0_21, %c0_22, %c0_23] : memref<8x32x32xf32, #tpu.memory_space<vmem>>, vector<1x32x32xf32>
    %56 = vector.shape_cast %55 : vector<1x32x32xf32> to vector<32x32xf32>
    %cst_24 = arith.constant dense<0.000000e+00> : vector<10x32xf32>
    %57 = tpu.matmul %42, %56, %cst_24 {dimension_numbers = #tpu.dot_dimension_numbers<[1], [0], [0], [1], [0, 0, 1, 1], [], []>} : vector<10x32xf32>, vector<32x32xf32>, vector<10x32xf32> -> vector<10x32xf32>
    %58 = vector.broadcast %46 : vector<1x32xf32> to vector<10x32xf32>
    %59 = arith.addf %57, %58 : vector<10x32xf32>
    %c1 = arith.constant 1 : index
    %c0_25 = arith.constant 0 : index
    %c0_26 = arith.constant 0 : index
    %60 = vector.load %arg6[%c1, %c0_25, %c0_26] : memref<8x32x32xf32, #tpu.memory_space<vmem>>, vector<1x32x32xf32>
    %61 = vector.shape_cast %60 : vector<1x32x32xf32> to vector<32x32xf32>
    %cst_27 = arith.constant dense<0.000000e+00> : vector<10x32xf32>
    %62 = tpu.matmul %42, %61, %cst_27 {dimension_numbers = #tpu.dot_dimension_numbers<[1], [0], [0], [1], [0, 0, 1, 1], [], []>} : vector<10x32xf32>, vector<32x32xf32>, vector<10x32xf32> -> vector<10x32xf32>
    %63 = vector.broadcast %47 : vector<1x32xf32> to vector<10x32xf32>
    %64 = arith.addf %62, %63 : vector<10x32xf32>
    %c2 = arith.constant 2 : index
    %c0_28 = arith.constant 0 : index
    %c0_29 = arith.constant 0 : index
    %65 = vector.load %arg6[%c2, %c0_28, %c0_29] : memref<8x32x32xf32, #tpu.memory_space<vmem>>, vector<1x32x32xf32>
    %66 = vector.shape_cast %65 : vector<1x32x32xf32> to vector<32x32xf32>
    %cst_30 = arith.constant dense<0.000000e+00> : vector<10x32xf32>
    %67 = tpu.matmul %42, %66, %cst_30 {dimension_numbers = #tpu.dot_dimension_numbers<[1], [0], [0], [1], [0, 0, 1, 1], [], []>} : vector<10x32xf32>, vector<32x32xf32>, vector<10x32xf32> -> vector<10x32xf32>
    %68 = vector.broadcast %48 : vector<1x32xf32> to vector<10x32xf32>
    %69 = arith.addf %67, %68 : vector<10x32xf32>
    %70 = vector.extract_strided_slice %59 {offsets = [0, 0], sizes = [10, 8], strides = [1, 1]} : vector<10x32xf32> to vector<10x8xf32>
    %71 = vector.extract_strided_slice %64 {offsets = [0, 0], sizes = [10, 8], strides = [1, 1]} : vector<10x32xf32> to vector<10x8xf32>
    %72 = vector.extract_strided_slice %69 {offsets = [0, 0], sizes = [10, 8], strides = [1, 1]} : vector<10x32xf32> to vector<10x8xf32>
    %cst_31 = arith.constant dense<0.000000e+00> : vector<10x10xf32>
    %73 = tpu.matmul %70, %71, %cst_31 {dimension_numbers = #tpu.dot_dimension_numbers<[1], [1], [0], [0], [0, 0, 1, 0], [], []>} : vector<10x8xf32>, vector<10x8xf32>, vector<10x10xf32> -> vector<10x10xf32>
    %cst_32 = arith.constant 0.353553385 : f32
    %74 = vector.broadcast %cst_32 : f32 to vector<10x10xf32>
    %75 = arith.mulf %73, %74 : vector<10x10xf32>
    %76 = arith.addf %75, %43 : vector<10x10xf32>
    %cst_33 = arith.constant dense<0xFF800000> : vector<10xf32>
    %77 = vector.multi_reduction <maximumf>, %76, %cst_33 [1] : vector<10x10xf32> to vector<10xf32>
    %78 = vector.shape_cast %77 : vector<10xf32> to vector<10x1xf32>
    %79 = vector.broadcast %78 : vector<10x1xf32> to vector<10x10xf32>
    %80 = arith.subf %76, %79 : vector<10x10xf32>
    %81 = math.exp %80 : vector<10x10xf32>
    %cst_34 = arith.constant dense<0.000000e+00> : vector<10xf32>
    %82 = vector.multi_reduction <add>, %81, %cst_34 [1] : vector<10x10xf32> to vector<10xf32>
    %83 = vector.shape_cast %82 : vector<10xf32> to vector<10x1xf32>
    %84 = vector.broadcast %83 : vector<10x1xf32> to vector<10x10xf32>
    %85 = arith.divf %81, %84 : vector<10x10xf32>
    %cst_35 = arith.constant dense<0.000000e+00> : vector<10x8xf32>
    %86 = tpu.matmul %85, %72, %cst_35 {dimension_numbers = #tpu.dot_dimension_numbers<[1], [0], [0], [1], [0, 0, 1, 1], [], []>} : vector<10x10xf32>, vector<10x8xf32>, vector<10x8xf32> -> vector<10x8xf32>
    %87 = vector.extract_strided_slice %59 {offsets = [0, 8], sizes = [10, 8], strides = [1, 1]} : vector<10x32xf32> to vector<10x8xf32>
    %88 = vector.extract_strided_slice %64 {offsets = [0, 8], sizes = [10, 8], strides = [1, 1]} : vector<10x32xf32> to vector<10x8xf32>
    %89 = vector.extract_strided_slice %69 {offsets = [0, 8], sizes = [10, 8], strides = [1, 1]} : vector<10x32xf32> to vector<10x8xf32>
    %cst_36 = arith.constant dense<0.000000e+00> : vector<10x10xf32>
    %90 = tpu.matmul %87, %88, %cst_36 {dimension_numbers = #tpu.dot_dimension_numbers<[1], [1], [0], [0], [0, 0, 1, 0], [], []>} : vector<10x8xf32>, vector<10x8xf32>, vector<10x10xf32> -> vector<10x10xf32>
    %cst_37 = arith.constant 0.353553385 : f32
    %91 = vector.broadcast %cst_37 : f32 to vector<10x10xf32>
    %92 = arith.mulf %90, %91 : vector<10x10xf32>
    %93 = arith.addf %92, %43 : vector<10x10xf32>
    %cst_38 = arith.constant dense<0xFF800000> : vector<10xf32>
    %94 = vector.multi_reduction <maximumf>, %93, %cst_38 [1] : vector<10x10xf32> to vector<10xf32>
    %95 = vector.shape_cast %94 : vector<10xf32> to vector<10x1xf32>
    %96 = vector.broadcast %95 : vector<10x1xf32> to vector<10x10xf32>
    %97 = arith.subf %93, %96 : vector<10x10xf32>
    %98 = math.exp %97 : vector<10x10xf32>
    %cst_39 = arith.constant dense<0.000000e+00> : vector<10xf32>
    %99 = vector.multi_reduction <add>, %98, %cst_39 [1] : vector<10x10xf32> to vector<10xf32>
    %100 = vector.shape_cast %99 : vector<10xf32> to vector<10x1xf32>
    %101 = vector.broadcast %100 : vector<10x1xf32> to vector<10x10xf32>
    %102 = arith.divf %98, %101 : vector<10x10xf32>
    %cst_40 = arith.constant dense<0.000000e+00> : vector<10x8xf32>
    %103 = tpu.matmul %102, %89, %cst_40 {dimension_numbers = #tpu.dot_dimension_numbers<[1], [0], [0], [1], [0, 0, 1, 1], [], []>} : vector<10x10xf32>, vector<10x8xf32>, vector<10x8xf32> -> vector<10x8xf32>
    %104 = vector.extract_strided_slice %59 {offsets = [0, 16], sizes = [10, 8], strides = [1, 1]} : vector<10x32xf32> to vector<10x8xf32>
    %105 = vector.extract_strided_slice %64 {offsets = [0, 16], sizes = [10, 8], strides = [1, 1]} : vector<10x32xf32> to vector<10x8xf32>
    %106 = vector.extract_strided_slice %69 {offsets = [0, 16], sizes = [10, 8], strides = [1, 1]} : vector<10x32xf32> to vector<10x8xf32>
    %cst_41 = arith.constant dense<0.000000e+00> : vector<10x10xf32>
    %107 = tpu.matmul %104, %105, %cst_41 {dimension_numbers = #tpu.dot_dimension_numbers<[1], [1], [0], [0], [0, 0, 1, 0], [], []>} : vector<10x8xf32>, vector<10x8xf32>, vector<10x10xf32> -> vector<10x10xf32>
    %cst_42 = arith.constant 0.353553385 : f32
    %108 = vector.broadcast %cst_42 : f32 to vector<10x10xf32>
    %109 = arith.mulf %107, %108 : vector<10x10xf32>
    %110 = arith.addf %109, %43 : vector<10x10xf32>
    %cst_43 = arith.constant dense<0xFF800000> : vector<10xf32>
    %111 = vector.multi_reduction <maximumf>, %110, %cst_43 [1] : vector<10x10xf32> to vector<10xf32>
    %112 = vector.shape_cast %111 : vector<10xf32> to vector<10x1xf32>
    %113 = vector.broadcast %112 : vector<10x1xf32> to vector<10x10xf32>
    %114 = arith.subf %110, %113 : vector<10x10xf32>
    %115 = math.exp %114 : vector<10x10xf32>
    %cst_44 = arith.constant dense<0.000000e+00> : vector<10xf32>
    %116 = vector.multi_reduction <add>, %115, %cst_44 [1] : vector<10x10xf32> to vector<10xf32>
    %117 = vector.shape_cast %116 : vector<10xf32> to vector<10x1xf32>
    %118 = vector.broadcast %117 : vector<10x1xf32> to vector<10x10xf32>
    %119 = arith.divf %115, %118 : vector<10x10xf32>
    %cst_45 = arith.constant dense<0.000000e+00> : vector<10x8xf32>
    %120 = tpu.matmul %119, %106, %cst_45 {dimension_numbers = #tpu.dot_dimension_numbers<[1], [0], [0], [1], [0, 0, 1, 1], [], []>} : vector<10x10xf32>, vector<10x8xf32>, vector<10x8xf32> -> vector<10x8xf32>
    %121 = vector.extract_strided_slice %59 {offsets = [0, 24], sizes = [10, 8], strides = [1, 1]} : vector<10x32xf32> to vector<10x8xf32>
    %122 = vector.extract_strided_slice %64 {offsets = [0, 24], sizes = [10, 8], strides = [1, 1]} : vector<10x32xf32> to vector<10x8xf32>
    %123 = vector.extract_strided_slice %69 {offsets = [0, 24], sizes = [10, 8], strides = [1, 1]} : vector<10x32xf32> to vector<10x8xf32>
    %cst_46 = arith.constant dense<0.000000e+00> : vector<10x10xf32>
    %124 = tpu.matmul %121, %122, %cst_46 {dimension_numbers = #tpu.dot_dimension_numbers<[1], [1], [0], [0], [0, 0, 1, 0], [], []>} : vector<10x8xf32>, vector<10x8xf32>, vector<10x10xf32> -> vector<10x10xf32>
    %cst_47 = arith.constant 0.353553385 : f32
    %125 = vector.broadcast %cst_47 : f32 to vector<10x10xf32>
    %126 = arith.mulf %124, %125 : vector<10x10xf32>
    %127 = arith.addf %126, %43 : vector<10x10xf32>
    %cst_48 = arith.constant dense<0xFF800000> : vector<10xf32>
    %128 = vector.multi_reduction <maximumf>, %127, %cst_48 [1] : vector<10x10xf32> to vector<10xf32>
    %129 = vector.shape_cast %128 : vector<10xf32> to vector<10x1xf32>
    %130 = vector.broadcast %129 : vector<10x1xf32> to vector<10x10xf32>
    %131 = arith.subf %127, %130 : vector<10x10xf32>
    %132 = math.exp %131 : vector<10x10xf32>
    %cst_49 = arith.constant dense<0.000000e+00> : vector<10xf32>
    %133 = vector.multi_reduction <add>, %132, %cst_49 [1] : vector<10x10xf32> to vector<10xf32>
    %134 = vector.shape_cast %133 : vector<10xf32> to vector<10x1xf32>
    %135 = vector.broadcast %134 : vector<10x1xf32> to vector<10x10xf32>
    %136 = arith.divf %132, %135 : vector<10x10xf32>
    %cst_50 = arith.constant dense<0.000000e+00> : vector<10x8xf32>
    %137 = tpu.matmul %136, %123, %cst_50 {dimension_numbers = #tpu.dot_dimension_numbers<[1], [0], [0], [1], [0, 0, 1, 1], [], []>} : vector<10x10xf32>, vector<10x8xf32>, vector<10x8xf32> -> vector<10x8xf32>
    %138 = tpu.concatenate %86, %103, %120, %137 in 1 : vector<10x8xf32>, vector<10x8xf32>, vector<10x8xf32>, vector<10x8xf32> -> vector<10x32xf32>
    %c3 = arith.constant 3 : index
    %c0_51 = arith.constant 0 : index
    %c0_52 = arith.constant 0 : index
    %139 = vector.load %arg6[%c3, %c0_51, %c0_52] : memref<8x32x32xf32, #tpu.memory_space<vmem>>, vector<1x32x32xf32>
    %140 = vector.shape_cast %139 : vector<1x32x32xf32> to vector<32x32xf32>
    %cst_53 = arith.constant dense<0.000000e+00> : vector<10x32xf32>
    %141 = tpu.matmul %138, %140, %cst_53 {dimension_numbers = #tpu.dot_dimension_numbers<[1], [0], [0], [1], [0, 0, 1, 1], [], []>} : vector<10x32xf32>, vector<32x32xf32>, vector<10x32xf32> -> vector<10x32xf32>
    %142 = vector.broadcast %49 : vector<1x32xf32> to vector<10x32xf32>
    %143 = arith.addf %141, %142 : vector<10x32xf32>
    %144 = arith.addf %42, %143 : vector<10x32xf32>
    %cst_54 = arith.constant dense<0.000000e+00> : vector<10xf32>
    %145 = vector.multi_reduction <add>, %144, %cst_54 [1] : vector<10x32xf32> to vector<10xf32>
    %146 = vector.shape_cast %145 : vector<10xf32> to vector<10x1xf32>
    %cst_55 = arith.constant 3.200000e+01 : f32
    %147 = vector.broadcast %cst_55 : f32 to vector<10x1xf32>
    %148 = arith.divf %146, %147 : vector<10x1xf32>
    %149 = vector.broadcast %148 : vector<10x1xf32> to vector<10x32xf32>
    %150 = arith.subf %144, %149 : vector<10x32xf32>
    %151 = arith.mulf %150, %150 : vector<10x32xf32>
    %cst_56 = arith.constant dense<0.000000e+00> : vector<10xf32>
    %152 = vector.multi_reduction <add>, %151, %cst_56 [1] : vector<10x32xf32> to vector<10xf32>
    %153 = vector.shape_cast %152 : vector<10xf32> to vector<10x1xf32>
    %cst_57 = arith.constant 3.200000e+01 : f32
    %154 = vector.broadcast %cst_57 : f32 to vector<10x1xf32>
    %155 = arith.divf %153, %154 : vector<10x1xf32>
    %cst_58 = arith.constant 9.99999974E-6 : f32
    %156 = vector.broadcast %cst_58 : f32 to vector<10x1xf32>
    %157 = arith.addf %155, %156 : vector<10x1xf32>
    %158 = math.rsqrt %157 : vector<10x1xf32>
    %159 = vector.broadcast %158 : vector<10x1xf32> to vector<10x32xf32>
    %160 = arith.mulf %150, %159 : vector<10x32xf32>
    %161 = vector.broadcast %50 : vector<1x32xf32> to vector<10x32xf32>
    %162 = arith.mulf %160, %161 : vector<10x32xf32>
    %163 = vector.broadcast %51 : vector<1x32xf32> to vector<10x32xf32>
    %164 = arith.addf %162, %163 : vector<10x32xf32>
    %c0_59 = arith.constant 0 : index
    %c0_60 = arith.constant 0 : index
    %c0_61 = arith.constant 0 : index
    %165 = vector.load %arg8[%c0_59, %c0_60, %c0_61] : memref<2x32x2048xf32, #tpu.memory_space<vmem>>, vector<1x32x2048xf32>
    %166 = vector.shape_cast %165 : vector<1x32x2048xf32> to vector<32x2048xf32>
    %cst_62 = arith.constant dense<0.000000e+00> : vector<10x2048xf32>
    %167 = tpu.matmul %164, %166, %cst_62 {dimension_numbers = #tpu.dot_dimension_numbers<[1], [0], [0], [1], [0, 0, 1, 1], [], []>} : vector<10x32xf32>, vector<32x2048xf32>, vector<10x2048xf32> -> vector<10x2048xf32>
    %c0_63 = arith.constant 0 : index
    %c0_64 = arith.constant 0 : index
    %c0_65 = arith.constant 0 : index
    %168 = vector.load %arg10[%c0_63, %c0_64, %c0_65] : memref<2x1x2048xf32, #tpu.memory_space<vmem>>, vector<1x1x2048xf32>
    %169 = vector.shape_cast %168 : vector<1x1x2048xf32> to vector<1x2048xf32>
    %170 = vector.broadcast %169 : vector<1x2048xf32> to vector<10x2048xf32>
    %171 = arith.addf %167, %170 : vector<10x2048xf32>
    %cst_66 = arith.constant 0.000000e+00 : f32
    %172 = vector.broadcast %cst_66 : f32 to vector<10x2048xf32>
    %173 = arith.maximumf %171, %172 : vector<10x2048xf32>
    %c0_67 = arith.constant 0 : index
    %c0_68 = arith.constant 0 : index
    %c0_69 = arith.constant 0 : index
    %174 = vector.load %arg9[%c0_67, %c0_68, %c0_69] : memref<2x2048x32xf32, #tpu.memory_space<vmem>>, vector<1x2048x32xf32>
    %175 = vector.shape_cast %174 : vector<1x2048x32xf32> to vector<2048x32xf32>
    %cst_70 = arith.constant dense<0.000000e+00> : vector<10x32xf32>
    %176 = tpu.matmul %173, %175, %cst_70 {dimension_numbers = #tpu.dot_dimension_numbers<[1], [0], [0], [1], [0, 0, 1, 1], [], []>} : vector<10x2048xf32>, vector<2048x32xf32>, vector<10x32xf32> -> vector<10x32xf32>
    %177 = vector.broadcast %54 : vector<1x32xf32> to vector<10x32xf32>
    %178 = arith.addf %176, %177 : vector<10x32xf32>
    %179 = arith.addf %164, %178 : vector<10x32xf32>
    %cst_71 = arith.constant dense<0.000000e+00> : vector<10xf32>
    %180 = vector.multi_reduction <add>, %179, %cst_71 [1] : vector<10x32xf32> to vector<10xf32>
    %181 = vector.shape_cast %180 : vector<10xf32> to vector<10x1xf32>
    %cst_72 = arith.constant 3.200000e+01 : f32
    %182 = vector.broadcast %cst_72 : f32 to vector<10x1xf32>
    %183 = arith.divf %181, %182 : vector<10x1xf32>
    %184 = vector.broadcast %183 : vector<10x1xf32> to vector<10x32xf32>
    %185 = arith.subf %179, %184 : vector<10x32xf32>
    %186 = arith.mulf %185, %185 : vector<10x32xf32>
    %cst_73 = arith.constant dense<0.000000e+00> : vector<10xf32>
    %187 = vector.multi_reduction <add>, %186, %cst_73 [1] : vector<10x32xf32> to vector<10xf32>
    %188 = vector.shape_cast %187 : vector<10xf32> to vector<10x1xf32>
    %cst_74 = arith.constant 3.200000e+01 : f32
    %189 = vector.broadcast %cst_74 : f32 to vector<10x1xf32>
    %190 = arith.divf %188, %189 : vector<10x1xf32>
    %cst_75 = arith.constant 9.99999974E-6 : f32
    %191 = vector.broadcast %cst_75 : f32 to vector<10x1xf32>
    %192 = arith.addf %190, %191 : vector<10x1xf32>
    %193 = math.rsqrt %192 : vector<10x1xf32>
    %194 = vector.broadcast %193 : vector<10x1xf32> to vector<10x32xf32>
    %195 = arith.mulf %185, %194 : vector<10x32xf32>
    %196 = vector.broadcast %52 : vector<1x32xf32> to vector<10x32xf32>
    %197 = arith.mulf %195, %196 : vector<10x32xf32>
    %198 = vector.broadcast %53 : vector<1x32xf32> to vector<10x32xf32>
    %199 = arith.addf %197, %198 : vector<10x32xf32>
    %c1_76 = arith.constant 1 : index
    %c0_77 = arith.constant 0 : index
    %c0_78 = arith.constant 0 : index
    %200 = vector.load %arg7[%c1_76, %c0_77, %c0_78] : memref<2x9x32xf32, #tpu.memory_space<vmem>>, vector<1x9x32xf32>
    %201 = vector.shape_cast %200 : vector<1x9x32xf32> to vector<9x32xf32>
    %202 = vector.extract_strided_slice %201 {offsets = [0, 0], sizes = [1, 32], strides = [1, 1]} : vector<9x32xf32> to vector<1x32xf32>
    %203 = vector.extract_strided_slice %201 {offsets = [1, 0], sizes = [1, 32], strides = [1, 1]} : vector<9x32xf32> to vector<1x32xf32>
    %204 = vector.extract_strided_slice %201 {offsets = [2, 0], sizes = [1, 32], strides = [1, 1]} : vector<9x32xf32> to vector<1x32xf32>
    %205 = vector.extract_strided_slice %201 {offsets = [3, 0], sizes = [1, 32], strides = [1, 1]} : vector<9x32xf32> to vector<1x32xf32>
    %206 = vector.extract_strided_slice %201 {offsets = [4, 0], sizes = [1, 32], strides = [1, 1]} : vector<9x32xf32> to vector<1x32xf32>
    %207 = vector.extract_strided_slice %201 {offsets = [5, 0], sizes = [1, 32], strides = [1, 1]} : vector<9x32xf32> to vector<1x32xf32>
    %208 = vector.extract_strided_slice %201 {offsets = [6, 0], sizes = [1, 32], strides = [1, 1]} : vector<9x32xf32> to vector<1x32xf32>
    %209 = vector.extract_strided_slice %201 {offsets = [7, 0], sizes = [1, 32], strides = [1, 1]} : vector<9x32xf32> to vector<1x32xf32>
    %210 = vector.extract_strided_slice %201 {offsets = [8, 0], sizes = [1, 32], strides = [1, 1]} : vector<9x32xf32> to vector<1x32xf32>
    %c4 = arith.constant 4 : index
    %c0_79 = arith.constant 0 : index
    %c0_80 = arith.constant 0 : index
    %211 = vector.load %arg6[%c4, %c0_79, %c0_80] : memref<8x32x32xf32, #tpu.memory_space<vmem>>, vector<1x32x32xf32>
    %212 = vector.shape_cast %211 : vector<1x32x32xf32> to vector<32x32xf32>
    %cst_81 = arith.constant dense<0.000000e+00> : vector<10x32xf32>
    %213 = tpu.matmul %199, %212, %cst_81 {dimension_numbers = #tpu.dot_dimension_numbers<[1], [0], [0], [1], [0, 0, 1, 1], [], []>} : vector<10x32xf32>, vector<32x32xf32>, vector<10x32xf32> -> vector<10x32xf32>
    %214 = vector.broadcast %202 : vector<1x32xf32> to vector<10x32xf32>
    %215 = arith.addf %213, %214 : vector<10x32xf32>
    %c5 = arith.constant 5 : index
    %c0_82 = arith.constant 0 : index
    %c0_83 = arith.constant 0 : index
    %216 = vector.load %arg6[%c5, %c0_82, %c0_83] : memref<8x32x32xf32, #tpu.memory_space<vmem>>, vector<1x32x32xf32>
    %217 = vector.shape_cast %216 : vector<1x32x32xf32> to vector<32x32xf32>
    %cst_84 = arith.constant dense<0.000000e+00> : vector<10x32xf32>
    %218 = tpu.matmul %199, %217, %cst_84 {dimension_numbers = #tpu.dot_dimension_numbers<[1], [0], [0], [1], [0, 0, 1, 1], [], []>} : vector<10x32xf32>, vector<32x32xf32>, vector<10x32xf32> -> vector<10x32xf32>
    %219 = vector.broadcast %203 : vector<1x32xf32> to vector<10x32xf32>
    %220 = arith.addf %218, %219 : vector<10x32xf32>
    %c6 = arith.constant 6 : index
    %c0_85 = arith.constant 0 : index
    %c0_86 = arith.constant 0 : index
    %221 = vector.load %arg6[%c6, %c0_85, %c0_86] : memref<8x32x32xf32, #tpu.memory_space<vmem>>, vector<1x32x32xf32>
    %222 = vector.shape_cast %221 : vector<1x32x32xf32> to vector<32x32xf32>
    %cst_87 = arith.constant dense<0.000000e+00> : vector<10x32xf32>
    %223 = tpu.matmul %199, %222, %cst_87 {dimension_numbers = #tpu.dot_dimension_numbers<[1], [0], [0], [1], [0, 0, 1, 1], [], []>} : vector<10x32xf32>, vector<32x32xf32>, vector<10x32xf32> -> vector<10x32xf32>
    %224 = vector.broadcast %204 : vector<1x32xf32> to vector<10x32xf32>
    %225 = arith.addf %223, %224 : vector<10x32xf32>
    %226 = vector.extract_strided_slice %215 {offsets = [0, 0], sizes = [10, 8], strides = [1, 1]} : vector<10x32xf32> to vector<10x8xf32>
    %227 = vector.extract_strided_slice %220 {offsets = [0, 0], sizes = [10, 8], strides = [1, 1]} : vector<10x32xf32> to vector<10x8xf32>
    %228 = vector.extract_strided_slice %225 {offsets = [0, 0], sizes = [10, 8], strides = [1, 1]} : vector<10x32xf32> to vector<10x8xf32>
    %cst_88 = arith.constant dense<0.000000e+00> : vector<10x10xf32>
    %229 = tpu.matmul %226, %227, %cst_88 {dimension_numbers = #tpu.dot_dimension_numbers<[1], [1], [0], [0], [0, 0, 1, 0], [], []>} : vector<10x8xf32>, vector<10x8xf32>, vector<10x10xf32> -> vector<10x10xf32>
    %cst_89 = arith.constant 0.353553385 : f32
    %230 = vector.broadcast %cst_89 : f32 to vector<10x10xf32>
    %231 = arith.mulf %229, %230 : vector<10x10xf32>
    %232 = arith.addf %231, %43 : vector<10x10xf32>
    %cst_90 = arith.constant dense<0xFF800000> : vector<10xf32>
    %233 = vector.multi_reduction <maximumf>, %232, %cst_90 [1] : vector<10x10xf32> to vector<10xf32>
    %234 = vector.shape_cast %233 : vector<10xf32> to vector<10x1xf32>
    %235 = vector.broadcast %234 : vector<10x1xf32> to vector<10x10xf32>
    %236 = arith.subf %232, %235 : vector<10x10xf32>
    %237 = math.exp %236 : vector<10x10xf32>
    %cst_91 = arith.constant dense<0.000000e+00> : vector<10xf32>
    %238 = vector.multi_reduction <add>, %237, %cst_91 [1] : vector<10x10xf32> to vector<10xf32>
    %239 = vector.shape_cast %238 : vector<10xf32> to vector<10x1xf32>
    %240 = vector.broadcast %239 : vector<10x1xf32> to vector<10x10xf32>
    %241 = arith.divf %237, %240 : vector<10x10xf32>
    %cst_92 = arith.constant dense<0.000000e+00> : vector<10x8xf32>
    %242 = tpu.matmul %241, %228, %cst_92 {dimension_numbers = #tpu.dot_dimension_numbers<[1], [0], [0], [1], [0, 0, 1, 1], [], []>} : vector<10x10xf32>, vector<10x8xf32>, vector<10x8xf32> -> vector<10x8xf32>
    %243 = vector.extract_strided_slice %215 {offsets = [0, 8], sizes = [10, 8], strides = [1, 1]} : vector<10x32xf32> to vector<10x8xf32>
    %244 = vector.extract_strided_slice %220 {offsets = [0, 8], sizes = [10, 8], strides = [1, 1]} : vector<10x32xf32> to vector<10x8xf32>
    %245 = vector.extract_strided_slice %225 {offsets = [0, 8], sizes = [10, 8], strides = [1, 1]} : vector<10x32xf32> to vector<10x8xf32>
    %cst_93 = arith.constant dense<0.000000e+00> : vector<10x10xf32>
    %246 = tpu.matmul %243, %244, %cst_93 {dimension_numbers = #tpu.dot_dimension_numbers<[1], [1], [0], [0], [0, 0, 1, 0], [], []>} : vector<10x8xf32>, vector<10x8xf32>, vector<10x10xf32> -> vector<10x10xf32>
    %cst_94 = arith.constant 0.353553385 : f32
    %247 = vector.broadcast %cst_94 : f32 to vector<10x10xf32>
    %248 = arith.mulf %246, %247 : vector<10x10xf32>
    %249 = arith.addf %248, %43 : vector<10x10xf32>
    %cst_95 = arith.constant dense<0xFF800000> : vector<10xf32>
    %250 = vector.multi_reduction <maximumf>, %249, %cst_95 [1] : vector<10x10xf32> to vector<10xf32>
    %251 = vector.shape_cast %250 : vector<10xf32> to vector<10x1xf32>
    %252 = vector.broadcast %251 : vector<10x1xf32> to vector<10x10xf32>
    %253 = arith.subf %249, %252 : vector<10x10xf32>
    %254 = math.exp %253 : vector<10x10xf32>
    %cst_96 = arith.constant dense<0.000000e+00> : vector<10xf32>
    %255 = vector.multi_reduction <add>, %254, %cst_96 [1] : vector<10x10xf32> to vector<10xf32>
    %256 = vector.shape_cast %255 : vector<10xf32> to vector<10x1xf32>
    %257 = vector.broadcast %256 : vector<10x1xf32> to vector<10x10xf32>
    %258 = arith.divf %254, %257 : vector<10x10xf32>
    %cst_97 = arith.constant dense<0.000000e+00> : vector<10x8xf32>
    %259 = tpu.matmul %258, %245, %cst_97 {dimension_numbers = #tpu.dot_dimension_numbers<[1], [0], [0], [1], [0, 0, 1, 1], [], []>} : vector<10x10xf32>, vector<10x8xf32>, vector<10x8xf32> -> vector<10x8xf32>
    %260 = vector.extract_strided_slice %215 {offsets = [0, 16], sizes = [10, 8], strides = [1, 1]} : vector<10x32xf32> to vector<10x8xf32>
    %261 = vector.extract_strided_slice %220 {offsets = [0, 16], sizes = [10, 8], strides = [1, 1]} : vector<10x32xf32> to vector<10x8xf32>
    %262 = vector.extract_strided_slice %225 {offsets = [0, 16], sizes = [10, 8], strides = [1, 1]} : vector<10x32xf32> to vector<10x8xf32>
    %cst_98 = arith.constant dense<0.000000e+00> : vector<10x10xf32>
    %263 = tpu.matmul %260, %261, %cst_98 {dimension_numbers = #tpu.dot_dimension_numbers<[1], [1], [0], [0], [0, 0, 1, 0], [], []>} : vector<10x8xf32>, vector<10x8xf32>, vector<10x10xf32> -> vector<10x10xf32>
    %cst_99 = arith.constant 0.353553385 : f32
    %264 = vector.broadcast %cst_99 : f32 to vector<10x10xf32>
    %265 = arith.mulf %263, %264 : vector<10x10xf32>
    %266 = arith.addf %265, %43 : vector<10x10xf32>
    %cst_100 = arith.constant dense<0xFF800000> : vector<10xf32>
    %267 = vector.multi_reduction <maximumf>, %266, %cst_100 [1] : vector<10x10xf32> to vector<10xf32>
    %268 = vector.shape_cast %267 : vector<10xf32> to vector<10x1xf32>
    %269 = vector.broadcast %268 : vector<10x1xf32> to vector<10x10xf32>
    %270 = arith.subf %266, %269 : vector<10x10xf32>
    %271 = math.exp %270 : vector<10x10xf32>
    %cst_101 = arith.constant dense<0.000000e+00> : vector<10xf32>
    %272 = vector.multi_reduction <add>, %271, %cst_101 [1] : vector<10x10xf32> to vector<10xf32>
    %273 = vector.shape_cast %272 : vector<10xf32> to vector<10x1xf32>
    %274 = vector.broadcast %273 : vector<10x1xf32> to vector<10x10xf32>
    %275 = arith.divf %271, %274 : vector<10x10xf32>
    %cst_102 = arith.constant dense<0.000000e+00> : vector<10x8xf32>
    %276 = tpu.matmul %275, %262, %cst_102 {dimension_numbers = #tpu.dot_dimension_numbers<[1], [0], [0], [1], [0, 0, 1, 1], [], []>} : vector<10x10xf32>, vector<10x8xf32>, vector<10x8xf32> -> vector<10x8xf32>
    %277 = vector.extract_strided_slice %215 {offsets = [0, 24], sizes = [10, 8], strides = [1, 1]} : vector<10x32xf32> to vector<10x8xf32>
    %278 = vector.extract_strided_slice %220 {offsets = [0, 24], sizes = [10, 8], strides = [1, 1]} : vector<10x32xf32> to vector<10x8xf32>
    %279 = vector.extract_strided_slice %225 {offsets = [0, 24], sizes = [10, 8], strides = [1, 1]} : vector<10x32xf32> to vector<10x8xf32>
    %cst_103 = arith.constant dense<0.000000e+00> : vector<10x10xf32>
    %280 = tpu.matmul %277, %278, %cst_103 {dimension_numbers = #tpu.dot_dimension_numbers<[1], [1], [0], [0], [0, 0, 1, 0], [], []>} : vector<10x8xf32>, vector<10x8xf32>, vector<10x10xf32> -> vector<10x10xf32>
    %cst_104 = arith.constant 0.353553385 : f32
    %281 = vector.broadcast %cst_104 : f32 to vector<10x10xf32>
    %282 = arith.mulf %280, %281 : vector<10x10xf32>
    %283 = arith.addf %282, %43 : vector<10x10xf32>
    %cst_105 = arith.constant dense<0xFF800000> : vector<10xf32>
    %284 = vector.multi_reduction <maximumf>, %283, %cst_105 [1] : vector<10x10xf32> to vector<10xf32>
    %285 = vector.shape_cast %284 : vector<10xf32> to vector<10x1xf32>
    %286 = vector.broadcast %285 : vector<10x1xf32> to vector<10x10xf32>
    %287 = arith.subf %283, %286 : vector<10x10xf32>
    %288 = math.exp %287 : vector<10x10xf32>
    %cst_106 = arith.constant dense<0.000000e+00> : vector<10xf32>
    %289 = vector.multi_reduction <add>, %288, %cst_106 [1] : vector<10x10xf32> to vector<10xf32>
    %290 = vector.shape_cast %289 : vector<10xf32> to vector<10x1xf32>
    %291 = vector.broadcast %290 : vector<10x1xf32> to vector<10x10xf32>
    %292 = arith.divf %288, %291 : vector<10x10xf32>
    %cst_107 = arith.constant dense<0.000000e+00> : vector<10x8xf32>
    %293 = tpu.matmul %292, %279, %cst_107 {dimension_numbers = #tpu.dot_dimension_numbers<[1], [0], [0], [1], [0, 0, 1, 1], [], []>} : vector<10x10xf32>, vector<10x8xf32>, vector<10x8xf32> -> vector<10x8xf32>
    %294 = tpu.concatenate %242, %259, %276, %293 in 1 : vector<10x8xf32>, vector<10x8xf32>, vector<10x8xf32>, vector<10x8xf32> -> vector<10x32xf32>
    %c7 = arith.constant 7 : index
    %c0_108 = arith.constant 0 : index
    %c0_109 = arith.constant 0 : index
    %295 = vector.load %arg6[%c7, %c0_108, %c0_109] : memref<8x32x32xf32, #tpu.memory_space<vmem>>, vector<1x32x32xf32>
    %296 = vector.shape_cast %295 : vector<1x32x32xf32> to vector<32x32xf32>
    %cst_110 = arith.constant dense<0.000000e+00> : vector<10x32xf32>
    %297 = tpu.matmul %294, %296, %cst_110 {dimension_numbers = #tpu.dot_dimension_numbers<[1], [0], [0], [1], [0, 0, 1, 1], [], []>} : vector<10x32xf32>, vector<32x32xf32>, vector<10x32xf32> -> vector<10x32xf32>
    %298 = vector.broadcast %205 : vector<1x32xf32> to vector<10x32xf32>
    %299 = arith.addf %297, %298 : vector<10x32xf32>
    %300 = arith.addf %199, %299 : vector<10x32xf32>
    %cst_111 = arith.constant dense<0.000000e+00> : vector<10xf32>
    %301 = vector.multi_reduction <add>, %300, %cst_111 [1] : vector<10x32xf32> to vector<10xf32>
    %302 = vector.shape_cast %301 : vector<10xf32> to vector<10x1xf32>
    %cst_112 = arith.constant 3.200000e+01 : f32
    %303 = vector.broadcast %cst_112 : f32 to vector<10x1xf32>
    %304 = arith.divf %302, %303 : vector<10x1xf32>
    %305 = vector.broadcast %304 : vector<10x1xf32> to vector<10x32xf32>
    %306 = arith.subf %300, %305 : vector<10x32xf32>
    %307 = arith.mulf %306, %306 : vector<10x32xf32>
    %cst_113 = arith.constant dense<0.000000e+00> : vector<10xf32>
    %308 = vector.multi_reduction <add>, %307, %cst_113 [1] : vector<10x32xf32> to vector<10xf32>
    %309 = vector.shape_cast %308 : vector<10xf32> to vector<10x1xf32>
    %cst_114 = arith.constant 3.200000e+01 : f32
    %310 = vector.broadcast %cst_114 : f32 to vector<10x1xf32>
    %311 = arith.divf %309, %310 : vector<10x1xf32>
    %cst_115 = arith.constant 9.99999974E-6 : f32
    %312 = vector.broadcast %cst_115 : f32 to vector<10x1xf32>
    %313 = arith.addf %311, %312 : vector<10x1xf32>
    %314 = math.rsqrt %313 : vector<10x1xf32>
    %315 = vector.broadcast %314 : vector<10x1xf32> to vector<10x32xf32>
    %316 = arith.mulf %306, %315 : vector<10x32xf32>
    %317 = vector.broadcast %206 : vector<1x32xf32> to vector<10x32xf32>
    %318 = arith.mulf %316, %317 : vector<10x32xf32>
    %319 = vector.broadcast %207 : vector<1x32xf32> to vector<10x32xf32>
    %320 = arith.addf %318, %319 : vector<10x32xf32>
    %c1_116 = arith.constant 1 : index
    %c0_117 = arith.constant 0 : index
    %c0_118 = arith.constant 0 : index
    %321 = vector.load %arg8[%c1_116, %c0_117, %c0_118] : memref<2x32x2048xf32, #tpu.memory_space<vmem>>, vector<1x32x2048xf32>
    %322 = vector.shape_cast %321 : vector<1x32x2048xf32> to vector<32x2048xf32>
    %cst_119 = arith.constant dense<0.000000e+00> : vector<10x2048xf32>
    %323 = tpu.matmul %320, %322, %cst_119 {dimension_numbers = #tpu.dot_dimension_numbers<[1], [0], [0], [1], [0, 0, 1, 1], [], []>} : vector<10x32xf32>, vector<32x2048xf32>, vector<10x2048xf32> -> vector<10x2048xf32>
    %c1_120 = arith.constant 1 : index
    %c0_121 = arith.constant 0 : index
    %c0_122 = arith.constant 0 : index
    %324 = vector.load %arg10[%c1_120, %c0_121, %c0_122] : memref<2x1x2048xf32, #tpu.memory_space<vmem>>, vector<1x1x2048xf32>
    %325 = vector.shape_cast %324 : vector<1x1x2048xf32> to vector<1x2048xf32>
    %326 = vector.broadcast %325 : vector<1x2048xf32> to vector<10x2048xf32>
    %327 = arith.addf %323, %326 : vector<10x2048xf32>
    %cst_123 = arith.constant 0.000000e+00 : f32
    %328 = vector.broadcast %cst_123 : f32 to vector<10x2048xf32>
    %329 = arith.maximumf %327, %328 : vector<10x2048xf32>
    %c1_124 = arith.constant 1 : index
    %c0_125 = arith.constant 0 : index
    %c0_126 = arith.constant 0 : index
    %330 = vector.load %arg9[%c1_124, %c0_125, %c0_126] : memref<2x2048x32xf32, #tpu.memory_space<vmem>>, vector<1x2048x32xf32>
    %331 = vector.shape_cast %330 : vector<1x2048x32xf32> to vector<2048x32xf32>
    %cst_127 = arith.constant dense<0.000000e+00> : vector<10x32xf32>
    %332 = tpu.matmul %329, %331, %cst_127 {dimension_numbers = #tpu.dot_dimension_numbers<[1], [0], [0], [1], [0, 0, 1, 1], [], []>} : vector<10x2048xf32>, vector<2048x32xf32>, vector<10x32xf32> -> vector<10x32xf32>
    %333 = vector.broadcast %210 : vector<1x32xf32> to vector<10x32xf32>
    %334 = arith.addf %332, %333 : vector<10x32xf32>
    %335 = arith.addf %320, %334 : vector<10x32xf32>
    %cst_128 = arith.constant dense<0.000000e+00> : vector<10xf32>
    %336 = vector.multi_reduction <add>, %335, %cst_128 [1] : vector<10x32xf32> to vector<10xf32>
    %337 = vector.shape_cast %336 : vector<10xf32> to vector<10x1xf32>
    %cst_129 = arith.constant 3.200000e+01 : f32
    %338 = vector.broadcast %cst_129 : f32 to vector<10x1xf32>
    %339 = arith.divf %337, %338 : vector<10x1xf32>
    %340 = vector.broadcast %339 : vector<10x1xf32> to vector<10x32xf32>
    %341 = arith.subf %335, %340 : vector<10x32xf32>
    %342 = arith.mulf %341, %341 : vector<10x32xf32>
    %cst_130 = arith.constant dense<0.000000e+00> : vector<10xf32>
    %343 = vector.multi_reduction <add>, %342, %cst_130 [1] : vector<10x32xf32> to vector<10xf32>
    %344 = vector.shape_cast %343 : vector<10xf32> to vector<10x1xf32>
    %cst_131 = arith.constant 3.200000e+01 : f32
    %345 = vector.broadcast %cst_131 : f32 to vector<10x1xf32>
    %346 = arith.divf %344, %345 : vector<10x1xf32>
    %cst_132 = arith.constant 9.99999974E-6 : f32
    %347 = vector.broadcast %cst_132 : f32 to vector<10x1xf32>
    %348 = arith.addf %346, %347 : vector<10x1xf32>
    %349 = math.rsqrt %348 : vector<10x1xf32>
    %350 = vector.broadcast %349 : vector<10x1xf32> to vector<10x32xf32>
    %351 = arith.mulf %341, %350 : vector<10x32xf32>
    %352 = vector.broadcast %208 : vector<1x32xf32> to vector<10x32xf32>
    %353 = arith.mulf %351, %352 : vector<10x32xf32>
    %354 = vector.broadcast %209 : vector<1x32xf32> to vector<10x32xf32>
    %355 = arith.addf %353, %354 : vector<10x32xf32>
    %c0_133 = arith.constant 0 : index
    %c0_134 = arith.constant 0 : index
    %356 = vector.load %arg11[%c0_133, %c0_134] : memref<10x32xf32, #tpu.memory_space<vmem>>, vector<10x32xf32>
    tpu.vector_store %arg11[%c0_133, %c0_134], %355 {strides = array<i32>} : memref<10x32xf32, #tpu.memory_space<vmem>>, vector<10x32xf32>,
    return
  }
}

</mosaic_0001>

<llo_original>
// kernel: tile.9
$region0: #{tile.9}
  %s0 = inlined_call_operand.vmem [shape: f32[2,5,32], index: 0, kind: input, shape index: {}]
  %s1 = inlined_call_operand.vmem [shape: f32[10,32], index: 1, kind: output, shape index: {}]
  %v2 = vld [vmem:[%s0] sm:$0x1f]
  %vm3 = vcmask 261120
  %4 = vst.msk [vmem:[%s1] sm:$0x1f] %vm3, %v2
  %s5 = scalar_lea.vmem %s0, 8
  %v6 = vld [vmem:[%s5] sm:$0x1f]
  %vm7 = vcmask 261120
  %s8 = scalar_lea.vmem %s1, 5
  %9 = vst.msk [vmem:[%s8] sm:$0x1f] %vm7, %v6

// kernel: eeg_conformer_forward.1
$region0: #{eeg_conformer_forward.1}
  #allocation0 [shape = 'u32[]', space=smem, size = 0x4, offset = 0x4, fixed_abs, tag = 'smem constant byte address 0x4 - core index']
  #allocation1 [shape = 'u32[72,128]{1,0:T(1,128)}', space=vmem, size = 0x9000, scoped, tag = 'internal scratch']
  %s0 = inlined_call_operand.vmem [shape: f32[256,3], index: 0, kind: input, shape index: {}]
  %s1 = inlined_call_operand.vmem [shape: f32[3,64], index: 1, kind: input, shape index: {}]
  %s2 = inlined_call_operand.vmem [shape: f32[512,32], index: 2, kind: input, shape index: {}]
  %s3 = inlined_call_operand.vmem [shape: f32[10,32], index: 3, kind: input, shape index: {}]
  %s4 = inlined_call_operand.vmem [shape: f32[10,10], index: 4, kind: input, shape index: {}]
  %s5 = inlined_call_operand.vmem [shape: f32[16,256], index: 5, kind: input, shape index: {}]
  %s6 = inlined_call_operand.vmem [shape: f32[8,32,32], index: 6, kind: input, shape index: {}]
  %s7 = inlined_call_operand.vmem [shape: f32[2,9,32], index: 7, kind: input, shape index: {}]
  %s8 = inlined_call_operand.vmem [shape: f32[2,32,2048], index: 8, kind: input, shape index: {}]
  %s9 = inlined_call_operand.vmem [shape: f32[2,2048,32], index: 9, kind: input, shape index: {}]
  %s10 = inlined_call_operand.vmem [shape: f32[2,1,2048], index: 10, kind: input, shape index: {}]
  %s11 = inlined_call_operand.vmem [shape: f32[10,32], index: 11, kind: output, shape index: {}]
  %s12 = sld [smem:[#allocation0]]
  $region54: #{eeg_conformer_forward.1} parent=0
    _
  %s14 = ssub.s32 1, %s12
  %s15 = scalar_select 0, %s14, %s12
  // Predicated region
  $region2: #{eeg_conformer_forward.1} parent=0 // pred_check
    _
  $region3: #{eeg_conformer_forward.1} parent=0 // pred_check_branch
    %17 = sbr.rel (0) target = $region5
  $region4: #{eeg_conformer_forward.1} parent=0 // pred_region
    _
  $region5: #{eeg_conformer_forward.1} parent=0 // pred_fallthru
    _
  // Predicated region
  $region6: #{eeg_conformer_forward.1} parent=0 // pred_check
    _
  $region7: #{eeg_conformer_forward.1} parent=0 // pred_check_branch
    %19 = sbr.rel (0) target = $region9
  $region8: #{eeg_conformer_forward.1} parent=0 // pred_region
    _
  $region9: #{eeg_conformer_forward.1} parent=0 // pred_fallthru
    _
  // Predicated region
  $region10: #{eeg_conformer_forward.1} parent=0 // pred_check
    _
  $region11: #{eeg_conformer_forward.1} parent=0 // pred_check_branch
    %21 = sbr.rel (0) target = $region13
  $region12: #{eeg_conformer_forward.1} parent=0 // pred_region
    _
  $region13: #{eeg_conformer_forward.1} parent=0 // pred_fallthru
    _
  // Predicated region
  $region14: #{eeg_conformer_forward.1} parent=0 // pred_check
    _
  $region15: #{eeg_conformer_forward.1} parent=0 // pred_check_branch
    %23 = sbr.rel (0) target = $region17
  $region16: #{eeg_conformer_forward.1} parent=0 // pred_region
    _
  $region17: #{eeg_conformer_forward.1} parent=0 // pred_fallthru
    _
  // Predicated region
  $region18: #{eeg_conformer_forward.1} parent=0 // pred_check
    _
  $region19: #{eeg_conformer_forward.1} parent=0 // pred_check_branch
    %25 = sbr.rel (0) target = $region21
  $region20: #{eeg_conformer_forward.1} parent=0 // pred_region
    _
  $region21: #{eeg_conformer_forward.1} parent=0 // pred_fallthru
    _
  // Predicated region
  $region22: #{eeg_conformer_forward.1} parent=0 // pred_check
    _
  $region23: #{eeg_conformer_forward.1} parent=0 // pred_check_branch
    %27 = sbr.rel (0) target = $region25
  $region24: #{eeg_conformer_forward.1} parent=0 // pred_region
    _
  $region25: #{eeg_conformer_forward.1} parent=0 // pred_fallthru
    _
  // Predicated region
  $region26: #{eeg_conformer_forward.1} parent=0 // pred_check
    _
  $region27: #{eeg_conformer_forward.1} parent=0 // pred_check_branch
    %29 = sbr.rel (0) target = $region29
  $region28: #{eeg_conformer_forward.1} parent=0 // pred_region
    _
  $region29: #{eeg_conformer_forward.1} parent=0 // pred_fallthru
    _
  // Predicated region
  $region30: #{eeg_conformer_forward.1} parent=0 // pred_check
    _
  $region31: #{eeg_conformer_forward.1} parent=0 // pred_check_branch
    %31 = sbr.rel (0) target = $region33
  $region32: #{eeg_conformer_forward.1} parent=0 // pred_region
    _
  $region33: #{eeg_conformer_forward.1} parent=0 // pred_fallthru
    _
  // Predicated region
  $region34: #{eeg_conformer_forward.1} parent=0 // pred_check
    _
  $region35: #{eeg_conformer_forward.1} parent=0 // pred_check_branch
    %33 = sbr.rel (0) target = $region37
  $region36: #{eeg_conformer_forward.1} parent=0 // pred_region
    _
  $region37: #{eeg_conformer_forward.1} parent=0 // pred_fallthru
    _
  // Predicated region
  $region38: #{eeg_conformer_forward.1} parent=0 // pred_check
    _
  $region39: #{eeg_conformer_forward.1} parent=0 // pred_check_branch
    %35 = sbr.rel (0) target = $region41
  $region40: #{eeg_conformer_forward.1} parent=0 // pred_region
    _
  $region41: #{eeg_conformer_forward.1} parent=0 // pred_fallthru
    _
  // Predicated region
  $region42: #{eeg_conformer_forward.1} parent=0 // pred_check
    _
  $region43: #{eeg_conformer_forward.1} parent=0 // pred_check_branch
    %37 = sbr.rel (0) target = $region45
  $region44: #{eeg_conformer_forward.1} parent=0 // pred_region
    _
  $region45: #{eeg_conformer_forward.1} parent=0 // pred_fallthru
    _
  %v38 = vld [vmem:[%s0] sm:$0xff]
  %v39 = vld [vmem:[%s0 + $0x8] sm:$0xff]
  %v40 = vld [vmem:[%s0 + $0x10] sm:$0xff]
  %v41 = vld [vmem:[%s0 + $0x18] sm:$0xff]
  %v42 = vld [vmem:[%s0 + $0x20] sm:$0xff]
  %v43 = vld [vmem:[%s0 + $0x28] sm:$0xff]
  %v44 = vld [vmem:[%s0 + $0x30] sm:$0xff]
  %v45 = vld [vmem:[%s0 + $0x38] sm:$0xff]
  %v46 = vld [vmem:[%s0 + $0x40] sm:$0xff]
  %v47 = vld [vmem:[%s0 + $0x48] sm:$0xff]
  %v48 = vld [vmem:[%s0 + $0x50] sm:$0xff]
  %v49 = vld [vmem:[%s0 + $0x58] sm:$0xff]
  %v50 = vld [vmem:[%s0 + $0x60] sm:$0xff]
  %v51 = vld [vmem:[%s0 + $0x68] sm:$0xff]
  %v52 = vld [vmem:[%s0 + $0x70] sm:$0xff]
  %v53 = vld [vmem:[%s0 + $0x78] sm:$0xff]
  %v54 = vld [vmem:[%s0 + $0x80] sm:$0xff]
  %v55 = vld [vmem:[%s0 + $0x88] sm:$0xff]
  %v56 = vld [vmem:[%s0 + $0x90] sm:$0xff]
  %v57 = vld [vmem:[%s0 + $0x98] sm:$0xff]
  %v58 = vld [vmem:[%s0 + $0xa0] sm:$0xff]
  %v59 = vld [vmem:[%s0 + $0xa8] sm:$0xff]
  %v60 = vld [vmem:[%s0 + $0xb0] sm:$0xff]
  %v61 = vld [vmem:[%s0 + $0xb8] sm:$0xff]
  %v62 = vld [vmem:[%s0 + $0xc0] sm:$0xff]
  %v63 = vld [vmem:[%s0 + $0xc8] sm:$0xff]
  %v64 = vld [vmem:[%s0 + $0xd0] sm:$0xff]
  %v65 = vld [vmem:[%s0 + $0xd8] sm:$0xff]
  %v66 = vld [vmem:[%s0 + $0xe0] sm:$0xff]
  %v67 = vld [vmem:[%s0 + $0xe8] sm:$0xff]
  %v68 = vld [vmem:[%s0 + $0xf0] sm:$0xff]
  %v69 = vld [vmem:[%s0 + $0xf8] sm:$0xff]
  %v70 = vld [vmem:[%s1] sm:$0x7]
  %vm71 = vcmask 23552
  %v73 = vsel %vm71, %v38, 0
  %v76 = vsel %vm71, %v39, 0
  %v79 = vsel %vm71, %v40, 0
  %v82 = vsel %vm71, %v41, 0
  %v85 = vsel %vm71, %v42, 0
  %v88 = vsel %vm71, %v43, 0
  %v91 = vsel %vm71, %v44, 0
  %v94 = vsel %vm71, %v45, 0
  %v97 = vsel %vm71, %v46, 0
  %v100 = vsel %vm71, %v47, 0
  %v103 = vsel %vm71, %v48, 0
  %v106 = vsel %vm71, %v49, 0
  %v109 = vsel %vm71, %v50, 0
  %v112 = vsel %vm71, %v51, 0
  %v115 = vsel %vm71, %v52, 0
  %v118 = vsel %vm71, %v53, 0
  %v121 = vsel %vm71, %v54, 0
  %v124 = vsel %vm71, %v55, 0
  %v127 = vsel %vm71, %v56, 0
  %v130 = vsel %vm71, %v57, 0
  %v133 = vsel %vm71, %v58, 0
  %v136 = vsel %vm71, %v59, 0
  %v139 = vsel %vm71, %v60, 0
  %v142 = vsel %vm71, %v61, 0
  %v145 = vsel %vm71, %v62, 0
  %v148 = vsel %vm71, %v63, 0
  %v151 = vsel %vm71, %v64, 0
  %v154 = vsel %vm71, %v65, 0
  %v157 = vsel %vm71, %v66, 0
  %v160 = vsel %vm71, %v67, 0
  %v163 = vsel %vm71, %v68, 0
  %v166 = vsel %vm71, %v69, 0
  %vm168 = vcmask 1042432
  %v170 = vsel %vm168, %v70, 0
  %172 = vmatpush.msra.mxu0 0.0
  %173 = vmatpush.msra.mxu0 0.0
  %174 = vmatpush.msra.mxu0 0.0
  %175 = vmatpush.msra.mxu0 0.0
  %176 = vmatpush.msra.mxu0 0.0
  %177 = vmatpush.msra.mxu0 0.0
  %178 = vmatpush.msra.mxu0 0.0
  %179 = vmatpush.msra.mxu0 0.0
  %180 = vmatpush.msra.mxu0 0.0
  %181 = vmatpush.msra.mxu0 0.0
  %182 = vmatpush.msra.mxu0 0.0
  %183 = vmatpush.msra.mxu0 0.0
  %184 = vmatpush.msra.mxu0 0.0
  %185 = vmatpush.msra.mxu0 0.0
  %186 = vmatpush.msra.mxu0 0.0
  %187 = vmatpush.msra.mxu0 %v170
  %188 = vmatmul.f32.gmra.mxu0 %v73
  %v189 = vpop.f32.mrf.mxu0
  %v190 = vadd.f32 0.0, %v189
  %191 = vmatmul.f32.gmra.mxu0 %v76
  %v192 = vpop.f32.mrf.mxu0
  %v193 = vadd.f32 0.0, %v192
  %194 = vmatmul.f32.gmra.mxu0 %v79
  %v195 = vpop.f32.mrf.mxu0
  %v196 = vadd.f32 0.0, %v195
  %197 = vmatmul.f32.gmra.mxu0 %v82
  %v198 = vpop.f32.mrf.mxu0
  %v199 = vadd.f32 0.0, %v198
  %200 = vmatmul.f32.gmra.mxu0 %v85
  %v201 = vpop.f32.mrf.mxu0
  %v202 = vadd.f32 0.0, %v201
  %203 = vmatmul.f32.gmra.mxu0 %v88
  %v204 = vpop.f32.mrf.mxu0
  %v205 = vadd.f32 0.0, %v204
  %206 = vmatmul.f32.gmra.mxu0 %v91
  %v207 = vpop.f32.mrf.mxu0
  %v208 = vadd.f32 0.0, %v207
  %209 = vmatmul.f32.gmra.mxu0 %v94
  %v210 = vpop.f32.mrf.mxu0
  %v211 = vadd.f32 0.0, %v210
  %212 = vmatmul.f32.gmra.mxu0 %v97
  %v213 = vpop.f32.mrf.mxu0
  %v214 = vadd.f32 0.0, %v213
  %215 = vmatmul.f32.gmra.mxu0 %v100
  %v216 = vpop.f32.mrf.mxu0
  %v217 = vadd.f32 0.0, %v216
  %218 = vmatmul.f32.gmra.mxu0 %v103
  %v219 = vpop.f32.mrf.mxu0
  %v220 = vadd.f32 0.0, %v219
  %221 = vmatmul.f32.gmra.mxu0 %v106
  %v222 = vpop.f32.mrf.mxu0
  %v223 = vadd.f32 0.0, %v222
  %224 = vmatmul.f32.gmra.mxu0 %v109
  %v225 = vpop.f32.mrf.mxu0
  %v226 = vadd.f32 0.0, %v225
  %227 = vmatmul.f32.gmra.mxu0 %v112
  %v228 = vpop.f32.mrf.mxu0
  %v229 = vadd.f32 0.0, %v228
  %230 = vmatmul.f32.gmra.mxu0 %v115
  %v231 = vpop.f32.mrf.mxu0
  %v232 = vadd.f32 0.0, %v231
  %233 = vmatmul.f32.gmra.mxu0 %v118
  %v234 = vpop.f32.mrf.mxu0
  %v235 = vadd.f32 0.0, %v234
  %236 = vmatmul.f32.gmra.mxu0 %v121
  %v237 = vpop.f32.mrf.mxu0
  %v238 = vadd.f32 0.0, %v237
  %239 = vmatmul.f32.gmra.mxu0 %v124
  %v240 = vpop.f32.mrf.mxu0
  %v241 = vadd.f32 0.0, %v240
  %242 = vmatmul.f32.gmra.mxu0 %v127
  %v243 = vpop.f32.mrf.mxu0
  %v244 = vadd.f32 0.0, %v243
  %245 = vmatmul.f32.gmra.mxu0 %v130
  %v246 = vpop.f32.mrf.mxu0
  %v247 = vadd.f32 0.0, %v246
  %248 = vmatmul.f32.gmra.mxu0 %v133
  %v249 = vpop.f32.mrf.mxu0
  %v250 = vadd.f32 0.0, %v249
  %251 = vmatmul.f32.gmra.mxu0 %v136
  %v252 = vpop.f32.mrf.mxu0
  %v253 = vadd.f32 0.0, %v252
  %254 = vmatmul.f32.gmra.mxu0 %v139
  %v255 = vpop.f32.mrf.mxu0
  %v256 = vadd.f32 0.0, %v255
  %257 = vmatmul.f32.gmra.mxu0 %v142
  %v258 = vpop.f32.mrf.mxu0
  %v259 = vadd.f32 0.0, %v258
  %260 = vmatmul.f32.gmra.mxu0 %v145
  %v261 = vpop.f32.mrf.mxu0
  %v262 = vadd.f32 0.0, %v261
  %263 = vmatmul.f32.gmra.mxu0 %v148
  %v264 = vpop.f32.mrf.mxu0
  %v265 = vadd.f32 0.0, %v264
  %266 = vmatmul.f32.gmra.mxu0 %v151
  %v267 = vpop.f32.mrf.mxu0
  %v268 = vadd.f32 0.0, %v267
  %269 = vmatmul.f32.gmra.mxu0 %v154
  %v270 = vpop.f32.mrf.mxu0
  %v271 = vadd.f32 0.0, %v270
  %272 = vmatmul.f32.gmra.mxu0 %v157
  %v273 = vpop.f32.mrf.mxu0
  %v274 = vadd.f32 0.0, %v273
  %275 = vmatmul.f32.gmra.mxu0 %v160
  %v276 = vpop.f32.mrf.mxu0
  %v277 = vadd.f32 0.0, %v276
  %278 = vmatmul.f32.gmra.mxu0 %v163
  %v279 = vpop.f32.mrf.mxu0
  %v280 = vadd.f32 0.0, %v279
  %281 = vmatmul.f32.gmra.mxu0 %v166
  %v282 = vpop.f32.mrf.mxu0
  %v283 = vadd.f32 0.0, %v282
  %284 = vdwg.mxu0
  %v285 = vmul.f32 %v190, 0.5
  %v286 = vmul.f32 %v193, 0.5
  %v287 = vmul.f32 %v196, 0.5
  %v288 = vmul.f32 %v199, 0.5
  %v289 = vmul.f32 %v202, 0.5
  %v290 = vmul.f32 %v205, 0.5
  %v291 = vmul.f32 %v208, 0.5
  %v292 = vmul.f32 %v211, 0.5
  %v293 = vmul.f32 %v214, 0.5
  %v294 = vmul.f32 %v217, 0.5
  %v295 = vmul.f32 %v220, 0.5
  %v296 = vmul.f32 %v223, 0.5
  %v297 = vmul.f32 %v226, 0.5
  %v298 = vmul.f32 %v229, 0.5
  %v299 = vmul.f32 %v232, 0.5
  %v300 = vmul.f32 %v235, 0.5
  %v301 = vmul.f32 %v238, 0.5
  %v302 = vmul.f32 %v241, 0.5
  %v303 = vmul.f32 %v244, 0.5
  %v304 = vmul.f32 %v247, 0.5
  %v305 = vmul.f32 %v250, 0.5
  %v306 = vmul.f32 %v253, 0.5
  %v307 = vmul.f32 %v256, 0.5
  %v308 = vmul.f32 %v259, 0.5
  %v309 = vmul.f32 %v262, 0.5
  %v310 = vmul.f32 %v265, 0.5
  %v311 = vmul.f32 %v268, 0.5
  %v312 = vmul.f32 %v271, 0.5
  %v313 = vmul.f32 %v274, 0.5
  %v314 = vmul.f32 %v277, 0.5
  %v315 = vmul.f32 %v280, 0.5
  %v316 = vmul.f32 %v283, 0.5
  %v317 = vmul.f32 %v190, 0.70710677
  %v318 = vmul.f32 %v193, 0.70710677
  %v319 = vmul.f32 %v196, 0.70710677
  %v320 = vmul.f32 %v199, 0.70710677
  %v321 = vmul.f32 %v202, 0.70710677
  %v322 = vmul.f32 %v205, 0.70710677
  %v323 = vmul.f32 %v208, 0.70710677
  %v324 = vmul.f32 %v211, 0.70710677
  %v325 = vmul.f32 %v214, 0.70710677
  %v326 = vmul.f32 %v217, 0.70710677
  %v327 = vmul.f32 %v220, 0.70710677
  %v328 = vmul.f32 %v223, 0.70710677
  %v329 = vmul.f32 %v226, 0.70710677
  %v330 = vmul.f32 %v229, 0.70710677
  %v331 = vmul.f32 %v232, 0.70710677
  %v332 = vmul.f32 %v235, 0.70710677
  %v333 = vmul.f32 %v238, 0.70710677
  %v334 = vmul.f32 %v241, 0.70710677
  %v335 = vmul.f32 %v244, 0.70710677
  %v336 = vmul.f32 %v247, 0.70710677
  %v337 = vmul.f32 %v250, 0.70710677
  %v338 = vmul.f32 %v253, 0.70710677
  %v339 = vmul.f32 %v256, 0.70710677
  %v340 = vmul.f32 %v259, 0.70710677
  %v341 = vmul.f32 %v262, 0.70710677
  %v342 = vmul.f32 %v265, 0.70710677
  %v343 = vmul.f32 %v268, 0.70710677
  %v344 = vmul.f32 %v271, 0.70710677
  %v345 = vmul.f32 %v274, 0.70710677
  %v346 = vmul.f32 %v277, 0.70710677
  %v347 = vmul.f32 %v280, 0.70710677
  %v348 = vmul.f32 %v283, 0.70710677
  %v349 = vmul.f32 %v317, %v317
  %v350 = vmin.f32 16.0, %v349
  %v351 = vmul.f32 %v350, 2.1237322e-06
  %v352 = vadd.f32 %v351, 0.00028619796
  %v353 = vmul.f32 %v350, %v352
  %v354 = vadd.f32 %v353, 0.0036580483
  %v355 = vmul.f32 %v350, %v354
  %v356 = vadd.f32 %v355, 0.05243302
  %v357 = vmul.f32 %v350, %v356
  %v358 = vadd.f32 %v357, 0.18741608
  %v359 = vmul.f32 %v350, %v358
  %v360 = vadd.f32 %v359, 1.1283791
  %v361 = vmul.f32 %v317, %v360
  %v362 = vmul.f32 %v350, 3.8918573e-05
  %v363 = vadd.f32 %v362, 0.001143296
  %v364 = vmul.f32 %v350, %v363
  %v365 = vadd.f32 %v364, 0.014752088
  %v366 = vmul.f32 %v350, %v365
  %v367 = vadd.f32 %v366, 0.112945676
  %v368 = vmul.f32 %v350, %v367
  %v369 = vadd.f32 %v368, 0.4994258
  %v370 = vmul.f32 %v350, %v369
  %v371 = vadd.f32 %v370, 1.0
  %v372 = vrcp.pop %v371
  %v373 = vmul.f32 %v371, %v372
  %v374 = vsub.f32 1.0, %v373
  %v375 = vmul.f32 %v372, %v374
  %v376 = vadd.f32 %v372, %v375
  %vm377 = vweird.f32 %v371
  %vm378 = vweird.f32 %v372
  %vm379 = vmor %vm377, %vm378
  %v380 = vsel %vm379, %v372, %v376
  %v381 = vand.u32 2147483647, %v371
  %vm382 = vcmp.eq.f32.partialorder %v381, 8.507059e+37
  %v383 = vand.u32 %v371, 2147483648
  %v384 = vor.u32 1.1754944e-38, %v383
  %v385 = vsel %vm382, %v384, %v380
  %v386 = vmul.f32 %v361, %v385
  %v387 = vmin.f32 %v386, 1.0
  %v388 = vmax.f32 %v387, -1.0
  %v389 = vmul.f32 %v318, %v318
  %v390 = vmin.f32 16.0, %v389
  %v391 = vmul.f32 %v390, 2.1237322e-06
  %v392 = vadd.f32 %v391, 0.00028619796
  %v393 = vmul.f32 %v390, %v392
  %v394 = vadd.f32 %v393, 0.0036580483
  %v395 = vmul.f32 %v390, %v394
  %v396 = vadd.f32 %v395, 0.05243302
  %v397 = vmul.f32 %v390, %v396
  %v398 = vadd.f32 %v397, 0.18741608
  %v399 = vmul.f32 %v390, %v398
  %v400 = vadd.f32 %v399, 1.1283791
  %v401 = vmul.f32 %v318, %v400
  %v402 = vmul.f32 %v390, 3.8918573e-05
  %v403 = vadd.f32 %v402, 0.001143296
  %v404 = vmul.f32 %v390, %v403
  %v405 = vadd.f32 %v404, 0.014752088
  %v406 = vmul.f32 %v390, %v405
  %v407 = vadd.f32 %v406, 0.112945676
  %v408 = vmul.f32 %v390, %v407
  %v409 = vadd.f32 %v408, 0.4994258
  %v410 = vmul.f32 %v390, %v409
  %v411 = vadd.f32 %v410, 1.0
  %v412 = vrcp.pop %v411
  %v413 = vmul.f32 %v411, %v412
  %v414 = vsub.f32 1.0, %v413
  %v415 = vmul.f32 %v412, %v414
  %v416 = vadd.f32 %v412, %v415
  %vm417 = vweird.f32 %v411
  %vm418 = vweird.f32 %v412
  %vm419 = vmor %vm417, %vm418
  %v420 = vsel %vm419, %v412, %v416
  %v421 = vand.u32 2147483647, %v411
  %vm422 = vcmp.eq.f32.partialorder %v421, 8.507059e+37
  %v423 = vand.u32 %v411, 2147483648
  %v424 = vor.u32 1.1754944e-38, %v423
  %v425 = vsel %vm422, %v424, %v420
  %v426 = vmul.f32 %v401, %v425
  %v427 = vmin.f32 %v426, 1.0
  %v428 = vmax.f32 %v427, -1.0
  %v429 = vmul.f32 %v319, %v319
  %v430 = vmin.f32 16.0, %v429
  %v431 = vmul.f32 %v430, 2.1237322e-06
  %v432 = vadd.f32 %v431, 0.00028619796
  %v433 = vmul.f32 %v430, %v432
  %v434 = vadd.f32 %v433, 0.0036580483
  %v435 = vmul.f32 %v430, %v434
  %v436 = vadd.f32 %v435, 0.05243302
  %v437 = vmul.f32 %v430, %v436
  %v438 = vadd.f32 %v437, 0.18741608
  %v439 = vmul.f32 %v430, %v438
  %v440 = vadd.f32 %v439, 1.1283791
  %v441 = vmul.f32 %v319, %v440
  %v442 = vmul.f32 %v430, 3.8918573e-05
  %v443 = vadd.f32 %v442, 0.001143296
  %v444 = vmul.f32 %v430, %v443
  %v445 = vadd.f32 %v444, 0.014752088
  %v446 = vmul.f32 %v430, %v445
  %v447 = vadd.f32 %v446, 0.112945676
  %v448 = vmul.f32 %v430, %v447
  %v449 = vadd.f32 %v448, 0.4994258
  %v450 = vmul.f32 %v430, %v449
  %v451 = vadd.f32 %v450, 1.0
  %v452 = vrcp.pop %v451
  %v453 = vmul.f32 %v451, %v452
  %v454 = vsub.f32 1.0, %v453
  %v455 = vmul.f32 %v452, %v454
  %v456 = vadd.f32 %v452, %v455
  %vm457 = vweird.f32 %v451
  %vm458 = vweird.f32 %v452
  %vm459 = vmor %vm457, %vm458
  %v460 = vsel %vm459, %v452, %v456
  %v461 = vand.u32 2147483647, %v451
  %vm462 = vcmp.eq.f32.partialorder %v461, 8.507059e+37
  %v463 = vand.u32 %v451, 2147483648
  %v464 = vor.u32 1.1754944e-38, %v463
  %v465 = vsel %vm462, %v464, %v460
  %v466 = vmul.f32 %v441, %v465
  %v467 = vmin.f32 %v466, 1.0
  %v468 = vmax.f32 %v467, -1.0
  %v469 = vmul.f32 %v320, %v320
  %v470 = vmin.f32 16.0, %v469
  %v471 = vmul.f32 %v470, 2.1237322e-06
  %v472 = vadd.f32 %v471, 0.00028619796
  %v473 = vmul.f32 %v470, %v472
  %v474 = vadd.f32 %v473, 0.0036580483
  %v475 = vmul.f32 %v470, %v474
  %v476 = vadd.f32 %v475, 0.05243302
  %v477 = vmul.f32 %v470, %v476
  %v478 = vadd.f32 %v477, 0.18741608
  %v479 = vmul.f32 %v470, %v478
  %v480 = vadd.f32 %v479, 1.1283791
  %v481 = vmul.f32 %v320, %v480
  %v482 = vmul.f32 %v470, 3.8918573e-05
  %v483 = vadd.f32 %v482, 0.001143296
  %v484 = vmul.f32 %v470, %v483
  %v485 = vadd.f32 %v484, 0.014752088
  %v486 = vmul.f32 %v470, %v485
  %v487 = vadd.f32 %v486, 0.112945676
  %v488 = vmul.f32 %v470, %v487
  %v489 = vadd.f32 %v488, 0.4994258
  %v490 = vmul.f32 %v470, %v489
  %v491 = vadd.f32 %v490, 1.0
  %v492 = vrcp.pop %v491
  %v493 = vmul.f32 %v491, %v492
  %v494 = vsub.f32 1.0, %v493
  %v495 = vmul.f32 %v492, %v494
  %v496 = vadd.f32 %v492, %v495
  %vm497 = vweird.f32 %v491
  %vm498 = vweird.f32 %v492
  %vm499 = vmor %vm497, %vm498
  %v500 = vsel %vm499, %v492, %v496
  %v501 = vand.u32 2147483647, %v491
  %vm502 = vcmp.eq.f32.partialorder %v501, 8.507059e+37
  %v503 = vand.u32 %v491, 2147483648
  %v504 = vor.u32 1.1754944e-38, %v503
  %v505 = vsel %vm502, %v504, %v500
  %v506 = vmul.f32 %v481, %v505
  %v507 = vmin.f32 %v506, 1.0
  %v508 = vmax.f32 %v507, -1.0
  %v509 = vmul.f32 %v321, %v321
  %v510 = vmin.f32 16.0, %v509
  %v511 = vmul.f32 %v510, 2.1237322e-06
  %v512 = vadd.f32 %v511, 0.00028619796
  %v513 = vmul.f32 %v510, %v512
  %v514 = vadd.f32 %v513, 0.0036580483
  %v515 = vmul.f32 %v510, %v514
  %v516 = vadd.f32 %v515, 0.05243302
  %v517 = vmul.f32 %v510, %v516
  %v518 = vadd.f32 %v517, 0.18741608
  %v519 = vmul.f32 %v510, %v518
  %v520 = vadd.f32 %v519, 1.1283791
  %v521 = vmul.f32 %v321, %v520
  %v522 = vmul.f32 %v510, 3.8918573e-05
  %v523 = vadd.f32 %v522, 0.001143296
  %v524 = vmul.f32 %v510, %v523
  %v525 = vadd.f32 %v524, 0.014752088
  %v526 = vmul.f32 %v510, %v525
  %v527 = vadd.f32 %v526, 0.112945676
  %v528 = vmul.f32 %v510, %v527
  %v529 = vadd.f32 %v528, 0.4994258
  %v530 = vmul.f32 %v510, %v529
  %v531 = vadd.f32 %v530, 1.0
  %v532 = vrcp.pop %v531
  %v533 = vmul.f32 %v531, %v532
  %v534 = vsub.f32 1.0, %v533
  %v535 = vmul.f32 %v532, %v534
  %v536 = vadd.f32 %v532, %v535
  %vm537 = vweird.f32 %v531
  %vm538 = vweird.f32 %v532
  %vm539 = vmor %vm537, %vm538
  %v540 = vsel %vm539, %v532, %v536
  %v541 = vand.u32 2147483647, %v531
  %vm542 = vcmp.eq.f32.partialorder %v541, 8.507059e+37
  %v543 = vand.u32 %v531, 2147483648
  %v544 = vor.u32 1.1754944e-38, %v543
  %v545 = vsel %vm542, %v544, %v540
  %v546 = vmul.f32 %v521, %v545
  %v547 = vmin.f32 %v546, 1.0
  %v548 = vmax.f32 %v547, -1.0
  %v549 = vmul.f32 %v322, %v322
  %v550 = vmin.f32 16.0, %v549
  %v551 = vmul.f32 %v550, 2.1237322e-06
  %v552 = vadd.f32 %v551, 0.00028619796
  %v553 = vmul.f32 %v550, %v552
  %v554 = vadd.f32 %v553, 0.0036580483
  %v555 = vmul.f32 %v550, %v554
  %v556 = vadd.f32 %v555, 0.05243302
  %v557 = vmul.f32 %v550, %v556
  %v558 = vadd.f32 %v557, 0.18741608
  %v559 = vmul.f32 %v550, %v558
  %v560 = vadd.f32 %v559, 1.1283791
  %v561 = vmul.f32 %v322, %v560
  %v562 = vmul.f32 %v550, 3.8918573e-05
  %v563 = vadd.f32 %v562, 0.001143296
  %v564 = vmul.f32 %v550, %v563
  %v565 = vadd.f32 %v564, 0.014752088
  %v566 = vmul.f32 %v550, %v565
  %v567 = vadd.f32 %v566, 0.112945676
  %v568 = vmul.f32 %v550, %v567
  %v569 = vadd.f32 %v568, 0.4994258
  %v570 = vmul.f32 %v550, %v569
  %v571 = vadd.f32 %v570, 1.0
  %v572 = vrcp.pop %v571
  %v573 = vmul.f32 %v571, %v572
  %v574 = vsub.f32 1.0, %v573
  %v575 = vmul.f32 %v572, %v574
  %v576 = vadd.f32 %v572, %v575
  %vm577 = vweird.f32 %v571
  %vm578 = vweird.f32 %v572
  %vm579 = vmor %vm577, %vm578
  %v580 = vsel %vm579, %v572, %v576
  %v581 = vand.u32 2147483647, %v571
  %vm582 = vcmp.eq.f32.partialorder %v581, 8.507059e+37
  %v583 = vand.u32 %v571, 2147483648
  %v584 = vor.u32 1.1754944e-38, %v583
  %v585 = vsel %vm582, %v584, %v580
  %v586 = vmul.f32 %v561, %v585
  %v587 = vmin.f32 %v586, 1.0
  %v588 = vmax.f32 %v587, -1.0
  %v589 = vmul.f32 %v323, %v323
  %v590 = vmin.f32 16.0, %v589
  %v591 = vmul.f32 %v590, 2.1237322e-06
  %v592 = vadd.f32 %v591, 0.00028619796
  %v593 = vmul.f32 %v590, %v592
  %v594 = vadd.f32 %v593, 0.0036580483
  %v595 = vmul.f32 %v590, %v594
  %v596 = vadd.f32 %v595, 0.05243302
  %v597 = vmul.f32 %v590, %v596
  %v598 = vadd.f32 %v597, 0.18741608
  %v599 = vmul.f32 %v590, %v598
  %v600 = vadd.f32 %v599, 1.1283791
  %v601 = vmul.f32 %v323, %v600
  %v602 = vmul.f32 %v590, 3.8918573e-05
  %v603 = vadd.f32 %v602, 0.001143296
  %v604 = vmul.f32 %v590, %v603
  %v605 = vadd.f32 %v604, 0.014752088
  %v606 = vmul.f32 %v590, %v605
  %v607 = vadd.f32 %v606, 0.112945676
  %v608 = vmul.f32 %v590, %v607
  %v609 = vadd.f32 %v608, 0.4994258
  %v610 = vmul.f32 %v590, %v609
  %v611 = vadd.f32 %v610, 1.0
  %v612 = vrcp.pop %v611
  %v613 = vmul.f32 %v611, %v612
  %v614 = vsub.f32 1.0, %v613
  %v615 = vmul.f32 %v612, %v614
  %v616 = vadd.f32 %v612, %v615
  %vm617 = vweird.f32 %v611
  %vm618 = vweird.f32 %v612
  %vm619 = vmor %vm617, %vm618
  %v620 = vsel %vm619, %v612, %v616
  %v621 = vand.u32 2147483647, %v611
  %vm622 = vcmp.eq.f32.partialorder %v621, 8.507059e+37
  %v623 = vand.u32 %v611, 2147483648
  %v624 = vor.u32 1.1754944e-38, %v623
  %v625 = vsel %vm622, %v624, %v620
  %v626 = vmul.f32 %v601, %v625
  %v627 = vmin.f32 %v626, 1.0
  %v628 = vmax.f32 %v627, -1.0
  %v629 = vmul.f32 %v324, %v324
  %v630 = vmin.f32 16.0, %v629
  %v631 = vmul.f32 %v630, 2.1237322e-06
  %v632 = vadd.f32 %v631, 0.00028619796
  %v633 = vmul.f32 %v630, %v632
  %v634 = vadd.f32 %v633, 0.0036580483
  %v635 = vmul.f32 %v630, %v634
  %v636 = vadd.f32 %v635, 0.05243302
  %v637 = vmul.f32 %v630, %v636
  %v638 = vadd.f32 %v637, 0.18741608
  %v639 = vmul.f32 %v630, %v638
  %v640 = vadd.f32 %v639, 1.1283791
  %v641 = vmul.f32 %v324, %v640
  %v642 = vmul.f32 %v630, 3.8918573e-05
  %v643 = vadd.f32 %v642, 0.001143296
  %v644 = vmul.f32 %v630, %v643
  %v645 = vadd.f32 %v644, 0.014752088
  %v646 = vmul.f32 %v630, %v645
  %v647 = vadd.f32 %v646, 0.112945676
  %v648 = vmul.f32 %v630, %v647
  %v649 = vadd.f32 %v648, 0.4994258
  %v650 = vmul.f32 %v630, %v649
  %v651 = vadd.f32 %v650, 1.0
  %v652 = vrcp.pop %v651
  %v653 = vmul.f32 %v651, %v652
  %v654 = vsub.f32 1.0, %v653
  %v655 = vmul.f32 %v652, %v654
  %v656 = vadd.f32 %v652, %v655
  %vm657 = vweird.f32 %v651
  %vm658 = vweird.f32 %v652
  %vm659 = vmor %vm657, %vm658
  %v660 = vsel %vm659, %v652, %v656
  %v661 = vand.u32 2147483647, %v651
  %vm662 = vcmp.eq.f32.partialorder %v661, 8.507059e+37
  %v663 = vand.u32 %v651, 2147483648
  %v664 = vor.u32 1.1754944e-38, %v663
  %v665 = vsel %vm662, %v664, %v660
  %v666 = vmul.f32 %v641, %v665
  %v667 = vmin.f32 %v666, 1.0
  %v668 = vmax.f32 %v667, -1.0
  %v669 = vmul.f32 %v325, %v325
  %v670 = vmin.f32 16.0, %v669
  %v671 = vmul.f32 %v670, 2.1237322e-06
  %v672 = vadd.f32 %v671, 0.00028619796
  %v673 = vmul.f32 %v670, %v672
  %v674 = vadd.f32 %v673, 0.0036580483
  %v675 = vmul.f32 %v670, %v674
  %v676 = vadd.f32 %v675, 0.05243302
  %v677 = vmul.f32 %v670, %v676
  %v678 = vadd.f32 %v677, 0.18741608
  %v679 = vmul.f32 %v670, %v678
  %v680 = vadd.f32 %v679, 1.1283791
  %v681 = vmul.f32 %v325, %v680
  %v682 = vmul.f32 %v670, 3.8918573e-05
  %v683 = vadd.f32 %v682, 0.001143296
  %v684 = vmul.f32 %v670, %v683
  %v685 = vadd.f32 %v684, 0.014752088
  %v686 = vmul.f32 %v670, %v685
  %v687 = vadd.f32 %v686, 0.112945676
  %v688 = vmul.f32 %v670, %v687
  %v689 = vadd.f32 %v688, 0.4994258
  %v690 = vmul.f32 %v670, %v689
  %v691 = vadd.f32 %v690, 1.0
  %v692 = vrcp.pop %v691
  %v693 = vmul.f32 %v691, %v692
  %v694 = vsub.f32 1.0, %v693
  %v695 = vmul.f32 %v692, %v694
  %v696 = vadd.f32 %v692, %v695
  %vm697 = vweird.f32 %v691
  %vm698 = vweird.f32 %v692
  %vm699 = vmor %vm697, %vm698
  %v700 = vsel %vm699, %v692, %v696
  %v701 = vand.u32 2147483647, %v691
  %vm702 = vcmp.eq.f32.partialorder %v701, 8.507059e+37
  %v703 = vand.u32 %v691, 2147483648
  %v704 = vor.u32 1.1754944e-38, %v703
  %v705 = vsel %vm702, %v704, %v700
  %v706 = vmul.f32 %v681, %v705
  %v707 = vmin.f32 %v706, 1.0
  %v708 = vmax.f32 %v707, -1.0
  %v709 = vmul.f32 %v326, %v326
  %v710 = vmin.f32 16.0, %v709
  %v711 = vmul.f32 %v710, 2.1237322e-06
  %v712 = vadd.f32 %v711, 0.00028619796
  %v713 = vmul.f32 %v710, %v712
  %v714 = vadd.f32 %v713, 0.0036580483
  %v715 = vmul.f32 %v710, %v714
  %v716 = vadd.f32 %v715, 0.05243302
  %v717 = vmul.f32 %v710, %v716
  %v718 = vadd.f32 %v717, 0.18741608
  %v719 = vmul.f32 %v710, %v718
  %v720 = vadd.f32 %v719, 1.1283791
  %v721 = vmul.f32 %v326, %v720
  %v722 = vmul.f32 %v710, 3.8918573e-05
  %v723 = vadd.f32 %v722, 0.001143296
  %v724 = vmul.f32 %v710, %v723
  %v725 = vadd.f32 %v724, 0.014752088
  %v726 = vmul.f32 %v710, %v725
  %v727 = vadd.f32 %v726, 0.112945676
  %v728 = vmul.f32 %v710, %v727
  %v729 = vadd.f32 %v728, 0.4994258
  %v730 = vmul.f32 %v710, %v729
  %v731 = vadd.f32 %v730, 1.0
  %v732 = vrcp.pop %v731
  %v733 = vmul.f32 %v731, %v732
  %v734 = vsub.f32 1.0, %v733
  %v735 = vmul.f32 %v732, %v734
  %v736 = vadd.f32 %v732, %v735
  %vm737 = vweird.f32 %v731
  %vm738 = vweird.f32 %v732
  %vm739 = vmor %vm737, %vm738
  %v740 = vsel %vm739, %v732, %v736
  %v741 = vand.u32 2147483647, %v731
  %vm742 = vcmp.eq.f32.partialorder %v741, 8.507059e+37
  %v743 = vand.u32 %v731, 2147483648
  %v744 = vor.u32 1.1754944e-38, %v743
  %v745 = vsel %vm742, %v744, %v740
  %v746 = vmul.f32 %v721, %v745
  %v747 = vmin.f32 %v746, 1.0
  %v748 = vmax.f32 %v747, -1.0
  %v749 = vmul.f32 %v327, %v327
  %v750 = vmin.f32 16.0, %v749
  %v751 = vmul.f32 %v750, 2.1237322e-06
  %v752 = vadd.f32 %v751, 0.00028619796
  %v753 = vmul.f32 %v750, %v752
  %v754 = vadd.f32 %v753, 0.0036580483
  %v755 = vmul.f32 %v750, %v754
  %v756 = vadd.f32 %v755, 0.05243302
  %v757 = vmul.f32 %v750, %v756
  %v758 = vadd.f32 %v757, 0.18741608
  %v759 = vmul.f32 %v750, %v758
  %v760 = vadd.f32 %v759, 1.1283791
  %v761 = vmul.f32 %v327, %v760
  %v762 = vmul.f32 %v750, 3.8918573e-05
  %v763 = vadd.f32 %v762, 0.001143296
  %v764 = vmul.f32 %v750, %v763
  %v765 = vadd.f32 %v764, 0.014752088
  %v766 = vmul.f32 %v750, %v765
  %v767 = vadd.f32 %v766, 0.112945676
  %v768 = vmul.f32 %v750, %v767
  %v769 = vadd.f32 %v768, 0.4994258
  %v770 = vmul.f32 %v750, %v769
  %v771 = vadd.f32 %v770, 1.0
  %v772 = vrcp.pop %v771
  %v773 = vmul.f32 %v771, %v772
  %v774 = vsub.f32 1.0, %v773
  %v775 = vmul.f32 %v772, %v774
  %v776 = vadd.f32 %v772, %v775
  %vm777 = vweird.f32 %v771
  %vm778 = vweird.f32 %v772
  %vm779 = vmor %vm777, %vm778
  %v780 = vsel %vm779, %v772, %v776
  %v781 = vand.u32 2147483647, %v771
  %vm782 = vcmp.eq.f32.partialorder %v781, 8.507059e+37
  %v783 = vand.u32 %v771, 2147483648
  %v784 = vor.u32 1.1754944e-38, %v783
  %v785 = vsel %vm782, %v784, %v780
  %v786 = vmul.f32 %v761, %v785
  %v787 = vmin.f32 %v786, 1.0
  %v788 = vmax.f32 %v787, -1.0
  %v789 = vmul.f32 %v328, %v328
  %v790 = vmin.f32 16.0, %v789
  %v791 = vmul.f32 %v790, 2.1237322e-06
  %v792 = vadd.f32 %v791, 0.00028619796
  %v793 = vmul.f32 %v790, %v792
  %v794 = vadd.f32 %v793, 0.0036580483
  %v795 = vmul.f32 %v790, %v794
  %v796 = vadd.f32 %v795, 0.05243302
  %v797 = vmul.f32 %v790, %v796
  %v798 = vadd.f32 %v797, 0.18741608
  %v799 = vmul.f32 %v790, %v798
  %v800 = vadd.f32 %v799, 1.1283791
  %v801 = vmul.f32 %v328, %v800
  %v802 = vmul.f32 %v790, 3.8918573e-05
  %v803 = vadd.f32 %v802, 0.001143296
  %v804 = vmul.f32 %v790, %v803
  %v805 = vadd.f32 %v804, 0.014752088
  %v806 = vmul.f32 %v790, %v805
  %v807 = vadd.f32 %v806, 0.112945676
  %v808 = vmul.f32 %v790, %v807
  %v809 = vadd.f32 %v808, 0.4994258
  %v810 = vmul.f32 %v790, %v809
  %v811 = vadd.f32 %v810, 1.0
  %v812 = vrcp.pop %v811
  %v813 = vmul.f32 %v811, %v812
  %v814 = vsub.f32 1.0, %v813
  %v815 = vmul.f32 %v812, %v814
  %v816 = vadd.f32 %v812, %v815
  %vm817 = vweird.f32 %v811
  %vm818 = vweird.f32 %v812
  %vm819 = vmor %vm817, %vm818
  %v820 = vsel %vm819, %v812, %v816
  %v821 = vand.u32 2147483647, %v811
  %vm822 = vcmp.eq.f32.partialorder %v821, 8.507059e+37
  %v823 = vand.u32 %v811, 2147483648
  %v824 = vor.u32 1.1754944e-38, %v823
  %v825 = vsel %vm822, %v824, %v820
  %v826 = vmul.f32 %v801, %v825
  %v827 = vmin.f32 %v826, 1.0
  %v828 = vmax.f32 %v827, -1.0
  %v829 = vmul.f32 %v329, %v329
  %v830 = vmin.f32 16.0, %v829
  %v831 = vmul.f32 %v830, 2.1237322e-06
  %v832 = vadd.f32 %v831, 0.00028619796
  %v833 = vmul.f32 %v830, %v832
  %v834 = vadd.f32 %v833, 0.0036580483
  %v835 = vmul.f32 %v830, %v834
  %v836 = vadd.f32 %v835, 0.05243302
  %v837 = vmul.f32 %v830, %v836
  %v838 = vadd.f32 %v837, 0.18741608
  %v839 = vmul.f32 %v830, %v838
  %v840 = vadd.f32 %v839, 1.1283791
  %v841 = vmul.f32 %v329, %v840
  %v842 = vmul.f32 %v830, 3.8918573e-05
  %v843 = vadd.f32 %v842, 0.001143296
  %v844 = vmul.f32 %v830, %v843
  %v845 = vadd.f32 %v844, 0.014752088
  %v846 = vmul.f32 %v830, %v845
  %v847 = vadd.f32 %v846, 0.112945676
  %v848 = vmul.f32 %v830, %v847
  %v849 = vadd.f32 %v848, 0.4994258
  %v850 = vmul.f32 %v830, %v849
  %v851 = vadd.f32 %v850, 1.0
  %v852 = vrcp.pop %v851
  %v853 = vmul.f32 %v851, %v852
  %v854 = vsub.f32 1.0, %v853
  %v855 = vmul.f32 %v852, %v854
  %v856 = vadd.f32 %v852, %v855
  %vm857 = vweird.f32 %v851
  %vm858 = vweird.f32 %v852
  %vm859 = vmor %vm857, %vm858
  %v860 = vsel %vm859, %v852, %v856
  %v861 = vand.u32 2147483647, %v851
  %vm862 = vcmp.eq.f32.partialorder %v861, 8.507059e+37
  %v863 = vand.u32 %v851, 2147483648
  %v864 = vor.u32 1.1754944e-38, %v863
  %v865 = vsel %vm862, %v864, %v860
  %v866 = vmul.f32 %v841, %v865
  %v867 = vmin.f32 %v866, 1.0
  %v868 = vmax.f32 %v867, -1.0
  %v869 = vmul.f32 %v330, %v330
  %v870 = vmin.f32 16.0, %v869
  %v871 = vmul.f32 %v870, 2.1237322e-06
  %v872 = vadd.f32 %v871, 0.00028619796
  %v873 = vmul.f32 %v870, %v872
  %v874 = vadd.f32 %v873, 0.0036580483
  %v875 = vmul.f32 %v870, %v874
  %v876 = vadd.f32 %v875, 0.05243302
  %v877 = vmul.f32 %v870, %v876
  %v878 = vadd.f32 %v877, 0.18741608
  %v879 = vmul.f32 %v870, %v878
  %v880 = vadd.f32 %v879, 1.1283791
  %v881 = vmul.f32 %v330, %v880
  %v882 = vmul.f32 %v870, 3.8918573e-05
  %v883 = vadd.f32 %v882, 0.001143296
  %v884 = vmul.f32 %v870, %v883
  %v885 = vadd.f32 %v884, 0.014752088
  %v886 = vmul.f32 %v870, %v885
  %v887 = vadd.f32 %v886, 0.112945676
  %v888 = vmul.f32 %v870, %v887
  %v889 = vadd.f32 %v888, 0.4994258
  %v890 = vmul.f32 %v870, %v889
  %v891 = vadd.f32 %v890, 1.0
  %v892 = vrcp.pop %v891
  %v893 = vmul.f32 %v891, %v892
  %v894 = vsub.f32 1.0, %v893
  %v895 = vmul.f32 %v892, %v894
  %v896 = vadd.f32 %v892, %v895
  %vm897 = vweird.f32 %v891
  %vm898 = vweird.f32 %v892
  %vm899 = vmor %vm897, %vm898
  %v900 = vsel %vm899, %v892, %v896
  %v901 = vand.u32 2147483647, %v891
  %vm902 = vcmp.eq.f32.partialorder %v901, 8.507059e+37
  %v903 = vand.u32 %v891, 2147483648
  %v904 = vor.u32 1.1754944e-38, %v903
  %v905 = vsel %vm902, %v904, %v900
  %v906 = vmul.f32 %v881, %v905
  %v907 = vmin.f32 %v906, 1.0
  %v908 = vmax.f32 %v907, -1.0
  %v909 = vmul.f32 %v331, %v331
  %v910 = vmin.f32 16.0, %v909
  %v911 = vmul.f32 %v910, 2.1237322e-06
  %v912 = vadd.f32 %v911, 0.00028619796
  %v913 = vmul.f32 %v910, %v912
  %v914 = vadd.f32 %v913, 0.0036580483
  %v915 = vmul.f32 %v910, %v914
  %v916 = vadd.f32 %v915, 0.05243302
  %v917 = vmul.f32 %v910, %v916
  %v918 = vadd.f32 %v917, 0.18741608
  %v919 = vmul.f32 %v910, %v918
  %v920 = vadd.f32 %v919, 1.1283791
  %v921 = vmul.f32 %v331, %v920
  %v922 = vmul.f32 %v910, 3.8918573e-05
  %v923 = vadd.f32 %v922, 0.001143296
  %v924 = vmul.f32 %v910, %v923
  %v925 = vadd.f32 %v924, 0.014752088
  %v926 = vmul.f32 %v910, %v925
  %v927 = vadd.f32 %v926, 0.112945676
  %v928 = vmul.f32 %v910, %v927
  %v929 = vadd.f32 %v928, 0.4994258
  %v930 = vmul.f32 %v910, %v929
  %v931 = vadd.f32 %v930, 1.0
  %v932 = vrcp.pop %v931
  %v933 = vmul.f32 %v931, %v932
  %v934 = vsub.f32 1.0, %v933
  %v935 = vmul.f32 %v932, %v934
  %v936 = vadd.f32 %v932, %v935
  %vm937 = vweird.f32 %v931
  %vm938 = vweird.f32 %v932
  %vm939 = vmor %vm937, %vm938
  %v940 = vsel %vm939, %v932, %v936
  %v941 = vand.u32 2147483647, %v931
  %vm942 = vcmp.eq.f32.partialorder %v941, 8.507059e+37
  %v943 = vand.u32 %v931, 2147483648
  %v944 = vor.u32 1.1754944e-38, %v943
  %v945 = vsel %vm942, %v944, %v940
  %v946 = vmul.f32 %v921, %v945
  %v947 = vmin.f32 %v946, 1.0
  %v948 = vmax.f32 %v947, -1.0
  %v949 = vmul.f32 %v332, %v332
  %v950 = vmin.f32 16.0, %v949
  %v951 = vmul.f32 %v950, 2.1237322e-06
  %v952 = vadd.f32 %v951, 0.00028619796
  %v953 = vmul.f32 %v950, %v952
  %v954 = vadd.f32 %v953, 0.0036580483
  %v955 = vmul.f32 %v950, %v954
  %v956 = vadd.f32 %v955, 0.05243302
  %v957 = vmul.f32 %v950, %v956
  %v958 = vadd.f32 %v957, 0.18741608
  %v959 = vmul.f32 %v950, %v958
  %v960 = vadd.f32 %v959, 1.1283791
  %v961 = vmul.f32 %v332, %v960
  %v962 = vmul.f32 %v950, 3.8918573e-05
  %v963 = vadd.f32 %v962, 0.001143296
  %v964 = vmul.f32 %v950, %v963
  %v965 = vadd.f32 %v964, 0.014752088
  %v966 = vmul.f32 %v950, %v965
  %v967 = vadd.f32 %v966, 0.112945676
  %v968 = vmul.f32 %v950, %v967
  %v969 = vadd.f32 %v968, 0.4994258
  %v970 = vmul.f32 %v950, %v969
  %v971 = vadd.f32 %v970, 1.0
  %v972 = vrcp.pop %v971
  %v973 = vmul.f32 %v971, %v972
  %v974 = vsub.f32 1.0, %v973
  %v975 = vmul.f32 %v972, %v974
  %v976 = vadd.f32 %v972, %v975
  %vm977 = vweird.f32 %v971
  %vm978 = vweird.f32 %v972
  %vm979 = vmor %vm977, %vm978
  %v980 = vsel %vm979, %v972, %v976
  %v981 = vand.u32 2147483647, %v971
  %vm982 = vcmp.eq.f32.partialorder %v981, 8.507059e+37
  %v983 = vand.u32 %v971, 2147483648
  %v984 = vor.u32 1.1754944e-38, %v983
  %v985 = vsel %vm982, %v984, %v980
  %v986 = vmul.f32 %v961, %v985
  %v987 = vmin.f32 %v986, 1.0
  %v988 = vmax.f32 %v987, -1.0
  %v989 = vmul.f32 %v333, %v333
  %v990 = vmin.f32 16.0, %v989
  %v991 = vmul.f32 %v990, 2.1237322e-06
  %v992 = vadd.f32 %v991, 0.00028619796
  %v993 = vmul.f32 %v990, %v992
  %v994 = vadd.f32 %v993, 0.0036580483
  %v995 = vmul.f32 %v990, %v994
  %v996 = vadd.f32 %v995, 0.05243302
  %v997 = vmul.f32 %v990, %v996
  %v998 = vadd.f32 %v997, 0.18741608
  %v999 = vmul.f32 %v990, %v998
  %v1000 = vadd.f32 %v999, 1.1283791
  %v1001 = vmul.f32 %v333, %v1000
  %v1002 = vmul.f32 %v990, 3.8918573e-05
  %v1003 = vadd.f32 %v1002, 0.001143296
  %v1004 = vmul.f32 %v990, %v1003
  %v1005 = vadd.f32 %v1004, 0.014752088
  %v1006 = vmul.f32 %v990, %v1005
  %v1007 = vadd.f32 %v1006, 0.112945676
  %v1008 = vmul.f32 %v990, %v1007
  %v1009 = vadd.f32 %v1008, 0.4994258
  %v1010 = vmul.f32 %v990, %v1009
  %v1011 = vadd.f32 %v1010, 1.0
  %v1012 = vrcp.pop %v1011
  %v1013 = vmul.f32 %v1011, %v1012
  %v1014 = vsub.f32 1.0, %v1013
  %v1015 = vmul.f32 %v1012, %v1014
  %v1016 = vadd.f32 %v1012, %v1015
  %vm1017 = vweird.f32 %v1011
  %vm1018 = vweird.f32 %v1012
  %vm1019 = vmor %vm1017, %vm1018
  %v1020 = vsel %vm1019, %v1012, %v1016
  %v1021 = vand.u32 2147483647, %v1011
  %vm1022 = vcmp.eq.f32.partialorder %v1021, 8.507059e+37
  %v1023 = vand.u32 %v1011, 2147483648
  %v1024 = vor.u32 1.1754944e-38, %v1023
  %v1025 = vsel %vm1022, %v1024, %v1020
  %v1026 = vmul.f32 %v1001, %v1025
  %v1027 = vmin.f32 %v1026, 1.0
  %v1028 = vmax.f32 %v1027, -1.0
  %v1029 = vmul.f32 %v334, %v334
  %v1030 = vmin.f32 16.0, %v1029
  %v1031 = vmul.f32 %v1030, 2.1237322e-06
  %v1032 = vadd.f32 %v1031, 0.00028619796
  %v1033 = vmul.f32 %v1030, %v1032
  %v1034 = vadd.f32 %v1033, 0.0036580483
  %v1035 = vmul.f32 %v1030, %v1034
  %v1036 = vadd.f32 %v1035, 0.05243302
  %v1037 = vmul.f32 %v1030, %v1036
  %v1038 = vadd.f32 %v1037, 0.18741608
  %v1039 = vmul.f32 %v1030, %v1038
  %v1040 = vadd.f32 %v1039, 1.1283791
  %v1041 = vmul.f32 %v334, %v1040
  %v1042 = vmul.f32 %v1030, 3.8918573e-05
  %v1043 = vadd.f32 %v1042, 0.001143296
  %v1044 = vmul.f32 %v1030, %v1043
  %v1045 = vadd.f32 %v1044, 0.014752088
  %v1046 = vmul.f32 %v1030, %v1045
  %v1047 = vadd.f32 %v1046, 0.112945676
  %v1048 = vmul.f32 %v1030, %v1047
  %v1049 = vadd.f32 %v1048, 0.4994258
  %v1050 = vmul.f32 %v1030, %v1049
  %v1051 = vadd.f32 %v1050, 1.0
  %v1052 = vrcp.pop %v1051
  %v1053 = vmul.f32 %v1051, %v1052
  %v1054 = vsub.f32 1.0, %v1053
  %v1055 = vmul.f32 %v1052, %v1054
  %v1056 = vadd.f32 %v1052, %v1055
  %vm1057 = vweird.f32 %v1051
  %vm1058 = vweird.f32 %v1052
  %vm1059 = vmor %vm1057, %vm1058
  %v1060 = vsel %vm1059, %v1052, %v1056
  %v1061 = vand.u32 2147483647, %v1051
  %vm1062 = vcmp.eq.f32.partialorder %v1061, 8.507059e+37
  %v1063 = vand.u32 %v1051, 2147483648
  %v1064 = vor.u32 1.1754944e-38, %v1063
  %v1065 = vsel %vm1062, %v1064, %v1060
  %v1066 = vmul.f32 %v1041, %v1065
  %v1067 = vmin.f32 %v1066, 1.0
  %v1068 = vmax.f32 %v1067, -1.0
  %v1069 = vmul.f32 %v335, %v335
  %v1070 = vmin.f32 16.0, %v1069
  %v1071 = vmul.f32 %v1070, 2.1237322e-06
  %v1072 = vadd.f32 %v1071, 0.00028619796
  %v1073 = vmul.f32 %v1070, %v1072
  %v1074 = vadd.f32 %v1073, 0.0036580483
  %v1075 = vmul.f32 %v1070, %v1074
  %v1076 = vadd.f32 %v1075, 0.05243302
  %v1077 = vmul.f32 %v1070, %v1076
  %v1078 = vadd.f32 %v1077, 0.18741608
  %v1079 = vmul.f32 %v1070, %v1078
  %v1080 = vadd.f32 %v1079, 1.1283791
  %v1081 = vmul.f32 %v335, %v1080
  %v1082 = vmul.f32 %v1070, 3.8918573e-05
  %v1083 = vadd.f32 %v1082, 0.001143296
  %v1084 = vmul.f32 %v1070, %v1083
  %v1085 = vadd.f32 %v1084, 0.014752088
  %v1086 = vmul.f32 %v1070, %v1085
  %v1087 = vadd.f32 %v1086, 0.112945676
  %v1088 = vmul.f32 %v1070, %v1087
  %v1089 = vadd.f32 %v1088, 0.4994258
  %v1090 = vmul.f32 %v1070, %v1089
  %v1091 = vadd.f32 %v1090, 1.0
  %v1092 = vrcp.pop %v1091
  %v1093 = vmul.f32 %v1091, %v1092
  %v1094 = vsub.f32 1.0, %v1093
  %v1095 = vmul.f32 %v1092, %v1094
  %v1096 = vadd.f32 %v1092, %v1095
  %vm1097 = vweird.f32 %v1091
  %vm1098 = vweird.f32 %v1092
  %vm1099 = vmor %vm1097, %vm1098
  %v1100 = vsel %vm1099, %v1092, %v1096
  %v1101 = vand.u32 2147483647, %v1091
  %vm1102 = vcmp.eq.f32.partialorder %v1101, 8.507059e+37
  %v1103 = vand.u32 %v1091, 2147483648
  %v1104 = vor.u32 1.1754944e-38, %v1103
  %v1105 = vsel %vm1102, %v1104, %v1100
  %v1106 = vmul.f32 %v1081, %v1105
  %v1107 = vmin.f32 %v1106, 1.0
  %v1108 = vmax.f32 %v1107, -1.0
  %v1109 = vmul.f32 %v336, %v336
  %v1110 = vmin.f32 16.0, %v1109
  %v1111 = vmul.f32 %v1110, 2.1237322e-06
  %v1112 = vadd.f32 %v1111, 0.00028619796
  %v1113 = vmul.f32 %v1110, %v1112
  %v1114 = vadd.f32 %v1113, 0.0036580483
  %v1115 = vmul.f32 %v1110, %v1114
  %v1116 = vadd.f32 %v1115, 0.05243302
  %v1117 = vmul.f32 %v1110, %v1116
  %v1118 = vadd.f32 %v1117, 0.18741608
  %v1119 = vmul.f32 %v1110, %v1118
  %v1120 = vadd.f32 %v1119, 1.1283791
  %v1121 = vmul.f32 %v336, %v1120
  %v1122 = vmul.f32 %v1110, 3.8918573e-05
  %v1123 = vadd.f32 %v1122, 0.001143296
  %v1124 = vmul.f32 %v1110, %v1123
  %v1125 = vadd.f32 %v1124, 0.014752088
  %v1126 = vmul.f32 %v1110, %v1125
  %v1127 = vadd.f32 %v1126, 0.112945676
  %v1128 = vmul.f32 %v1110, %v1127
  %v1129 = vadd.f32 %v1128, 0.4994258
  %v1130 = vmul.f32 %v1110, %v1129
  %v1131 = vadd.f32 %v1130, 1.0
  %v1132 = vrcp.pop %v1131
  %v1133 = vmul.f32 %v1131, %v1132
  %v1134 = vsub.f32 1.0, %v1133
  %v1135 = vmul.f32 %v1132, %v1134
  %v1136 = vadd.f32 %v1132, %v1135
  %vm1137 = vweird.f32 %v1131
  %vm1138 = vweird.f32 %v1132
  %vm1139 = vmor %vm1137, %vm1138
  %v1140 = vsel %vm1139, %v1132, %v1136
  %v1141 = vand.u32 2147483647, %v1131
  %vm1142 = vcmp.eq.f32.partialorder %v1141, 8.507059e+37
  %v1143 = vand.u32 %v1131, 2147483648
  %v1144 = vor.u32 1.1754944e-38, %v1143
  %v1145 = vsel %vm1142, %v1144, %v1140
  %v1146 = vmul.f32 %v1121, %v1145
  %v1147 = vmin.f32 %v1146, 1.0
  %v1148 = vmax.f32 %v1147, -1.0
  %v1149 = vmul.f32 %v337, %v337
  %v1150 = vmin.f32 16.0, %v1149
  %v1151 = vmul.f32 %v1150, 2.1237322e-06
  %v1152 = vadd.f32 %v1151, 0.00028619796
  %v1153 = vmul.f32 %v1150, %v1152
  %v1154 = vadd.f32 %v1153, 0.0036580483
  %v1155 = vmul.f32 %v1150, %v1154
  %v1156 = vadd.f32 %v1155, 0.05243302
  %v1157 = vmul.f32 %v1150, %v1156
  %v1158 = vadd.f32 %v1157, 0.18741608
  %v1159 = vmul.f32 %v1150, %v1158
  %v1160 = vadd.f32 %v1159, 1.1283791
  %v1161 = vmul.f32 %v337, %v1160
  %v1162 = vmul.f32 %v1150, 3.8918573e-05
  %v1163 = vadd.f32 %v1162, 0.001143296
  %v1164 = vmul.f32 %v1150, %v1163
  %v1165 = vadd.f32 %v1164, 0.014752088
  %v1166 = vmul.f32 %v1150, %v1165
  %v1167 = vadd.f32 %v1166, 0.112945676
  %v1168 = vmul.f32 %v1150, %v1167
  %v1169 = vadd.f32 %v1168, 0.4994258
  %v1170 = vmul.f32 %v1150, %v1169
  %v1171 = vadd.f32 %v1170, 1.0
  %v1172 = vrcp.pop %v1171
  %v1173 = vmul.f32 %v1171, %v1172
  %v1174 = vsub.f32 1.0, %v1173
  %v1175 = vmul.f32 %v1172, %v1174
  %v1176 = vadd.f32 %v1172, %v1175
  %vm1177 = vweird.f32 %v1171
  %vm1178 = vweird.f32 %v1172
  %vm1179 = vmor %vm1177, %vm1178
  %v1180 = vsel %vm1179, %v1172, %v1176
  %v1181 = vand.u32 2147483647, %v1171
  %vm1182 = vcmp.eq.f32.partialorder %v1181, 8.507059e+37
  %v1183 = vand.u32 %v1171, 2147483648
  %v1184 = vor.u32 1.1754944e-38, %v1183
  %v1185 = vsel %vm1182, %v1184, %v1180
  %v1186 = vmul.f32 %v1161, %v1185
  %v1187 = vmin.f32 %v1186, 1.0
  %v1188 = vmax.f32 %v1187, -1.0
  %v1189 = vmul.f32 %v338, %v338
  %v1190 = vmin.f32 16.0, %v1189
  %v1191 = vmul.f32 %v1190, 2.1237322e-06
  %v1192 = vadd.f32 %v1191, 0.00028619796
  %v1193 = vmul.f32 %v1190, %v1192
  %v1194 = vadd.f32 %v1193, 0.0036580483
  %v1195 = vmul.f32 %v1190, %v1194
  %v1196 = vadd.f32 %v1195, 0.05243302
  %v1197 = vmul.f32 %v1190, %v1196
  %v1198 = vadd.f32 %v1197, 0.18741608
  %v1199 = vmul.f32 %v1190, %v1198
  %v1200 = vadd.f32 %v1199, 1.1283791
  %v1201 = vmul.f32 %v338, %v1200
  %v1202 = vmul.f32 %v1190, 3.8918573e-05
  %v1203 = vadd.f32 %v1202, 0.001143296
  %v1204 = vmul.f32 %v1190, %v1203
  %v1205 = vadd.f32 %v1204, 0.014752088
  %v1206 = vmul.f32 %v1190, %v1205
  %v1207 = vadd.f32 %v1206, 0.112945676
  %v1208 = vmul.f32 %v1190, %v1207
  %v1209 = vadd.f32 %v1208, 0.4994258
  %v1210 = vmul.f32 %v1190, %v1209
  %v1211 = vadd.f32 %v1210, 1.0
  %v1212 = vrcp.pop %v1211
  %v1213 = vmul.f32 %v1211, %v1212
  %v1214 = vsub.f32 1.0, %v1213
  %v1215 = vmul.f32 %v1212, %v1214
  %v1216 = vadd.f32 %v1212, %v1215
  %vm1217 = vweird.f32 %v1211
  %vm1218 = vweird.f32 %v1212
  %vm1219 = vmor %vm1217, %vm1218
  %v1220 = vsel %vm1219, %v1212, %v1216
  %v1221 = vand.u32 2147483647, %v1211
  %vm1222 = vcmp.eq.f32.partialorder %v1221, 8.507059e+37
  %v1223 = vand.u32 %v1211, 2147483648
  %v1224 = vor.u32 1.1754944e-38, %v1223
  %v1225 = vsel %vm1222, %v1224, %v1220
  %v1226 = vmul.f32 %v1201, %v1225
  %v1227 = vmin.f32 %v1226, 1.0
  %v1228 = vmax.f32 %v1227, -1.0
  %v1229 = vmul.f32 %v339, %v339
  %v1230 = vmin.f32 16.0, %v1229
  %v1231 = vmul.f32 %v1230, 2.1237322e-06
  %v1232 = vadd.f32 %v1231, 0.00028619796
  %v1233 = vmul.f32 %v1230, %v1232
  %v1234 = vadd.f32 %v1233, 0.0036580483
  %v1235 = vmul.f32 %v1230, %v1234
  %v1236 = vadd.f32 %v1235, 0.05243302
  %v1237 = vmul.f32 %v1230, %v1236
  %v1238 = vadd.f32 %v1237, 0.18741608
  %v1239 = vmul.f32 %v1230, %v1238
  %v1240 = vadd.f32 %v1239, 1.1283791
  %v1241 = vmul.f32 %v339, %v1240
  %v1242 = vmul.f32 %v1230, 3.8918573e-05
  %v1243 = vadd.f32 %v1242, 0.001143296
  %v1244 = vmul.f32 %v1230, %v1243
  %v1245 = vadd.f32 %v1244, 0.014752088
  %v1246 = vmul.f32 %v1230, %v1245
  %v1247 = vadd.f32 %v1246, 0.112945676
  %v1248 = vmul.f32 %v1230, %v1247
  %v1249 = vadd.f32 %v1248, 0.4994258
  %v1250 = vmul.f32 %v1230, %v1249
  %v1251 = vadd.f32 %v1250, 1.0
  %v1252 = vrcp.pop %v1251
  %v1253 = vmul.f32 %v1251, %v1252
  %v1254 = vsub.f32 1.0, %v1253
  %v1255 = vmul.f32 %v1252, %v1254
  %v1256 = vadd.f32 %v1252, %v1255
  %vm1257 = vweird.f32 %v1251
  %vm1258 = vweird.f32 %v1252
  %vm1259 = vmor %vm1257, %vm1258
  %v1260 = vsel %vm1259, %v1252, %v1256
  %v1261 = vand.u32 2147483647, %v1251
  %vm1262 = vcmp.eq.f32.partialorder %v1261, 8.507059e+37
  %v1263 = vand.u32 %v1251, 2147483648
  %v1264 = vor.u32 1.1754944e-38, %v1263
  %v1265 = vsel %vm1262, %v1264, %v1260
  %v1266 = vmul.f32 %v1241, %v1265
  %v1267 = vmin.f32 %v1266, 1.0
  %v1268 = vmax.f32 %v1267, -1.0
  %v1269 = vmul.f32 %v340, %v340
  %v1270 = vmin.f32 16.0, %v1269
  %v1271 = vmul.f32 %v1270, 2.1237322e-06
  %v1272 = vadd.f32 %v1271, 0.00028619796
  %v1273 = vmul.f32 %v1270, %v1272
  %v1274 = vadd.f32 %v1273, 0.0036580483
  %v1275 = vmul.f32 %v1270, %v1274
  %v1276 = vadd.f32 %v1275, 0.05243302
  %v1277 = vmul.f32 %v1270, %v1276
  %v1278 = vadd.f32 %v1277, 0.18741608
  %v1279 = vmul.f32 %v1270, %v1278
  %v1280 = vadd.f32 %v1279, 1.1283791
  %v1281 = vmul.f32 %v340, %v1280
  %v1282 = vmul.f32 %v1270, 3.8918573e-05
  %v1283 = vadd.f32 %v1282, 0.001143296
  %v1284 = vmul.f32 %v1270, %v1283
  %v1285 = vadd.f32 %v1284, 0.014752088
  %v1286 = vmul.f32 %v1270, %v1285
  %v1287 = vadd.f32 %v1286, 0.112945676
  %v1288 = vmul.f32 %v1270, %v1287
  %v1289 = vadd.f32 %v1288, 0.4994258
  %v1290 = vmul.f32 %v1270, %v1289
  %v1291 = vadd.f32 %v1290, 1.0
  %v1292 = vrcp.pop %v1291
  %v1293 = vmul.f32 %v1291, %v1292
  %v1294 = vsub.f32 1.0, %v1293
  %v1295 = vmul.f32 %v1292, %v1294
  %v1296 = vadd.f32 %v1292, %v1295
  %vm1297 = vweird.f32 %v1291
  %vm1298 = vweird.f32 %v1292
  %vm1299 = vmor %vm1297, %vm1298
  %v1300 = vsel %vm1299, %v1292, %v1296
  %v1301 = vand.u32 2147483647, %v1291
  %vm1302 = vcmp.eq.f32.partialorder %v1301, 8.507059e+37
  %v1303 = vand.u32 %v1291, 2147483648
  %v1304 = vor.u32 1.1754944e-38, %v1303
  %v1305 = vsel %vm1302, %v1304, %v1300
  %v1306 = vmul.f32 %v1281, %v1305
  %v1307 = vmin.f32 %v1306, 1.0
  %v1308 = vmax.f32 %v1307, -1.0
  %v1309 = vmul.f32 %v341, %v341
  %v1310 = vmin.f32 16.0, %v1309
  %v1311 = vmul.f32 %v1310, 2.1237322e-06
  %v1312 = vadd.f32 %v1311, 0.00028619796
  %v1313 = vmul.f32 %v1310, %v1312
  %v1314 = vadd.f32 %v1313, 0.0036580483
  %v1315 = vmul.f32 %v1310, %v1314
  %v1316 = vadd.f32 %v1315, 0.05243302
  %v1317 = vmul.f32 %v1310, %v1316
  %v1318 = vadd.f32 %v1317, 0.18741608
  %v1319 = vmul.f32 %v1310, %v1318
  %v1320 = vadd.f32 %v1319, 1.1283791
  %v1321 = vmul.f32 %v341, %v1320
  %v1322 = vmul.f32 %v1310, 3.8918573e-05
  %v1323 = vadd.f32 %v1322, 0.001143296
  %v1324 = vmul.f32 %v1310, %v1323
  %v1325 = vadd.f32 %v1324, 0.014752088
  %v1326 = vmul.f32 %v1310, %v1325
  %v1327 = vadd.f32 %v1326, 0.112945676
  %v1328 = vmul.f32 %v1310, %v1327
  %v1329 = vadd.f32 %v1328, 0.4994258
  %v1330 = vmul.f32 %v1310, %v1329
  %v1331 = vadd.f32 %v1330, 1.0
  %v1332 = vrcp.pop %v1331
  %v1333 = vmul.f32 %v1331, %v1332
  %v1334 = vsub.f32 1.0, %v1333
  %v1335 = vmul.f32 %v1332, %v1334
  %v1336 = vadd.f32 %v1332, %v1335
  %vm1337 = vweird.f32 %v1331
  %vm1338 = vweird.f32 %v1332
  %vm1339 = vmor %vm1337, %vm1338
  %v1340 = vsel %vm1339, %v1332, %v1336
  %v1341 = vand.u32 2147483647, %v1331
  %vm1342 = vcmp.eq.f32.partialorder %v1341, 8.507059e+37
  %v1343 = vand.u32 %v1331, 2147483648
  %v1344 = vor.u32 1.1754944e-38, %v1343
  %v1345 = vsel %vm1342, %v1344, %v1340
  %v1346 = vmul.f32 %v1321, %v1345
  %v1347 = vmin.f32 %v1346, 1.0
  %v1348 = vmax.f32 %v1347, -1.0
  %v1349 = vmul.f32 %v342, %v342
  %v1350 = vmin.f32 16.0, %v1349
  %v1351 = vmul.f32 %v1350, 2.1237322e-06
  %v1352 = vadd.f32 %v1351, 0.00028619796
  %v1353 = vmul.f32 %v1350, %v1352
  %v1354 = vadd.f32 %v1353, 0.0036580483
  %v1355 = vmul.f32 %v1350, %v1354
  %v1356 = vadd.f32 %v1355, 0.05243302
  %v1357 = vmul.f32 %v1350, %v1356
  %v1358 = vadd.f32 %v1357, 0.18741608
  %v1359 = vmul.f32 %v1350, %v1358
  %v1360 = vadd.f32 %v1359, 1.1283791
  %v1361 = vmul.f32 %v342, %v1360
  %v1362 = vmul.f32 %v1350, 3.8918573e-05
  %v1363 = vadd.f32 %v1362, 0.001143296
  %v1364 = vmul.f32 %v1350, %v1363
  %v1365 = vadd.f32 %v1364, 0.014752088
  %v1366 = vmul.f32 %v1350, %v1365
  %v1367 = vadd.f32 %v1366, 0.112945676
  %v1368 = vmul.f32 %v1350, %v1367
  %v1369 = vadd.f32 %v1368, 0.4994258
  %v1370 = vmul.f32 %v1350, %v1369
  %v1371 = vadd.f32 %v1370, 1.0
  %v1372 = vrcp.pop %v1371
  %v1373 = vmul.f32 %v1371, %v1372
  %v1374 = vsub.f32 1.0, %v1373
  %v1375 = vmul.f32 %v1372, %v1374
  %v1376 = vadd.f32 %v1372, %v1375
  %vm1377 = vweird.f32 %v1371
  %vm1378 = vweird.f32 %v1372
  %vm1379 = vmor %vm1377, %vm1378
  %v1380 = vsel %vm1379, %v1372, %v1376
  %v1381 = vand.u32 2147483647, %v1371
  %vm1382 = vcmp.eq.f32.partialorder %v1381, 8.507059e+37
  %v1383 = vand.u32 %v1371, 2147483648
  %v1384 = vor.u32 1.1754944e-38, %v1383
  %v1385 = vsel %vm1382, %v1384, %v1380
  %v1386 = vmul.f32 %v1361, %v1385
  %v1387 = vmin.f32 %v1386, 1.0
  %v1388 = vmax.f32 %v1387, -1.0
  %v1389 = vmul.f32 %v343, %v343
  %v1390 = vmin.f32 16.0, %v1389
  %v1391 = vmul.f32 %v1390, 2.1237322e-06
  %v1392 = vadd.f32 %v1391, 0.00028619796
  %v1393 = vmul.f32 %v1390, %v1392
  %v1394 = vadd.f32 %v1393, 0.0036580483
  %v1395 = vmul.f32 %v1390, %v1394
  %v1396 = vadd.f32 %v1395, 0.05243302
  %v1397 = vmul.f32 %v1390, %v1396
  %v1398 = vadd.f32 %v1397, 0.18741608
  %v1399 = vmul.f32 %v1390, %v1398
  %v1400 = vadd.f32 %v1399, 1.1283791
  %v1401 = vmul.f32 %v343, %v1400
  %v1402 = vmul.f32 %v1390, 3.8918573e-05
  %v1403 = vadd.f32 %v1402, 0.001143296
  %v1404 = vmul.f32 %v1390, %v1403
  %v1405 = vadd.f32 %v1404, 0.014752088
  %v1406 = vmul.f32 %v1390, %v1405
  %v1407 = vadd.f32 %v1406, 0.112945676
  %v1408 = vmul.f32 %v1390, %v1407
  %v1409 = vadd.f32 %v1408, 0.4994258
  %v1410 = vmul.f32 %v1390, %v1409
  %v1411 = vadd.f32 %v1410, 1.0
  %v1412 = vrcp.pop %v1411
  %v1413 = vmul.f32 %v1411, %v1412
  %v1414 = vsub.f32 1.0, %v1413
  %v1415 = vmul.f32 %v1412, %v1414
  %v1416 = vadd.f32 %v1412, %v1415
  %vm1417 = vweird.f32 %v1411
  %vm1418 = vweird.f32 %v1412
  %vm1419 = vmor %vm1417, %vm1418
  %v1420 = vsel %vm1419, %v1412, %v1416
  %v1421 = vand.u32 2147483647, %v1411
  %vm1422 = vcmp.eq.f32.partialorder %v1421, 8.507059e+37
  %v1423 = vand.u32 %v1411, 2147483648
  %v1424 = vor.u32 1.1754944e-38, %v1423
  %v1425 = vsel %vm1422, %v1424, %v1420
  %v1426 = vmul.f32 %v1401, %v1425
  %v1427 = vmin.f32 %v1426, 1.0
  %v1428 = vmax.f32 %v1427, -1.0
  %v1429 = vmul.f32 %v344, %v344
  %v1430 = vmin.f32 16.0, %v1429
  %v1431 = vmul.f32 %v1430, 2.1237322e-06
  %v1432 = vadd.f32 %v1431, 0.00028619796
  %v1433 = vmul.f32 %v1430, %v1432
  %v1434 = vadd.f32 %v1433, 0.0036580483
  %v1435 = vmul.f32 %v1430, %v1434
  %v1436 = vadd.f32 %v1435, 0.05243302
  %v1437 = vmul.f32 %v1430, %v1436
  %v1438 = vadd.f32 %v1437, 0.18741608
  %v1439 = vmul.f32 %v1430, %v1438
  %v1440 = vadd.f32 %v1439, 1.1283791
  %v1441 = vmul.f32 %v344, %v1440
  %v1442 = vmul.f32 %v1430, 3.8918573e-05
  %v1443 = vadd.f32 %v1442, 0.001143296
  %v1444 = vmul.f32 %v1430, %v1443
  %v1445 = vadd.f32 %v1444, 0.014752088
  %v1446 = vmul.f32 %v1430, %v1445
  %v1447 = vadd.f32 %v1446, 0.112945676
  %v1448 = vmul.f32 %v1430, %v1447
  %v1449 = vadd.f32 %v1448, 0.4994258
  %v1450 = vmul.f32 %v1430, %v1449
  %v1451 = vadd.f32 %v1450, 1.0
  %v1452 = vrcp.pop %v1451
  %v1453 = vmul.f32 %v1451, %v1452
  %v1454 = vsub.f32 1.0, %v1453
  %v1455 = vmul.f32 %v1452, %v1454
  %v1456 = vadd.f32 %v1452, %v1455
  %vm1457 = vweird.f32 %v1451
  %vm1458 = vweird.f32 %v1452
  %vm1459 = vmor %vm1457, %vm1458
  %v1460 = vsel %vm1459, %v1452, %v1456
  %v1461 = vand.u32 2147483647, %v1451
  %vm1462 = vcmp.eq.f32.partialorder %v1461, 8.507059e+37
  %v1463 = vand.u32 %v1451, 2147483648
  %v1464 = vor.u32 1.1754944e-38, %v1463
  %v1465 = vsel %vm1462, %v1464, %v1460
  %v1466 = vmul.f32 %v1441, %v1465
  %v1467 = vmin.f32 %v1466, 1.0
  %v1468 = vmax.f32 %v1467, -1.0
  %v1469 = vmul.f32 %v345, %v345
  %v1470 = vmin.f32 16.0, %v1469
  %v1471 = vmul.f32 %v1470, 2.1237322e-06
  %v1472 = vadd.f32 %v1471, 0.00028619796
  %v1473 = vmul.f32 %v1470, %v1472
  %v1474 = vadd.f32 %v1473, 0.0036580483
  %v1475 = vmul.f32 %v1470, %v1474
  %v1476 = vadd.f32 %v1475, 0.05243302
  %v1477 = vmul.f32 %v1470, %v1476
  %v1478 = vadd.f32 %v1477, 0.18741608
  %v1479 = vmul.f32 %v1470, %v1478
  %v1480 = vadd.f32 %v1479, 1.1283791
  %v1481 = vmul.f32 %v345, %v1480
  %v1482 = vmul.f32 %v1470, 3.8918573e-05
  %v1483 = vadd.f32 %v1482, 0.001143296
  %v1484 = vmul.f32 %v1470, %v1483
  %v1485 = vadd.f32 %v1484, 0.014752088
  %v1486 = vmul.f32 %v1470, %v1485
  %v1487 = vadd.f32 %v1486, 0.112945676
  %v1488 = vmul.f32 %v1470, %v1487
  %v1489 = vadd.f32 %v1488, 0.4994258
  %v1490 = vmul.f32 %v1470, %v1489
  %v1491 = vadd.f32 %v1490, 1.0
  %v1492 = vrcp.pop %v1491
  %v1493 = vmul.f32 %v1491, %v1492
  %v1494 = vsub.f32 1.0, %v1493
  %v1495 = vmul.f32 %v1492, %v1494
  %v1496 = vadd.f32 %v1492, %v1495
  %vm1497 = vweird.f32 %v1491
  %vm1498 = vweird.f32 %v1492
  %vm1499 = vmor %vm1497, %vm1498
  %v1500 = vsel %vm1499, %v1492, %v1496
  %v1501 = vand.u32 2147483647, %v1491
  %vm1502 = vcmp.eq.f32.partialorder %v1501, 8.507059e+37
  %v1503 = vand.u32 %v1491, 2147483648
  %v1504 = vor.u32 1.1754944e-38, %v1503
  %v1505 = vsel %vm1502, %v1504, %v1500
  %v1506 = vmul.f32 %v1481, %v1505
  %v1507 = vmin.f32 %v1506, 1.0
  %v1508 = vmax.f32 %v1507, -1.0
  %v1509 = vmul.f32 %v346, %v346
  %v1510 = vmin.f32 16.0, %v1509
  %v1511 = vmul.f32 %v1510, 2.1237322e-06
  %v1512 = vadd.f32 %v1511, 0.00028619796
  %v1513 = vmul.f32 %v1510, %v1512
  %v1514 = vadd.f32 %v1513, 0.0036580483
  %v1515 = vmul.f32 %v1510, %v1514
  %v1516 = vadd.f32 %v1515, 0.05243302
  %v1517 = vmul.f32 %v1510, %v1516
  %v1518 = vadd.f32 %v1517, 0.18741608
  %v1519 = vmul.f32 %v1510, %v1518
  %v1520 = vadd.f32 %v1519, 1.1283791
  %v1521 = vmul.f32 %v346, %v1520
  %v1522 = vmul.f32 %v1510, 3.8918573e-05
  %v1523 = vadd.f32 %v1522, 0.001143296
  %v1524 = vmul.f32 %v1510, %v1523
  %v1525 = vadd.f32 %v1524, 0.014752088
  %v1526 = vmul.f32 %v1510, %v1525
  %v1527 = vadd.f32 %v1526, 0.112945676
  %v1528 = vmul.f32 %v1510, %v1527
  %v1529 = vadd.f32 %v1528, 0.4994258
  %v1530 = vmul.f32 %v1510, %v1529
  %v1531 = vadd.f32 %v1530, 1.0
  %v1532 = vrcp.pop %v1531
  %v1533 = vmul.f32 %v1531, %v1532
  %v1534 = vsub.f32 1.0, %v1533
  %v1535 = vmul.f32 %v1532, %v1534
  %v1536 = vadd.f32 %v1532, %v1535
  %vm1537 = vweird.f32 %v1531
  %vm1538 = vweird.f32 %v1532
  %vm1539 = vmor %vm1537, %vm1538
  %v1540 = vsel %vm1539, %v1532, %v1536
  %v1541 = vand.u32 2147483647, %v1531
  %vm1542 = vcmp.eq.f32.partialorder %v1541, 8.507059e+37
  %v1543 = vand.u32 %v1531, 2147483648
  %v1544 = vor.u32 1.1754944e-38, %v1543
  %v1545 = vsel %vm1542, %v1544, %v1540
  %v1546 = vmul.f32 %v1521, %v1545
  %v1547 = vmin.f32 %v1546, 1.0
  %v1548 = vmax.f32 %v1547, -1.0
  %v1549 = vmul.f32 %v347, %v347
  %v1550 = vmin.f32 16.0, %v1549
  %v1551 = vmul.f32 %v1550, 2.1237322e-06
  %v1552 = vadd.f32 %v1551, 0.00028619796
  %v1553 = vmul.f32 %v1550, %v1552
  %v1554 = vadd.f32 %v1553, 0.0036580483
  %v1555 = vmul.f32 %v1550, %v1554
  %v1556 = vadd.f32 %v1555, 0.05243302
  %v1557 = vmul.f32 %v1550, %v1556
  %v1558 = vadd.f32 %v1557, 0.18741608
  %v1559 = vmul.f32 %v1550, %v1558
  %v1560 = vadd.f32 %v1559, 1.1283791
  %v1561 = vmul.f32 %v347, %v1560
  %v1562 = vmul.f32 %v1550, 3.8918573e-05
  %v1563 = vadd.f32 %v1562, 0.001143296
  %v1564 = vmul.f32 %v1550, %v1563
  %v1565 = vadd.f32 %v1564, 0.014752088
  %v1566 = vmul.f32 %v1550, %v1565
  %v1567 = vadd.f32 %v1566, 0.112945676
  %v1568 = vmul.f32 %v1550, %v1567
  %v1569 = vadd.f32 %v1568, 0.4994258
  %v1570 = vmul.f32 %v1550, %v1569
  %v1571 = vadd.f32 %v1570, 1.0
  %v1572 = vrcp.pop %v1571
  %v1573 = vmul.f32 %v1571, %v1572
  %v1574 = vsub.f32 1.0, %v1573
  %v1575 = vmul.f32 %v1572, %v1574
  %v1576 = vadd.f32 %v1572, %v1575
  %vm1577 = vweird.f32 %v1571
  %vm1578 = vweird.f32 %v1572
  %vm1579 = vmor %vm1577, %vm1578
  %v1580 = vsel %vm1579, %v1572, %v1576
  %v1581 = vand.u32 2147483647, %v1571
  %vm1582 = vcmp.eq.f32.partialorder %v1581, 8.507059e+37
  %v1583 = vand.u32 %v1571, 2147483648
  %v1584 = vor.u32 1.1754944e-38, %v1583
  %v1585 = vsel %vm1582, %v1584, %v1580
  %v1586 = vmul.f32 %v1561, %v1585
  %v1587 = vmin.f32 %v1586, 1.0
  %v1588 = vmax.f32 %v1587, -1.0
  %v1589 = vmul.f32 %v348, %v348
  %v1590 = vmin.f32 16.0, %v1589
  %v1591 = vmul.f32 %v1590, 2.1237322e-06
  %v1592 = vadd.f32 %v1591, 0.00028619796
  %v1593 = vmul.f32 %v1590, %v1592
  %v1594 = vadd.f32 %v1593, 0.0036580483
  %v1595 = vmul.f32 %v1590, %v1594
  %v1596 = vadd.f32 %v1595, 0.05243302
  %v1597 = vmul.f32 %v1590, %v1596
  %v1598 = vadd.f32 %v1597, 0.18741608
  %v1599 = vmul.f32 %v1590, %v1598
  %v1600 = vadd.f32 %v1599, 1.1283791
  %v1601 = vmul.f32 %v348, %v1600
  %v1602 = vmul.f32 %v1590, 3.8918573e-05
  %v1603 = vadd.f32 %v1602, 0.001143296
  %v1604 = vmul.f32 %v1590, %v1603
  %v1605 = vadd.f32 %v1604, 0.014752088
  %v1606 = vmul.f32 %v1590, %v1605
  %v1607 = vadd.f32 %v1606, 0.112945676
  %v1608 = vmul.f32 %v1590, %v1607
  %v1609 = vadd.f32 %v1608, 0.4994258
  %v1610 = vmul.f32 %v1590, %v1609
  %v1611 = vadd.f32 %v1610, 1.0
  %v1612 = vrcp.pop %v1611
  %v1613 = vmul.f32 %v1611, %v1612
  %v1614 = vsub.f32 1.0, %v1613
  %v1615 = vmul.f32 %v1612, %v1614
  %v1616 = vadd.f32 %v1612, %v1615
  %vm1617 = vweird.f32 %v1611
  %vm1618 = vweird.f32 %v1612
  %vm1619 = vmor %vm1617, %vm1618
  %v1620 = vsel %vm1619, %v1612, %v1616
  %v1621 = vand.u32 2147483647, %v1611
  %vm1622 = vcmp.eq.f32.partialorder %v1621, 8.507059e+37
  %v1623 = vand.u32 %v1611, 2147483648
  %v1624 = vor.u32 1.1754944e-38, %v1623
  %v1625 = vsel %vm1622, %v1624, %v1620
  %v1626 = vmul.f32 %v1601, %v1625
  %v1627 = vmin.f32 %v1626, 1.0
  %v1628 = vmax.f32 %v1627, -1.0
  %v1629 = vadd.f32 %v388, 1.0
  %v1630 = vadd.f32 %v428, 1.0
  %v1631 = vadd.f32 %v468, 1.0
  %v1632 = vadd.f32 %v508, 1.0
  %v1633 = vadd.f32 %v548, 1.0
  %v1634 = vadd.f32 %v588, 1.0
  %v1635 = vadd.f32 %v628, 1.0
  %v1636 = vadd.f32 %v668, 1.0
  %v1637 = vadd.f32 %v708, 1.0
  %v1638 = vadd.f32 %v748, 1.0
  %v1639 = vadd.f32 %v788, 1.0
  %v1640 = vadd.f32 %v828, 1.0
  %v1641 = vadd.f32 %v868, 1.0
  %v1642 = vadd.f32 %v908, 1.0
  %v1643 = vadd.f32 %v948, 1.0
  %v1644 = vadd.f32 %v988, 1.0
  %v1645 = vadd.f32 %v1028, 1.0
  %v1646 = vadd.f32 %v1068, 1.0
  %v1647 = vadd.f32 %v1108, 1.0
  %v1648 = vadd.f32 %v1148, 1.0
  %v1649 = vadd.f32 %v1188, 1.0
  %v1650 = vadd.f32 %v1228, 1.0
  %v1651 = vadd.f32 %v1268, 1.0
  %v1652 = vadd.f32 %v1308, 1.0
  %v1653 = vadd.f32 %v1348, 1.0
  %v1654 = vadd.f32 %v1388, 1.0
  %v1655 = vadd.f32 %v1428, 1.0
  %v1656 = vadd.f32 %v1468, 1.0
  %v1657 = vadd.f32 %v1508, 1.0
  %v1658 = vadd.f32 %v1548, 1.0
  %v1659 = vadd.f32 %v1588, 1.0
  %v1660 = vadd.f32 %v1628, 1.0
  %v1661 = vmul.f32 %v285, %v1629
  %v1662 = vmul.f32 %v286, %v1630
  %v1663 = vmul.f32 %v287, %v1631
  %v1664 = vmul.f32 %v288, %v1632
  %v1665 = vmul.f32 %v289, %v1633
  %v1666 = vmul.f32 %v290, %v1634
  %v1667 = vmul.f32 %v291, %v1635
  %v1668 = vmul.f32 %v292, %v1636
  %v1669 = vmul.f32 %v293, %v1637
  %v1670 = vmul.f32 %v294, %v1638
  %v1671 = vmul.f32 %v295, %v1639
  %v1672 = vmul.f32 %v296, %v1640
  %v1673 = vmul.f32 %v297, %v1641
  %v1674 = vmul.f32 %v298, %v1642
  %v1675 = vmul.f32 %v299, %v1643
  %v1676 = vmul.f32 %v300, %v1644
  %v1677 = vmul.f32 %v301, %v1645
  %v1678 = vmul.f32 %v302, %v1646
  %v1679 = vmul.f32 %v303, %v1647
  %v1680 = vmul.f32 %v304, %v1648
  %v1681 = vmul.f32 %v305, %v1649
  %v1682 = vmul.f32 %v306, %v1650
  %v1683 = vmul.f32 %v307, %v1651
  %v1684 = vmul.f32 %v308, %v1652
  %v1685 = vmul.f32 %v309, %v1653
  %v1686 = vmul.f32 %v310, %v1654
  %v1687 = vmul.f32 %v311, %v1655
  %v1688 = vmul.f32 %v312, %v1656
  %v1689 = vmul.f32 %v313, %v1657
  %v1690 = vmul.f32 %v314, %v1658
  %v1691 = vmul.f32 %v315, %v1659
  %v1692 = vmul.f32 %v316, %v1660
  %v1693 = vld [vmem:[%s5] sm:$0xff]
  %v1694 = vld [vmem:[%s5 + $0x8] sm:$0xff]
  %v1695 = vld [vmem:[%s5 + $0x10] sm:$0xff]
  %v1696 = vld [vmem:[%s5 + $0x18] sm:$0xff]
  %1697 = vmatpush.msra.mxu0 %v1676
  %1698 = vmatpush.msra.mxu0 %v1675
  %1699 = vmatpush.msra.mxu0 %v1674
  %1700 = vmatpush.msra.mxu0 %v1673
  %1701 = vmatpush.msra.mxu0 %v1672
  %1702 = vmatpush.msra.mxu0 %v1671
  %1703 = vmatpush.msra.mxu0 %v1670
  %1704 = vmatpush.msra.mxu0 %v1669
  %1705 = vmatpush.msra.mxu0 %v1668
  %1706 = vmatpush.msra.mxu0 %v1667
  %1707 = vmatpush.msra.mxu0 %v1666
  %1708 = vmatpush.msra.mxu0 %v1665
  %1709 = vmatpush.msra.mxu0 %v1664
  %1710 = vmatpush.msra.mxu0 %v1663
  %1711 = vmatpush.msra.mxu0 %v1662
  %1712 = vmatpush.msra.mxu0 %v1661
  %1713 = vmatmul.f32.gmra.mxu0 %v1693
  %v1714 = vpop.f32.mrf.mxu0
  %v1715 = vadd.f32 0.0, %v1714
  %1716 = vmatmul.f32.gmra.mxu0 %v1695
  %v1717 = vpop.f32.mrf.mxu0
  %v1718 = vadd.f32 0.0, %v1717
  %1719 = vdwg.mxu0
  %1720 = vmatpush.msra.mxu0 %v1692
  %1721 = vmatpush.msra.mxu0 %v1691
  %1722 = vmatpush.msra.mxu0 %v1690
  %1723 = vmatpush.msra.mxu0 %v1689
  %1724 = vmatpush.msra.mxu0 %v1688
  %1725 = vmatpush.msra.mxu0 %v1687
  %1726 = vmatpush.msra.mxu0 %v1686
  %1727 = vmatpush.msra.mxu0 %v1685
  %1728 = vmatpush.msra.mxu0 %v1684
  %1729 = vmatpush.msra.mxu0 %v1683
  %1730 = vmatpush.msra.mxu0 %v1682
  %1731 = vmatpush.msra.mxu0 %v1681
  %1732 = vmatpush.msra.mxu0 %v1680
  %1733 = vmatpush.msra.mxu0 %v1679
  %1734 = vmatpush.msra.mxu0 %v1678
  %1735 = vmatpush.msra.mxu0 %v1677
  %1736 = vmatmul.f32.gmra.mxu0 %v1694
  %v1737 = vpop.f32.mrf.mxu0
  %v1738 = vadd.f32 %v1715, %v1737
  %1739 = vmatmul.f32.gmra.mxu0 %v1696
  %v1740 = vpop.f32.mrf.mxu0
  %v1741 = vadd.f32 %v1718, %v1740
  %1742 = vdwg.mxu0
  %v1744 = vrot.slane %v1738, 6
  %vm1746 = vcmask 1041408
  %v1747 = vsel %vm1746, 0.0, %v1744
  %v1748 = vsel %vm1746, %v1744, 0.0
  %v1750 = vrot.slane %v1747, 1
  %1751 = vrot.lane.b32.xlu0 %v1750, 64
  %v1752 = vpop.permute.xlu0 %1751
  %v1754 = vrot.slane %v1747, 2
  %v1756 = vrot.slane %v1747, 3
  %1757 = vrot.lane.b32.xlu0 %v1756, 64
  %v1758 = vpop.permute.xlu0 %1757
  %vm1761 = vcmask 1043456
  %v1762 = vrot.slane %v1747, 4
  %v1763 = vrot.slane %v1748, 4
  %v1764 = vsel %vm1761, %v1762, %v1763
  %v1766 = vrot.slane %v1747, 5
  %v1767 = vrot.slane %v1748, 5
  %v1768 = vsel %vm168, %v1766, %v1767
  %1769 = vrot.lane.b32.xlu0 %v1768, 64
  %v1770 = vpop.permute.xlu0 %1769
  %v1772 = vrot.slane %v1747, 6
  %v1773 = vrot.slane %v1748, 6
  %v1774 = vsel %vm1746, %v1772, %v1773
  %vm1776 = vcmask 1040384
  %v1777 = vrot.slane %v1747, 7
  %v1778 = vrot.slane %v1748, 7
  %v1779 = vsel %vm1776, %v1777, %v1778
  %1780 = vrot.lane.b32.xlu0 %v1779, 64
  %v1781 = vpop.permute.xlu0 %1780
  %vm1783 = vcmask 523264
  %v1784 = vsel %vm1783, %v1747, %v1752
  %v1785 = vsel %vm1783, %v1754, %v1758
  %v1786 = vsel %vm1783, %v1764, %v1770
  %v1787 = vsel %vm1783, %v1774, %v1781
  %v1789 = vrot.slane %v1741, 6
  %v1791 = vsel %vm1746, 0.0, %v1789
  %v1792 = vsel %vm1746, %v1789, 0.0
  %v1794 = vrot.slane %v1791, 1
  %1795 = vrot.lane.b32.xlu0 %v1794, 64
  %v1796 = vpop.permute.xlu0 %1795
  %v1798 = vrot.slane %v1791, 2
  %v1800 = vrot.slane %v1791, 3
  %1801 = vrot.lane.b32.xlu0 %v1800, 64
  %v1802 = vpop.permute.xlu0 %1801
  %v1805 = vrot.slane %v1791, 4
  %v1806 = vrot.slane %v1792, 4
  %v1807 = vsel %vm1761, %v1805, %v1806
  %v1809 = vrot.slane %v1791, 5
  %v1810 = vrot.slane %v1792, 5
  %v1811 = vsel %vm168, %v1809, %v1810
  %1812 = vrot.lane.b32.xlu0 %v1811, 64
  %v1813 = vpop.permute.xlu0 %1812
  %v1815 = vrot.slane %v1791, 6
  %v1816 = vrot.slane %v1792, 6
  %v1817 = vsel %vm1746, %v1815, %v1816
  %v1819 = vrot.slane %v1791, 7
  %v1820 = vrot.slane %v1792, 7
  %v1821 = vsel %vm1776, %v1819, %v1820
  %1822 = vrot.lane.b32.xlu0 %v1821, 64
  %v1823 = vpop.permute.xlu0 %1822
  %v1825 = vsel %vm1783, %v1791, %v1796
  %v1826 = vsel %vm1783, %v1798, %v1802
  %v1827 = vsel %vm1783, %v1807, %v1813
  %v1828 = vsel %vm1783, %v1817, %v1823
  %v1833 = vrot.slane %v1825, 3
  %v1834 = vrot.slane %v1826, 3
  %v1835 = vrot.slane %v1827, 3
  %v1836 = vrot.slane %v1828, 3
  %vm1841 = vcmask 1044480
  %v1842 = vsel %vm1841, %v1784, %v1833
  %v1843 = vsel %vm1841, %v1785, %v1834
  %v1844 = vsel %vm1841, %v1786, %v1835
  %v1845 = vsel %vm1841, %v1787, %v1836
  %v1846 = vld [vmem:[%s2] sm:$0xff]
  %v1847 = vld [vmem:[%s2 + $0x8] sm:$0xff]
  %v1848 = vld [vmem:[%s2 + $0x10] sm:$0xff]
  %v1849 = vld [vmem:[%s2 + $0x18] sm:$0xff]
  %v1850 = vld [vmem:[%s2 + $0x20] sm:$0xff]
  %v1851 = vld [vmem:[%s2 + $0x28] sm:$0xff]
  %v1852 = vld [vmem:[%s2 + $0x30] sm:$0xff]
  %v1853 = vld [vmem:[%s2 + $0x38] sm:$0xff]
  %v1854 = vld [vmem:[%s2 + $0x40] sm:$0xff]
  %v1855 = vld [vmem:[%s2 + $0x48] sm:$0xff]
  %v1856 = vld [vmem:[%s2 + $0x50] sm:$0xff]
  %v1857 = vld [vmem:[%s2 + $0x58] sm:$0xff]
  %v1858 = vld [vmem:[%s2 + $0x60] sm:$0xff]
  %v1859 = vld [vmem:[%s2 + $0x68] sm:$0xff]
  %v1860 = vld [vmem:[%s2 + $0x70] sm:$0xff]
  %v1861 = vld [vmem:[%s2 + $0x78] sm:$0xff]
  %v1862 = vld [vmem:[%s2 + $0x80] sm:$0xff]
  %v1863 = vld [vmem:[%s2 + $0x88] sm:$0xff]
  %v1864 = vld [vmem:[%s2 + $0x90] sm:$0xff]
  %v1865 = vld [vmem:[%s2 + $0x98] sm:$0xff]
  %v1866 = vld [vmem:[%s2 + $0xa0] sm:$0xff]
  %v1867 = vld [vmem:[%s2 + $0xa8] sm:$0xff]
  %v1868 = vld [vmem:[%s2 + $0xb0] sm:$0xff]
  %v1869 = vld [vmem:[%s2 + $0xb8] sm:$0xff]
  %v1870 = vld [vmem:[%s2 + $0xc0] sm:$0xff]
  %v1871 = vld [vmem:[%s2 + $0xc8] sm:$0xff]
  %v1872 = vld [vmem:[%s2 + $0xd0] sm:$0xff]
  %v1873 = vld [vmem:[%s2 + $0xd8] sm:$0xff]
  %v1874 = vld [vmem:[%s2 + $0xe0] sm:$0xff]
  %v1875 = vld [vmem:[%s2 + $0xe8] sm:$0xff]
  %v1876 = vld [vmem:[%s2 + $0xf0] sm:$0xff]
  %v1877 = vld [vmem:[%s2 + $0xf8] sm:$0xff]
  %v1878 = vld [vmem:[%s2 + $0x100] sm:$0xff]
  %v1879 = vld [vmem:[%s2 + $0x108] sm:$0xff]
  %v1880 = vld [vmem:[%s2 + $0x110] sm:$0xff]
  %v1881 = vld [vmem:[%s2 + $0x118] sm:$0xff]
  %v1882 = vld [vmem:[%s2 + $0x120] sm:$0xff]
  %v1883 = vld [vmem:[%s2 + $0x128] sm:$0xff]
  %v1884 = vld [vmem:[%s2 + $0x130] sm:$0xff]
  %v1885 = vld [vmem:[%s2 + $0x138] sm:$0xff]
  %v1886 = vld [vmem:[%s2 + $0x140] sm:$0xff]
  %v1887 = vld [vmem:[%s2 + $0x148] sm:$0xff]
  %v1888 = vld [vmem:[%s2 + $0x150] sm:$0xff]
  %v1889 = vld [vmem:[%s2 + $0x158] sm:$0xff]
  %v1890 = vld [vmem:[%s2 + $0x160] sm:$0xff]
  %v1891 = vld [vmem:[%s2 + $0x168] sm:$0xff]
  %v1892 = vld [vmem:[%s2 + $0x170] sm:$0xff]
  %v1893 = vld [vmem:[%s2 + $0x178] sm:$0xff]
  %v1894 = vld [vmem:[%s2 + $0x180] sm:$0xff]
  %v1895 = vld [vmem:[%s2 + $0x188] sm:$0xff]
  %v1896 = vld [vmem:[%s2 + $0x190] sm:$0xff]
  %v1897 = vld [vmem:[%s2 + $0x198] sm:$0xff]
  %v1898 = vld [vmem:[%s2 + $0x1a0] sm:$0xff]
  %v1899 = vld [vmem:[%s2 + $0x1a8] sm:$0xff]
  %v1900 = vld [vmem:[%s2 + $0x1b0] sm:$0xff]
  %v1901 = vld [vmem:[%s2 + $0x1b8] sm:$0xff]
  %v1902 = vld [vmem:[%s2 + $0x1c0] sm:$0xff]
  %v1903 = vld [vmem:[%s2 + $0x1c8] sm:$0xff]
  %v1904 = vld [vmem:[%s2 + $0x1d0] sm:$0xff]
  %v1905 = vld [vmem:[%s2 + $0x1d8] sm:$0xff]
  %v1906 = vld [vmem:[%s2 + $0x1e0] sm:$0xff]
  %v1907 = vld [vmem:[%s2 + $0x1e8] sm:$0xff]
  %v1908 = vld [vmem:[%s2 + $0x1f0] sm:$0xff]
  %v1909 = vld [vmem:[%s2 + $0x1f8] sm:$0xff]
  %1910 = vmatpush.msra.mxu0 %v1861
  %1911 = vmatpush.msra.mxu0 %v1860
  %1912 = vmatpush.msra.mxu0 %v1859
  %1913 = vmatpush.msra.mxu0 %v1858
  %1914 = vmatpush.msra.mxu0 %v1857
  %1915 = vmatpush.msra.mxu0 %v1856
  %1916 = vmatpush.msra.mxu0 %v1855
  %1917 = vmatpush.msra.mxu0 %v1854
  %1918 = vmatpush.msra.mxu0 %v1853
  %1919 = vmatpush.msra.mxu0 %v1852
  %1920 = vmatpush.msra.mxu0 %v1851
  %1921 = vmatpush.msra.mxu0 %v1850
  %1922 = vmatpush.msra.mxu0 %v1849
  %1923 = vmatpush.msra.mxu0 %v1848
  %1924 = vmatpush.msra.mxu0 %v1847
  %1925 = vmatpush.msra.mxu0 %v1846
  %1926 = vmatmul.f32.gmra.mxu0 %v1842
  %v1927 = vpop.f32.mrf.mxu0
  %v1928 = vadd.f32 0.0, %v1927
  %1929 = vmatmul.f32.gmra.mxu0 %v1833
  %v1930 = vpop.f32.mrf.mxu0
  %v1931 = vadd.f32 0.0, %v1930
  %1932 = vdwg.mxu0
  %1933 = vmatpush.msra.mxu0 %v1877
  %1934 = vmatpush.msra.mxu0 %v1876
  %1935 = vmatpush.msra.mxu0 %v1875
  %1936 = vmatpush.msra.mxu0 %v1874
  %1937 = vmatpush.msra.mxu0 %v1873
  %1938 = vmatpush.msra.mxu0 %v1872
  %1939 = vmatpush.msra.mxu0 %v1871
  %1940 = vmatpush.msra.mxu0 %v1870
  %1941 = vmatpush.msra.mxu0 %v1869
  %1942 = vmatpush.msra.mxu0 %v1868
  %1943 = vmatpush.msra.mxu0 %v1867
  %1944 = vmatpush.msra.mxu0 %v1866
  %1945 = vmatpush.msra.mxu0 %v1865
  %1946 = vmatpush.msra.mxu0 %v1864
  %1947 = vmatpush.msra.mxu0 %v1863
  %1948 = vmatpush.msra.mxu0 %v1862
  %1949 = vmatmul.f32.gmra.mxu0 %v1843
  %v1950 = vpop.f32.mrf.mxu0
  %v1951 = vadd.f32 %v1928, %v1950
  %1952 = vmatmul.f32.gmra.mxu0 %v1834
  %v1953 = vpop.f32.mrf.mxu0
  %v1954 = vadd.f32 %v1931, %v1953
  %1955 = vdwg.mxu0
  %1956 = vmatpush.msra.mxu0 %v1893
  %1957 = vmatpush.msra.mxu0 %v1892
  %1958 = vmatpush.msra.mxu0 %v1891
  %1959 = vmatpush.msra.mxu0 %v1890
  %1960 = vmatpush.msra.mxu0 %v1889
  %1961 = vmatpush.msra.mxu0 %v1888
  %1962 = vmatpush.msra.mxu0 %v1887
  %1963 = vmatpush.msra.mxu0 %v1886
  %1964 = vmatpush.msra.mxu0 %v1885
  %1965 = vmatpush.msra.mxu0 %v1884
  %1966 = vmatpush.msra.mxu0 %v1883
  %1967 = vmatpush.msra.mxu0 %v1882
  %1968 = vmatpush.msra.mxu0 %v1881
  %1969 = vmatpush.msra.mxu0 %v1880
  %1970 = vmatpush.msra.mxu0 %v1879
  %1971 = vmatpush.msra.mxu0 %v1878
  %1972 = vmatmul.f32.gmra.mxu0 %v1844
  %v1973 = vpop.f32.mrf.mxu0
  %v1974 = vadd.f32 %v1951, %v1973
  %1975 = vmatmul.f32.gmra.mxu0 %v1835
  %v1976 = vpop.f32.mrf.mxu0
  %v1977 = vadd.f32 %v1954, %v1976
  %1978 = vdwg.mxu0
  %1979 = vmatpush.msra.mxu0 %v1909
  %1980 = vmatpush.msra.mxu0 %v1908
  %1981 = vmatpush.msra.mxu0 %v1907
  %1982 = vmatpush.msra.mxu0 %v1906
  %1983 = vmatpush.msra.mxu0 %v1905
  %1984 = vmatpush.msra.mxu0 %v1904
  %1985 = vmatpush.msra.mxu0 %v1903
  %1986 = vmatpush.msra.mxu0 %v1902
  %1987 = vmatpush.msra.mxu0 %v1901
  %1988 = vmatpush.msra.mxu0 %v1900
  %1989 = vmatpush.msra.mxu0 %v1899
  %1990 = vmatpush.msra.mxu0 %v1898
  %1991 = vmatpush.msra.mxu0 %v1897
  %1992 = vmatpush.msra.mxu0 %v1896
  %1993 = vmatpush.msra.mxu0 %v1895
  %1994 = vmatpush.msra.mxu0 %v1894
  %1995 = vmatmul.f32.gmra.mxu0 %v1845
  %v1996 = vpop.f32.mrf.mxu0
  %v1997 = vadd.f32 %v1974, %v1996
  %1998 = vmatmul.f32.gmra.mxu0 %v1836
  %v1999 = vpop.f32.mrf.mxu0
  %v2000 = vadd.f32 %v1977, %v1999
  %2001 = vdwg.mxu0
  %v2002 = vmul.f32 %v1997, 0.055555556
  %v2003 = vmul.f32 %v2000, 0.055555556
  %v2004 = vld [vmem:[%s3] sm:$0xff]
  %v2005 = vld [vmem:[%s3 + $0x8] sm:$0x3]
  %v2006 = vadd.f32 %v2002, %v2004
  %v2007 = vadd.f32 %v2003, %v2005
  %v2008 = vld [vmem:[%s4] sm:$0xff]
  %v2009 = vld [vmem:[%s4 + $0x8] sm:$0x3]
  %v2010 = vld [vmem:[%s7] sm:$0xff]
  %v2011 = vld [vmem:[%s7 + $0x8] sm:$0x1]
  %v2012 = vld [vmem:[%s6] sm:$0xff]
  %v2013 = vld [vmem:[%s6 + $0x8] sm:$0xff]
  %v2014 = vld [vmem:[%s6 + $0x10] sm:$0xff]
  %v2015 = vld [vmem:[%s6 + $0x18] sm:$0xff]
  %v2016 = vperm.slane %v2010, 0
  %vm2017 = vcmask 261120
  %v2019 = vsel %vm2017, %v2006, 0
  %v2022 = vsel %vm2017, %v2007, 0
  %2024 = vmatpush.msra.mxu0 0.0
  %2025 = vmatpush.msra.mxu0 0.0
  %2026 = vmatpush.msra.mxu0 0.0
  %2027 = vmatpush.msra.mxu0 0.0
  %2028 = vmatpush.msra.mxu0 0.0
  %2029 = vmatpush.msra.mxu0 0.0
  %2030 = vmatpush.msra.mxu0 0.0
  %2031 = vmatpush.msra.mxu0 0.0
  %2032 = vmatpush.msra.mxu0 0.0
  %2033 = vmatpush.msra.mxu0 0.0
  %2034 = vmatpush.msra.mxu0 0.0
  %2035 = vmatpush.msra.mxu0 0.0
  %2036 = vmatpush.msra.mxu0 %v2015
  %2037 = vmatpush.msra.mxu0 %v2014
  %2038 = vmatpush.msra.mxu0 %v2013
  %2039 = vmatpush.msra.mxu0 %v2012
  %2040 = vmatmul.f32.gmra.mxu0 %v2019
  %v2041 = vpop.f32.mrf.mxu0
  %v2042 = vadd.f32 %v2016, %v2041
  %2043 = vmatmul.f32.gmra.mxu0 %v2022
  %v2044 = vpop.f32.mrf.mxu0
  %v2045 = vadd.f32 %v2016, %v2044
  %2046 = vdwg.mxu0
  %s2047 = scalar_lea.vmem %s6, 32
  %v2048 = vld [vmem:[%s2047] sm:$0xff]
  %v2049 = vld [vmem:[%s2047 + $0x8] sm:$0xff]
  %v2050 = vld [vmem:[%s2047 + $0x10] sm:$0xff]
  %v2051 = vld [vmem:[%s2047 + $0x18] sm:$0xff]
  %v2052 = vperm.slane %v2010, 1
  %2053 = vmatpush.msra.mxu0 0.0
  %2054 = vmatpush.msra.mxu0 0.0
  %2055 = vmatpush.msra.mxu0 0.0
  %2056 = vmatpush.msra.mxu0 0.0
  %2057 = vmatpush.msra.mxu0 0.0
  %2058 = vmatpush.msra.mxu0 0.0
  %2059 = vmatpush.msra.mxu0 0.0
  %2060 = vmatpush.msra.mxu0 0.0
  %2061 = vmatpush.msra.mxu0 0.0
  %2062 = vmatpush.msra.mxu0 0.0
  %2063 = vmatpush.msra.mxu0 0.0
  %2064 = vmatpush.msra.mxu0 0.0
  %2065 = vmatpush.msra.mxu0 %v2051
  %2066 = vmatpush.msra.mxu0 %v2050
  %2067 = vmatpush.msra.mxu0 %v2049
  %2068 = vmatpush.msra.mxu0 %v2048
  %2069 = vmatmul.f32.gmra.mxu0 %v2019
  %v2070 = vpop.f32.mrf.mxu0
  %v2071 = vadd.f32 %v2052, %v2070
  %2072 = vmatmul.f32.gmra.mxu0 %v2022
  %v2073 = vpop.f32.mrf.mxu0
  %v2074 = vadd.f32 %v2052, %v2073
  %2075 = vdwg.mxu0
  %s2076 = scalar_lea.vmem %s6, 64
  %v2077 = vld [vmem:[%s2076] sm:$0xff]
  %v2078 = vld [vmem:[%s2076 + $0x8] sm:$0xff]
  %v2079 = vld [vmem:[%s2076 + $0x10] sm:$0xff]
  %v2080 = vld [vmem:[%s2076 + $0x18] sm:$0xff]
  %v2081 = vperm.slane %v2010, 2
  %2082 = vmatpush.msra.mxu0 0.0
  %2083 = vmatpush.msra.mxu0 0.0
  %2084 = vmatpush.msra.mxu0 0.0
  %2085 = vmatpush.msra.mxu0 0.0
  %2086 = vmatpush.msra.mxu0 0.0
  %2087 = vmatpush.msra.mxu0 0.0
  %2088 = vmatpush.msra.mxu0 0.0
  %2089 = vmatpush.msra.mxu0 0.0
  %2090 = vmatpush.msra.mxu0 0.0
  %2091 = vmatpush.msra.mxu0 0.0
  %2092 = vmatpush.msra.mxu0 0.0
  %2093 = vmatpush.msra.mxu0 0.0
  %2094 = vmatpush.msra.mxu0 %v2080
  %2095 = vmatpush.msra.mxu0 %v2079
  %2096 = vmatpush.msra.mxu0 %v2078
  %2097 = vmatpush.msra.mxu0 %v2077
  %2098 = vmatmul.f32.gmra.mxu0 %v2019
  %v2099 = vpop.f32.mrf.mxu0
  %v2100 = vadd.f32 %v2081, %v2099
  %2101 = vmatmul.f32.gmra.mxu0 %v2022
  %v2102 = vpop.f32.mrf.mxu0
  %v2103 = vadd.f32 %v2081, %v2102
  %2104 = vdwg.mxu0
  %vm2105 = vcmask 64512
  %v2107 = vsel %vm2105, %v2042, 0
  %v2110 = vsel %vm2105, %v2045, 0
  %v2113 = vsel %vm2105, %v2071, 0
  %v2116 = vsel %vm2105, %v2074, 0
  %2118 = vmatpush.xpose.msra.mxu0 0.0
  %2119 = vmatpush.xpose.msra.mxu0 0.0
  %2120 = vmatpush.xpose.msra.mxu0 0.0
  %2121 = vmatpush.xpose.msra.mxu0 0.0
  %2122 = vmatpush.xpose.msra.mxu0 0.0
  %2123 = vmatpush.xpose.msra.mxu0 0.0
  %2124 = vmatpush.xpose.msra.mxu0 0.0
  %2125 = vmatpush.xpose.msra.mxu0 0.0
  %2126 = vmatpush.xpose.msra.mxu0 0.0
  %2127 = vmatpush.xpose.msra.mxu0 0.0
  %2128 = vmatpush.xpose.msra.mxu0 0.0
  %2129 = vmatpush.xpose.msra.mxu0 0.0
  %2130 = vmatpush.xpose.msra.mxu0 0.0
  %2131 = vmatpush.xpose.msra.mxu0 0.0
  %2132 = vmatpush.xpose.msra.mxu0 %v2116
  %2133 = vmatpush.xpose.msra.mxu0 %v2113
  %2134 = vmatmul.f32.gmra.mxu0 %v2107
  %v2135 = vpop.f32.mrf.mxu0
  %v2136 = vadd.f32 0.0, %v2135
  %2137 = vmatmul.f32.gmra.mxu0 %v2110
  %v2138 = vpop.f32.mrf.mxu0
  %v2139 = vadd.f32 0.0, %v2138
  %2140 = vdwg.mxu0
  %v2141 = vmul.f32 %v2136, 0.35355338
  %v2142 = vmul.f32 %v2139, 0.35355338
  %v2143 = vadd.f32 %v2141, %v2008
  %v2144 = vadd.f32 %v2142, %v2009
  %vm2145 = vcmask 80896
  %v2146 = vsel %vm2145, %v2143, -inf
  %2147 = vmax.xlane.f32.xlu0 %v2146
  %v2148 = vpop.xlane.xlu0 %2147
  %vm2149 = vcmask 74752
  %v2150 = vsel %vm2149, %v2144, -inf
  %2151 = vmax.xlane.f32.xlu0 %v2150
  %v2152 = vpop.xlane.xlu0 %2151
  %v2153 = vsub.f32 %v2143, %v2148
  %v2154 = vsub.f32 %v2144, %v2152
  %v2155 = vmul.f32 %v2153, 1.442695
  %v2156 = vpow.pop %v2155
  %v2157 = vmul.f32 %v2154, 1.442695
  %v2158 = vpow.pop %v2157
  %v2159 = vsel %vm2145, %v2156, 0.0
  %2160 = vadd.xlane.f32.xlu0 %v2159
  %v2161 = vpop.xlane.xlu0 %2160
  %v2162 = vsel %vm2149, %v2158, 0.0
  %2163 = vadd.xlane.f32.xlu0 %v2162
  %v2164 = vpop.xlane.xlu0 %2163
  %v2165 = vrcp.pop %v2161
  %v2166 = vmul.f32 %v2161, %v2165
  %v2167 = vsub.f32 1.0, %v2166
  %v2168 = vmul.f32 %v2165, %v2167
  %v2169 = vadd.f32 %v2165, %v2168
  %vm2170 = vweird.f32 %v2161
  %vm2171 = vweird.f32 %v2165
  %vm2172 = vmor %vm2170, %vm2171
  %v2173 = vsel %vm2172, %v2165, %v2169
  %v2174 = vand.u32 2147483647, %v2161
  %vm2175 = vcmp.eq.f32.partialorder %v2174, 8.507059e+37
  %v2176 = vand.u32 %v2161, 2147483648
  %v2177 = vor.u32 1.1754944e-38, %v2176
  %v2178 = vsel %vm2175, %v2177, %v2173
  %v2179 = vmul.f32 %v2156, %v2178
  %v2180 = vrcp.pop %v2164
  %v2181 = vmul.f32 %v2164, %v2180
  %v2182 = vsub.f32 1.0, %v2181
  %v2183 = vmul.f32 %v2180, %v2182
  %v2184 = vadd.f32 %v2180, %v2183
  %vm2185 = vweird.f32 %v2164
  %vm2186 = vweird.f32 %v2180
  %vm2187 = vmor %vm2185, %vm2186
  %v2188 = vsel %vm2187, %v2180, %v2184
  %v2189 = vand.u32 2147483647, %v2164
  %vm2190 = vcmp.eq.f32.partialorder %v2189, 8.507059e+37
  %v2191 = vand.u32 %v2164, 2147483648
  %v2192 = vor.u32 1.1754944e-38, %v2191
  %v2193 = vsel %vm2190, %v2192, %v2188
  %v2194 = vmul.f32 %v2158, %v2193
  %v2196 = vsel %vm2145, %v2179, 0
  %v2199 = vsel %vm2145, %v2194, 0
  %v2202 = vsel %vm1746, %v2103, 0
  %2204 = vmatpush.msra.mxu0 0.0
  %2205 = vmatpush.msra.mxu0 0.0
  %2206 = vmatpush.msra.mxu0 0.0
  %2207 = vmatpush.msra.mxu0 0.0
  %2208 = vmatpush.msra.mxu0 0.0
  %2209 = vmatpush.msra.mxu0 0.0
  %2210 = vmatpush.msra.mxu0 0.0
  %2211 = vmatpush.msra.mxu0 0.0
  %2212 = vmatpush.msra.mxu0 0.0
  %2213 = vmatpush.msra.mxu0 0.0
  %2214 = vmatpush.msra.mxu0 0.0
  %2215 = vmatpush.msra.mxu0 0.0
  %2216 = vmatpush.msra.mxu0 0.0
  %2217 = vmatpush.msra.mxu0 0.0
  %2218 = vmatpush.msra.mxu0 %v2202
  %2219 = vmatpush.msra.mxu0 %v2100
  %2220 = vmatmul.f32.gmra.mxu0 %v2196
  %v2221 = vpop.f32.mrf.mxu0
  %v2222 = vadd.f32 0.0, %v2221
  %2223 = vmatmul.f32.gmra.mxu0 %v2199
  %v2224 = vpop.f32.mrf.mxu0
  %v2225 = vadd.f32 0.0, %v2224
  %2226 = vdwg.mxu0
  %2227 = vrot.lane.b32.xlu0 %v2042, 120
  %v2228 = vpop.permute.xlu0 %2227
  %2229 = vrot.lane.b32.xlu0 %v2045, 120
  %v2230 = vpop.permute.xlu0 %2229
  %2231 = vrot.lane.b32.xlu0 %v2071, 120
  %v2232 = vpop.permute.xlu0 %2231
  %2233 = vrot.lane.b32.xlu0 %v2074, 120
  %v2234 = vpop.permute.xlu0 %2233
  %v2235 = vsel %vm2105, %v2228, 0
  %v2237 = vsel %vm2105, %v2230, 0
  %v2239 = vsel %vm2105, %v2232, 0
  %v2241 = vsel %vm2105, %v2234, 0
  %2243 = vmatpush.xpose.msra.mxu0 0.0
  %2244 = vmatpush.xpose.msra.mxu0 0.0
  %2245 = vmatpush.xpose.msra.mxu0 0.0
  %2246 = vmatpush.xpose.msra.mxu0 0.0
  %2247 = vmatpush.xpose.msra.mxu0 0.0
  %2248 = vmatpush.xpose.msra.mxu0 0.0
  %2249 = vmatpush.xpose.msra.mxu0 0.0
  %2250 = vmatpush.xpose.msra.mxu0 0.0
  %2251 = vmatpush.xpose.msra.mxu0 0.0
  %2252 = vmatpush.xpose.msra.mxu0 0.0
  %2253 = vmatpush.xpose.msra.mxu0 0.0
  %2254 = vmatpush.xpose.msra.mxu0 0.0
  %2255 = vmatpush.xpose.msra.mxu0 0.0
  %2256 = vmatpush.xpose.msra.mxu0 0.0
  %2257 = vmatpush.xpose.msra.mxu0 %v2241
  %2258 = vmatpush.xpose.msra.mxu0 %v2239
  %2259 = vmatmul.f32.gmra.mxu0 %v2235
  %v2260 = vpop.f32.mrf.mxu0
  %v2261 = vadd.f32 0.0, %v2260
  %2262 = vmatmul.f32.gmra.mxu0 %v2237
  %v2263 = vpop.f32.mrf.mxu0
  %v2264 = vadd.f32 0.0, %v2263
  %2265 = vdwg.mxu0
  %v2266 = vmul.f32 %v2261, 0.35355338
  %v2267 = vmul.f32 %v2264, 0.35355338
  %v2268 = vadd.f32 %v2266, %v2008
  %v2269 = vadd.f32 %v2267, %v2009
  %v2270 = vsel %vm2145, %v2268, -inf
  %2271 = vmax.xlane.f32.xlu0 %v2270
  %v2272 = vpop.xlane.xlu0 %2271
  %v2273 = vsel %vm2149, %v2269, -inf
  %2274 = vmax.xlane.f32.xlu0 %v2273
  %v2275 = vpop.xlane.xlu0 %2274
  %v2276 = vsub.f32 %v2268, %v2272
  %v2277 = vsub.f32 %v2269, %v2275
  %v2278 = vmul.f32 %v2276, 1.442695
  %v2279 = vpow.pop %v2278
  %v2280 = vmul.f32 %v2277, 1.442695
  %v2281 = vpow.pop %v2280
  %v2282 = vsel %vm2145, %v2279, 0.0
  %2283 = vadd.xlane.f32.xlu0 %v2282
  %v2284 = vpop.xlane.xlu0 %2283
  %v2285 = vsel %vm2149, %v2281, 0.0
  %2286 = vadd.xlane.f32.xlu0 %v2285
  %v2287 = vpop.xlane.xlu0 %2286
  %v2288 = vrcp.pop %v2284
  %v2289 = vmul.f32 %v2284, %v2288
  %v2290 = vsub.f32 1.0, %v2289
  %v2291 = vmul.f32 %v2288, %v2290
  %v2292 = vadd.f32 %v2288, %v2291
  %vm2293 = vweird.f32 %v2284
  %vm2294 = vweird.f32 %v2288
  %vm2295 = vmor %vm2293, %vm2294
  %v2296 = vsel %vm2295, %v2288, %v2292
  %v2297 = vand.u32 2147483647, %v2284
  %vm2298 = vcmp.eq.f32.partialorder %v2297, 8.507059e+37
  %v2299 = vand.u32 %v2284, 2147483648
  %v2300 = vor.u32 1.1754944e-38, %v2299
  %v2301 = vsel %vm2298, %v2300, %v2296
  %v2302 = vmul.f32 %v2279, %v2301
  %v2303 = vrcp.pop %v2287
  %v2304 = vmul.f32 %v2287, %v2303
  %v2305 = vsub.f32 1.0, %v2304
  %v2306 = vmul.f32 %v2303, %v2305
  %v2307 = vadd.f32 %v2303, %v2306
  %vm2308 = vweird.f32 %v2287
  %vm2309 = vweird.f32 %v2303
  %vm2310 = vmor %vm2308, %vm2309
  %v2311 = vsel %vm2310, %v2303, %v2307
  %v2312 = vand.u32 2147483647, %v2287
  %vm2313 = vcmp.eq.f32.partialorder %v2312, 8.507059e+37
  %v2314 = vand.u32 %v2287, 2147483648
  %v2315 = vor.u32 1.1754944e-38, %v2314
  %v2316 = vsel %vm2313, %v2315, %v2311
  %v2317 = vmul.f32 %v2281, %v2316
  %2319 = vrot.lane.b32.xlu0 %v2100, 120
  %v2320 = vpop.permute.xlu0 %2319
  %2321 = vrot.lane.b32.xlu0 %v2103, 120
  %v2322 = vpop.permute.xlu0 %2321
  %v2325 = vsel %vm2145, %v2302, 0
  %v2328 = vsel %vm2145, %v2317, 0
  %v2330 = vsel %vm1746, %v2322, 0
  %2332 = vmatpush.msra.mxu0 0.0
  %2333 = vmatpush.msra.mxu0 0.0
  %2334 = vmatpush.msra.mxu0 0.0
  %2335 = vmatpush.msra.mxu0 0.0
  %2336 = vmatpush.msra.mxu0 0.0
  %2337 = vmatpush.msra.mxu0 0.0
  %2338 = vmatpush.msra.mxu0 0.0
  %2339 = vmatpush.msra.mxu0 0.0
  %2340 = vmatpush.msra.mxu0 0.0
  %2341 = vmatpush.msra.mxu0 0.0
  %2342 = vmatpush.msra.mxu0 0.0
  %2343 = vmatpush.msra.mxu0 0.0
  %2344 = vmatpush.msra.mxu0 0.0
  %2345 = vmatpush.msra.mxu0 0.0
  %2346 = vmatpush.msra.mxu0 %v2330
  %2347 = vmatpush.msra.mxu0 %v2320
  %2348 = vmatmul.f32.gmra.mxu0 %v2325
  %v2349 = vpop.f32.mrf.mxu0
  %v2350 = vadd.f32 0.0, %v2349
  %2351 = vmatmul.f32.gmra.mxu0 %v2328
  %v2352 = vpop.f32.mrf.mxu0
  %v2353 = vadd.f32 0.0, %v2352
  %2354 = vdwg.mxu0
  %2355 = vrot.lane.b32.xlu0 %v2042, 112
  %v2356 = vpop.permute.xlu0 %2355
  %2357 = vrot.lane.b32.xlu0 %v2045, 112
  %v2358 = vpop.permute.xlu0 %2357
  %2359 = vrot.lane.b32.xlu0 %v2071, 112
  %v2360 = vpop.permute.xlu0 %2359
  %2361 = vrot.lane.b32.xlu0 %v2074, 112
  %v2362 = vpop.permute.xlu0 %2361
  %v2363 = vsel %vm2105, %v2356, 0
  %v2365 = vsel %vm2105, %v2358, 0
  %v2367 = vsel %vm2105, %v2360, 0
  %v2369 = vsel %vm2105, %v2362, 0
  %2371 = vmatpush.xpose.msra.mxu0 0.0
  %2372 = vmatpush.xpose.msra.mxu0 0.0
  %2373 = vmatpush.xpose.msra.mxu0 0.0
  %2374 = vmatpush.xpose.msra.mxu0 0.0
  %2375 = vmatpush.xpose.msra.mxu0 0.0
  %2376 = vmatpush.xpose.msra.mxu0 0.0
  %2377 = vmatpush.xpose.msra.mxu0 0.0
  %2378 = vmatpush.xpose.msra.mxu0 0.0
  %2379 = vmatpush.xpose.msra.mxu0 0.0
  %2380 = vmatpush.xpose.msra.mxu0 0.0
  %2381 = vmatpush.xpose.msra.mxu0 0.0
  %2382 = vmatpush.xpose.msra.mxu0 0.0
  %2383 = vmatpush.xpose.msra.mxu0 0.0
  %2384 = vmatpush.xpose.msra.mxu0 0.0
  %2385 = vmatpush.xpose.msra.mxu0 %v2369
  %2386 = vmatpush.xpose.msra.mxu0 %v2367
  %2387 = vmatmul.f32.gmra.mxu0 %v2363
  %v2388 = vpop.f32.mrf.mxu0
  %v2389 = vadd.f32 0.0, %v2388
  %2390 = vmatmul.f32.gmra.mxu0 %v2365
  %v2391 = vpop.f32.mrf.mxu0
  %v2392 = vadd.f32 0.0, %v2391
  %2393 = vdwg.mxu0
  %v2394 = vmul.f32 %v2389, 0.35355338
  %v2395 = vmul.f32 %v2392, 0.35355338
  %v2396 = vadd.f32 %v2394, %v2008
  %v2397 = vadd.f32 %v2395, %v2009
  %v2398 = vsel %vm2145, %v2396, -inf
  %2399 = vmax.xlane.f32.xlu0 %v2398
  %v2400 = vpop.xlane.xlu0 %2399
  %v2401 = vsel %vm2149, %v2397, -inf
  %2402 = vmax.xlane.f32.xlu0 %v2401
  %v2403 = vpop.xlane.xlu0 %2402
  %v2404 = vsub.f32 %v2396, %v2400
  %v2405 = vsub.f32 %v2397, %v2403
  %v2406 = vmul.f32 %v2404, 1.442695
  %v2407 = vpow.pop %v2406
  %v2408 = vmul.f32 %v2405, 1.442695
  %v2409 = vpow.pop %v2408
  %v2410 = vsel %vm2145, %v2407, 0.0
  %2411 = vadd.xlane.f32.xlu0 %v2410
  %v2412 = vpop.xlane.xlu0 %2411
  %v2413 = vsel %vm2149, %v2409, 0.0
  %2414 = vadd.xlane.f32.xlu0 %v2413
  %v2415 = vpop.xlane.xlu0 %2414
  %v2416 = vrcp.pop %v2412
  %v2417 = vmul.f32 %v2412, %v2416
  %v2418 = vsub.f32 1.0, %v2417
  %v2419 = vmul.f32 %v2416, %v2418
  %v2420 = vadd.f32 %v2416, %v2419
  %vm2421 = vweird.f32 %v2412
  %vm2422 = vweird.f32 %v2416
  %vm2423 = vmor %vm2421, %vm2422
  %v2424 = vsel %vm2423, %v2416, %v2420
  %v2425 = vand.u32 2147483647, %v2412
  %vm2426 = vcmp.eq.f32.partialorder %v2425, 8.507059e+37
  %v2427 = vand.u32 %v2412, 2147483648
  %v2428 = vor.u32 1.1754944e-38, %v2427
  %v2429 = vsel %vm2426, %v2428, %v2424
  %v2430 = vmul.f32 %v2407, %v2429
  %v2431 = vrcp.pop %v2415
  %v2432 = vmul.f32 %v2415, %v2431
  %v2433 = vsub.f32 1.0, %v2432
  %v2434 = vmul.f32 %v2431, %v2433
  %v2435 = vadd.f32 %v2431, %v2434
  %vm2436 = vweird.f32 %v2415
  %vm2437 = vweird.f32 %v2431
  %vm2438 = vmor %vm2436, %vm2437
  %v2439 = vsel %vm2438, %v2431, %v2435
  %v2440 = vand.u32 2147483647, %v2415
  %vm2441 = vcmp.eq.f32.partialorder %v2440, 8.507059e+37
  %v2442 = vand.u32 %v2415, 2147483648
  %v2443 = vor.u32 1.1754944e-38, %v2442
  %v2444 = vsel %vm2441, %v2443, %v2439
  %v2445 = vmul.f32 %v2409, %v2444
  %2446 = vrot.lane.b32.xlu0 %v2100, 112
  %v2447 = vpop.permute.xlu0 %2446
  %2448 = vrot.lane.b32.xlu0 %v2103, 112
  %v2449 = vpop.permute.xlu0 %2448
  %v2452 = vsel %vm2145, %v2430, 0
  %v2455 = vsel %vm2145, %v2445, 0
  %v2457 = vsel %vm1746, %v2449, 0
  %2459 = vmatpush.msra.mxu0 0.0
  %2460 = vmatpush.msra.mxu0 0.0
  %2461 = vmatpush.msra.mxu0 0.0
  %2462 = vmatpush.msra.mxu0 0.0
  %2463 = vmatpush.msra.mxu0 0.0
  %2464 = vmatpush.msra.mxu0 0.0
  %2465 = vmatpush.msra.mxu0 0.0
  %2466 = vmatpush.msra.mxu0 0.0
  %2467 = vmatpush.msra.mxu0 0.0
  %2468 = vmatpush.msra.mxu0 0.0
  %2469 = vmatpush.msra.mxu0 0.0
  %2470 = vmatpush.msra.mxu0 0.0
  %2471 = vmatpush.msra.mxu0 0.0
  %2472 = vmatpush.msra.mxu0 0.0
  %2473 = vmatpush.msra.mxu0 %v2457
  %2474 = vmatpush.msra.mxu0 %v2447
  %2475 = vmatmul.f32.gmra.mxu0 %v2452
  %v2476 = vpop.f32.mrf.mxu0
  %v2477 = vadd.f32 0.0, %v2476
  %2478 = vmatmul.f32.gmra.mxu0 %v2455
  %v2479 = vpop.f32.mrf.mxu0
  %v2480 = vadd.f32 0.0, %v2479
  %2481 = vdwg.mxu0
  %2482 = vrot.lane.b32.xlu0 %v2042, 104
  %v2483 = vpop.permute.xlu0 %2482
  %2484 = vrot.lane.b32.xlu0 %v2045, 104
  %v2485 = vpop.permute.xlu0 %2484
  %2486 = vrot.lane.b32.xlu0 %v2071, 104
  %v2487 = vpop.permute.xlu0 %2486
  %2488 = vrot.lane.b32.xlu0 %v2074, 104
  %v2489 = vpop.permute.xlu0 %2488
  %v2490 = vsel %vm2105, %v2483, 0
  %v2492 = vsel %vm2105, %v2485, 0
  %v2494 = vsel %vm2105, %v2487, 0
  %v2496 = vsel %vm2105, %v2489, 0
  %2498 = vmatpush.xpose.msra.mxu0 0.0
  %2499 = vmatpush.xpose.msra.mxu0 0.0
  %2500 = vmatpush.xpose.msra.mxu0 0.0
  %2501 = vmatpush.xpose.msra.mxu0 0.0
  %2502 = vmatpush.xpose.msra.mxu0 0.0
  %2503 = vmatpush.xpose.msra.mxu0 0.0
  %2504 = vmatpush.xpose.msra.mxu0 0.0
  %2505 = vmatpush.xpose.msra.mxu0 0.0
  %2506 = vmatpush.xpose.msra.mxu0 0.0
  %2507 = vmatpush.xpose.msra.mxu0 0.0
  %2508 = vmatpush.xpose.msra.mxu0 0.0
  %2509 = vmatpush.xpose.msra.mxu0 0.0
  %2510 = vmatpush.xpose.msra.mxu0 0.0
  %2511 = vmatpush.xpose.msra.mxu0 0.0
  %2512 = vmatpush.xpose.msra.mxu0 %v2496
  %2513 = vmatpush.xpose.msra.mxu0 %v2494
  %2514 = vmatmul.f32.gmra.mxu0 %v2490
  %v2515 = vpop.f32.mrf.mxu0
  %v2516 = vadd.f32 0.0, %v2515
  %2517 = vmatmul.f32.gmra.mxu0 %v2492
  %v2518 = vpop.f32.mrf.mxu0
  %v2519 = vadd.f32 0.0, %v2518
  %2520 = vdwg.mxu0
  %v2521 = vmul.f32 %v2516, 0.35355338
  %v2522 = vmul.f32 %v2519, 0.35355338
  %v2523 = vadd.f32 %v2521, %v2008
  %v2524 = vadd.f32 %v2522, %v2009
  %v2525 = vsel %vm2145, %v2523, -inf
  %2526 = vmax.xlane.f32.xlu0 %v2525
  %v2527 = vpop.xlane.xlu0 %2526
  %v2528 = vsel %vm2149, %v2524, -inf
  %2529 = vmax.xlane.f32.xlu0 %v2528
  %v2530 = vpop.xlane.xlu0 %2529
  %v2531 = vsub.f32 %v2523, %v2527
  %v2532 = vsub.f32 %v2524, %v2530
  %v2533 = vmul.f32 %v2531, 1.442695
  %v2534 = vpow.pop %v2533
  %v2535 = vmul.f32 %v2532, 1.442695
  %v2536 = vpow.pop %v2535
  %v2537 = vsel %vm2145, %v2534, 0.0
  %2538 = vadd.xlane.f32.xlu0 %v2537
  %v2539 = vpop.xlane.xlu0 %2538
  %v2540 = vsel %vm2149, %v2536, 0.0
  %2541 = vadd.xlane.f32.xlu0 %v2540
  %v2542 = vpop.xlane.xlu0 %2541
  %v2543 = vrcp.pop %v2539
  %v2544 = vmul.f32 %v2539, %v2543
  %v2545 = vsub.f32 1.0, %v2544
  %v2546 = vmul.f32 %v2543, %v2545
  %v2547 = vadd.f32 %v2543, %v2546
  %vm2548 = vweird.f32 %v2539
  %vm2549 = vweird.f32 %v2543
  %vm2550 = vmor %vm2548, %vm2549
  %v2551 = vsel %vm2550, %v2543, %v2547
  %v2552 = vand.u32 2147483647, %v2539
  %vm2553 = vcmp.eq.f32.partialorder %v2552, 8.507059e+37
  %v2554 = vand.u32 %v2539, 2147483648
  %v2555 = vor.u32 1.1754944e-38, %v2554
  %v2556 = vsel %vm2553, %v2555, %v2551
  %v2557 = vmul.f32 %v2534, %v2556
  %v2558 = vrcp.pop %v2542
  %v2559 = vmul.f32 %v2542, %v2558
  %v2560 = vsub.f32 1.0, %v2559
  %v2561 = vmul.f32 %v2558, %v2560
  %v2562 = vadd.f32 %v2558, %v2561
  %vm2563 = vweird.f32 %v2542
  %vm2564 = vweird.f32 %v2558
  %vm2565 = vmor %vm2563, %vm2564
  %v2566 = vsel %vm2565, %v2558, %v2562
  %v2567 = vand.u32 2147483647, %v2542
  %vm2568 = vcmp.eq.f32.partialorder %v2567, 8.507059e+37
  %v2569 = vand.u32 %v2542, 2147483648
  %v2570 = vor.u32 1.1754944e-38, %v2569
  %v2571 = vsel %vm2568, %v2570, %v2566
  %v2572 = vmul.f32 %v2536, %v2571
  %2573 = vrot.lane.b32.xlu0 %v2100, 104
  %v2574 = vpop.permute.xlu0 %2573
  %2575 = vrot.lane.b32.xlu0 %v2103, 104
  %v2576 = vpop.permute.xlu0 %2575
  %v2579 = vsel %vm2145, %v2557, 0
  %v2582 = vsel %vm2145, %v2572, 0
  %v2584 = vsel %vm1746, %v2576, 0
  %2586 = vmatpush.msra.mxu0 0.0
  %2587 = vmatpush.msra.mxu0 0.0
  %2588 = vmatpush.msra.mxu0 0.0
  %2589 = vmatpush.msra.mxu0 0.0
  %2590 = vmatpush.msra.mxu0 0.0
  %2591 = vmatpush.msra.mxu0 0.0
  %2592 = vmatpush.msra.mxu0 0.0
  %2593 = vmatpush.msra.mxu0 0.0
  %2594 = vmatpush.msra.mxu0 0.0
  %2595 = vmatpush.msra.mxu0 0.0
  %2596 = vmatpush.msra.mxu0 0.0
  %2597 = vmatpush.msra.mxu0 0.0
  %2598 = vmatpush.msra.mxu0 0.0
  %2599 = vmatpush.msra.mxu0 0.0
  %2600 = vmatpush.msra.mxu0 %v2584
  %2601 = vmatpush.msra.mxu0 %v2574
  %2602 = vmatmul.f32.gmra.mxu0 %v2579
  %v2603 = vpop.f32.mrf.mxu0
  %v2604 = vadd.f32 0.0, %v2603
  %2605 = vmatmul.f32.gmra.mxu0 %v2582
  %v2606 = vpop.f32.mrf.mxu0
  %v2607 = vadd.f32 0.0, %v2606
  %2608 = vdwg.mxu0
  %2611 = vrot.lane.b32.xlu0 %v2350, 8
  %v2612 = vpop.permute.xlu0 %2611
  %2613 = vrot.lane.b32.xlu0 %v2353, 8
  %v2614 = vpop.permute.xlu0 %2613
  %2619 = vrot.lane.b32.xlu0 %v2477, 16
  %v2620 = vpop.permute.xlu0 %2619
  %2621 = vrot.lane.b32.xlu0 %v2480, 16
  %v2622 = vpop.permute.xlu0 %2621
  %2627 = vrot.lane.b32.xlu0 %v2604, 24
  %v2628 = vpop.permute.xlu0 %2627
  %2629 = vrot.lane.b32.xlu0 %v2607, 24
  %v2630 = vpop.permute.xlu0 %2629
  %v2633 = vsel %vm2105, %v2222, %v2612
  %v2634 = vsel %vm2105, %v2225, %v2614
  %vm2635 = vcmask 130048
  %v2636 = vsel %vm2635, %v2633, %v2620
  %v2637 = vsel %vm2635, %v2634, %v2622
  %vm2638 = vcmask 195584
  %v2639 = vsel %vm2638, %v2636, %v2628
  %v2640 = vsel %vm2638, %v2637, %v2630
  %s2641 = scalar_lea.vmem %s6, 96
  %v2642 = vld [vmem:[%s2641] sm:$0xff]
  %v2643 = vld [vmem:[%s2641 + $0x8] sm:$0xff]
  %v2644 = vld [vmem:[%s2641 + $0x10] sm:$0xff]
  %v2645 = vld [vmem:[%s2641 + $0x18] sm:$0xff]
  %v2646 = vperm.slane %v2010, 3
  %v2648 = vsel %vm2017, %v2639, 0
  %v2651 = vsel %vm2017, %v2640, 0
  %2653 = vmatpush.msra.mxu0 0.0
  %2654 = vmatpush.msra.mxu0 0.0
  %2655 = vmatpush.msra.mxu0 0.0
  %2656 = vmatpush.msra.mxu0 0.0
  %2657 = vmatpush.msra.mxu0 0.0
  %2658 = vmatpush.msra.mxu0 0.0
  %2659 = vmatpush.msra.mxu0 0.0
  %2660 = vmatpush.msra.mxu0 0.0
  %2661 = vmatpush.msra.mxu0 0.0
  %2662 = vmatpush.msra.mxu0 0.0
  %2663 = vmatpush.msra.mxu0 0.0
  %2664 = vmatpush.msra.mxu0 0.0
  %2665 = vmatpush.msra.mxu0 %v2645
  %2666 = vmatpush.msra.mxu0 %v2644
  %2667 = vmatpush.msra.mxu0 %v2643
  %2668 = vmatpush.msra.mxu0 %v2642
  %2669 = vmatmul.f32.gmra.mxu0 %v2648
  %v2670 = vpop.f32.mrf.mxu0
  %v2671 = vadd.f32 %v2646, %v2670
  %2672 = vmatmul.f32.gmra.mxu0 %v2651
  %v2673 = vpop.f32.mrf.mxu0
  %v2674 = vadd.f32 %v2646, %v2673
  %2675 = vdwg.mxu0
  %v2676 = vadd.f32 %v2006, %v2671
  %v2677 = vadd.f32 %v2007, %v2674
  %v2678 = vsel %vm2017, %v2676, 0.0
  %2679 = vadd.xlane.f32.xlu0 %v2678
  %v2680 = vpop.xlane.xlu0 %2679
  %vm2681 = vcmask 254976
  %v2682 = vsel %vm2681, %v2677, 0.0
  %2683 = vadd.xlane.f32.xlu0 %v2682
  %v2684 = vpop.xlane.xlu0 %2683
  %v2685 = vrcp.pop 32.0
  %v2686 = vmul.f32 32.0, %v2685
  %v2687 = vsub.f32 1.0, %v2686
  %v2688 = vmul.f32 %v2685, %v2687
  %v2689 = vadd.f32 %v2685, %v2688
  %vm2690 = vweird.f32 %v2685
  %v2691 = vsel %vm2690, %v2685, %v2689
  %v2692 = vmul.f32 %v2680, %v2691
  %v2693 = vmul.f32 %v2684, %v2691
  %v2694 = vsub.f32 %v2676, %v2692
  %v2695 = vsub.f32 %v2677, %v2693
  %v2696 = vmul.f32 %v2694, %v2694
  %v2697 = vmul.f32 %v2695, %v2695
  %v2698 = vsel %vm2017, %v2696, 0.0
  %2699 = vadd.xlane.f32.xlu0 %v2698
  %v2700 = vpop.xlane.xlu0 %2699
  %v2701 = vsel %vm2681, %v2697, 0.0
  %2702 = vadd.xlane.f32.xlu0 %v2701
  %v2703 = vpop.xlane.xlu0 %2702
  %v2704 = vmul.f32 %v2700, %v2691
  %v2705 = vmul.f32 %v2703, %v2691
  %v2706 = vadd.f32 %v2704, 1e-05
  %v2707 = vadd.f32 %v2705, 1e-05
  %v2708 = vrsqrt.pop %v2706
  %v2709 = vmul.f32 %v2708, %v2706
  %v2710 = vmul.f32 %v2709, %v2708
  %v2711 = vmul.f32 0.5, %v2710
  %v2712 = vsub.f32 1.5, %v2711
  %v2713 = vmul.f32 %v2708, %v2712
  %vm2714 = vweird.f32 %v2706
  %vm2715 = vweird.f32 %v2708
  %vm2716 = vmor %vm2714, %vm2715
  %v2717 = vsel %vm2716, %v2708, %v2713
  %v2718 = vrsqrt.pop %v2707
  %v2719 = vmul.f32 %v2718, %v2707
  %v2720 = vmul.f32 %v2719, %v2718
  %v2721 = vmul.f32 0.5, %v2720
  %v2722 = vsub.f32 1.5, %v2721
  %v2723 = vmul.f32 %v2718, %v2722
  %vm2724 = vweird.f32 %v2707
  %vm2725 = vweird.f32 %v2718
  %vm2726 = vmor %vm2724, %vm2725
  %v2727 = vsel %vm2726, %v2718, %v2723
  %v2728 = vmul.f32 %v2694, %v2717
  %v2729 = vmul.f32 %v2695, %v2727
  %v2730 = vperm.slane %v2010, 4
  %v2731 = vmul.f32 %v2728, %v2730
  %v2732 = vmul.f32 %v2729, %v2730
  %v2733 = vperm.slane %v2010, 5
  %v2734 = vadd.f32 %v2731, %v2733
  %v2735 = vadd.f32 %v2732, %v2733
  %v2736 = vld [vmem:[%s8] sm:$0xff]
  %v2737 = vld [vmem:[%s8 + $0x8] sm:$0xff]
  %v2738 = vld [vmem:[%s8 + $0x10] sm:$0xff]
  %v2739 = vld [vmem:[%s8 + $0x18] sm:$0xff]
  %v2740 = vld [vmem:[%s8 + $0x20] sm:$0xff]
  %v2741 = vld [vmem:[%s8 + $0x28] sm:$0xff]
  %v2742 = vld [vmem:[%s8 + $0x30] sm:$0xff]
  %v2743 = vld [vmem:[%s8 + $0x38] sm:$0xff]
  %v2744 = vld [vmem:[%s8 + $0x40] sm:$0xff]
  %v2745 = vld [vmem:[%s8 + $0x48] sm:$0xff]
  %v2746 = vld [vmem:[%s8 + $0x50] sm:$0xff]
  %v2747 = vld [vmem:[%s8 + $0x58] sm:$0xff]
  %v2748 = vld [vmem:[%s8 + $0x60] sm:$0xff]
  %v2749 = vld [vmem:[%s8 + $0x68] sm:$0xff]
  %v2750 = vld [vmem:[%s8 + $0x70] sm:$0xff]
  %v2751 = vld [vmem:[%s8 + $0x78] sm:$0xff]
  %v2752 = vld [vmem:[%s8 + $0x80] sm:$0xff]
  %v2753 = vld [vmem:[%s8 + $0x88] sm:$0xff]
  %v2754 = vld [vmem:[%s8 + $0x90] sm:$0xff]
  %v2755 = vld [vmem:[%s8 + $0x98] sm:$0xff]
  %v2756 = vld [vmem:[%s8 + $0xa0] sm:$0xff]
  %v2757 = vld [vmem:[%s8 + $0xa8] sm:$0xff]
  %v2758 = vld [vmem:[%s8 + $0xb0] sm:$0xff]
  %v2759 = vld [vmem:[%s8 + $0xb8] sm:$0xff]
  %v2760 = vld [vmem:[%s8 + $0xc0] sm:$0xff]
  %v2761 = vld [vmem:[%s8 + $0xc8] sm:$0xff]
  %v2762 = vld [vmem:[%s8 + $0xd0] sm:$0xff]
  %v2763 = vld [vmem:[%s8 + $0xd8] sm:$0xff]
  %v2764 = vld [vmem:[%s8 + $0xe0] sm:$0xff]
  %v2765 = vld [vmem:[%s8 + $0xe8] sm:$0xff]
  %v2766 = vld [vmem:[%s8 + $0xf0] sm:$0xff]
  %v2767 = vld [vmem:[%s8 + $0xf8] sm:$0xff]
  %v2768 = vld [vmem:[%s8 + $0x100] sm:$0xff]
  %v2769 = vld [vmem:[%s8 + $0x108] sm:$0xff]
  %v2770 = vld [vmem:[%s8 + $0x110] sm:$0xff]
  %v2771 = vld [vmem:[%s8 + $0x118] sm:$0xff]
  %v2772 = vld [vmem:[%s8 + $0x120] sm:$0xff]
  %v2773 = vld [vmem:[%s8 + $0x128] sm:$0xff]
  %v2774 = vld [vmem:[%s8 + $0x130] sm:$0xff]
  %v2775 = vld [vmem:[%s8 + $0x138] sm:$0xff]
  %v2776 = vld [vmem:[%s8 + $0x140] sm:$0xff]
  %v2777 = vld [vmem:[%s8 + $0x148] sm:$0xff]
  %v2778 = vld [vmem:[%s8 + $0x150] sm:$0xff]
  %v2779 = vld [vmem:[%s8 + $0x158] sm:$0xff]
  %v2780 = vld [vmem:[%s8 + $0x160] sm:$0xff]
  %v2781 = vld [vmem:[%s8 + $0x168] sm:$0xff]
  %v2782 = vld [vmem:[%s8 + $0x170] sm:$0xff]
  %v2783 = vld [vmem:[%s8 + $0x178] sm:$0xff]
  %v2784 = vld [vmem:[%s8 + $0x180] sm:$0xff]
  %v2785 = vld [vmem:[%s8 + $0x188] sm:$0xff]
  %v2786 = vld [vmem:[%s8 + $0x190] sm:$0xff]
  %v2787 = vld [vmem:[%s8 + $0x198] sm:$0xff]
  %v2788 = vld [vmem:[%s8 + $0x1a0] sm:$0xff]
  %v2789 = vld [vmem:[%s8 + $0x1a8] sm:$0xff]
  %v2790 = vld [vmem:[%s8 + $0x1b0] sm:$0xff]
  %v2791 = vld [vmem:[%s8 + $0x1b8] sm:$0xff]
  %v2792 = vld [vmem:[%s8 + $0x1c0] sm:$0xff]
  %v2793 = vld [vmem:[%s8 + $0x1c8] sm:$0xff]
  %v2794 = vld [vmem:[%s8 + $0x1d0] sm:$0xff]
  %v2795 = vld [vmem:[%s8 + $0x1d8] sm:$0xff]
  %v2796 = vld [vmem:[%s8 + $0x1e0] sm:$0xff]
  %v2797 = vld [vmem:[%s8 + $0x1e8] sm:$0xff]
  %v2798 = vld [vmem:[%s8 + $0x1f0] sm:$0xff]
  %v2799 = vld [vmem:[%s8 + $0x1f8] sm:$0xff]
  %v2800 = vld [vmem:[%s10] sm:$0xff]
  %v2801 = vld [vmem:[%s10 + $0x8] sm:$0xff]
  %v2804 = vperm.slane %v2800, 0
  %v2805 = vperm.slane %v2800, 1
  %v2806 = vperm.slane %v2800, 2
  %v2807 = vperm.slane %v2800, 3
  %v2808 = vperm.slane %v2800, 4
  %v2809 = vperm.slane %v2800, 5
  %v2810 = vperm.slane %v2800, 6
  %v2811 = vperm.slane %v2800, 7
  %v2812 = vperm.slane %v2801, 0
  %v2813 = vperm.slane %v2801, 1
  %v2814 = vperm.slane %v2801, 2
  %v2815 = vperm.slane %v2801, 3
  %v2816 = vperm.slane %v2801, 4
  %v2817 = vperm.slane %v2801, 5
  %v2818 = vperm.slane %v2801, 6
  %v2819 = vperm.slane %v2801, 7
  %v2837 = vsel %vm2017, %v2734, 0
  %v2840 = vsel %vm2017, %v2735, 0
  %2842 = vmatpush.msra.mxu0 0.0
  %2843 = vmatpush.msra.mxu0 0.0
  %2844 = vmatpush.msra.mxu0 0.0
  %2845 = vmatpush.msra.mxu0 0.0
  %2846 = vmatpush.msra.mxu0 0.0
  %2847 = vmatpush.msra.mxu0 0.0
  %2848 = vmatpush.msra.mxu0 0.0
  %2849 = vmatpush.msra.mxu0 0.0
  %2850 = vmatpush.msra.mxu0 0.0
  %2851 = vmatpush.msra.mxu0 0.0
  %2852 = vmatpush.msra.mxu0 0.0
  %2853 = vmatpush.msra.mxu0 0.0
  %2854 = vmatpush.msra.mxu0 %v2784
  %2855 = vmatpush.msra.mxu0 %v2768
  %2856 = vmatpush.msra.mxu0 %v2752
  %2857 = vmatpush.msra.mxu0 %v2736
  %2858 = vmatmul.f32.gmra.mxu0 %v2837
  %v2859 = vpop.f32.mrf.mxu0
  %v2860 = vadd.f32 %v2804, %v2859
  %2861 = vmatmul.f32.gmra.mxu0 %v2840
  %v2862 = vpop.f32.mrf.mxu0
  %v2863 = vadd.f32 %v2804, %v2862
  %2864 = vdwg.mxu0
  %2865 = vmatpush.msra.mxu0 0.0
  %2866 = vmatpush.msra.mxu0 0.0
  %2867 = vmatpush.msra.mxu0 0.0
  %2868 = vmatpush.msra.mxu0 0.0
  %2869 = vmatpush.msra.mxu0 0.0
  %2870 = vmatpush.msra.mxu0 0.0
  %2871 = vmatpush.msra.mxu0 0.0
  %2872 = vmatpush.msra.mxu0 0.0
  %2873 = vmatpush.msra.mxu0 0.0
  %2874 = vmatpush.msra.mxu0 0.0
  %2875 = vmatpush.msra.mxu0 0.0
  %2876 = vmatpush.msra.mxu0 0.0
  %2877 = vmatpush.msra.mxu0 %v2785
  %2878 = vmatpush.msra.mxu0 %v2769
  %2879 = vmatpush.msra.mxu0 %v2753
  %2880 = vmatpush.msra.mxu0 %v2737
  %2881 = vmatmul.f32.gmra.mxu0 %v2837
  %v2882 = vpop.f32.mrf.mxu0
  %v2883 = vadd.f32 %v2805, %v2882
  %2884 = vmatmul.f32.gmra.mxu0 %v2840
  %v2885 = vpop.f32.mrf.mxu0
  %v2886 = vadd.f32 %v2805, %v2885
  %2887 = vdwg.mxu0
  %2888 = vmatpush.msra.mxu0 0.0
  %2889 = vmatpush.msra.mxu0 0.0
  %2890 = vmatpush.msra.mxu0 0.0
  %2891 = vmatpush.msra.mxu0 0.0
  %2892 = vmatpush.msra.mxu0 0.0
  %2893 = vmatpush.msra.mxu0 0.0
  %2894 = vmatpush.msra.mxu0 0.0
  %2895 = vmatpush.msra.mxu0 0.0
  %2896 = vmatpush.msra.mxu0 0.0
  %2897 = vmatpush.msra.mxu0 0.0
  %2898 = vmatpush.msra.mxu0 0.0
  %2899 = vmatpush.msra.mxu0 0.0
  %2900 = vmatpush.msra.mxu0 %v2786
  %2901 = vmatpush.msra.mxu0 %v2770
  %2902 = vmatpush.msra.mxu0 %v2754
  %2903 = vmatpush.msra.mxu0 %v2738
  %2904 = vmatmul.f32.gmra.mxu0 %v2837
  %v2905 = vpop.f32.mrf.mxu0
  %v2906 = vadd.f32 %v2806, %v2905
  %2907 = vmatmul.f32.gmra.mxu0 %v2840
  %v2908 = vpop.f32.mrf.mxu0
  %v2909 = vadd.f32 %v2806, %v2908
  %2910 = vdwg.mxu0
  %2911 = vmatpush.msra.mxu0 0.0
  %2912 = vmatpush.msra.mxu0 0.0
  %2913 = vmatpush.msra.mxu0 0.0
  %2914 = vmatpush.msra.mxu0 0.0
  %2915 = vmatpush.msra.mxu0 0.0
  %2916 = vmatpush.msra.mxu0 0.0
  %2917 = vmatpush.msra.mxu0 0.0
  %2918 = vmatpush.msra.mxu0 0.0
  %2919 = vmatpush.msra.mxu0 0.0
  %2920 = vmatpush.msra.mxu0 0.0
  %2921 = vmatpush.msra.mxu0 0.0
  %2922 = vmatpush.msra.mxu0 0.0
  %2923 = vmatpush.msra.mxu0 %v2787
  %2924 = vmatpush.msra.mxu0 %v2771
  %2925 = vmatpush.msra.mxu0 %v2755
  %2926 = vmatpush.msra.mxu0 %v2739
  %2927 = vmatmul.f32.gmra.mxu0 %v2837
  %v2928 = vpop.f32.mrf.mxu0
  %v2929 = vadd.f32 %v2807, %v2928
  %2930 = vmatmul.f32.gmra.mxu0 %v2840
  %v2931 = vpop.f32.mrf.mxu0
  %v2932 = vadd.f32 %v2807, %v2931
  %2933 = vdwg.mxu0
  %2934 = vmatpush.msra.mxu0 0.0
  %2935 = vmatpush.msra.mxu0 0.0
  %2936 = vmatpush.msra.mxu0 0.0
  %2937 = vmatpush.msra.mxu0 0.0
  %2938 = vmatpush.msra.mxu0 0.0
  %2939 = vmatpush.msra.mxu0 0.0
  %2940 = vmatpush.msra.mxu0 0.0
  %2941 = vmatpush.msra.mxu0 0.0
  %2942 = vmatpush.msra.mxu0 0.0
  %2943 = vmatpush.msra.mxu0 0.0
  %2944 = vmatpush.msra.mxu0 0.0
  %2945 = vmatpush.msra.mxu0 0.0
  %2946 = vmatpush.msra.mxu0 %v2788
  %2947 = vmatpush.msra.mxu0 %v2772
  %2948 = vmatpush.msra.mxu0 %v2756
  %2949 = vmatpush.msra.mxu0 %v2740
  %2950 = vmatmul.f32.gmra.mxu0 %v2837
  %v2951 = vpop.f32.mrf.mxu0
  %v2952 = vadd.f32 %v2808, %v2951
  %2953 = vmatmul.f32.gmra.mxu0 %v2840
  %v2954 = vpop.f32.mrf.mxu0
  %v2955 = vadd.f32 %v2808, %v2954
  %2956 = vdwg.mxu0
  %2957 = vmatpush.msra.mxu0 0.0
  %2958 = vmatpush.msra.mxu0 0.0
  %2959 = vmatpush.msra.mxu0 0.0
  %2960 = vmatpush.msra.mxu0 0.0
  %2961 = vmatpush.msra.mxu0 0.0
  %2962 = vmatpush.msra.mxu0 0.0
  %2963 = vmatpush.msra.mxu0 0.0
  %2964 = vmatpush.msra.mxu0 0.0
  %2965 = vmatpush.msra.mxu0 0.0
  %2966 = vmatpush.msra.mxu0 0.0
  %2967 = vmatpush.msra.mxu0 0.0
  %2968 = vmatpush.msra.mxu0 0.0
  %2969 = vmatpush.msra.mxu0 %v2789
  %2970 = vmatpush.msra.mxu0 %v2773
  %2971 = vmatpush.msra.mxu0 %v2757
  %2972 = vmatpush.msra.mxu0 %v2741
  %2973 = vmatmul.f32.gmra.mxu0 %v2837
  %v2974 = vpop.f32.mrf.mxu0
  %v2975 = vadd.f32 %v2809, %v2974
  %2976 = vmatmul.f32.gmra.mxu0 %v2840
  %v2977 = vpop.f32.mrf.mxu0
  %v2978 = vadd.f32 %v2809, %v2977
  %2979 = vdwg.mxu0
  %2980 = vmatpush.msra.mxu0 0.0
  %2981 = vmatpush.msra.mxu0 0.0
  %2982 = vmatpush.msra.mxu0 0.0
  %2983 = vmatpush.msra.mxu0 0.0
  %2984 = vmatpush.msra.mxu0 0.0
  %2985 = vmatpush.msra.mxu0 0.0
  %2986 = vmatpush.msra.mxu0 0.0
  %2987 = vmatpush.msra.mxu0 0.0
  %2988 = vmatpush.msra.mxu0 0.0
  %2989 = vmatpush.msra.mxu0 0.0
  %2990 = vmatpush.msra.mxu0 0.0
  %2991 = vmatpush.msra.mxu0 0.0
  %2992 = vmatpush.msra.mxu0 %v2790
  %2993 = vmatpush.msra.mxu0 %v2774
  %2994 = vmatpush.msra.mxu0 %v2758
  %2995 = vmatpush.msra.mxu0 %v2742
  %2996 = vmatmul.f32.gmra.mxu0 %v2837
  %v2997 = vpop.f32.mrf.mxu0
  %v2998 = vadd.f32 %v2810, %v2997
  %2999 = vmatmul.f32.gmra.mxu0 %v2840
  %v3000 = vpop.f32.mrf.mxu0
  %v3001 = vadd.f32 %v2810, %v3000
  %3002 = vdwg.mxu0
  %3003 = vmatpush.msra.mxu0 0.0
  %3004 = vmatpush.msra.mxu0 0.0
  %3005 = vmatpush.msra.mxu0 0.0
  %3006 = vmatpush.msra.mxu0 0.0
  %3007 = vmatpush.msra.mxu0 0.0
  %3008 = vmatpush.msra.mxu0 0.0
  %3009 = vmatpush.msra.mxu0 0.0
  %3010 = vmatpush.msra.mxu0 0.0
  %3011 = vmatpush.msra.mxu0 0.0
  %3012 = vmatpush.msra.mxu0 0.0
  %3013 = vmatpush.msra.mxu0 0.0
  %3014 = vmatpush.msra.mxu0 0.0
  %3015 = vmatpush.msra.mxu0 %v2791
  %3016 = vmatpush.msra.mxu0 %v2775
  %3017 = vmatpush.msra.mxu0 %v2759
  %3018 = vmatpush.msra.mxu0 %v2743
  %3019 = vmatmul.f32.gmra.mxu0 %v2837
  %v3020 = vpop.f32.mrf.mxu0
  %v3021 = vadd.f32 %v2811, %v3020
  %3022 = vmatmul.f32.gmra.mxu0 %v2840
  %v3023 = vpop.f32.mrf.mxu0
  %v3024 = vadd.f32 %v2811, %v3023
  %3025 = vdwg.mxu0
  %3026 = vmatpush.msra.mxu0 0.0
  %3027 = vmatpush.msra.mxu0 0.0
  %3028 = vmatpush.msra.mxu0 0.0
  %3029 = vmatpush.msra.mxu0 0.0
  %3030 = vmatpush.msra.mxu0 0.0
  %3031 = vmatpush.msra.mxu0 0.0
  %3032 = vmatpush.msra.mxu0 0.0
  %3033 = vmatpush.msra.mxu0 0.0
  %3034 = vmatpush.msra.mxu0 0.0
  %3035 = vmatpush.msra.mxu0 0.0
  %3036 = vmatpush.msra.mxu0 0.0
  %3037 = vmatpush.msra.mxu0 0.0
  %3038 = vmatpush.msra.mxu0 %v2792
  %3039 = vmatpush.msra.mxu0 %v2776
  %3040 = vmatpush.msra.mxu0 %v2760
  %3041 = vmatpush.msra.mxu0 %v2744
  %3042 = vmatmul.f32.gmra.mxu0 %v2837
  %v3043 = vpop.f32.mrf.mxu0
  %v3044 = vadd.f32 %v2812, %v3043
  %3045 = vmatmul.f32.gmra.mxu0 %v2840
  %v3046 = vpop.f32.mrf.mxu0
  %v3047 = vadd.f32 %v2812, %v3046
  %3048 = vdwg.mxu0
  %3049 = vmatpush.msra.mxu0 0.0
  %3050 = vmatpush.msra.mxu0 0.0
  %3051 = vmatpush.msra.mxu0 0.0
  %3052 = vmatpush.msra.mxu0 0.0
  %3053 = vmatpush.msra.mxu0 0.0
  %3054 = vmatpush.msra.mxu0 0.0
  %3055 = vmatpush.msra.mxu0 0.0
  %3056 = vmatpush.msra.mxu0 0.0
  %3057 = vmatpush.msra.mxu0 0.0
  %3058 = vmatpush.msra.mxu0 0.0
  %3059 = vmatpush.msra.mxu0 0.0
  %3060 = vmatpush.msra.mxu0 0.0
  %3061 = vmatpush.msra.mxu0 %v2793
  %3062 = vmatpush.msra.mxu0 %v2777
  %3063 = vmatpush.msra.mxu0 %v2761
  %3064 = vmatpush.msra.mxu0 %v2745
  %3065 = vmatmul.f32.gmra.mxu0 %v2837
  %v3066 = vpop.f32.mrf.mxu0
  %v3067 = vadd.f32 %v2813, %v3066
  %3068 = vmatmul.f32.gmra.mxu0 %v2840
  %v3069 = vpop.f32.mrf.mxu0
  %v3070 = vadd.f32 %v2813, %v3069
  %3071 = vdwg.mxu0
  %3072 = vmatpush.msra.mxu0 0.0
  %3073 = vmatpush.msra.mxu0 0.0
  %3074 = vmatpush.msra.mxu0 0.0
  %3075 = vmatpush.msra.mxu0 0.0
  %3076 = vmatpush.msra.mxu0 0.0
  %3077 = vmatpush.msra.mxu0 0.0
  %3078 = vmatpush.msra.mxu0 0.0
  %3079 = vmatpush.msra.mxu0 0.0
  %3080 = vmatpush.msra.mxu0 0.0
  %3081 = vmatpush.msra.mxu0 0.0
  %3082 = vmatpush.msra.mxu0 0.0
  %3083 = vmatpush.msra.mxu0 0.0
  %3084 = vmatpush.msra.mxu0 %v2794
  %3085 = vmatpush.msra.mxu0 %v2778
  %3086 = vmatpush.msra.mxu0 %v2762
  %3087 = vmatpush.msra.mxu0 %v2746
  %3088 = vmatmul.f32.gmra.mxu0 %v2837
  %v3089 = vpop.f32.mrf.mxu0
  %v3090 = vadd.f32 %v2814, %v3089
  %3091 = vmatmul.f32.gmra.mxu0 %v2840
  %v3092 = vpop.f32.mrf.mxu0
  %v3093 = vadd.f32 %v2814, %v3092
  %3094 = vdwg.mxu0
  %3095 = vmatpush.msra.mxu0 0.0
  %3096 = vmatpush.msra.mxu0 0.0
  %3097 = vmatpush.msra.mxu0 0.0
  %3098 = vmatpush.msra.mxu0 0.0
  %3099 = vmatpush.msra.mxu0 0.0
  %3100 = vmatpush.msra.mxu0 0.0
  %3101 = vmatpush.msra.mxu0 0.0
  %3102 = vmatpush.msra.mxu0 0.0
  %3103 = vmatpush.msra.mxu0 0.0
  %3104 = vmatpush.msra.mxu0 0.0
  %3105 = vmatpush.msra.mxu0 0.0
  %3106 = vmatpush.msra.mxu0 0.0
  %3107 = vmatpush.msra.mxu0 %v2795
  %3108 = vmatpush.msra.mxu0 %v2779
  %3109 = vmatpush.msra.mxu0 %v2763
  %3110 = vmatpush.msra.mxu0 %v2747
  %3111 = vmatmul.f32.gmra.mxu0 %v2837
  %v3112 = vpop.f32.mrf.mxu0
  %v3113 = vadd.f32 %v2815, %v3112
  %3114 = vmatmul.f32.gmra.mxu0 %v2840
  %v3115 = vpop.f32.mrf.mxu0
  %v3116 = vadd.f32 %v2815, %v3115
  %3117 = vdwg.mxu0
  %3118 = vmatpush.msra.mxu0 0.0
  %3119 = vmatpush.msra.mxu0 0.0
  %3120 = vmatpush.msra.mxu0 0.0
  %3121 = vmatpush.msra.mxu0 0.0
  %3122 = vmatpush.msra.mxu0 0.0
  %3123 = vmatpush.msra.mxu0 0.0
  %3124 = vmatpush.msra.mxu0 0.0
  %3125 = vmatpush.msra.mxu0 0.0
  %3126 = vmatpush.msra.mxu0 0.0
  %3127 = vmatpush.msra.mxu0 0.0
  %3128 = vmatpush.msra.mxu0 0.0
  %3129 = vmatpush.msra.mxu0 0.0
  %3130 = vmatpush.msra.mxu0 %v2796
  %3131 = vmatpush.msra.mxu0 %v2780
  %3132 = vmatpush.msra.mxu0 %v2764
  %3133 = vmatpush.msra.mxu0 %v2748
  %3134 = vmatmul.f32.gmra.mxu0 %v2837
  %v3135 = vpop.f32.mrf.mxu0
  %v3136 = vadd.f32 %v2816, %v3135
  %3137 = vmatmul.f32.gmra.mxu0 %v2840
  %v3138 = vpop.f32.mrf.mxu0
  %v3139 = vadd.f32 %v2816, %v3138
  %3140 = vdwg.mxu0
  %3141 = vmatpush.msra.mxu0 0.0
  %3142 = vmatpush.msra.mxu0 0.0
  %3143 = vmatpush.msra.mxu0 0.0
  %3144 = vmatpush.msra.mxu0 0.0
  %3145 = vmatpush.msra.mxu0 0.0
  %3146 = vmatpush.msra.mxu0 0.0
  %3147 = vmatpush.msra.mxu0 0.0
  %3148 = vmatpush.msra.mxu0 0.0
  %3149 = vmatpush.msra.mxu0 0.0
  %3150 = vmatpush.msra.mxu0 0.0
  %3151 = vmatpush.msra.mxu0 0.0
  %3152 = vmatpush.msra.mxu0 0.0
  %3153 = vmatpush.msra.mxu0 %v2797
  %3154 = vmatpush.msra.mxu0 %v2781
  %3155 = vmatpush.msra.mxu0 %v2765
  %3156 = vmatpush.msra.mxu0 %v2749
  %3157 = vmatmul.f32.gmra.mxu0 %v2837
  %v3158 = vpop.f32.mrf.mxu0
  %v3159 = vadd.f32 %v2817, %v3158
  %3160 = vmatmul.f32.gmra.mxu0 %v2840
  %v3161 = vpop.f32.mrf.mxu0
  %v3162 = vadd.f32 %v2817, %v3161
  %3163 = vdwg.mxu0
  %3164 = vmatpush.msra.mxu0 0.0
  %3165 = vmatpush.msra.mxu0 0.0
  %3166 = vmatpush.msra.mxu0 0.0
  %3167 = vmatpush.msra.mxu0 0.0
  %3168 = vmatpush.msra.mxu0 0.0
  %3169 = vmatpush.msra.mxu0 0.0
  %3170 = vmatpush.msra.mxu0 0.0
  %3171 = vmatpush.msra.mxu0 0.0
  %3172 = vmatpush.msra.mxu0 0.0
  %3173 = vmatpush.msra.mxu0 0.0
  %3174 = vmatpush.msra.mxu0 0.0
  %3175 = vmatpush.msra.mxu0 0.0
  %3176 = vmatpush.msra.mxu0 %v2798
  %3177 = vmatpush.msra.mxu0 %v2782
  %3178 = vmatpush.msra.mxu0 %v2766
  %3179 = vmatpush.msra.mxu0 %v2750
  %3180 = vmatmul.f32.gmra.mxu0 %v2837
  %v3181 = vpop.f32.mrf.mxu0
  %v3182 = vadd.f32 %v2818, %v3181
  %3183 = vmatmul.f32.gmra.mxu0 %v2840
  %v3184 = vpop.f32.mrf.mxu0
  %v3185 = vadd.f32 %v2818, %v3184
  %3186 = vdwg.mxu0
  %3187 = vmatpush.msra.mxu0 0.0
  %3188 = vmatpush.msra.mxu0 0.0
  %3189 = vmatpush.msra.mxu0 0.0
  %3190 = vmatpush.msra.mxu0 0.0
  %3191 = vmatpush.msra.mxu0 0.0
  %3192 = vmatpush.msra.mxu0 0.0
  %3193 = vmatpush.msra.mxu0 0.0
  %3194 = vmatpush.msra.mxu0 0.0
  %3195 = vmatpush.msra.mxu0 0.0
  %3196 = vmatpush.msra.mxu0 0.0
  %3197 = vmatpush.msra.mxu0 0.0
  %3198 = vmatpush.msra.mxu0 0.0
  %3199 = vmatpush.msra.mxu0 %v2799
  %3200 = vmatpush.msra.mxu0 %v2783
  %3201 = vmatpush.msra.mxu0 %v2767
  %3202 = vmatpush.msra.mxu0 %v2751
  %3203 = vmatmul.f32.gmra.mxu0 %v2837
  %v3204 = vpop.f32.mrf.mxu0
  %v3205 = vadd.f32 %v2819, %v3204
  %3206 = vmatmul.f32.gmra.mxu0 %v2840
  %v3207 = vpop.f32.mrf.mxu0
  %v3208 = vadd.f32 %v2819, %v3207
  %3209 = vdwg.mxu0
  %v3210 = vmax.f32 %v2860, 0.0
  %v3211 = vmax.f32 %v2883, 0.0
  %v3212 = vmax.f32 %v2906, 0.0
  %v3213 = vmax.f32 %v2929, 0.0
  %v3214 = vmax.f32 %v2952, 0.0
  %v3215 = vmax.f32 %v2975, 0.0
  %v3216 = vmax.f32 %v2998, 0.0
  %v3217 = vmax.f32 %v3021, 0.0
  %v3218 = vmax.f32 %v3044, 0.0
  %v3219 = vmax.f32 %v3067, 0.0
  %v3220 = vmax.f32 %v3090, 0.0
  %v3221 = vmax.f32 %v3113, 0.0
  %v3222 = vmax.f32 %v3136, 0.0
  %v3223 = vmax.f32 %v3159, 0.0
  %v3224 = vmax.f32 %v3182, 0.0
  %v3225 = vmax.f32 %v3205, 0.0
  %v3226 = vmax.f32 %v2863, 0.0
  %v3227 = vmax.f32 %v2886, 0.0
  %v3228 = vmax.f32 %v2909, 0.0
  %v3229 = vmax.f32 %v2932, 0.0
  %v3230 = vmax.f32 %v2955, 0.0
  %v3231 = vmax.f32 %v2978, 0.0
  %v3232 = vmax.f32 %v3001, 0.0
  %v3233 = vmax.f32 %v3024, 0.0
  %v3234 = vmax.f32 %v3047, 0.0
  %v3235 = vmax.f32 %v3070, 0.0
  %v3236 = vmax.f32 %v3093, 0.0
  %v3237 = vmax.f32 %v3116, 0.0
  %v3238 = vmax.f32 %v3139, 0.0
  %v3239 = vmax.f32 %v3162, 0.0
  %v3240 = vmax.f32 %v3185, 0.0
  %v3241 = vmax.f32 %v3208, 0.0
  %v3242 = vld [vmem:[%s9] sm:$0xff]
  %v3243 = vld [vmem:[%s9 + $0x8] sm:$0xff]
  %v3244 = vld [vmem:[%s9 + $0x10] sm:$0xff]
  %v3245 = vld [vmem:[%s9 + $0x18] sm:$0xff]
  %v3246 = vld [vmem:[%s9 + $0x20] sm:$0xff]
  %v3247 = vld [vmem:[%s9 + $0x28] sm:$0xff]
  %v3248 = vld [vmem:[%s9 + $0x30] sm:$0xff]
  %v3249 = vld [vmem:[%s9 + $0x38] sm:$0xff]
  %v3250 = vld [vmem:[%s9 + $0x40] sm:$0xff]
  %v3251 = vld [vmem:[%s9 + $0x48] sm:$0xff]
  %v3252 = vld [vmem:[%s9 + $0x50] sm:$0xff]
  %v3253 = vld [vmem:[%s9 + $0x58] sm:$0xff]
  %v3254 = vld [vmem:[%s9 + $0x60] sm:$0xff]
  %v3255 = vld [vmem:[%s9 + $0x68] sm:$0xff]
  %v3256 = vld [vmem:[%s9 + $0x70] sm:$0xff]
  %v3257 = vld [vmem:[%s9 + $0x78] sm:$0xff]
  %v3258 = vld [vmem:[%s9 + $0x80] sm:$0xff]
  %v3259 = vld [vmem:[%s9 + $0x88] sm:$0xff]
  %v3260 = vld [vmem:[%s9 + $0x90] sm:$0xff]
  %v3261 = vld [vmem:[%s9 + $0x98] sm:$0xff]
  %v3262 = vld [vmem:[%s9 + $0xa0] sm:$0xff]
  %v3263 = vld [vmem:[%s9 + $0xa8] sm:$0xff]
  %v3264 = vld [vmem:[%s9 + $0xb0] sm:$0xff]
  %v3265 = vld [vmem:[%s9 + $0xb8] sm:$0xff]
  %v3266 = vld [vmem:[%s9 + $0xc0] sm:$0xff]
  %v3267 = vld [vmem:[%s9 + $0xc8] sm:$0xff]
  %v3268 = vld [vmem:[%s9 + $0xd0] sm:$0xff]
  %v3269 = vld [vmem:[%s9 + $0xd8] sm:$0xff]
  %v3270 = vld [vmem:[%s9 + $0xe0] sm:$0xff]
  %v3271 = vld [vmem:[%s9 + $0xe8] sm:$0xff]
  %v3272 = vld [vmem:[%s9 + $0xf0] sm:$0xff]
  %v3273 = vld [vmem:[%s9 + $0xf8] sm:$0xff]
  %v3274 = vld [vmem:[%s9 + $0x100] sm:$0xff]
  %v3275 = vld [vmem:[%s9 + $0x108] sm:$0xff]
  %v3276 = vld [vmem:[%s9 + $0x110] sm:$0xff]
  %v3277 = vld [vmem:[%s9 + $0x118] sm:$0xff]
  %v3278 = vld [vmem:[%s9 + $0x120] sm:$0xff]
  %v3279 = vld [vmem:[%s9 + $0x128] sm:$0xff]
  %v3280 = vld [vmem:[%s9 + $0x130] sm:$0xff]
  %v3281 = vld [vmem:[%s9 + $0x138] sm:$0xff]
  %v3282 = vld [vmem:[%s9 + $0x140] sm:$0xff]
  %v3283 = vld [vmem:[%s9 + $0x148] sm:$0xff]
  %v3284 = vld [vmem:[%s9 + $0x150] sm:$0xff]
  %v3285 = vld [vmem:[%s9 + $0x158] sm:$0xff]
  %v3286 = vld [vmem:[%s9 + $0x160] sm:$0xff]
  %v3287 = vld [vmem:[%s9 + $0x168] sm:$0xff]
  %v3288 = vld [vmem:[%s9 + $0x170] sm:$0xff]
  %v3289 = vld [vmem:[%s9 + $0x178] sm:$0xff]
  %v3290 = vld [vmem:[%s9 + $0x180] sm:$0xff]
  %v3291 = vld [vmem:[%s9 + $0x188] sm:$0xff]
  %v3292 = vld [vmem:[%s9 + $0x190] sm:$0xff]
  %v3293 = vld [vmem:[%s9 + $0x198] sm:$0xff]
  %v3294 = vld [vmem:[%s9 + $0x1a0] sm:$0xff]
  %v3295 = vld [vmem:[%s9 + $0x1a8] sm:$0xff]
  %v3296 = vld [vmem:[%s9 + $0x1b0] sm:$0xff]
  %v3297 = vld [vmem:[%s9 + $0x1b8] sm:$0xff]
  %v3298 = vld [vmem:[%s9 + $0x1c0] sm:$0xff]
  %v3299 = vld [vmem:[%s9 + $0x1c8] sm:$0xff]
  %v3300 = vld [vmem:[%s9 + $0x1d0] sm:$0xff]
  %v3301 = vld [vmem:[%s9 + $0x1d8] sm:$0xff]
  %v3302 = vld [vmem:[%s9 + $0x1e0] sm:$0xff]
  %v3303 = vld [vmem:[%s9 + $0x1e8] sm:$0xff]
  %v3304 = vld [vmem:[%s9 + $0x1f0] sm:$0xff]
  %v3305 = vld [vmem:[%s9 + $0x1f8] sm:$0xff]
  %v3306 = vld [vmem:[%s9 + $0x200] sm:$0xff]
  %v3307 = vld [vmem:[%s9 + $0x208] sm:$0xff]
  %v3308 = vld [vmem:[%s9 + $0x210] sm:$0xff]
  %v3309 = vld [vmem:[%s9 + $0x218] sm:$0xff]
  %v3310 = vld [vmem:[%s9 + $0x220] sm:$0xff]
  %v3311 = vld [vmem:[%s9 + $0x228] sm:$0xff]
  %v3312 = vld [vmem:[%s9 + $0x230] sm:$0xff]
  %v3313 = vld [vmem:[%s9 + $0x238] sm:$0xff]
  %v3314 = vld [vmem:[%s9 + $0x240] sm:$0xff]
  %v3315 = vld [vmem:[%s9 + $0x248] sm:$0xff]
  %v3316 = vld [vmem:[%s9 + $0x250] sm:$0xff]
  %v3317 = vld [vmem:[%s9 + $0x258] sm:$0xff]
  %v3318 = vld [vmem:[%s9 + $0x260] sm:$0xff]
  %v3319 = vld [vmem:[%s9 + $0x268] sm:$0xff]
  %v3320 = vld [vmem:[%s9 + $0x270] sm:$0xff]
  %v3321 = vld [vmem:[%s9 + $0x278] sm:$0xff]
  %v3322 = vld [vmem:[%s9 + $0x280] sm:$0xff]
  %v3323 = vld [vmem:[%s9 + $0x288] sm:$0xff]
  %v3324 = vld [vmem:[%s9 + $0x290] sm:$0xff]
  %v3325 = vld [vmem:[%s9 + $0x298] sm:$0xff]
  %v3326 = vld [vmem:[%s9 + $0x2a0] sm:$0xff]
  %v3327 = vld [vmem:[%s9 + $0x2a8] sm:$0xff]
  %v3328 = vld [vmem:[%s9 + $0x2b0] sm:$0xff]
  %v3329 = vld [vmem:[%s9 + $0x2b8] sm:$0xff]
  %v3330 = vld [vmem:[%s9 + $0x2c0] sm:$0xff]
  %v3331 = vld [vmem:[%s9 + $0x2c8] sm:$0xff]
  %v3332 = vld [vmem:[%s9 + $0x2d0] sm:$0xff]
  %v3333 = vld [vmem:[%s9 + $0x2d8] sm:$0xff]
  %v3334 = vld [vmem:[%s9 + $0x2e0] sm:$0xff]
  %v3335 = vld [vmem:[%s9 + $0x2e8] sm:$0xff]
  %v3336 = vld [vmem:[%s9 + $0x2f0] sm:$0xff]
  %v3337 = vld [vmem:[%s9 + $0x2f8] sm:$0xff]
  %v3338 = vld [vmem:[%s9 + $0x300] sm:$0xff]
  %v3339 = vld [vmem:[%s9 + $0x308] sm:$0xff]
  %v3340 = vld [vmem:[%s9 + $0x310] sm:$0xff]
  %v3341 = vld [vmem:[%s9 + $0x318] sm:$0xff]
  %v3342 = vld [vmem:[%s9 + $0x320] sm:$0xff]
  %v3343 = vld [vmem:[%s9 + $0x328] sm:$0xff]
  %v3344 = vld [vmem:[%s9 + $0x330] sm:$0xff]
  %v3345 = vld [vmem:[%s9 + $0x338] sm:$0xff]
  %v3346 = vld [vmem:[%s9 + $0x340] sm:$0xff]
  %v3347 = vld [vmem:[%s9 + $0x348] sm:$0xff]
  %v3348 = vld [vmem:[%s9 + $0x350] sm:$0xff]
  %v3349 = vld [vmem:[%s9 + $0x358] sm:$0xff]
  %v3350 = vld [vmem:[%s9 + $0x360] sm:$0xff]
  %v3351 = vld [vmem:[%s9 + $0x368] sm:$0xff]
  %v3352 = vld [vmem:[%s9 + $0x370] sm:$0xff]
  %v3353 = vld [vmem:[%s9 + $0x378] sm:$0xff]
  %v3354 = vld [vmem:[%s9 + $0x380] sm:$0xff]
  %v3355 = vld [vmem:[%s9 + $0x388] sm:$0xff]
  %v3356 = vld [vmem:[%s9 + $0x390] sm:$0xff]
  %v3357 = vld [vmem:[%s9 + $0x398] sm:$0xff]
  %v3358 = vld [vmem:[%s9 + $0x3a0] sm:$0xff]
  %v3359 = vld [vmem:[%s9 + $0x3a8] sm:$0xff]
  %v3360 = vld [vmem:[%s9 + $0x3b0] sm:$0xff]
  %v3361 = vld [vmem:[%s9 + $0x3b8] sm:$0xff]
  %v3362 = vld [vmem:[%s9 + $0x3c0] sm:$0xff]
  %v3363 = vld [vmem:[%s9 + $0x3c8] sm:$0xff]
  %v3364 = vld [vmem:[%s9 + $0x3d0] sm:$0xff]
  %v3365 = vld [vmem:[%s9 + $0x3d8] sm:$0xff]
  %v3366 = vld [vmem:[%s9 + $0x3e0] sm:$0xff]
  %v3367 = vld [vmem:[%s9 + $0x3e8] sm:$0xff]
  %v3368 = vld [vmem:[%s9 + $0x3f0] sm:$0xff]
  %v3369 = vld [vmem:[%s9 + $0x3f8] sm:$0xff]
  %v3370 = vld [vmem:[%s9 + $0x400] sm:$0xff]
  %v3371 = vld [vmem:[%s9 + $0x408] sm:$0xff]
  %v3372 = vld [vmem:[%s9 + $0x410] sm:$0xff]
  %v3373 = vld [vmem:[%s9 + $0x418] sm:$0xff]
  %v3374 = vld [vmem:[%s9 + $0x420] sm:$0xff]
  %v3375 = vld [vmem:[%s9 + $0x428] sm:$0xff]
  %v3376 = vld [vmem:[%s9 + $0x430] sm:$0xff]
  %v3377 = vld [vmem:[%s9 + $0x438] sm:$0xff]
  %v3378 = vld [vmem:[%s9 + $0x440] sm:$0xff]
  %v3379 = vld [vmem:[%s9 + $0x448] sm:$0xff]
  %v3380 = vld [vmem:[%s9 + $0x450] sm:$0xff]
  %v3381 = vld [vmem:[%s9 + $0x458] sm:$0xff]
  %v3382 = vld [vmem:[%s9 + $0x460] sm:$0xff]
  %v3383 = vld [vmem:[%s9 + $0x468] sm:$0xff]
  %v3384 = vld [vmem:[%s9 + $0x470] sm:$0xff]
  %v3385 = vld [vmem:[%s9 + $0x478] sm:$0xff]
  %v3386 = vld [vmem:[%s9 + $0x480] sm:$0xff]
  %v3387 = vld [vmem:[%s9 + $0x488] sm:$0xff]
  %v3388 = vld [vmem:[%s9 + $0x490] sm:$0xff]
  %v3389 = vld [vmem:[%s9 + $0x498] sm:$0xff]
  %v3390 = vld [vmem:[%s9 + $0x4a0] sm:$0xff]
  %v3391 = vld [vmem:[%s9 + $0x4a8] sm:$0xff]
  %v3392 = vld [vmem:[%s9 + $0x4b0] sm:$0xff]
  %v3393 = vld [vmem:[%s9 + $0x4b8] sm:$0xff]
  %v3394 = vld [vmem:[%s9 + $0x4c0] sm:$0xff]
  %v3395 = vld [vmem:[%s9 + $0x4c8] sm:$0xff]
  %v3396 = vld [vmem:[%s9 + $0x4d0] sm:$0xff]
  %v3397 = vld [vmem:[%s9 + $0x4d8] sm:$0xff]
  %v3398 = vld [vmem:[%s9 + $0x4e0] sm:$0xff]
  %v3399 = vld [vmem:[%s9 + $0x4e8] sm:$0xff]
  %v3400 = vld [vmem:[%s9 + $0x4f0] sm:$0xff]
  %v3401 = vld [vmem:[%s9 + $0x4f8] sm:$0xff]
  %v3402 = vld [vmem:[%s9 + $0x500] sm:$0xff]
  %v3403 = vld [vmem:[%s9 + $0x508] sm:$0xff]
  %v3404 = vld [vmem:[%s9 + $0x510] sm:$0xff]
  %v3405 = vld [vmem:[%s9 + $0x518] sm:$0xff]
  %v3406 = vld [vmem:[%s9 + $0x520] sm:$0xff]
  %v3407 = vld [vmem:[%s9 + $0x528] sm:$0xff]
  %v3408 = vld [vmem:[%s9 + $0x530] sm:$0xff]
  %v3409 = vld [vmem:[%s9 + $0x538] sm:$0xff]
  %v3410 = vld [vmem:[%s9 + $0x540] sm:$0xff]
  %v3411 = vld [vmem:[%s9 + $0x548] sm:$0xff]
  %v3412 = vld [vmem:[%s9 + $0x550] sm:$0xff]
  %v3413 = vld [vmem:[%s9 + $0x558] sm:$0xff]
  %v3414 = vld [vmem:[%s9 + $0x560] sm:$0xff]
  %v3415 = vld [vmem:[%s9 + $0x568] sm:$0xff]
  %v3416 = vld [vmem:[%s9 + $0x570] sm:$0xff]
  %v3417 = vld [vmem:[%s9 + $0x578] sm:$0xff]
  %v3418 = vld [vmem:[%s9 + $0x580] sm:$0xff]
  %v3419 = vld [vmem:[%s9 + $0x588] sm:$0xff]
  %v3420 = vld [vmem:[%s9 + $0x590] sm:$0xff]
  %v3421 = vld [vmem:[%s9 + $0x598] sm:$0xff]
  %v3422 = vld [vmem:[%s9 + $0x5a0] sm:$0xff]
  %v3423 = vld [vmem:[%s9 + $0x5a8] sm:$0xff]
  %v3424 = vld [vmem:[%s9 + $0x5b0] sm:$0xff]
  %v3425 = vld [vmem:[%s9 + $0x5b8] sm:$0xff]
  %v3426 = vld [vmem:[%s9 + $0x5c0] sm:$0xff]
  %v3427 = vld [vmem:[%s9 + $0x5c8] sm:$0xff]
  %v3428 = vld [vmem:[%s9 + $0x5d0] sm:$0xff]
  %v3429 = vld [vmem:[%s9 + $0x5d8] sm:$0xff]
  %v3430 = vld [vmem:[%s9 + $0x5e0] sm:$0xff]
  %v3431 = vld [vmem:[%s9 + $0x5e8] sm:$0xff]
  %v3432 = vld [vmem:[%s9 + $0x5f0] sm:$0xff]
  %v3433 = vld [vmem:[%s9 + $0x5f8] sm:$0xff]
  %v3434 = vld [vmem:[%s9 + $0x600] sm:$0xff]
  %v3435 = vld [vmem:[%s9 + $0x608] sm:$0xff]
  %v3436 = vld [vmem:[%s9 + $0x610] sm:$0xff]
  %v3437 = vld [vmem:[%s9 + $0x618] sm:$0xff]
  %v3438 = vld [vmem:[%s9 + $0x620] sm:$0xff]
  %v3439 = vld [vmem:[%s9 + $0x628] sm:$0xff]
  %v3440 = vld [vmem:[%s9 + $0x630] sm:$0xff]
  %v3441 = vld [vmem:[%s9 + $0x638] sm:$0xff]
  %v3442 = vld [vmem:[%s9 + $0x640] sm:$0xff]
  %v3443 = vld [vmem:[%s9 + $0x648] sm:$0xff]
  %v3444 = vld [vmem:[%s9 + $0x650] sm:$0xff]
  %v3445 = vld [vmem:[%s9 + $0x658] sm:$0xff]
  %v3446 = vld [vmem:[%s9 + $0x660] sm:$0xff]
  %v3447 = vld [vmem:[%s9 + $0x668] sm:$0xff]
  %v3448 = vld [vmem:[%s9 + $0x670] sm:$0xff]
  %v3449 = vld [vmem:[%s9 + $0x678] sm:$0xff]
  %v3450 = vld [vmem:[%s9 + $0x680] sm:$0xff]
  %v3451 = vld [vmem:[%s9 + $0x688] sm:$0xff]
  %v3452 = vld [vmem:[%s9 + $0x690] sm:$0xff]
  %v3453 = vld [vmem:[%s9 + $0x698] sm:$0xff]
  %v3454 = vld [vmem:[%s9 + $0x6a0] sm:$0xff]
  %v3455 = vld [vmem:[%s9 + $0x6a8] sm:$0xff]
  %v3456 = vld [vmem:[%s9 + $0x6b0] sm:$0xff]
  %v3457 = vld [vmem:[%s9 + $0x6b8] sm:$0xff]
  %v3458 = vld [vmem:[%s9 + $0x6c0] sm:$0xff]
  %v3459 = vld [vmem:[%s9 + $0x6c8] sm:$0xff]
  %v3460 = vld [vmem:[%s9 + $0x6d0] sm:$0xff]
  %v3461 = vld [vmem:[%s9 + $0x6d8] sm:$0xff]
  %v3462 = vld [vmem:[%s9 + $0x6e0] sm:$0xff]
  %v3463 = vld [vmem:[%s9 + $0x6e8] sm:$0xff]
  %v3464 = vld [vmem:[%s9 + $0x6f0] sm:$0xff]
  %v3465 = vld [vmem:[%s9 + $0x6f8] sm:$0xff]
  %v3466 = vld [vmem:[%s9 + $0x700] sm:$0xff]
  %v3467 = vld [vmem:[%s9 + $0x708] sm:$0xff]
  %v3468 = vld [vmem:[%s9 + $0x710] sm:$0xff]
  %v3469 = vld [vmem:[%s9 + $0x718] sm:$0xff]
  %v3470 = vld [vmem:[%s9 + $0x720] sm:$0xff]
  %v3471 = vld [vmem:[%s9 + $0x728] sm:$0xff]
  %v3472 = vld [vmem:[%s9 + $0x730] sm:$0xff]
  %v3473 = vld [vmem:[%s9 + $0x738] sm:$0xff]
  %v3474 = vld [vmem:[%s9 + $0x740] sm:$0xff]
  %v3475 = vld [vmem:[%s9 + $0x748] sm:$0xff]
  %v3476 = vld [vmem:[%s9 + $0x750] sm:$0xff]
  %v3477 = vld [vmem:[%s9 + $0x758] sm:$0xff]
  %v3478 = vld [vmem:[%s9 + $0x760] sm:$0xff]
  %v3479 = vld [vmem:[%s9 + $0x768] sm:$0xff]
  %v3480 = vld [vmem:[%s9 + $0x770] sm:$0xff]
  %v3481 = vld [vmem:[%s9 + $0x778] sm:$0xff]
  %v3482 = vld [vmem:[%s9 + $0x780] sm:$0xff]
  %v3483 = vld [vmem:[%s9 + $0x788] sm:$0xff]
  %v3484 = vld [vmem:[%s9 + $0x790] sm:$0xff]
  %v3485 = vld [vmem:[%s9 + $0x798] sm:$0xff]
  %v3486 = vld [vmem:[%s9 + $0x7a0] sm:$0xff]
  %v3487 = vld [vmem:[%s9 + $0x7a8] sm:$0xff]
  %v3488 = vld [vmem:[%s9 + $0x7b0] sm:$0xff]
  %v3489 = vld [vmem:[%s9 + $0x7b8] sm:$0xff]
  %v3490 = vld [vmem:[%s9 + $0x7c0] sm:$0xff]
  %v3491 = vld [vmem:[%s9 + $0x7c8] sm:$0xff]
  %v3492 = vld [vmem:[%s9 + $0x7d0] sm:$0xff]
  %v3493 = vld [vmem:[%s9 + $0x7d8] sm:$0xff]
  %v3494 = vld [vmem:[%s9 + $0x7e0] sm:$0xff]
  %v3495 = vld [vmem:[%s9 + $0x7e8] sm:$0xff]
  %v3496 = vld [vmem:[%s9 + $0x7f0] sm:$0xff]
  %v3497 = vld [vmem:[%s9 + $0x7f8] sm:$0xff]
  %v3498 = vperm.slane %v2011, 0
  %3499 = vmatpush.msra.mxu0 %v3257
  %3500 = vmatpush.msra.mxu0 %v3256
  %3501 = vmatpush.msra.mxu0 %v3255
  %3502 = vmatpush.msra.mxu0 %v3254
  %3503 = vmatpush.msra.mxu0 %v3253
  %3504 = vmatpush.msra.mxu0 %v3252
  %3505 = vmatpush.msra.mxu0 %v3251
  %3506 = vmatpush.msra.mxu0 %v3250
  %3507 = vmatpush.msra.mxu0 %v3249
  %3508 = vmatpush.msra.mxu0 %v3248
  %3509 = vmatpush.msra.mxu0 %v3247
  %3510 = vmatpush.msra.mxu0 %v3246
  %3511 = vmatpush.msra.mxu0 %v3245
  %3512 = vmatpush.msra.mxu0 %v3244
  %3513 = vmatpush.msra.mxu0 %v3243
  %3514 = vmatpush.msra.mxu0 %v3242
  %3515 = vmatmul.f32.gmra.mxu0 %v3210
  %v3516 = vpop.f32.mrf.mxu0
  %v3517 = vadd.f32 %v3498, %v3516
  %3518 = vmatmul.f32.gmra.mxu0 %v3226
  %v3519 = vpop.f32.mrf.mxu0
  %v3520 = vadd.f32 %v3498, %v3519
  %3521 = vdwg.mxu0
  %3522 = vmatpush.msra.mxu0 %v3273
  %3523 = vmatpush.msra.mxu0 %v3272
  %3524 = vmatpush.msra.mxu0 %v3271
  %3525 = vmatpush.msra.mxu0 %v3270
  %3526 = vmatpush.msra.mxu0 %v3269
  %3527 = vmatpush.msra.mxu0 %v3268
  %3528 = vmatpush.msra.mxu0 %v3267
  %3529 = vmatpush.msra.mxu0 %v3266
  %3530 = vmatpush.msra.mxu0 %v3265
  %3531 = vmatpush.msra.mxu0 %v3264
  %3532 = vmatpush.msra.mxu0 %v3263
  %3533 = vmatpush.msra.mxu0 %v3262
  %3534 = vmatpush.msra.mxu0 %v3261
  %3535 = vmatpush.msra.mxu0 %v3260
  %3536 = vmatpush.msra.mxu0 %v3259
  %3537 = vmatpush.msra.mxu0 %v3258
  %3538 = vmatmul.f32.gmra.mxu0 %v3211
  %v3539 = vpop.f32.mrf.mxu0
  %v3540 = vadd.f32 %v3517, %v3539
  %3541 = vmatmul.f32.gmra.mxu0 %v3227
  %v3542 = vpop.f32.mrf.mxu0
  %v3543 = vadd.f32 %v3520, %v3542
  %3544 = vdwg.mxu0
  %3545 = vmatpush.msra.mxu0 %v3289
  %3546 = vmatpush.msra.mxu0 %v3288
  %3547 = vmatpush.msra.mxu0 %v3287
  %3548 = vmatpush.msra.mxu0 %v3286
  %3549 = vmatpush.msra.mxu0 %v3285
  %3550 = vmatpush.msra.mxu0 %v3284
  %3551 = vmatpush.msra.mxu0 %v3283
  %3552 = vmatpush.msra.mxu0 %v3282
  %3553 = vmatpush.msra.mxu0 %v3281
  %3554 = vmatpush.msra.mxu0 %v3280
  %3555 = vmatpush.msra.mxu0 %v3279
  %3556 = vmatpush.msra.mxu0 %v3278
  %3557 = vmatpush.msra.mxu0 %v3277
  %3558 = vmatpush.msra.mxu0 %v3276
  %3559 = vmatpush.msra.mxu0 %v3275
  %3560 = vmatpush.msra.mxu0 %v3274
  %3561 = vmatmul.f32.gmra.mxu0 %v3212
  %v3562 = vpop.f32.mrf.mxu0
  %v3563 = vadd.f32 %v3540, %v3562
  %3564 = vmatmul.f32.gmra.mxu0 %v3228
  %v3565 = vpop.f32.mrf.mxu0
  %v3566 = vadd.f32 %v3543, %v3565
  %3567 = vdwg.mxu0
  %3568 = vmatpush.msra.mxu0 %v3305
  %3569 = vmatpush.msra.mxu0 %v3304
  %3570 = vmatpush.msra.mxu0 %v3303
  %3571 = vmatpush.msra.mxu0 %v3302
  %3572 = vmatpush.msra.mxu0 %v3301
  %3573 = vmatpush.msra.mxu0 %v3300
  %3574 = vmatpush.msra.mxu0 %v3299
  %3575 = vmatpush.msra.mxu0 %v3298
  %3576 = vmatpush.msra.mxu0 %v3297
  %3577 = vmatpush.msra.mxu0 %v3296
  %3578 = vmatpush.msra.mxu0 %v3295
  %3579 = vmatpush.msra.mxu0 %v3294
  %3580 = vmatpush.msra.mxu0 %v3293
  %3581 = vmatpush.msra.mxu0 %v3292
  %3582 = vmatpush.msra.mxu0 %v3291
  %3583 = vmatpush.msra.mxu0 %v3290
  %3584 = vmatmul.f32.gmra.mxu0 %v3213
  %v3585 = vpop.f32.mrf.mxu0
  %v3586 = vadd.f32 %v3563, %v3585
  %3587 = vmatmul.f32.gmra.mxu0 %v3229
  %v3588 = vpop.f32.mrf.mxu0
  %v3589 = vadd.f32 %v3566, %v3588
  %3590 = vdwg.mxu0
  %3591 = vmatpush.msra.mxu0 %v3321
  %3592 = vmatpush.msra.mxu0 %v3320
  %3593 = vmatpush.msra.mxu0 %v3319
  %3594 = vmatpush.msra.mxu0 %v3318
  %3595 = vmatpush.msra.mxu0 %v3317
  %3596 = vmatpush.msra.mxu0 %v3316
  %3597 = vmatpush.msra.mxu0 %v3315
  %3598 = vmatpush.msra.mxu0 %v3314
  %3599 = vmatpush.msra.mxu0 %v3313
  %3600 = vmatpush.msra.mxu0 %v3312
  %3601 = vmatpush.msra.mxu0 %v3311
  %3602 = vmatpush.msra.mxu0 %v3310
  %3603 = vmatpush.msra.mxu0 %v3309
  %3604 = vmatpush.msra.mxu0 %v3308
  %3605 = vmatpush.msra.mxu0 %v3307
  %3606 = vmatpush.msra.mxu0 %v3306
  %3607 = vmatmul.f32.gmra.mxu0 %v3214
  %v3608 = vpop.f32.mrf.mxu0
  %v3609 = vadd.f32 %v3586, %v3608
  %3610 = vmatmul.f32.gmra.mxu0 %v3230
  %v3611 = vpop.f32.mrf.mxu0
  %v3612 = vadd.f32 %v3589, %v3611
  %3613 = vdwg.mxu0
  %3614 = vmatpush.msra.mxu0 %v3337
  %3615 = vmatpush.msra.mxu0 %v3336
  %3616 = vmatpush.msra.mxu0 %v3335
  %3617 = vmatpush.msra.mxu0 %v3334
  %3618 = vmatpush.msra.mxu0 %v3333
  %3619 = vmatpush.msra.mxu0 %v3332
  %3620 = vmatpush.msra.mxu0 %v3331
  %3621 = vmatpush.msra.mxu0 %v3330
  %3622 = vmatpush.msra.mxu0 %v3329
  %3623 = vmatpush.msra.mxu0 %v3328
  %3624 = vmatpush.msra.mxu0 %v3327
  %3625 = vmatpush.msra.mxu0 %v3326
  %3626 = vmatpush.msra.mxu0 %v3325
  %3627 = vmatpush.msra.mxu0 %v3324
  %3628 = vmatpush.msra.mxu0 %v3323
  %3629 = vmatpush.msra.mxu0 %v3322
  %3630 = vmatmul.f32.gmra.mxu0 %v3215
  %v3631 = vpop.f32.mrf.mxu0
  %v3632 = vadd.f32 %v3609, %v3631
  %3633 = vmatmul.f32.gmra.mxu0 %v3231
  %v3634 = vpop.f32.mrf.mxu0
  %v3635 = vadd.f32 %v3612, %v3634
  %3636 = vdwg.mxu0
  %3637 = vmatpush.msra.mxu0 %v3353
  %3638 = vmatpush.msra.mxu0 %v3352
  %3639 = vmatpush.msra.mxu0 %v3351
  %3640 = vmatpush.msra.mxu0 %v3350
  %3641 = vmatpush.msra.mxu0 %v3349
  %3642 = vmatpush.msra.mxu0 %v3348
  %3643 = vmatpush.msra.mxu0 %v3347
  %3644 = vmatpush.msra.mxu0 %v3346
  %3645 = vmatpush.msra.mxu0 %v3345
  %3646 = vmatpush.msra.mxu0 %v3344
  %3647 = vmatpush.msra.mxu0 %v3343
  %3648 = vmatpush.msra.mxu0 %v3342
  %3649 = vmatpush.msra.mxu0 %v3341
  %3650 = vmatpush.msra.mxu0 %v3340
  %3651 = vmatpush.msra.mxu0 %v3339
  %3652 = vmatpush.msra.mxu0 %v3338
  %3653 = vmatmul.f32.gmra.mxu0 %v3216
  %v3654 = vpop.f32.mrf.mxu0
  %v3655 = vadd.f32 %v3632, %v3654
  %3656 = vmatmul.f32.gmra.mxu0 %v3232
  %v3657 = vpop.f32.mrf.mxu0
  %v3658 = vadd.f32 %v3635, %v3657
  %3659 = vdwg.mxu0
  %3660 = vmatpush.msra.mxu0 %v3369
  %3661 = vmatpush.msra.mxu0 %v3368
  %3662 = vmatpush.msra.mxu0 %v3367
  %3663 = vmatpush.msra.mxu0 %v3366
  %3664 = vmatpush.msra.mxu0 %v3365
  %3665 = vmatpush.msra.mxu0 %v3364
  %3666 = vmatpush.msra.mxu0 %v3363
  %3667 = vmatpush.msra.mxu0 %v3362
  %3668 = vmatpush.msra.mxu0 %v3361
  %3669 = vmatpush.msra.mxu0 %v3360
  %3670 = vmatpush.msra.mxu0 %v3359
  %3671 = vmatpush.msra.mxu0 %v3358
  %3672 = vmatpush.msra.mxu0 %v3357
  %3673 = vmatpush.msra.mxu0 %v3356
  %3674 = vmatpush.msra.mxu0 %v3355
  %3675 = vmatpush.msra.mxu0 %v3354
  %3676 = vmatmul.f32.gmra.mxu0 %v3217
  %v3677 = vpop.f32.mrf.mxu0
  %v3678 = vadd.f32 %v3655, %v3677
  %3679 = vmatmul.f32.gmra.mxu0 %v3233
  %v3680 = vpop.f32.mrf.mxu0
  %v3681 = vadd.f32 %v3658, %v3680
  %3682 = vdwg.mxu0
  %3683 = vmatpush.msra.mxu0 %v3385
  %3684 = vmatpush.msra.mxu0 %v3384
  %3685 = vmatpush.msra.mxu0 %v3383
  %3686 = vmatpush.msra.mxu0 %v3382
  %3687 = vmatpush.msra.mxu0 %v3381
  %3688 = vmatpush.msra.mxu0 %v3380
  %3689 = vmatpush.msra.mxu0 %v3379
  %3690 = vmatpush.msra.mxu0 %v3378
  %3691 = vmatpush.msra.mxu0 %v3377
  %3692 = vmatpush.msra.mxu0 %v3376
  %3693 = vmatpush.msra.mxu0 %v3375
  %3694 = vmatpush.msra.mxu0 %v3374
  %3695 = vmatpush.msra.mxu0 %v3373
  %3696 = vmatpush.msra.mxu0 %v3372
  %3697 = vmatpush.msra.mxu0 %v3371
  %3698 = vmatpush.msra.mxu0 %v3370
  %3699 = vmatmul.f32.gmra.mxu0 %v3218
  %v3700 = vpop.f32.mrf.mxu0
  %v3701 = vadd.f32 %v3678, %v3700
  %3702 = vmatmul.f32.gmra.mxu0 %v3234
  %v3703 = vpop.f32.mrf.mxu0
  %v3704 = vadd.f32 %v3681, %v3703
  %3705 = vdwg.mxu0
  %3706 = vmatpush.msra.mxu0 %v3401
  %3707 = vmatpush.msra.mxu0 %v3400
  %3708 = vmatpush.msra.mxu0 %v3399
  %3709 = vmatpush.msra.mxu0 %v3398
  %3710 = vmatpush.msra.mxu0 %v3397
  %3711 = vmatpush.msra.mxu0 %v3396
  %3712 = vmatpush.msra.mxu0 %v3395
  %3713 = vmatpush.msra.mxu0 %v3394
  %3714 = vmatpush.msra.mxu0 %v3393
  %3715 = vmatpush.msra.mxu0 %v3392
  %3716 = vmatpush.msra.mxu0 %v3391
  %3717 = vmatpush.msra.mxu0 %v3390
  %3718 = vmatpush.msra.mxu0 %v3389
  %3719 = vmatpush.msra.mxu0 %v3388
  %3720 = vmatpush.msra.mxu0 %v3387
  %3721 = vmatpush.msra.mxu0 %v3386
  %3722 = vmatmul.f32.gmra.mxu0 %v3219
  %v3723 = vpop.f32.mrf.mxu0
  %v3724 = vadd.f32 %v3701, %v3723
  %3725 = vmatmul.f32.gmra.mxu0 %v3235
  %v3726 = vpop.f32.mrf.mxu0
  %v3727 = vadd.f32 %v3704, %v3726
  %3728 = vdwg.mxu0
  %3729 = vmatpush.msra.mxu0 %v3417
  %3730 = vmatpush.msra.mxu0 %v3416
  %3731 = vmatpush.msra.mxu0 %v3415
  %3732 = vmatpush.msra.mxu0 %v3414
  %3733 = vmatpush.msra.mxu0 %v3413
  %3734 = vmatpush.msra.mxu0 %v3412
  %3735 = vmatpush.msra.mxu0 %v3411
  %3736 = vmatpush.msra.mxu0 %v3410
  %3737 = vmatpush.msra.mxu0 %v3409
  %3738 = vmatpush.msra.mxu0 %v3408
  %3739 = vmatpush.msra.mxu0 %v3407
  %3740 = vmatpush.msra.mxu0 %v3406
  %3741 = vmatpush.msra.mxu0 %v3405
  %3742 = vmatpush.msra.mxu0 %v3404
  %3743 = vmatpush.msra.mxu0 %v3403
  %3744 = vmatpush.msra.mxu0 %v3402
  %3745 = vmatmul.f32.gmra.mxu0 %v3220
  %v3746 = vpop.f32.mrf.mxu0
  %v3747 = vadd.f32 %v3724, %v3746
  %3748 = vmatmul.f32.gmra.mxu0 %v3236
  %v3749 = vpop.f32.mrf.mxu0
  %v3750 = vadd.f32 %v3727, %v3749
  %3751 = vdwg.mxu0
  %3752 = vmatpush.msra.mxu0 %v3433
  %3753 = vmatpush.msra.mxu0 %v3432
  %3754 = vmatpush.msra.mxu0 %v3431
  %3755 = vmatpush.msra.mxu0 %v3430
  %3756 = vmatpush.msra.mxu0 %v3429
  %3757 = vmatpush.msra.mxu0 %v3428
  %3758 = vmatpush.msra.mxu0 %v3427
  %3759 = vmatpush.msra.mxu0 %v3426
  %3760 = vmatpush.msra.mxu0 %v3425
  %3761 = vmatpush.msra.mxu0 %v3424
  %3762 = vmatpush.msra.mxu0 %v3423
  %3763 = vmatpush.msra.mxu0 %v3422
  %3764 = vmatpush.msra.mxu0 %v3421
  %3765 = vmatpush.msra.mxu0 %v3420
  %3766 = vmatpush.msra.mxu0 %v3419
  %3767 = vmatpush.msra.mxu0 %v3418
  %3768 = vmatmul.f32.gmra.mxu0 %v3221
  %v3769 = vpop.f32.mrf.mxu0
  %v3770 = vadd.f32 %v3747, %v3769
  %3771 = vmatmul.f32.gmra.mxu0 %v3237
  %v3772 = vpop.f32.mrf.mxu0
  %v3773 = vadd.f32 %v3750, %v3772
  %3774 = vdwg.mxu0
  %3775 = vmatpush.msra.mxu0 %v3449
  %3776 = vmatpush.msra.mxu0 %v3448
  %3777 = vmatpush.msra.mxu0 %v3447
  %3778 = vmatpush.msra.mxu0 %v3446
  %3779 = vmatpush.msra.mxu0 %v3445
  %3780 = vmatpush.msra.mxu0 %v3444
  %3781 = vmatpush.msra.mxu0 %v3443
  %3782 = vmatpush.msra.mxu0 %v3442
  %3783 = vmatpush.msra.mxu0 %v3441
  %3784 = vmatpush.msra.mxu0 %v3440
  %3785 = vmatpush.msra.mxu0 %v3439
  %3786 = vmatpush.msra.mxu0 %v3438
  %3787 = vmatpush.msra.mxu0 %v3437
  %3788 = vmatpush.msra.mxu0 %v3436
  %3789 = vmatpush.msra.mxu0 %v3435
  %3790 = vmatpush.msra.mxu0 %v3434
  %3791 = vmatmul.f32.gmra.mxu0 %v3222
  %v3792 = vpop.f32.mrf.mxu0
  %v3793 = vadd.f32 %v3770, %v3792
  %3794 = vmatmul.f32.gmra.mxu0 %v3238
  %v3795 = vpop.f32.mrf.mxu0
  %v3796 = vadd.f32 %v3773, %v3795
  %3797 = vdwg.mxu0
  %3798 = vmatpush.msra.mxu0 %v3465
  %3799 = vmatpush.msra.mxu0 %v3464
  %3800 = vmatpush.msra.mxu0 %v3463
  %3801 = vmatpush.msra.mxu0 %v3462
  %3802 = vmatpush.msra.mxu0 %v3461
  %3803 = vmatpush.msra.mxu0 %v3460
  %3804 = vmatpush.msra.mxu0 %v3459
  %3805 = vmatpush.msra.mxu0 %v3458
  %3806 = vmatpush.msra.mxu0 %v3457
  %3807 = vmatpush.msra.mxu0 %v3456
  %3808 = vmatpush.msra.mxu0 %v3455
  %3809 = vmatpush.msra.mxu0 %v3454
  %3810 = vmatpush.msra.mxu0 %v3453
  %3811 = vmatpush.msra.mxu0 %v3452
  %3812 = vmatpush.msra.mxu0 %v3451
  %3813 = vmatpush.msra.mxu0 %v3450
  %3814 = vmatmul.f32.gmra.mxu0 %v3223
  %v3815 = vpop.f32.mrf.mxu0
  %v3816 = vadd.f32 %v3793, %v3815
  %3817 = vmatmul.f32.gmra.mxu0 %v3239
  %v3818 = vpop.f32.mrf.mxu0
  %v3819 = vadd.f32 %v3796, %v3818
  %3820 = vdwg.mxu0
  %3821 = vmatpush.msra.mxu0 %v3481
  %3822 = vmatpush.msra.mxu0 %v3480
  %3823 = vmatpush.msra.mxu0 %v3479
  %3824 = vmatpush.msra.mxu0 %v3478
  %3825 = vmatpush.msra.mxu0 %v3477
  %3826 = vmatpush.msra.mxu0 %v3476
  %3827 = vmatpush.msra.mxu0 %v3475
  %3828 = vmatpush.msra.mxu0 %v3474
  %3829 = vmatpush.msra.mxu0 %v3473
  %3830 = vmatpush.msra.mxu0 %v3472
  %3831 = vmatpush.msra.mxu0 %v3471
  %3832 = vmatpush.msra.mxu0 %v3470
  %3833 = vmatpush.msra.mxu0 %v3469
  %3834 = vmatpush.msra.mxu0 %v3468
  %3835 = vmatpush.msra.mxu0 %v3467
  %3836 = vmatpush.msra.mxu0 %v3466
  %3837 = vmatmul.f32.gmra.mxu0 %v3224
  %v3838 = vpop.f32.mrf.mxu0
  %v3839 = vadd.f32 %v3816, %v3838
  %3840 = vmatmul.f32.gmra.mxu0 %v3240
  %v3841 = vpop.f32.mrf.mxu0
  %v3842 = vadd.f32 %v3819, %v3841
  %3843 = vdwg.mxu0
  %3844 = vmatpush.msra.mxu0 %v3497
  %3845 = vmatpush.msra.mxu0 %v3496
  %3846 = vmatpush.msra.mxu0 %v3495
  %3847 = vmatpush.msra.mxu0 %v3494
  %3848 = vmatpush.msra.mxu0 %v3493
  %3849 = vmatpush.msra.mxu0 %v3492
  %3850 = vmatpush.msra.mxu0 %v3491
  %3851 = vmatpush.msra.mxu0 %v3490
  %3852 = vmatpush.msra.mxu0 %v3489
  %3853 = vmatpush.msra.mxu0 %v3488
  %3854 = vmatpush.msra.mxu0 %v3487
  %3855 = vmatpush.msra.mxu0 %v3486
  %3856 = vmatpush.msra.mxu0 %v3485
  %3857 = vmatpush.msra.mxu0 %v3484
  %3858 = vmatpush.msra.mxu0 %v3483
  %3859 = vmatpush.msra.mxu0 %v3482
  %3860 = vmatmul.f32.gmra.mxu0 %v3225
  %v3861 = vpop.f32.mrf.mxu0
  %v3862 = vadd.f32 %v3839, %v3861
  %3863 = vmatmul.f32.gmra.mxu0 %v3241
  %v3864 = vpop.f32.mrf.mxu0
  %v3865 = vadd.f32 %v3842, %v3864
  %3866 = vdwg.mxu0
  %v3867 = vadd.f32 %v2734, %v3862
  %v3868 = vadd.f32 %v2735, %v3865
  %v3869 = vsel %vm2017, %v3867, 0.0
  %3870 = vadd.xlane.f32.xlu0 %v3869
  %v3871 = vpop.xlane.xlu0 %3870
  %v3872 = vsel %vm2681, %v3868, 0.0
  %3873 = vadd.xlane.f32.xlu0 %v3872
  %v3874 = vpop.xlane.xlu0 %3873
  %v3875 = vmul.f32 %v3871, %v2691
  %v3876 = vmul.f32 %v3874, %v2691
  %v3877 = vsub.f32 %v3867, %v3875
  %v3878 = vsub.f32 %v3868, %v3876
  %v3879 = vmul.f32 %v3877, %v3877
  %v3880 = vmul.f32 %v3878, %v3878
  %v3881 = vsel %vm2017, %v3879, 0.0
  %3882 = vadd.xlane.f32.xlu0 %v3881
  %v3883 = vpop.xlane.xlu0 %3882
  %v3884 = vsel %vm2681, %v3880, 0.0
  %3885 = vadd.xlane.f32.xlu0 %v3884
  %v3886 = vpop.xlane.xlu0 %3885
  %v3887 = vmul.f32 %v3883, %v2691
  %v3888 = vmul.f32 %v3886, %v2691
  %v3889 = vadd.f32 %v3887, 1e-05
  %v3890 = vadd.f32 %v3888, 1e-05
  %v3891 = vrsqrt.pop %v3889
  %v3892 = vmul.f32 %v3891, %v3889
  %v3893 = vmul.f32 %v3892, %v3891
  %v3894 = vmul.f32 0.5, %v3893
  %v3895 = vsub.f32 1.5, %v3894
  %v3896 = vmul.f32 %v3891, %v3895
  %vm3897 = vweird.f32 %v3889
  %vm3898 = vweird.f32 %v3891
  %vm3899 = vmor %vm3897, %vm3898
  %v3900 = vsel %vm3899, %v3891, %v3896
  %v3901 = vrsqrt.pop %v3890
  %v3902 = vmul.f32 %v3901, %v3890
  %v3903 = vmul.f32 %v3902, %v3901
  %v3904 = vmul.f32 0.5, %v3903
  %v3905 = vsub.f32 1.5, %v3904
  %v3906 = vmul.f32 %v3901, %v3905
  %vm3907 = vweird.f32 %v3890
  %vm3908 = vweird.f32 %v3901
  %vm3909 = vmor %vm3907, %vm3908
  %v3910 = vsel %vm3909, %v3901, %v3906
  %v3911 = vmul.f32 %v3877, %v3900
  %v3912 = vmul.f32 %v3878, %v3910
  %v3913 = vperm.slane %v2010, 6
  %v3914 = vmul.f32 %v3911, %v3913
  %v3915 = vmul.f32 %v3912, %v3913
  %v3916 = vperm.slane %v2010, 7
  %v3917 = vadd.f32 %v3914, %v3916
  %v3918 = vadd.f32 %v3915, %v3916
  %s3919 = scalar_lea.vmem %s7, 16
  %v3920 = vld [vmem:[%s3919] sm:$0xff]
  %v3921 = vld [vmem:[%s3919 + $0x8] sm:$0x1]
  %s3922 = scalar_lea.vmem %s6, 128
  %v3923 = vld [vmem:[%s3922] sm:$0xff]
  %v3924 = vld [vmem:[%s3922 + $0x8] sm:$0xff]
  %v3925 = vld [vmem:[%s3922 + $0x10] sm:$0xff]
  %v3926 = vld [vmem:[%s3922 + $0x18] sm:$0xff]
  %v3927 = vperm.slane %v3920, 0
  %v3929 = vsel %vm2017, %v3917, 0
  %v3932 = vsel %vm2017, %v3918, 0
  %3934 = vmatpush.msra.mxu0 0.0
  %3935 = vmatpush.msra.mxu0 0.0
  %3936 = vmatpush.msra.mxu0 0.0
  %3937 = vmatpush.msra.mxu0 0.0
  %3938 = vmatpush.msra.mxu0 0.0
  %3939 = vmatpush.msra.mxu0 0.0
  %3940 = vmatpush.msra.mxu0 0.0
  %3941 = vmatpush.msra.mxu0 0.0
  %3942 = vmatpush.msra.mxu0 0.0
  %3943 = vmatpush.msra.mxu0 0.0
  %3944 = vmatpush.msra.mxu0 0.0
  %3945 = vmatpush.msra.mxu0 0.0
  %3946 = vmatpush.msra.mxu0 %v3926
  %3947 = vmatpush.msra.mxu0 %v3925
  %3948 = vmatpush.msra.mxu0 %v3924
  %3949 = vmatpush.msra.mxu0 %v3923
  %3950 = vmatmul.f32.gmra.mxu0 %v3929
  %v3951 = vpop.f32.mrf.mxu0
  %v3952 = vadd.f32 %v3927, %v3951
  %3953 = vmatmul.f32.gmra.mxu0 %v3932
  %v3954 = vpop.f32.mrf.mxu0
  %v3955 = vadd.f32 %v3927, %v3954
  %3956 = vdwg.mxu0
  %s3957 = scalar_lea.vmem %s6, 160
  %v3958 = vld [vmem:[%s3957] sm:$0xff]
  %v3959 = vld [vmem:[%s3957 + $0x8] sm:$0xff]
  %v3960 = vld [vmem:[%s3957 + $0x10] sm:$0xff]
  %v3961 = vld [vmem:[%s3957 + $0x18] sm:$0xff]
  %v3962 = vperm.slane %v3920, 1
  %3963 = vmatpush.msra.mxu0 0.0
  %3964 = vmatpush.msra.mxu0 0.0
  %3965 = vmatpush.msra.mxu0 0.0
  %3966 = vmatpush.msra.mxu0 0.0
  %3967 = vmatpush.msra.mxu0 0.0
  %3968 = vmatpush.msra.mxu0 0.0
  %3969 = vmatpush.msra.mxu0 0.0
  %3970 = vmatpush.msra.mxu0 0.0
  %3971 = vmatpush.msra.mxu0 0.0
  %3972 = vmatpush.msra.mxu0 0.0
  %3973 = vmatpush.msra.mxu0 0.0
  %3974 = vmatpush.msra.mxu0 0.0
  %3975 = vmatpush.msra.mxu0 %v3961
  %3976 = vmatpush.msra.mxu0 %v3960
  %3977 = vmatpush.msra.mxu0 %v3959
  %3978 = vmatpush.msra.mxu0 %v3958
  %3979 = vmatmul.f32.gmra.mxu0 %v3929
  %v3980 = vpop.f32.mrf.mxu0
  %v3981 = vadd.f32 %v3962, %v3980
  %3982 = vmatmul.f32.gmra.mxu0 %v3932
  %v3983 = vpop.f32.mrf.mxu0
  %v3984 = vadd.f32 %v3962, %v3983
  %3985 = vdwg.mxu0
  %s3986 = scalar_lea.vmem %s6, 192
  %v3987 = vld [vmem:[%s3986] sm:$0xff]
  %v3988 = vld [vmem:[%s3986 + $0x8] sm:$0xff]
  %v3989 = vld [vmem:[%s3986 + $0x10] sm:$0xff]
  %v3990 = vld [vmem:[%s3986 + $0x18] sm:$0xff]
  %v3991 = vperm.slane %v3920, 2
  %3992 = vmatpush.msra.mxu0 0.0
  %3993 = vmatpush.msra.mxu0 0.0
  %3994 = vmatpush.msra.mxu0 0.0
  %3995 = vmatpush.msra.mxu0 0.0
  %3996 = vmatpush.msra.mxu0 0.0
  %3997 = vmatpush.msra.mxu0 0.0
  %3998 = vmatpush.msra.mxu0 0.0
  %3999 = vmatpush.msra.mxu0 0.0
  %4000 = vmatpush.msra.mxu0 0.0
  %4001 = vmatpush.msra.mxu0 0.0
  %4002 = vmatpush.msra.mxu0 0.0
  %4003 = vmatpush.msra.mxu0 0.0
  %4004 = vmatpush.msra.mxu0 %v3990
  %4005 = vmatpush.msra.mxu0 %v3989
  %4006 = vmatpush.msra.mxu0 %v3988
  %4007 = vmatpush.msra.mxu0 %v3987
  %4008 = vmatmul.f32.gmra.mxu0 %v3929
  %v4009 = vpop.f32.mrf.mxu0
  %v4010 = vadd.f32 %v3991, %v4009
  %4011 = vmatmul.f32.gmra.mxu0 %v3932
  %v4012 = vpop.f32.mrf.mxu0
  %v4013 = vadd.f32 %v3991, %v4012
  %4014 = vdwg.mxu0
  %v4016 = vsel %vm2105, %v3952, 0
  %v4019 = vsel %vm2105, %v3955, 0
  %v4022 = vsel %vm2105, %v3981, 0
  %v4025 = vsel %vm2105, %v3984, 0
  %4027 = vmatpush.xpose.msra.mxu0 0.0
  %4028 = vmatpush.xpose.msra.mxu0 0.0
  %4029 = vmatpush.xpose.msra.mxu0 0.0
  %4030 = vmatpush.xpose.msra.mxu0 0.0
  %4031 = vmatpush.xpose.msra.mxu0 0.0
  %4032 = vmatpush.xpose.msra.mxu0 0.0
  %4033 = vmatpush.xpose.msra.mxu0 0.0
  %4034 = vmatpush.xpose.msra.mxu0 0.0
  %4035 = vmatpush.xpose.msra.mxu0 0.0
  %4036 = vmatpush.xpose.msra.mxu0 0.0
  %4037 = vmatpush.xpose.msra.mxu0 0.0
  %4038 = vmatpush.xpose.msra.mxu0 0.0
  %4039 = vmatpush.xpose.msra.mxu0 0.0
  %4040 = vmatpush.xpose.msra.mxu0 0.0
  %4041 = vmatpush.xpose.msra.mxu0 %v4025
  %4042 = vmatpush.xpose.msra.mxu0 %v4022
  %4043 = vmatmul.f32.gmra.mxu0 %v4016
  %v4044 = vpop.f32.mrf.mxu0
  %v4045 = vadd.f32 0.0, %v4044
  %4046 = vmatmul.f32.gmra.mxu0 %v4019
  %v4047 = vpop.f32.mrf.mxu0
  %v4048 = vadd.f32 0.0, %v4047
  %4049 = vdwg.mxu0
  %v4050 = vmul.f32 %v4045, 0.35355338
  %v4051 = vmul.f32 %v4048, 0.35355338
  %v4052 = vadd.f32 %v4050, %v2008
  %v4053 = vadd.f32 %v4051, %v2009
  %v4054 = vsel %vm2145, %v4052, -inf
  %4055 = vmax.xlane.f32.xlu0 %v4054
  %v4056 = vpop.xlane.xlu0 %4055
  %v4057 = vsel %vm2149, %v4053, -inf
  %4058 = vmax.xlane.f32.xlu0 %v4057
  %v4059 = vpop.xlane.xlu0 %4058
  %v4060 = vsub.f32 %v4052, %v4056
  %v4061 = vsub.f32 %v4053, %v4059
  %v4062 = vmul.f32 %v4060, 1.442695
  %v4063 = vpow.pop %v4062
  %v4064 = vmul.f32 %v4061, 1.442695
  %v4065 = vpow.pop %v4064
  %v4066 = vsel %vm2145, %v4063, 0.0
  %4067 = vadd.xlane.f32.xlu0 %v4066
  %v4068 = vpop.xlane.xlu0 %4067
  %v4069 = vsel %vm2149, %v4065, 0.0
  %4070 = vadd.xlane.f32.xlu0 %v4069
  %v4071 = vpop.xlane.xlu0 %4070
  %v4072 = vrcp.pop %v4068
  %v4073 = vmul.f32 %v4068, %v4072
  %v4074 = vsub.f32 1.0, %v4073
  %v4075 = vmul.f32 %v4072, %v4074
  %v4076 = vadd.f32 %v4072, %v4075
  %vm4077 = vweird.f32 %v4068
  %vm4078 = vweird.f32 %v4072
  %vm4079 = vmor %vm4077, %vm4078
  %v4080 = vsel %vm4079, %v4072, %v4076
  %v4081 = vand.u32 2147483647, %v4068
  %vm4082 = vcmp.eq.f32.partialorder %v4081, 8.507059e+37
  %v4083 = vand.u32 %v4068, 2147483648
  %v4084 = vor.u32 1.1754944e-38, %v4083
  %v4085 = vsel %vm4082, %v4084, %v4080
  %v4086 = vmul.f32 %v4063, %v4085
  %v4087 = vrcp.pop %v4071
  %v4088 = vmul.f32 %v4071, %v4087
  %v4089 = vsub.f32 1.0, %v4088
  %v4090 = vmul.f32 %v4087, %v4089
  %v4091 = vadd.f32 %v4087, %v4090
  %vm4092 = vweird.f32 %v4071
  %vm4093 = vweird.f32 %v4087
  %vm4094 = vmor %vm4092, %vm4093
  %v4095 = vsel %vm4094, %v4087, %v4091
  %v4096 = vand.u32 2147483647, %v4071
  %vm4097 = vcmp.eq.f32.partialorder %v4096, 8.507059e+37
  %v4098 = vand.u32 %v4071, 2147483648
  %v4099 = vor.u32 1.1754944e-38, %v4098
  %v4100 = vsel %vm4097, %v4099, %v4095
  %v4101 = vmul.f32 %v4065, %v4100
  %v4103 = vsel %vm2145, %v4086, 0
  %v4106 = vsel %vm2145, %v4101, 0
  %v4109 = vsel %vm1746, %v4013, 0
  %4111 = vmatpush.msra.mxu0 0.0
  %4112 = vmatpush.msra.mxu0 0.0
  %4113 = vmatpush.msra.mxu0 0.0
  %4114 = vmatpush.msra.mxu0 0.0
  %4115 = vmatpush.msra.mxu0 0.0
  %4116 = vmatpush.msra.mxu0 0.0
  %4117 = vmatpush.msra.mxu0 0.0
  %4118 = vmatpush.msra.mxu0 0.0
  %4119 = vmatpush.msra.mxu0 0.0
  %4120 = vmatpush.msra.mxu0 0.0
  %4121 = vmatpush.msra.mxu0 0.0
  %4122 = vmatpush.msra.mxu0 0.0
  %4123 = vmatpush.msra.mxu0 0.0
  %4124 = vmatpush.msra.mxu0 0.0
  %4125 = vmatpush.msra.mxu0 %v4109
  %4126 = vmatpush.msra.mxu0 %v4010
  %4127 = vmatmul.f32.gmra.mxu0 %v4103
  %v4128 = vpop.f32.mrf.mxu0
  %v4129 = vadd.f32 0.0, %v4128
  %4130 = vmatmul.f32.gmra.mxu0 %v4106
  %v4131 = vpop.f32.mrf.mxu0
  %v4132 = vadd.f32 0.0, %v4131
  %4133 = vdwg.mxu0
  %4134 = vrot.lane.b32.xlu0 %v3952, 120
  %v4135 = vpop.permute.xlu0 %4134
  %4136 = vrot.lane.b32.xlu0 %v3955, 120
  %v4137 = vpop.permute.xlu0 %4136
  %4138 = vrot.lane.b32.xlu0 %v3981, 120
  %v4139 = vpop.permute.xlu0 %4138
  %4140 = vrot.lane.b32.xlu0 %v3984, 120
  %v4141 = vpop.permute.xlu0 %4140
  %v4142 = vsel %vm2105, %v4135, 0
  %v4144 = vsel %vm2105, %v4137, 0
  %v4146 = vsel %vm2105, %v4139, 0
  %v4148 = vsel %vm2105, %v4141, 0
  %4150 = vmatpush.xpose.msra.mxu0 0.0
  %4151 = vmatpush.xpose.msra.mxu0 0.0
  %4152 = vmatpush.xpose.msra.mxu0 0.0
  %4153 = vmatpush.xpose.msra.mxu0 0.0
  %4154 = vmatpush.xpose.msra.mxu0 0.0
  %4155 = vmatpush.xpose.msra.mxu0 0.0
  %4156 = vmatpush.xpose.msra.mxu0 0.0
  %4157 = vmatpush.xpose.msra.mxu0 0.0
  %4158 = vmatpush.xpose.msra.mxu0 0.0
  %4159 = vmatpush.xpose.msra.mxu0 0.0
  %4160 = vmatpush.xpose.msra.mxu0 0.0
  %4161 = vmatpush.xpose.msra.mxu0 0.0
  %4162 = vmatpush.xpose.msra.mxu0 0.0
  %4163 = vmatpush.xpose.msra.mxu0 0.0
  %4164 = vmatpush.xpose.msra.mxu0 %v4148
  %4165 = vmatpush.xpose.msra.mxu0 %v4146
  %4166 = vmatmul.f32.gmra.mxu0 %v4142
  %v4167 = vpop.f32.mrf.mxu0
  %v4168 = vadd.f32 0.0, %v4167
  %4169 = vmatmul.f32.gmra.mxu0 %v4144
  %v4170 = vpop.f32.mrf.mxu0
  %v4171 = vadd.f32 0.0, %v4170
  %4172 = vdwg.mxu0
  %v4173 = vmul.f32 %v4168, 0.35355338
  %v4174 = vmul.f32 %v4171, 0.35355338
  %v4175 = vadd.f32 %v4173, %v2008
  %v4176 = vadd.f32 %v4174, %v2009
  %v4177 = vsel %vm2145, %v4175, -inf
  %4178 = vmax.xlane.f32.xlu0 %v4177
  %v4179 = vpop.xlane.xlu0 %4178
  %v4180 = vsel %vm2149, %v4176, -inf
  %4181 = vmax.xlane.f32.xlu0 %v4180
  %v4182 = vpop.xlane.xlu0 %4181
  %v4183 = vsub.f32 %v4175, %v4179
  %v4184 = vsub.f32 %v4176, %v4182
  %v4185 = vmul.f32 %v4183, 1.442695
  %v4186 = vpow.pop %v4185
  %v4187 = vmul.f32 %v4184, 1.442695
  %v4188 = vpow.pop %v4187
  %v4189 = vsel %vm2145, %v4186, 0.0
  %4190 = vadd.xlane.f32.xlu0 %v4189
  %v4191 = vpop.xlane.xlu0 %4190
  %v4192 = vsel %vm2149, %v4188, 0.0
  %4193 = vadd.xlane.f32.xlu0 %v4192
  %v4194 = vpop.xlane.xlu0 %4193
  %v4195 = vrcp.pop %v4191
  %v4196 = vmul.f32 %v4191, %v4195
  %v4197 = vsub.f32 1.0, %v4196
  %v4198 = vmul.f32 %v4195, %v4197
  %v4199 = vadd.f32 %v4195, %v4198
  %vm4200 = vweird.f32 %v4191
  %vm4201 = vweird.f32 %v4195
  %vm4202 = vmor %vm4200, %vm4201
  %v4203 = vsel %vm4202, %v4195, %v4199
  %v4204 = vand.u32 2147483647, %v4191
  %vm4205 = vcmp.eq.f32.partialorder %v4204, 8.507059e+37
  %v4206 = vand.u32 %v4191, 2147483648
  %v4207 = vor.u32 1.1754944e-38, %v4206
  %v4208 = vsel %vm4205, %v4207, %v4203
  %v4209 = vmul.f32 %v4186, %v4208
  %v4210 = vrcp.pop %v4194
  %v4211 = vmul.f32 %v4194, %v4210
  %v4212 = vsub.f32 1.0, %v4211
  %v4213 = vmul.f32 %v4210, %v4212
  %v4214 = vadd.f32 %v4210, %v4213
  %vm4215 = vweird.f32 %v4194
  %vm4216 = vweird.f32 %v4210
  %vm4217 = vmor %vm4215, %vm4216
  %v4218 = vsel %vm4217, %v4210, %v4214
  %v4219 = vand.u32 2147483647, %v4194
  %vm4220 = vcmp.eq.f32.partialorder %v4219, 8.507059e+37
  %v4221 = vand.u32 %v4194, 2147483648
  %v4222 = vor.u32 1.1754944e-38, %v4221
  %v4223 = vsel %vm4220, %v4222, %v4218
  %v4224 = vmul.f32 %v4188, %v4223
  %4226 = vrot.lane.b32.xlu0 %v4010, 120
  %v4227 = vpop.permute.xlu0 %4226
  %4228 = vrot.lane.b32.xlu0 %v4013, 120
  %v4229 = vpop.permute.xlu0 %4228
  %v4232 = vsel %vm2145, %v4209, 0
  %v4235 = vsel %vm2145, %v4224, 0
  %v4237 = vsel %vm1746, %v4229, 0
  %4239 = vmatpush.msra.mxu0 0.0
  %4240 = vmatpush.msra.mxu0 0.0
  %4241 = vmatpush.msra.mxu0 0.0
  %4242 = vmatpush.msra.mxu0 0.0
  %4243 = vmatpush.msra.mxu0 0.0
  %4244 = vmatpush.msra.mxu0 0.0
  %4245 = vmatpush.msra.mxu0 0.0
  %4246 = vmatpush.msra.mxu0 0.0
  %4247 = vmatpush.msra.mxu0 0.0
  %4248 = vmatpush.msra.mxu0 0.0
  %4249 = vmatpush.msra.mxu0 0.0
  %4250 = vmatpush.msra.mxu0 0.0
  %4251 = vmatpush.msra.mxu0 0.0
  %4252 = vmatpush.msra.mxu0 0.0
  %4253 = vmatpush.msra.mxu0 %v4237
  %4254 = vmatpush.msra.mxu0 %v4227
  %4255 = vmatmul.f32.gmra.mxu0 %v4232
  %v4256 = vpop.f32.mrf.mxu0
  %v4257 = vadd.f32 0.0, %v4256
  %4258 = vmatmul.f32.gmra.mxu0 %v4235
  %v4259 = vpop.f32.mrf.mxu0
  %v4260 = vadd.f32 0.0, %v4259
  %4261 = vdwg.mxu0
  %4262 = vrot.lane.b32.xlu0 %v3952, 112
  %v4263 = vpop.permute.xlu0 %4262
  %4264 = vrot.lane.b32.xlu0 %v3955, 112
  %v4265 = vpop.permute.xlu0 %4264
  %4266 = vrot.lane.b32.xlu0 %v3981, 112
  %v4267 = vpop.permute.xlu0 %4266
  %4268 = vrot.lane.b32.xlu0 %v3984, 112
  %v4269 = vpop.permute.xlu0 %4268
  %v4270 = vsel %vm2105, %v4263, 0
  %v4272 = vsel %vm2105, %v4265, 0
  %v4274 = vsel %vm2105, %v4267, 0
  %v4276 = vsel %vm2105, %v4269, 0
  %4278 = vmatpush.xpose.msra.mxu0 0.0
  %4279 = vmatpush.xpose.msra.mxu0 0.0
  %4280 = vmatpush.xpose.msra.mxu0 0.0
  %4281 = vmatpush.xpose.msra.mxu0 0.0
  %4282 = vmatpush.xpose.msra.mxu0 0.0
  %4283 = vmatpush.xpose.msra.mxu0 0.0
  %4284 = vmatpush.xpose.msra.mxu0 0.0
  %4285 = vmatpush.xpose.msra.mxu0 0.0
  %4286 = vmatpush.xpose.msra.mxu0 0.0
  %4287 = vmatpush.xpose.msra.mxu0 0.0
  %4288 = vmatpush.xpose.msra.mxu0 0.0
  %4289 = vmatpush.xpose.msra.mxu0 0.0
  %4290 = vmatpush.xpose.msra.mxu0 0.0
  %4291 = vmatpush.xpose.msra.mxu0 0.0
  %4292 = vmatpush.xpose.msra.mxu0 %v4276
  %4293 = vmatpush.xpose.msra.mxu0 %v4274
  %4294 = vmatmul.f32.gmra.mxu0 %v4270
  %v4295 = vpop.f32.mrf.mxu0
  %v4296 = vadd.f32 0.0, %v4295
  %4297 = vmatmul.f32.gmra.mxu0 %v4272
  %v4298 = vpop.f32.mrf.mxu0
  %v4299 = vadd.f32 0.0, %v4298
  %4300 = vdwg.mxu0
  %v4301 = vmul.f32 %v4296, 0.35355338
  %v4302 = vmul.f32 %v4299, 0.35355338
  %v4303 = vadd.f32 %v4301, %v2008
  %v4304 = vadd.f32 %v4302, %v2009
  %v4305 = vsel %vm2145, %v4303, -inf
  %4306 = vmax.xlane.f32.xlu0 %v4305
  %v4307 = vpop.xlane.xlu0 %4306
  %v4308 = vsel %vm2149, %v4304, -inf
  %4309 = vmax.xlane.f32.xlu0 %v4308
  %v4310 = vpop.xlane.xlu0 %4309
  %v4311 = vsub.f32 %v4303, %v4307
  %v4312 = vsub.f32 %v4304, %v4310
  %v4313 = vmul.f32 %v4311, 1.442695
  %v4314 = vpow.pop %v4313
  %v4315 = vmul.f32 %v4312, 1.442695
  %v4316 = vpow.pop %v4315
  %v4317 = vsel %vm2145, %v4314, 0.0
  %4318 = vadd.xlane.f32.xlu0 %v4317
  %v4319 = vpop.xlane.xlu0 %4318
  %v4320 = vsel %vm2149, %v4316, 0.0
  %4321 = vadd.xlane.f32.xlu0 %v4320
  %v4322 = vpop.xlane.xlu0 %4321
  %v4323 = vrcp.pop %v4319
  %v4324 = vmul.f32 %v4319, %v4323
  %v4325 = vsub.f32 1.0, %v4324
  %v4326 = vmul.f32 %v4323, %v4325
  %v4327 = vadd.f32 %v4323, %v4326
  %vm4328 = vweird.f32 %v4319
  %vm4329 = vweird.f32 %v4323
  %vm4330 = vmor %vm4328, %vm4329
  %v4331 = vsel %vm4330, %v4323, %v4327
  %v4332 = vand.u32 2147483647, %v4319
  %vm4333 = vcmp.eq.f32.partialorder %v4332, 8.507059e+37
  %v4334 = vand.u32 %v4319, 2147483648
  %v4335 = vor.u32 1.1754944e-38, %v4334
  %v4336 = vsel %vm4333, %v4335, %v4331
  %v4337 = vmul.f32 %v4314, %v4336
  %v4338 = vrcp.pop %v4322
  %v4339 = vmul.f32 %v4322, %v4338
  %v4340 = vsub.f32 1.0, %v4339
  %v4341 = vmul.f32 %v4338, %v4340
  %v4342 = vadd.f32 %v4338, %v4341
  %vm4343 = vweird.f32 %v4322
  %vm4344 = vweird.f32 %v4338
  %vm4345 = vmor %vm4343, %vm4344
  %v4346 = vsel %vm4345, %v4338, %v4342
  %v4347 = vand.u32 2147483647, %v4322
  %vm4348 = vcmp.eq.f32.partialorder %v4347, 8.507059e+37
  %v4349 = vand.u32 %v4322, 2147483648
  %v4350 = vor.u32 1.1754944e-38, %v4349
  %v4351 = vsel %vm4348, %v4350, %v4346
  %v4352 = vmul.f32 %v4316, %v4351
  %4353 = vrot.lane.b32.xlu0 %v4010, 112
  %v4354 = vpop.permute.xlu0 %4353
  %4355 = vrot.lane.b32.xlu0 %v4013, 112
  %v4356 = vpop.permute.xlu0 %4355
  %v4359 = vsel %vm2145, %v4337, 0
  %v4362 = vsel %vm2145, %v4352, 0
  %v4364 = vsel %vm1746, %v4356, 0
  %4366 = vmatpush.msra.mxu0 0.0
  %4367 = vmatpush.msra.mxu0 0.0
  %4368 = vmatpush.msra.mxu0 0.0
  %4369 = vmatpush.msra.mxu0 0.0
  %4370 = vmatpush.msra.mxu0 0.0
  %4371 = vmatpush.msra.mxu0 0.0
  %4372 = vmatpush.msra.mxu0 0.0
  %4373 = vmatpush.msra.mxu0 0.0
  %4374 = vmatpush.msra.mxu0 0.0
  %4375 = vmatpush.msra.mxu0 0.0
  %4376 = vmatpush.msra.mxu0 0.0
  %4377 = vmatpush.msra.mxu0 0.0
  %4378 = vmatpush.msra.mxu0 0.0
  %4379 = vmatpush.msra.mxu0 0.0
  %4380 = vmatpush.msra.mxu0 %v4364
  %4381 = vmatpush.msra.mxu0 %v4354
  %4382 = vmatmul.f32.gmra.mxu0 %v4359
  %v4383 = vpop.f32.mrf.mxu0
  %v4384 = vadd.f32 0.0, %v4383
  %4385 = vmatmul.f32.gmra.mxu0 %v4362
  %v4386 = vpop.f32.mrf.mxu0
  %v4387 = vadd.f32 0.0, %v4386
  %4388 = vdwg.mxu0
  %4389 = vrot.lane.b32.xlu0 %v3952, 104
  %v4390 = vpop.permute.xlu0 %4389
  %4391 = vrot.lane.b32.xlu0 %v3955, 104
  %v4392 = vpop.permute.xlu0 %4391
  %4393 = vrot.lane.b32.xlu0 %v3981, 104
  %v4394 = vpop.permute.xlu0 %4393
  %4395 = vrot.lane.b32.xlu0 %v3984, 104
  %v4396 = vpop.permute.xlu0 %4395
  %v4397 = vsel %vm2105, %v4390, 0
  %v4399 = vsel %vm2105, %v4392, 0
  %v4401 = vsel %vm2105, %v4394, 0
  %v4403 = vsel %vm2105, %v4396, 0
  %4405 = vmatpush.xpose.msra.mxu0 0.0
  %4406 = vmatpush.xpose.msra.mxu0 0.0
  %4407 = vmatpush.xpose.msra.mxu0 0.0
  %4408 = vmatpush.xpose.msra.mxu0 0.0
  %4409 = vmatpush.xpose.msra.mxu0 0.0
  %4410 = vmatpush.xpose.msra.mxu0 0.0
  %4411 = vmatpush.xpose.msra.mxu0 0.0
  %4412 = vmatpush.xpose.msra.mxu0 0.0
  %4413 = vmatpush.xpose.msra.mxu0 0.0
  %4414 = vmatpush.xpose.msra.mxu0 0.0
  %4415 = vmatpush.xpose.msra.mxu0 0.0
  %4416 = vmatpush.xpose.msra.mxu0 0.0
  %4417 = vmatpush.xpose.msra.mxu0 0.0
  %4418 = vmatpush.xpose.msra.mxu0 0.0
  %4419 = vmatpush.xpose.msra.mxu0 %v4403
  %4420 = vmatpush.xpose.msra.mxu0 %v4401
  %4421 = vmatmul.f32.gmra.mxu0 %v4397
  %v4422 = vpop.f32.mrf.mxu0
  %v4423 = vadd.f32 0.0, %v4422
  %4424 = vmatmul.f32.gmra.mxu0 %v4399
  %v4425 = vpop.f32.mrf.mxu0
  %v4426 = vadd.f32 0.0, %v4425
  %4427 = vdwg.mxu0
  %v4428 = vmul.f32 %v4423, 0.35355338
  %v4429 = vmul.f32 %v4426, 0.35355338
  %v4430 = vadd.f32 %v4428, %v2008
  %v4431 = vadd.f32 %v4429, %v2009
  %v4432 = vsel %vm2145, %v4430, -inf
  %4433 = vmax.xlane.f32.xlu0 %v4432
  %v4434 = vpop.xlane.xlu0 %4433
  %v4435 = vsel %vm2149, %v4431, -inf
  %4436 = vmax.xlane.f32.xlu0 %v4435
  %v4437 = vpop.xlane.xlu0 %4436
  %v4438 = vsub.f32 %v4430, %v4434
  %v4439 = vsub.f32 %v4431, %v4437
  %v4440 = vmul.f32 %v4438, 1.442695
  %v4441 = vpow.pop %v4440
  %v4442 = vmul.f32 %v4439, 1.442695
  %v4443 = vpow.pop %v4442
  %v4444 = vsel %vm2145, %v4441, 0.0
  %4445 = vadd.xlane.f32.xlu0 %v4444
  %v4446 = vpop.xlane.xlu0 %4445
  %v4447 = vsel %vm2149, %v4443, 0.0
  %4448 = vadd.xlane.f32.xlu0 %v4447
  %v4449 = vpop.xlane.xlu0 %4448
  %v4450 = vrcp.pop %v4446
  %v4451 = vmul.f32 %v4446, %v4450
  %v4452 = vsub.f32 1.0, %v4451
  %v4453 = vmul.f32 %v4450, %v4452
  %v4454 = vadd.f32 %v4450, %v4453
  %vm4455 = vweird.f32 %v4446
  %vm4456 = vweird.f32 %v4450
  %vm4457 = vmor %vm4455, %vm4456
  %v4458 = vsel %vm4457, %v4450, %v4454
  %v4459 = vand.u32 2147483647, %v4446
  %vm4460 = vcmp.eq.f32.partialorder %v4459, 8.507059e+37
  %v4461 = vand.u32 %v4446, 2147483648
  %v4462 = vor.u32 1.1754944e-38, %v4461
  %v4463 = vsel %vm4460, %v4462, %v4458
  %v4464 = vmul.f32 %v4441, %v4463
  %v4465 = vrcp.pop %v4449
  %v4466 = vmul.f32 %v4449, %v4465
  %v4467 = vsub.f32 1.0, %v4466
  %v4468 = vmul.f32 %v4465, %v4467
  %v4469 = vadd.f32 %v4465, %v4468
  %vm4470 = vweird.f32 %v4449
  %vm4471 = vweird.f32 %v4465
  %vm4472 = vmor %vm4470, %vm4471
  %v4473 = vsel %vm4472, %v4465, %v4469
  %v4474 = vand.u32 2147483647, %v4449
  %vm4475 = vcmp.eq.f32.partialorder %v4474, 8.507059e+37
  %v4476 = vand.u32 %v4449, 2147483648
  %v4477 = vor.u32 1.1754944e-38, %v4476
  %v4478 = vsel %vm4475, %v4477, %v4473
  %v4479 = vmul.f32 %v4443, %v4478
  %4480 = vrot.lane.b32.xlu0 %v4010, 104
  %v4481 = vpop.permute.xlu0 %4480
  %4482 = vrot.lane.b32.xlu0 %v4013, 104
  %v4483 = vpop.permute.xlu0 %4482
  %v4486 = vsel %vm2145, %v4464, 0
  %v4489 = vsel %vm2145, %v4479, 0
  %v4491 = vsel %vm1746, %v4483, 0
  %4493 = vmatpush.msra.mxu0 0.0
  %4494 = vmatpush.msra.mxu0 0.0
  %4495 = vmatpush.msra.mxu0 0.0
  %4496 = vmatpush.msra.mxu0 0.0
  %4497 = vmatpush.msra.mxu0 0.0
  %4498 = vmatpush.msra.mxu0 0.0
  %4499 = vmatpush.msra.mxu0 0.0
  %4500 = vmatpush.msra.mxu0 0.0
  %4501 = vmatpush.msra.mxu0 0.0
  %4502 = vmatpush.msra.mxu0 0.0
  %4503 = vmatpush.msra.mxu0 0.0
  %4504 = vmatpush.msra.mxu0 0.0
  %4505 = vmatpush.msra.mxu0 0.0
  %4506 = vmatpush.msra.mxu0 0.0
  %4507 = vmatpush.msra.mxu0 %v4491
  %4508 = vmatpush.msra.mxu0 %v4481
  %4509 = vmatmul.f32.gmra.mxu0 %v4486
  %v4510 = vpop.f32.mrf.mxu0
  %v4511 = vadd.f32 0.0, %v4510
  %4512 = vmatmul.f32.gmra.mxu0 %v4489
  %v4513 = vpop.f32.mrf.mxu0
  %v4514 = vadd.f32 0.0, %v4513
  %4515 = vdwg.mxu0
  %4518 = vrot.lane.b32.xlu0 %v4257, 8
  %v4519 = vpop.permute.xlu0 %4518
  %4520 = vrot.lane.b32.xlu0 %v4260, 8
  %v4521 = vpop.permute.xlu0 %4520
  %4526 = vrot.lane.b32.xlu0 %v4384, 16
  %v4527 = vpop.permute.xlu0 %4526
  %4528 = vrot.lane.b32.xlu0 %v4387, 16
  %v4529 = vpop.permute.xlu0 %4528
  %4534 = vrot.lane.b32.xlu0 %v4511, 24
  %v4535 = vpop.permute.xlu0 %4534
  %4536 = vrot.lane.b32.xlu0 %v4514, 24
  %v4537 = vpop.permute.xlu0 %4536
  %v4540 = vsel %vm2105, %v4129, %v4519
  %v4541 = vsel %vm2105, %v4132, %v4521
  %v4542 = vsel %vm2635, %v4540, %v4527
  %v4543 = vsel %vm2635, %v4541, %v4529
  %v4544 = vsel %vm2638, %v4542, %v4535
  %v4545 = vsel %vm2638, %v4543, %v4537
  %s4546 = scalar_lea.vmem %s6, 224
  %v4547 = vld [vmem:[%s4546] sm:$0xff]
  %v4548 = vld [vmem:[%s4546 + $0x8] sm:$0xff]
  %v4549 = vld [vmem:[%s4546 + $0x10] sm:$0xff]
  %v4550 = vld [vmem:[%s4546 + $0x18] sm:$0xff]
  %v4551 = vperm.slane %v3920, 3
  %v4553 = vsel %vm2017, %v4544, 0
  %v4556 = vsel %vm2017, %v4545, 0
  %4558 = vmatpush.msra.mxu0 0.0
  %4559 = vmatpush.msra.mxu0 0.0
  %4560 = vmatpush.msra.mxu0 0.0
  %4561 = vmatpush.msra.mxu0 0.0
  %4562 = vmatpush.msra.mxu0 0.0
  %4563 = vmatpush.msra.mxu0 0.0
  %4564 = vmatpush.msra.mxu0 0.0
  %4565 = vmatpush.msra.mxu0 0.0
  %4566 = vmatpush.msra.mxu0 0.0
  %4567 = vmatpush.msra.mxu0 0.0
  %4568 = vmatpush.msra.mxu0 0.0
  %4569 = vmatpush.msra.mxu0 0.0
  %4570 = vmatpush.msra.mxu0 %v4550
  %4571 = vmatpush.msra.mxu0 %v4549
  %4572 = vmatpush.msra.mxu0 %v4548
  %4573 = vmatpush.msra.mxu0 %v4547
  %4574 = vmatmul.f32.gmra.mxu0 %v4553
  %v4575 = vpop.f32.mrf.mxu0
  %v4576 = vadd.f32 %v4551, %v4575
  %4577 = vmatmul.f32.gmra.mxu0 %v4556
  %v4578 = vpop.f32.mrf.mxu0
  %v4579 = vadd.f32 %v4551, %v4578
  %4580 = vdwg.mxu0
  %v4581 = vadd.f32 %v3917, %v4576
  %v4582 = vadd.f32 %v3918, %v4579
  %v4583 = vsel %vm2017, %v4581, 0.0
  %4584 = vadd.xlane.f32.xlu0 %v4583
  %v4585 = vpop.xlane.xlu0 %4584
  %v4586 = vsel %vm2681, %v4582, 0.0
  %4587 = vadd.xlane.f32.xlu0 %v4586
  %v4588 = vpop.xlane.xlu0 %4587
  %v4589 = vmul.f32 %v4585, %v2691
  %v4590 = vmul.f32 %v4588, %v2691
  %v4591 = vsub.f32 %v4581, %v4589
  %v4592 = vsub.f32 %v4582, %v4590
  %v4593 = vmul.f32 %v4591, %v4591
  %v4594 = vmul.f32 %v4592, %v4592
  %v4595 = vsel %vm2017, %v4593, 0.0
  %4596 = vadd.xlane.f32.xlu0 %v4595
  %v4597 = vpop.xlane.xlu0 %4596
  %v4598 = vsel %vm2681, %v4594, 0.0
  %4599 = vadd.xlane.f32.xlu0 %v4598
  %v4600 = vpop.xlane.xlu0 %4599
  %v4601 = vmul.f32 %v4597, %v2691
  %v4602 = vmul.f32 %v4600, %v2691
  %v4603 = vadd.f32 %v4601, 1e-05
  %v4604 = vadd.f32 %v4602, 1e-05
  %v4605 = vrsqrt.pop %v4603
  %v4606 = vmul.f32 %v4605, %v4603
  %v4607 = vmul.f32 %v4606, %v4605
  %v4608 = vmul.f32 0.5, %v4607
  %v4609 = vsub.f32 1.5, %v4608
  %v4610 = vmul.f32 %v4605, %v4609
  %vm4611 = vweird.f32 %v4603
  %vm4612 = vweird.f32 %v4605
  %vm4613 = vmor %vm4611, %vm4612
  %v4614 = vsel %vm4613, %v4605, %v4610
  %v4615 = vrsqrt.pop %v4604
  %v4616 = vmul.f32 %v4615, %v4604
  %v4617 = vmul.f32 %v4616, %v4615
  %v4618 = vmul.f32 0.5, %v4617
  %v4619 = vsub.f32 1.5, %v4618
  %v4620 = vmul.f32 %v4615, %v4619
  %vm4621 = vweird.f32 %v4604
  %vm4622 = vweird.f32 %v4615
  %vm4623 = vmor %vm4621, %vm4622
  %v4624 = vsel %vm4623, %v4615, %v4620
  %v4625 = vmul.f32 %v4591, %v4614
  %v4626 = vmul.f32 %v4592, %v4624
  %v4627 = vperm.slane %v3920, 4
  %v4628 = vmul.f32 %v4625, %v4627
  %v4629 = vmul.f32 %v4626, %v4627
  %v4630 = vperm.slane %v3920, 5
  %v4631 = vadd.f32 %v4628, %v4630
  %v4632 = vadd.f32 %v4629, %v4630
  %s4633 = scalar_lea.vmem %s8, 512
  %v4634 = vld [vmem:[%s4633] sm:$0xff]
  %v4635 = vld [vmem:[%s4633 + $0x8] sm:$0xff]
  %v4636 = vld [vmem:[%s4633 + $0x10] sm:$0xff]
  %v4637 = vld [vmem:[%s4633 + $0x18] sm:$0xff]
  %v4638 = vld [vmem:[%s4633 + $0x20] sm:$0xff]
  %v4639 = vld [vmem:[%s4633 + $0x28] sm:$0xff]
  %v4640 = vld [vmem:[%s4633 + $0x30] sm:$0xff]
  %v4641 = vld [vmem:[%s4633 + $0x38] sm:$0xff]
  %v4642 = vld [vmem:[%s4633 + $0x40] sm:$0xff]
  %v4643 = vld [vmem:[%s4633 + $0x48] sm:$0xff]
  %v4644 = vld [vmem:[%s4633 + $0x50] sm:$0xff]
  %v4645 = vld [vmem:[%s4633 + $0x58] sm:$0xff]
  %v4646 = vld [vmem:[%s4633 + $0x60] sm:$0xff]
  %v4647 = vld [vmem:[%s4633 + $0x68] sm:$0xff]
  %v4648 = vld [vmem:[%s4633 + $0x70] sm:$0xff]
  %v4649 = vld [vmem:[%s4633 + $0x78] sm:$0xff]
  %v4650 = vld [vmem:[%s4633 + $0x80] sm:$0xff]
  %v4651 = vld [vmem:[%s4633 + $0x88] sm:$0xff]
  %v4652 = vld [vmem:[%s4633 + $0x90] sm:$0xff]
  %v4653 = vld [vmem:[%s4633 + $0x98] sm:$0xff]
  %v4654 = vld [vmem:[%s4633 + $0xa0] sm:$0xff]
  %v4655 = vld [vmem:[%s4633 + $0xa8] sm:$0xff]
  %v4656 = vld [vmem:[%s4633 + $0xb0] sm:$0xff]
  %v4657 = vld [vmem:[%s4633 + $0xb8] sm:$0xff]
  %v4658 = vld [vmem:[%s4633 + $0xc0] sm:$0xff]
  %v4659 = vld [vmem:[%s4633 + $0xc8] sm:$0xff]
  %v4660 = vld [vmem:[%s4633 + $0xd0] sm:$0xff]
  %v4661 = vld [vmem:[%s4633 + $0xd8] sm:$0xff]
  %v4662 = vld [vmem:[%s4633 + $0xe0] sm:$0xff]
  %v4663 = vld [vmem:[%s4633 + $0xe8] sm:$0xff]
  %v4664 = vld [vmem:[%s4633 + $0xf0] sm:$0xff]
  %v4665 = vld [vmem:[%s4633 + $0xf8] sm:$0xff]
  %v4666 = vld [vmem:[%s4633 + $0x100] sm:$0xff]
  %v4667 = vld [vmem:[%s4633 + $0x108] sm:$0xff]
  %v4668 = vld [vmem:[%s4633 + $0x110] sm:$0xff]
  %v4669 = vld [vmem:[%s4633 + $0x118] sm:$0xff]
  %v4670 = vld [vmem:[%s4633 + $0x120] sm:$0xff]
  %v4671 = vld [vmem:[%s4633 + $0x128] sm:$0xff]
  %v4672 = vld [vmem:[%s4633 + $0x130] sm:$0xff]
  %v4673 = vld [vmem:[%s4633 + $0x138] sm:$0xff]
  %v4674 = vld [vmem:[%s4633 + $0x140] sm:$0xff]
  %v4675 = vld [vmem:[%s4633 + $0x148] sm:$0xff]
  %v4676 = vld [vmem:[%s4633 + $0x150] sm:$0xff]
  %v4677 = vld [vmem:[%s4633 + $0x158] sm:$0xff]
  %v4678 = vld [vmem:[%s4633 + $0x160] sm:$0xff]
  %v4679 = vld [vmem:[%s4633 + $0x168] sm:$0xff]
  %v4680 = vld [vmem:[%s4633 + $0x170] sm:$0xff]
  %v4681 = vld [vmem:[%s4633 + $0x178] sm:$0xff]
  %v4682 = vld [vmem:[%s4633 + $0x180] sm:$0xff]
  %v4683 = vld [vmem:[%s4633 + $0x188] sm:$0xff]
  %v4684 = vld [vmem:[%s4633 + $0x190] sm:$0xff]
  %v4685 = vld [vmem:[%s4633 + $0x198] sm:$0xff]
  %v4686 = vld [vmem:[%s4633 + $0x1a0] sm:$0xff]
  %v4687 = vld [vmem:[%s4633 + $0x1a8] sm:$0xff]
  %v4688 = vld [vmem:[%s4633 + $0x1b0] sm:$0xff]
  %v4689 = vld [vmem:[%s4633 + $0x1b8] sm:$0xff]
  %v4690 = vld [vmem:[%s4633 + $0x1c0] sm:$0xff]
  %v4691 = vld [vmem:[%s4633 + $0x1c8] sm:$0xff]
  %v4692 = vld [vmem:[%s4633 + $0x1d0] sm:$0xff]
  %v4693 = vld [vmem:[%s4633 + $0x1d8] sm:$0xff]
  %v4694 = vld [vmem:[%s4633 + $0x1e0] sm:$0xff]
  %v4695 = vld [vmem:[%s4633 + $0x1e8] sm:$0xff]
  %v4696 = vld [vmem:[%s4633 + $0x1f0] sm:$0xff]
  %v4697 = vld [vmem:[%s4633 + $0x1f8] sm:$0xff]
  %s4698 = scalar_lea.vmem %s10, 16
  %v4699 = vld [vmem:[%s4698] sm:$0xff]
  %v4700 = vld [vmem:[%s4698 + $0x8] sm:$0xff]
  %v4703 = vperm.slane %v4699, 0
  %v4704 = vperm.slane %v4699, 1
  %v4705 = vperm.slane %v4699, 2
  %v4706 = vperm.slane %v4699, 3
  %v4707 = vperm.slane %v4699, 4
  %v4708 = vperm.slane %v4699, 5
  %v4709 = vperm.slane %v4699, 6
  %v4710 = vperm.slane %v4699, 7
  %v4711 = vperm.slane %v4700, 0
  %v4712 = vperm.slane %v4700, 1
  %v4713 = vperm.slane %v4700, 2
  %v4714 = vperm.slane %v4700, 3
  %v4715 = vperm.slane %v4700, 4
  %v4716 = vperm.slane %v4700, 5
  %v4717 = vperm.slane %v4700, 6
  %v4718 = vperm.slane %v4700, 7
  %v4736 = vsel %vm2017, %v4631, 0
  %v4739 = vsel %vm2017, %v4632, 0
  %4741 = vmatpush.msra.mxu0 0.0
  %4742 = vmatpush.msra.mxu0 0.0
  %4743 = vmatpush.msra.mxu0 0.0
  %4744 = vmatpush.msra.mxu0 0.0
  %4745 = vmatpush.msra.mxu0 0.0
  %4746 = vmatpush.msra.mxu0 0.0
  %4747 = vmatpush.msra.mxu0 0.0
  %4748 = vmatpush.msra.mxu0 0.0
  %4749 = vmatpush.msra.mxu0 0.0
  %4750 = vmatpush.msra.mxu0 0.0
  %4751 = vmatpush.msra.mxu0 0.0
  %4752 = vmatpush.msra.mxu0 0.0
  %4753 = vmatpush.msra.mxu0 %v4682
  %4754 = vmatpush.msra.mxu0 %v4666
  %4755 = vmatpush.msra.mxu0 %v4650
  %4756 = vmatpush.msra.mxu0 %v4634
  %4757 = vmatmul.f32.gmra.mxu0 %v4736
  %v4758 = vpop.f32.mrf.mxu0
  %v4759 = vadd.f32 %v4703, %v4758
  %4760 = vmatmul.f32.gmra.mxu0 %v4739
  %v4761 = vpop.f32.mrf.mxu0
  %v4762 = vadd.f32 %v4703, %v4761
  %4763 = vdwg.mxu0
  %4764 = vmatpush.msra.mxu0 0.0
  %4765 = vmatpush.msra.mxu0 0.0
  %4766 = vmatpush.msra.mxu0 0.0
  %4767 = vmatpush.msra.mxu0 0.0
  %4768 = vmatpush.msra.mxu0 0.0
  %4769 = vmatpush.msra.mxu0 0.0
  %4770 = vmatpush.msra.mxu0 0.0
  %4771 = vmatpush.msra.mxu0 0.0
  %4772 = vmatpush.msra.mxu0 0.0
  %4773 = vmatpush.msra.mxu0 0.0
  %4774 = vmatpush.msra.mxu0 0.0
  %4775 = vmatpush.msra.mxu0 0.0
  %4776 = vmatpush.msra.mxu0 %v4683
  %4777 = vmatpush.msra.mxu0 %v4667
  %4778 = vmatpush.msra.mxu0 %v4651
  %4779 = vmatpush.msra.mxu0 %v4635
  %4780 = vmatmul.f32.gmra.mxu0 %v4736
  %v4781 = vpop.f32.mrf.mxu0
  %v4782 = vadd.f32 %v4704, %v4781
  %4783 = vmatmul.f32.gmra.mxu0 %v4739
  %v4784 = vpop.f32.mrf.mxu0
  %v4785 = vadd.f32 %v4704, %v4784
  %4786 = vdwg.mxu0
  %4787 = vmatpush.msra.mxu0 0.0
  %4788 = vmatpush.msra.mxu0 0.0
  %4789 = vmatpush.msra.mxu0 0.0
  %4790 = vmatpush.msra.mxu0 0.0
  %4791 = vmatpush.msra.mxu0 0.0
  %4792 = vmatpush.msra.mxu0 0.0
  %4793 = vmatpush.msra.mxu0 0.0
  %4794 = vmatpush.msra.mxu0 0.0
  %4795 = vmatpush.msra.mxu0 0.0
  %4796 = vmatpush.msra.mxu0 0.0
  %4797 = vmatpush.msra.mxu0 0.0
  %4798 = vmatpush.msra.mxu0 0.0
  %4799 = vmatpush.msra.mxu0 %v4684
  %4800 = vmatpush.msra.mxu0 %v4668
  %4801 = vmatpush.msra.mxu0 %v4652
  %4802 = vmatpush.msra.mxu0 %v4636
  %4803 = vmatmul.f32.gmra.mxu0 %v4736
  %v4804 = vpop.f32.mrf.mxu0
  %v4805 = vadd.f32 %v4705, %v4804
  %4806 = vmatmul.f32.gmra.mxu0 %v4739
  %v4807 = vpop.f32.mrf.mxu0
  %v4808 = vadd.f32 %v4705, %v4807
  %4809 = vdwg.mxu0
  %4810 = vmatpush.msra.mxu0 0.0
  %4811 = vmatpush.msra.mxu0 0.0
  %4812 = vmatpush.msra.mxu0 0.0
  %4813 = vmatpush.msra.mxu0 0.0
  %4814 = vmatpush.msra.mxu0 0.0
  %4815 = vmatpush.msra.mxu0 0.0
  %4816 = vmatpush.msra.mxu0 0.0
  %4817 = vmatpush.msra.mxu0 0.0
  %4818 = vmatpush.msra.mxu0 0.0
  %4819 = vmatpush.msra.mxu0 0.0
  %4820 = vmatpush.msra.mxu0 0.0
  %4821 = vmatpush.msra.mxu0 0.0
  %4822 = vmatpush.msra.mxu0 %v4685
  %4823 = vmatpush.msra.mxu0 %v4669
  %4824 = vmatpush.msra.mxu0 %v4653
  %4825 = vmatpush.msra.mxu0 %v4637
  %4826 = vmatmul.f32.gmra.mxu0 %v4736
  %v4827 = vpop.f32.mrf.mxu0
  %v4828 = vadd.f32 %v4706, %v4827
  %4829 = vmatmul.f32.gmra.mxu0 %v4739
  %v4830 = vpop.f32.mrf.mxu0
  %v4831 = vadd.f32 %v4706, %v4830
  %4832 = vdwg.mxu0
  %4833 = vmatpush.msra.mxu0 0.0
  %4834 = vmatpush.msra.mxu0 0.0
  %4835 = vmatpush.msra.mxu0 0.0
  %4836 = vmatpush.msra.mxu0 0.0
  %4837 = vmatpush.msra.mxu0 0.0
  %4838 = vmatpush.msra.mxu0 0.0
  %4839 = vmatpush.msra.mxu0 0.0
  %4840 = vmatpush.msra.mxu0 0.0
  %4841 = vmatpush.msra.mxu0 0.0
  %4842 = vmatpush.msra.mxu0 0.0
  %4843 = vmatpush.msra.mxu0 0.0
  %4844 = vmatpush.msra.mxu0 0.0
  %4845 = vmatpush.msra.mxu0 %v4686
  %4846 = vmatpush.msra.mxu0 %v4670
  %4847 = vmatpush.msra.mxu0 %v4654
  %4848 = vmatpush.msra.mxu0 %v4638
  %4849 = vmatmul.f32.gmra.mxu0 %v4736
  %v4850 = vpop.f32.mrf.mxu0
  %v4851 = vadd.f32 %v4707, %v4850
  %4852 = vmatmul.f32.gmra.mxu0 %v4739
  %v4853 = vpop.f32.mrf.mxu0
  %v4854 = vadd.f32 %v4707, %v4853
  %4855 = vdwg.mxu0
  %4856 = vmatpush.msra.mxu0 0.0
  %4857 = vmatpush.msra.mxu0 0.0
  %4858 = vmatpush.msra.mxu0 0.0
  %4859 = vmatpush.msra.mxu0 0.0
  %4860 = vmatpush.msra.mxu0 0.0
  %4861 = vmatpush.msra.mxu0 0.0
  %4862 = vmatpush.msra.mxu0 0.0
  %4863 = vmatpush.msra.mxu0 0.0
  %4864 = vmatpush.msra.mxu0 0.0
  %4865 = vmatpush.msra.mxu0 0.0
  %4866 = vmatpush.msra.mxu0 0.0
  %4867 = vmatpush.msra.mxu0 0.0
  %4868 = vmatpush.msra.mxu0 %v4687
  %4869 = vmatpush.msra.mxu0 %v4671
  %4870 = vmatpush.msra.mxu0 %v4655
  %4871 = vmatpush.msra.mxu0 %v4639
  %4872 = vmatmul.f32.gmra.mxu0 %v4736
  %v4873 = vpop.f32.mrf.mxu0
  %v4874 = vadd.f32 %v4708, %v4873
  %4875 = vmatmul.f32.gmra.mxu0 %v4739
  %v4876 = vpop.f32.mrf.mxu0
  %v4877 = vadd.f32 %v4708, %v4876
  %4878 = vdwg.mxu0
  %4879 = vmatpush.msra.mxu0 0.0
  %4880 = vmatpush.msra.mxu0 0.0
  %4881 = vmatpush.msra.mxu0 0.0
  %4882 = vmatpush.msra.mxu0 0.0
  %4883 = vmatpush.msra.mxu0 0.0
  %4884 = vmatpush.msra.mxu0 0.0
  %4885 = vmatpush.msra.mxu0 0.0
  %4886 = vmatpush.msra.mxu0 0.0
  %4887 = vmatpush.msra.mxu0 0.0
  %4888 = vmatpush.msra.mxu0 0.0
  %4889 = vmatpush.msra.mxu0 0.0
  %4890 = vmatpush.msra.mxu0 0.0
  %4891 = vmatpush.msra.mxu0 %v4688
  %4892 = vmatpush.msra.mxu0 %v4672
  %4893 = vmatpush.msra.mxu0 %v4656
  %4894 = vmatpush.msra.mxu0 %v4640
  %4895 = vmatmul.f32.gmra.mxu0 %v4736
  %v4896 = vpop.f32.mrf.mxu0
  %v4897 = vadd.f32 %v4709, %v4896
  %4898 = vmatmul.f32.gmra.mxu0 %v4739
  %v4899 = vpop.f32.mrf.mxu0
  %v4900 = vadd.f32 %v4709, %v4899
  %4901 = vdwg.mxu0
  %4902 = vmatpush.msra.mxu0 0.0
  %4903 = vmatpush.msra.mxu0 0.0
  %4904 = vmatpush.msra.mxu0 0.0
  %4905 = vmatpush.msra.mxu0 0.0
  %4906 = vmatpush.msra.mxu0 0.0
  %4907 = vmatpush.msra.mxu0 0.0
  %4908 = vmatpush.msra.mxu0 0.0
  %4909 = vmatpush.msra.mxu0 0.0
  %4910 = vmatpush.msra.mxu0 0.0
  %4911 = vmatpush.msra.mxu0 0.0
  %4912 = vmatpush.msra.mxu0 0.0
  %4913 = vmatpush.msra.mxu0 0.0
  %4914 = vmatpush.msra.mxu0 %v4689
  %4915 = vmatpush.msra.mxu0 %v4673
  %4916 = vmatpush.msra.mxu0 %v4657
  %4917 = vmatpush.msra.mxu0 %v4641
  %4918 = vmatmul.f32.gmra.mxu0 %v4736
  %v4919 = vpop.f32.mrf.mxu0
  %v4920 = vadd.f32 %v4710, %v4919
  %4921 = vmatmul.f32.gmra.mxu0 %v4739
  %v4922 = vpop.f32.mrf.mxu0
  %v4923 = vadd.f32 %v4710, %v4922
  %4924 = vdwg.mxu0
  %4925 = vmatpush.msra.mxu0 0.0
  %4926 = vmatpush.msra.mxu0 0.0
  %4927 = vmatpush.msra.mxu0 0.0
  %4928 = vmatpush.msra.mxu0 0.0
  %4929 = vmatpush.msra.mxu0 0.0
  %4930 = vmatpush.msra.mxu0 0.0
  %4931 = vmatpush.msra.mxu0 0.0
  %4932 = vmatpush.msra.mxu0 0.0
  %4933 = vmatpush.msra.mxu0 0.0
  %4934 = vmatpush.msra.mxu0 0.0
  %4935 = vmatpush.msra.mxu0 0.0
  %4936 = vmatpush.msra.mxu0 0.0
  %4937 = vmatpush.msra.mxu0 %v4690
  %4938 = vmatpush.msra.mxu0 %v4674
  %4939 = vmatpush.msra.mxu0 %v4658
  %4940 = vmatpush.msra.mxu0 %v4642
  %4941 = vmatmul.f32.gmra.mxu0 %v4736
  %v4942 = vpop.f32.mrf.mxu0
  %v4943 = vadd.f32 %v4711, %v4942
  %4944 = vmatmul.f32.gmra.mxu0 %v4739
  %v4945 = vpop.f32.mrf.mxu0
  %v4946 = vadd.f32 %v4711, %v4945
  %4947 = vdwg.mxu0
  %4948 = vmatpush.msra.mxu0 0.0
  %4949 = vmatpush.msra.mxu0 0.0
  %4950 = vmatpush.msra.mxu0 0.0
  %4951 = vmatpush.msra.mxu0 0.0
  %4952 = vmatpush.msra.mxu0 0.0
  %4953 = vmatpush.msra.mxu0 0.0
  %4954 = vmatpush.msra.mxu0 0.0
  %4955 = vmatpush.msra.mxu0 0.0
  %4956 = vmatpush.msra.mxu0 0.0
  %4957 = vmatpush.msra.mxu0 0.0
  %4958 = vmatpush.msra.mxu0 0.0
  %4959 = vmatpush.msra.mxu0 0.0
  %4960 = vmatpush.msra.mxu0 %v4691
  %4961 = vmatpush.msra.mxu0 %v4675
  %4962 = vmatpush.msra.mxu0 %v4659
  %4963 = vmatpush.msra.mxu0 %v4643
  %4964 = vmatmul.f32.gmra.mxu0 %v4736
  %v4965 = vpop.f32.mrf.mxu0
  %v4966 = vadd.f32 %v4712, %v4965
  %4967 = vmatmul.f32.gmra.mxu0 %v4739
  %v4968 = vpop.f32.mrf.mxu0
  %v4969 = vadd.f32 %v4712, %v4968
  %4970 = vdwg.mxu0
  %4971 = vmatpush.msra.mxu0 0.0
  %4972 = vmatpush.msra.mxu0 0.0
  %4973 = vmatpush.msra.mxu0 0.0
  %4974 = vmatpush.msra.mxu0 0.0
  %4975 = vmatpush.msra.mxu0 0.0
  %4976 = vmatpush.msra.mxu0 0.0
  %4977 = vmatpush.msra.mxu0 0.0
  %4978 = vmatpush.msra.mxu0 0.0
  %4979 = vmatpush.msra.mxu0 0.0
  %4980 = vmatpush.msra.mxu0 0.0
  %4981 = vmatpush.msra.mxu0 0.0
  %4982 = vmatpush.msra.mxu0 0.0
  %4983 = vmatpush.msra.mxu0 %v4692
  %4984 = vmatpush.msra.mxu0 %v4676
  %4985 = vmatpush.msra.mxu0 %v4660
  %4986 = vmatpush.msra.mxu0 %v4644
  %4987 = vmatmul.f32.gmra.mxu0 %v4736
  %v4988 = vpop.f32.mrf.mxu0
  %v4989 = vadd.f32 %v4713, %v4988
  %4990 = vmatmul.f32.gmra.mxu0 %v4739
  %v4991 = vpop.f32.mrf.mxu0
  %v4992 = vadd.f32 %v4713, %v4991
  %4993 = vdwg.mxu0
  %4994 = vmatpush.msra.mxu0 0.0
  %4995 = vmatpush.msra.mxu0 0.0
  %4996 = vmatpush.msra.mxu0 0.0
  %4997 = vmatpush.msra.mxu0 0.0
  %4998 = vmatpush.msra.mxu0 0.0
  %4999 = vmatpush.msra.mxu0 0.0
  %5000 = vmatpush.msra.mxu0 0.0
  %5001 = vmatpush.msra.mxu0 0.0
  %5002 = vmatpush.msra.mxu0 0.0
  %5003 = vmatpush.msra.mxu0 0.0
  %5004 = vmatpush.msra.mxu0 0.0
  %5005 = vmatpush.msra.mxu0 0.0
  %5006 = vmatpush.msra.mxu0 %v4693
  %5007 = vmatpush.msra.mxu0 %v4677
  %5008 = vmatpush.msra.mxu0 %v4661
  %5009 = vmatpush.msra.mxu0 %v4645
  %5010 = vmatmul.f32.gmra.mxu0 %v4736
  %v5011 = vpop.f32.mrf.mxu0
  %v5012 = vadd.f32 %v4714, %v5011
  %5013 = vmatmul.f32.gmra.mxu0 %v4739
  %v5014 = vpop.f32.mrf.mxu0
  %v5015 = vadd.f32 %v4714, %v5014
  %5016 = vdwg.mxu0
  %5017 = vmatpush.msra.mxu0 0.0
  %5018 = vmatpush.msra.mxu0 0.0
  %5019 = vmatpush.msra.mxu0 0.0
  %5020 = vmatpush.msra.mxu0 0.0
  %5021 = vmatpush.msra.mxu0 0.0
  %5022 = vmatpush.msra.mxu0 0.0
  %5023 = vmatpush.msra.mxu0 0.0
  %5024 = vmatpush.msra.mxu0 0.0
  %5025 = vmatpush.msra.mxu0 0.0
  %5026 = vmatpush.msra.mxu0 0.0
  %5027 = vmatpush.msra.mxu0 0.0
  %5028 = vmatpush.msra.mxu0 0.0
  %5029 = vmatpush.msra.mxu0 %v4694
  %5030 = vmatpush.msra.mxu0 %v4678
  %5031 = vmatpush.msra.mxu0 %v4662
  %5032 = vmatpush.msra.mxu0 %v4646
  %5033 = vmatmul.f32.gmra.mxu0 %v4736
  %v5034 = vpop.f32.mrf.mxu0
  %v5035 = vadd.f32 %v4715, %v5034
  %5036 = vmatmul.f32.gmra.mxu0 %v4739
  %v5037 = vpop.f32.mrf.mxu0
  %v5038 = vadd.f32 %v4715, %v5037
  %5039 = vdwg.mxu0
  %5040 = vmatpush.msra.mxu0 0.0
  %5041 = vmatpush.msra.mxu0 0.0
  %5042 = vmatpush.msra.mxu0 0.0
  %5043 = vmatpush.msra.mxu0 0.0
  %5044 = vmatpush.msra.mxu0 0.0
  %5045 = vmatpush.msra.mxu0 0.0
  %5046 = vmatpush.msra.mxu0 0.0
  %5047 = vmatpush.msra.mxu0 0.0
  %5048 = vmatpush.msra.mxu0 0.0
  %5049 = vmatpush.msra.mxu0 0.0
  %5050 = vmatpush.msra.mxu0 0.0
  %5051 = vmatpush.msra.mxu0 0.0
  %5052 = vmatpush.msra.mxu0 %v4695
  %5053 = vmatpush.msra.mxu0 %v4679
  %5054 = vmatpush.msra.mxu0 %v4663
  %5055 = vmatpush.msra.mxu0 %v4647
  %5056 = vmatmul.f32.gmra.mxu0 %v4736
  %v5057 = vpop.f32.mrf.mxu0
  %v5058 = vadd.f32 %v4716, %v5057
  %5059 = vmatmul.f32.gmra.mxu0 %v4739
  %v5060 = vpop.f32.mrf.mxu0
  %v5061 = vadd.f32 %v4716, %v5060
  %5062 = vdwg.mxu0
  %5063 = vmatpush.msra.mxu0 0.0
  %5064 = vmatpush.msra.mxu0 0.0
  %5065 = vmatpush.msra.mxu0 0.0
  %5066 = vmatpush.msra.mxu0 0.0
  %5067 = vmatpush.msra.mxu0 0.0
  %5068 = vmatpush.msra.mxu0 0.0
  %5069 = vmatpush.msra.mxu0 0.0
  %5070 = vmatpush.msra.mxu0 0.0
  %5071 = vmatpush.msra.mxu0 0.0
  %5072 = vmatpush.msra.mxu0 0.0
  %5073 = vmatpush.msra.mxu0 0.0
  %5074 = vmatpush.msra.mxu0 0.0
  %5075 = vmatpush.msra.mxu0 %v4696
  %5076 = vmatpush.msra.mxu0 %v4680
  %5077 = vmatpush.msra.mxu0 %v4664
  %5078 = vmatpush.msra.mxu0 %v4648
  %5079 = vmatmul.f32.gmra.mxu0 %v4736
  %v5080 = vpop.f32.mrf.mxu0
  %v5081 = vadd.f32 %v4717, %v5080
  %5082 = vmatmul.f32.gmra.mxu0 %v4739
  %v5083 = vpop.f32.mrf.mxu0
  %v5084 = vadd.f32 %v4717, %v5083
  %5085 = vdwg.mxu0
  %5086 = vmatpush.msra.mxu0 0.0
  %5087 = vmatpush.msra.mxu0 0.0
  %5088 = vmatpush.msra.mxu0 0.0
  %5089 = vmatpush.msra.mxu0 0.0
  %5090 = vmatpush.msra.mxu0 0.0
  %5091 = vmatpush.msra.mxu0 0.0
  %5092 = vmatpush.msra.mxu0 0.0
  %5093 = vmatpush.msra.mxu0 0.0
  %5094 = vmatpush.msra.mxu0 0.0
  %5095 = vmatpush.msra.mxu0 0.0
  %5096 = vmatpush.msra.mxu0 0.0
  %5097 = vmatpush.msra.mxu0 0.0
  %5098 = vmatpush.msra.mxu0 %v4697
  %5099 = vmatpush.msra.mxu0 %v4681
  %5100 = vmatpush.msra.mxu0 %v4665
  %5101 = vmatpush.msra.mxu0 %v4649
  %5102 = vmatmul.f32.gmra.mxu0 %v4736
  %v5103 = vpop.f32.mrf.mxu0
  %v5104 = vadd.f32 %v4718, %v5103
  %5105 = vmatmul.f32.gmra.mxu0 %v4739
  %v5106 = vpop.f32.mrf.mxu0
  %v5107 = vadd.f32 %v4718, %v5106
  %5108 = vdwg.mxu0
  %v5109 = vmax.f32 %v4759, 0.0
  %v5110 = vmax.f32 %v4782, 0.0
  %v5111 = vmax.f32 %v4805, 0.0
  %v5112 = vmax.f32 %v4828, 0.0
  %v5113 = vmax.f32 %v4851, 0.0
  %v5114 = vmax.f32 %v4874, 0.0
  %v5115 = vmax.f32 %v4897, 0.0
  %v5116 = vmax.f32 %v4920, 0.0
  %v5117 = vmax.f32 %v4943, 0.0
  %v5118 = vmax.f32 %v4966, 0.0
  %v5119 = vmax.f32 %v4989, 0.0
  %v5120 = vmax.f32 %v5012, 0.0
  %v5121 = vmax.f32 %v5035, 0.0
  %v5122 = vmax.f32 %v5058, 0.0
  %v5123 = vmax.f32 %v5081, 0.0
  %v5124 = vmax.f32 %v5104, 0.0
  %v5125 = vmax.f32 %v4762, 0.0
  %v5126 = vmax.f32 %v4785, 0.0
  %v5127 = vmax.f32 %v4808, 0.0
  %v5128 = vmax.f32 %v4831, 0.0
  %v5129 = vmax.f32 %v4854, 0.0
  %v5130 = vmax.f32 %v4877, 0.0
  %v5131 = vmax.f32 %v4900, 0.0
  %v5132 = vmax.f32 %v4923, 0.0
  %v5133 = vmax.f32 %v4946, 0.0
  %v5134 = vmax.f32 %v4969, 0.0
  %v5135 = vmax.f32 %v4992, 0.0
  %v5136 = vmax.f32 %v5015, 0.0
  %v5137 = vmax.f32 %v5038, 0.0
  %v5138 = vmax.f32 %v5061, 0.0
  %v5139 = vmax.f32 %v5084, 0.0
  %v5140 = vmax.f32 %v5107, 0.0
  %s5141 = scalar_lea.vmem %s9, 2048
  %v5142 = vld [vmem:[%s5141] sm:$0xff]
  %v5143 = vld [vmem:[%s5141 + $0x8] sm:$0xff]
  %v5144 = vld [vmem:[%s5141 + $0x10] sm:$0xff]
  %v5145 = vld [vmem:[%s5141 + $0x18] sm:$0xff]
  %v5146 = vld [vmem:[%s5141 + $0x20] sm:$0xff]
  %v5147 = vld [vmem:[%s5141 + $0x28] sm:$0xff]
  %v5148 = vld [vmem:[%s5141 + $0x30] sm:$0xff]
  %v5149 = vld [vmem:[%s5141 + $0x38] sm:$0xff]
  %v5150 = vld [vmem:[%s5141 + $0x40] sm:$0xff]
  %v5151 = vld [vmem:[%s5141 + $0x48] sm:$0xff]
  %v5152 = vld [vmem:[%s5141 + $0x50] sm:$0xff]
  %v5153 = vld [vmem:[%s5141 + $0x58] sm:$0xff]
  %v5154 = vld [vmem:[%s5141 + $0x60] sm:$0xff]
  %v5155 = vld [vmem:[%s5141 + $0x68] sm:$0xff]
  %v5156 = vld [vmem:[%s5141 + $0x70] sm:$0xff]
  %v5157 = vld [vmem:[%s5141 + $0x78] sm:$0xff]
  %v5158 = vld [vmem:[%s5141 + $0x80] sm:$0xff]
  %v5159 = vld [vmem:[%s5141 + $0x88] sm:$0xff]
  %v5160 = vld [vmem:[%s5141 + $0x90] sm:$0xff]
  %v5161 = vld [vmem:[%s5141 + $0x98] sm:$0xff]
  %v5162 = vld [vmem:[%s5141 + $0xa0] sm:$0xff]
  %v5163 = vld [vmem:[%s5141 + $0xa8] sm:$0xff]
  %v5164 = vld [vmem:[%s5141 + $0xb0] sm:$0xff]
  %v5165 = vld [vmem:[%s5141 + $0xb8] sm:$0xff]
  %v5166 = vld [vmem:[%s5141 + $0xc0] sm:$0xff]
  %v5167 = vld [vmem:[%s5141 + $0xc8] sm:$0xff]
  %v5168 = vld [vmem:[%s5141 + $0xd0] sm:$0xff]
  %v5169 = vld [vmem:[%s5141 + $0xd8] sm:$0xff]
  %v5170 = vld [vmem:[%s5141 + $0xe0] sm:$0xff]
  %v5171 = vld [vmem:[%s5141 + $0xe8] sm:$0xff]
  %v5172 = vld [vmem:[%s5141 + $0xf0] sm:$0xff]
  %v5173 = vld [vmem:[%s5141 + $0xf8] sm:$0xff]
  %v5174 = vld [vmem:[%s5141 + $0x100] sm:$0xff]
  %v5175 = vld [vmem:[%s5141 + $0x108] sm:$0xff]
  %v5176 = vld [vmem:[%s5141 + $0x110] sm:$0xff]
  %v5177 = vld [vmem:[%s5141 + $0x118] sm:$0xff]
  %v5178 = vld [vmem:[%s5141 + $0x120] sm:$0xff]
  %v5179 = vld [vmem:[%s5141 + $0x128] sm:$0xff]
  %v5180 = vld [vmem:[%s5141 + $0x130] sm:$0xff]
  %v5181 = vld [vmem:[%s5141 + $0x138] sm:$0xff]
  %v5182 = vld [vmem:[%s5141 + $0x140] sm:$0xff]
  %v5183 = vld [vmem:[%s5141 + $0x148] sm:$0xff]
  %v5184 = vld [vmem:[%s5141 + $0x150] sm:$0xff]
  %v5185 = vld [vmem:[%s5141 + $0x158] sm:$0xff]
  %v5186 = vld [vmem:[%s5141 + $0x160] sm:$0xff]
  %v5187 = vld [vmem:[%s5141 + $0x168] sm:$0xff]
  %v5188 = vld [vmem:[%s5141 + $0x170] sm:$0xff]
  %v5189 = vld [vmem:[%s5141 + $0x178] sm:$0xff]
  %v5190 = vld [vmem:[%s5141 + $0x180] sm:$0xff]
  %v5191 = vld [vmem:[%s5141 + $0x188] sm:$0xff]
  %v5192 = vld [vmem:[%s5141 + $0x190] sm:$0xff]
  %v5193 = vld [vmem:[%s5141 + $0x198] sm:$0xff]
  %v5194 = vld [vmem:[%s5141 + $0x1a0] sm:$0xff]
  %v5195 = vld [vmem:[%s5141 + $0x1a8] sm:$0xff]
  %v5196 = vld [vmem:[%s5141 + $0x1b0] sm:$0xff]
  %v5197 = vld [vmem:[%s5141 + $0x1b8] sm:$0xff]
  %v5198 = vld [vmem:[%s5141 + $0x1c0] sm:$0xff]
  %v5199 = vld [vmem:[%s5141 + $0x1c8] sm:$0xff]
  %v5200 = vld [vmem:[%s5141 + $0x1d0] sm:$0xff]
  %v5201 = vld [vmem:[%s5141 + $0x1d8] sm:$0xff]
  %v5202 = vld [vmem:[%s5141 + $0x1e0] sm:$0xff]
  %v5203 = vld [vmem:[%s5141 + $0x1e8] sm:$0xff]
  %v5204 = vld [vmem:[%s5141 + $0x1f0] sm:$0xff]
  %v5205 = vld [vmem:[%s5141 + $0x1f8] sm:$0xff]
  %v5206 = vld [vmem:[%s5141 + $0x200] sm:$0xff]
  %v5207 = vld [vmem:[%s5141 + $0x208] sm:$0xff]
  %v5208 = vld [vmem:[%s5141 + $0x210] sm:$0xff]
  %v5209 = vld [vmem:[%s5141 + $0x218] sm:$0xff]
  %v5210 = vld [vmem:[%s5141 + $0x220] sm:$0xff]
  %v5211 = vld [vmem:[%s5141 + $0x228] sm:$0xff]
  %v5212 = vld [vmem:[%s5141 + $0x230] sm:$0xff]
  %v5213 = vld [vmem:[%s5141 + $0x238] sm:$0xff]
  %v5214 = vld [vmem:[%s5141 + $0x240] sm:$0xff]
  %v5215 = vld [vmem:[%s5141 + $0x248] sm:$0xff]
  %v5216 = vld [vmem:[%s5141 + $0x250] sm:$0xff]
  %v5217 = vld [vmem:[%s5141 + $0x258] sm:$0xff]
  %v5218 = vld [vmem:[%s5141 + $0x260] sm:$0xff]
  %v5219 = vld [vmem:[%s5141 + $0x268] sm:$0xff]
  %v5220 = vld [vmem:[%s5141 + $0x270] sm:$0xff]
  %v5221 = vld [vmem:[%s5141 + $0x278] sm:$0xff]
  %v5222 = vld [vmem:[%s5141 + $0x280] sm:$0xff]
  %v5223 = vld [vmem:[%s5141 + $0x288] sm:$0xff]
  %v5224 = vld [vmem:[%s5141 + $0x290] sm:$0xff]
  %v5225 = vld [vmem:[%s5141 + $0x298] sm:$0xff]
  %v5226 = vld [vmem:[%s5141 + $0x2a0] sm:$0xff]
  %v5227 = vld [vmem:[%s5141 + $0x2a8] sm:$0xff]
  %v5228 = vld [vmem:[%s5141 + $0x2b0] sm:$0xff]
  %v5229 = vld [vmem:[%s5141 + $0x2b8] sm:$0xff]
  %v5230 = vld [vmem:[%s5141 + $0x2c0] sm:$0xff]
  %v5231 = vld [vmem:[%s5141 + $0x2c8] sm:$0xff]
  %v5232 = vld [vmem:[%s5141 + $0x2d0] sm:$0xff]
  %v5233 = vld [vmem:[%s5141 + $0x2d8] sm:$0xff]
  %v5234 = vld [vmem:[%s5141 + $0x2e0] sm:$0xff]
  %v5235 = vld [vmem:[%s5141 + $0x2e8] sm:$0xff]
  %v5236 = vld [vmem:[%s5141 + $0x2f0] sm:$0xff]
  %v5237 = vld [vmem:[%s5141 + $0x2f8] sm:$0xff]
  %v5238 = vld [vmem:[%s5141 + $0x300] sm:$0xff]
  %v5239 = vld [vmem:[%s5141 + $0x308] sm:$0xff]
  %v5240 = vld [vmem:[%s5141 + $0x310] sm:$0xff]
  %v5241 = vld [vmem:[%s5141 + $0x318] sm:$0xff]
  %v5242 = vld [vmem:[%s5141 + $0x320] sm:$0xff]
  %v5243 = vld [vmem:[%s5141 + $0x328] sm:$0xff]
  %v5244 = vld [vmem:[%s5141 + $0x330] sm:$0xff]
  %v5245 = vld [vmem:[%s5141 + $0x338] sm:$0xff]
  %v5246 = vld [vmem:[%s5141 + $0x340] sm:$0xff]
  %v5247 = vld [vmem:[%s5141 + $0x348] sm:$0xff]
  %v5248 = vld [vmem:[%s5141 + $0x350] sm:$0xff]
  %v5249 = vld [vmem:[%s5141 + $0x358] sm:$0xff]
  %v5250 = vld [vmem:[%s5141 + $0x360] sm:$0xff]
  %v5251 = vld [vmem:[%s5141 + $0x368] sm:$0xff]
  %v5252 = vld [vmem:[%s5141 + $0x370] sm:$0xff]
  %v5253 = vld [vmem:[%s5141 + $0x378] sm:$0xff]
  %v5254 = vld [vmem:[%s5141 + $0x380] sm:$0xff]
  %v5255 = vld [vmem:[%s5141 + $0x388] sm:$0xff]
  %v5256 = vld [vmem:[%s5141 + $0x390] sm:$0xff]
  %v5257 = vld [vmem:[%s5141 + $0x398] sm:$0xff]
  %v5258 = vld [vmem:[%s5141 + $0x3a0] sm:$0xff]
  %v5259 = vld [vmem:[%s5141 + $0x3a8] sm:$0xff]
  %v5260 = vld [vmem:[%s5141 + $0x3b0] sm:$0xff]
  %v5261 = vld [vmem:[%s5141 + $0x3b8] sm:$0xff]
  %v5262 = vld [vmem:[%s5141 + $0x3c0] sm:$0xff]
  %v5263 = vld [vmem:[%s5141 + $0x3c8] sm:$0xff]
  %v5264 = vld [vmem:[%s5141 + $0x3d0] sm:$0xff]
  %v5265 = vld [vmem:[%s5141 + $0x3d8] sm:$0xff]
  %v5266 = vld [vmem:[%s5141 + $0x3e0] sm:$0xff]
  %v5267 = vld [vmem:[%s5141 + $0x3e8] sm:$0xff]
  %v5268 = vld [vmem:[%s5141 + $0x3f0] sm:$0xff]
  %v5269 = vld [vmem:[%s5141 + $0x3f8] sm:$0xff]
  %v5270 = vld [vmem:[%s5141 + $0x400] sm:$0xff]
  %v5271 = vld [vmem:[%s5141 + $0x408] sm:$0xff]
  %v5272 = vld [vmem:[%s5141 + $0x410] sm:$0xff]
  %v5273 = vld [vmem:[%s5141 + $0x418] sm:$0xff]
  %v5274 = vld [vmem:[%s5141 + $0x420] sm:$0xff]
  %v5275 = vld [vmem:[%s5141 + $0x428] sm:$0xff]
  %v5276 = vld [vmem:[%s5141 + $0x430] sm:$0xff]
  %v5277 = vld [vmem:[%s5141 + $0x438] sm:$0xff]
  %v5278 = vld [vmem:[%s5141 + $0x440] sm:$0xff]
  %v5279 = vld [vmem:[%s5141 + $0x448] sm:$0xff]
  %v5280 = vld [vmem:[%s5141 + $0x450] sm:$0xff]
  %v5281 = vld [vmem:[%s5141 + $0x458] sm:$0xff]
  %v5282 = vld [vmem:[%s5141 + $0x460] sm:$0xff]
  %v5283 = vld [vmem:[%s5141 + $0x468] sm:$0xff]
  %v5284 = vld [vmem:[%s5141 + $0x470] sm:$0xff]
  %v5285 = vld [vmem:[%s5141 + $0x478] sm:$0xff]
  %v5286 = vld [vmem:[%s5141 + $0x480] sm:$0xff]
  %v5287 = vld [vmem:[%s5141 + $0x488] sm:$0xff]
  %v5288 = vld [vmem:[%s5141 + $0x490] sm:$0xff]
  %v5289 = vld [vmem:[%s5141 + $0x498] sm:$0xff]
  %v5290 = vld [vmem:[%s5141 + $0x4a0] sm:$0xff]
  %v5291 = vld [vmem:[%s5141 + $0x4a8] sm:$0xff]
  %v5292 = vld [vmem:[%s5141 + $0x4b0] sm:$0xff]
  %v5293 = vld [vmem:[%s5141 + $0x4b8] sm:$0xff]
  %v5294 = vld [vmem:[%s5141 + $0x4c0] sm:$0xff]
  %v5295 = vld [vmem:[%s5141 + $0x4c8] sm:$0xff]
  %v5296 = vld [vmem:[%s5141 + $0x4d0] sm:$0xff]
  %v5297 = vld [vmem:[%s5141 + $0x4d8] sm:$0xff]
  %v5298 = vld [vmem:[%s5141 + $0x4e0] sm:$0xff]
  %v5299 = vld [vmem:[%s5141 + $0x4e8] sm:$0xff]
  %v5300 = vld [vmem:[%s5141 + $0x4f0] sm:$0xff]
  %v5301 = vld [vmem:[%s5141 + $0x4f8] sm:$0xff]
  %v5302 = vld [vmem:[%s5141 + $0x500] sm:$0xff]
  %v5303 = vld [vmem:[%s5141 + $0x508] sm:$0xff]
  %v5304 = vld [vmem:[%s5141 + $0x510] sm:$0xff]
  %v5305 = vld [vmem:[%s5141 + $0x518] sm:$0xff]
  %v5306 = vld [vmem:[%s5141 + $0x520] sm:$0xff]
  %v5307 = vld [vmem:[%s5141 + $0x528] sm:$0xff]
  %v5308 = vld [vmem:[%s5141 + $0x530] sm:$0xff]
  %v5309 = vld [vmem:[%s5141 + $0x538] sm:$0xff]
  %v5310 = vld [vmem:[%s5141 + $0x540] sm:$0xff]
  %v5311 = vld [vmem:[%s5141 + $0x548] sm:$0xff]
  %v5312 = vld [vmem:[%s5141 + $0x550] sm:$0xff]
  %v5313 = vld [vmem:[%s5141 + $0x558] sm:$0xff]
  %v5314 = vld [vmem:[%s5141 + $0x560] sm:$0xff]
  %v5315 = vld [vmem:[%s5141 + $0x568] sm:$0xff]
  %v5316 = vld [vmem:[%s5141 + $0x570] sm:$0xff]
  %v5317 = vld [vmem:[%s5141 + $0x578] sm:$0xff]
  %v5318 = vld [vmem:[%s5141 + $0x580] sm:$0xff]
  %v5319 = vld [vmem:[%s5141 + $0x588] sm:$0xff]
  %v5320 = vld [vmem:[%s5141 + $0x590] sm:$0xff]
  %v5321 = vld [vmem:[%s5141 + $0x598] sm:$0xff]
  %v5322 = vld [vmem:[%s5141 + $0x5a0] sm:$0xff]
  %v5323 = vld [vmem:[%s5141 + $0x5a8] sm:$0xff]
  %v5324 = vld [vmem:[%s5141 + $0x5b0] sm:$0xff]
  %v5325 = vld [vmem:[%s5141 + $0x5b8] sm:$0xff]
  %v5326 = vld [vmem:[%s5141 + $0x5c0] sm:$0xff]
  %v5327 = vld [vmem:[%s5141 + $0x5c8] sm:$0xff]
  %v5328 = vld [vmem:[%s5141 + $0x5d0] sm:$0xff]
  %v5329 = vld [vmem:[%s5141 + $0x5d8] sm:$0xff]
  %v5330 = vld [vmem:[%s5141 + $0x5e0] sm:$0xff]
  %v5331 = vld [vmem:[%s5141 + $0x5e8] sm:$0xff]
  %v5332 = vld [vmem:[%s5141 + $0x5f0] sm:$0xff]
  %v5333 = vld [vmem:[%s5141 + $0x5f8] sm:$0xff]
  %v5334 = vld [vmem:[%s5141 + $0x600] sm:$0xff]
  %v5335 = vld [vmem:[%s5141 + $0x608] sm:$0xff]
  %v5336 = vld [vmem:[%s5141 + $0x610] sm:$0xff]
  %v5337 = vld [vmem:[%s5141 + $0x618] sm:$0xff]
  %v5338 = vld [vmem:[%s5141 + $0x620] sm:$0xff]
  %v5339 = vld [vmem:[%s5141 + $0x628] sm:$0xff]
  %v5340 = vld [vmem:[%s5141 + $0x630] sm:$0xff]
  %v5341 = vld [vmem:[%s5141 + $0x638] sm:$0xff]
  %v5342 = vld [vmem:[%s5141 + $0x640] sm:$0xff]
  %v5343 = vld [vmem:[%s5141 + $0x648] sm:$0xff]
  %v5344 = vld [vmem:[%s5141 + $0x650] sm:$0xff]
  %v5345 = vld [vmem:[%s5141 + $0x658] sm:$0xff]
  %v5346 = vld [vmem:[%s5141 + $0x660] sm:$0xff]
  %v5347 = vld [vmem:[%s5141 + $0x668] sm:$0xff]
  %v5348 = vld [vmem:[%s5141 + $0x670] sm:$0xff]
  %v5349 = vld [vmem:[%s5141 + $0x678] sm:$0xff]
  %v5350 = vld [vmem:[%s5141 + $0x680] sm:$0xff]
  %v5351 = vld [vmem:[%s5141 + $0x688] sm:$0xff]
  %v5352 = vld [vmem:[%s5141 + $0x690] sm:$0xff]
  %v5353 = vld [vmem:[%s5141 + $0x698] sm:$0xff]
  %v5354 = vld [vmem:[%s5141 + $0x6a0] sm:$0xff]
  %v5355 = vld [vmem:[%s5141 + $0x6a8] sm:$0xff]
  %v5356 = vld [vmem:[%s5141 + $0x6b0] sm:$0xff]
  %v5357 = vld [vmem:[%s5141 + $0x6b8] sm:$0xff]
  %v5358 = vld [vmem:[%s5141 + $0x6c0] sm:$0xff]
  %v5359 = vld [vmem:[%s5141 + $0x6c8] sm:$0xff]
  %v5360 = vld [vmem:[%s5141 + $0x6d0] sm:$0xff]
  %v5361 = vld [vmem:[%s5141 + $0x6d8] sm:$0xff]
  %v5362 = vld [vmem:[%s5141 + $0x6e0] sm:$0xff]
  %v5363 = vld [vmem:[%s5141 + $0x6e8] sm:$0xff]
  %v5364 = vld [vmem:[%s5141 + $0x6f0] sm:$0xff]
  %v5365 = vld [vmem:[%s5141 + $0x6f8] sm:$0xff]
  %v5366 = vld [vmem:[%s5141 + $0x700] sm:$0xff]
  %v5367 = vld [vmem:[%s5141 + $0x708] sm:$0xff]
  %v5368 = vld [vmem:[%s5141 + $0x710] sm:$0xff]
  %v5369 = vld [vmem:[%s5141 + $0x718] sm:$0xff]
  %v5370 = vld [vmem:[%s5141 + $0x720] sm:$0xff]
  %v5371 = vld [vmem:[%s5141 + $0x728] sm:$0xff]
  %v5372 = vld [vmem:[%s5141 + $0x730] sm:$0xff]
  %v5373 = vld [vmem:[%s5141 + $0x738] sm:$0xff]
  %v5374 = vld [vmem:[%s5141 + $0x740] sm:$0xff]
  %v5375 = vld [vmem:[%s5141 + $0x748] sm:$0xff]
  %v5376 = vld [vmem:[%s5141 + $0x750] sm:$0xff]
  %v5377 = vld [vmem:[%s5141 + $0x758] sm:$0xff]
  %v5378 = vld [vmem:[%s5141 + $0x760] sm:$0xff]
  %v5379 = vld [vmem:[%s5141 + $0x768] sm:$0xff]
  %v5380 = vld [vmem:[%s5141 + $0x770] sm:$0xff]
  %v5381 = vld [vmem:[%s5141 + $0x778] sm:$0xff]
  %v5382 = vld [vmem:[%s5141 + $0x780] sm:$0xff]
  %v5383 = vld [vmem:[%s5141 + $0x788] sm:$0xff]
  %v5384 = vld [vmem:[%s5141 + $0x790] sm:$0xff]
  %v5385 = vld [vmem:[%s5141 + $0x798] sm:$0xff]
  %v5386 = vld [vmem:[%s5141 + $0x7a0] sm:$0xff]
  %v5387 = vld [vmem:[%s5141 + $0x7a8] sm:$0xff]
  %v5388 = vld [vmem:[%s5141 + $0x7b0] sm:$0xff]
  %v5389 = vld [vmem:[%s5141 + $0x7b8] sm:$0xff]
  %v5390 = vld [vmem:[%s5141 + $0x7c0] sm:$0xff]
  %v5391 = vld [vmem:[%s5141 + $0x7c8] sm:$0xff]
  %v5392 = vld [vmem:[%s5141 + $0x7d0] sm:$0xff]
  %v5393 = vld [vmem:[%s5141 + $0x7d8] sm:$0xff]
  %v5394 = vld [vmem:[%s5141 + $0x7e0] sm:$0xff]
  %v5395 = vld [vmem:[%s5141 + $0x7e8] sm:$0xff]
  %v5396 = vld [vmem:[%s5141 + $0x7f0] sm:$0xff]
  %v5397 = vld [vmem:[%s5141 + $0x7f8] sm:$0xff]
  %v5398 = vperm.slane %v3921, 0
  %5399 = vmatpush.msra.mxu0 %v5157
  %5400 = vmatpush.msra.mxu0 %v5156
  %5401 = vmatpush.msra.mxu0 %v5155
  %5402 = vmatpush.msra.mxu0 %v5154
  %5403 = vmatpush.msra.mxu0 %v5153
  %5404 = vmatpush.msra.mxu0 %v5152
  %5405 = vmatpush.msra.mxu0 %v5151
  %5406 = vmatpush.msra.mxu0 %v5150
  %5407 = vmatpush.msra.mxu0 %v5149
  %5408 = vmatpush.msra.mxu0 %v5148
  %5409 = vmatpush.msra.mxu0 %v5147
  %5410 = vmatpush.msra.mxu0 %v5146
  %5411 = vmatpush.msra.mxu0 %v5145
  %5412 = vmatpush.msra.mxu0 %v5144
  %5413 = vmatpush.msra.mxu0 %v5143
  %5414 = vmatpush.msra.mxu0 %v5142
  %5415 = vmatmul.f32.gmra.mxu0 %v5109
  %v5416 = vpop.f32.mrf.mxu0
  %v5417 = vadd.f32 %v5398, %v5416
  %5418 = vmatmul.f32.gmra.mxu0 %v5125
  %v5419 = vpop.f32.mrf.mxu0
  %v5420 = vadd.f32 %v5398, %v5419
  %5421 = vdwg.mxu0
  %5422 = vmatpush.msra.mxu0 %v5173
  %5423 = vmatpush.msra.mxu0 %v5172
  %5424 = vmatpush.msra.mxu0 %v5171
  %5425 = vmatpush.msra.mxu0 %v5170
  %5426 = vmatpush.msra.mxu0 %v5169
  %5427 = vmatpush.msra.mxu0 %v5168
  %5428 = vmatpush.msra.mxu0 %v5167
  %5429 = vmatpush.msra.mxu0 %v5166
  %5430 = vmatpush.msra.mxu0 %v5165
  %5431 = vmatpush.msra.mxu0 %v5164
  %5432 = vmatpush.msra.mxu0 %v5163
  %5433 = vmatpush.msra.mxu0 %v5162
  %5434 = vmatpush.msra.mxu0 %v5161
  %5435 = vmatpush.msra.mxu0 %v5160
  %5436 = vmatpush.msra.mxu0 %v5159
  %5437 = vmatpush.msra.mxu0 %v5158
  %5438 = vmatmul.f32.gmra.mxu0 %v5110
  %v5439 = vpop.f32.mrf.mxu0
  %v5440 = vadd.f32 %v5417, %v5439
  %5441 = vmatmul.f32.gmra.mxu0 %v5126
  %v5442 = vpop.f32.mrf.mxu0
  %v5443 = vadd.f32 %v5420, %v5442
  %5444 = vdwg.mxu0
  %5445 = vmatpush.msra.mxu0 %v5189
  %5446 = vmatpush.msra.mxu0 %v5188
  %5447 = vmatpush.msra.mxu0 %v5187
  %5448 = vmatpush.msra.mxu0 %v5186
  %5449 = vmatpush.msra.mxu0 %v5185
  %5450 = vmatpush.msra.mxu0 %v5184
  %5451 = vmatpush.msra.mxu0 %v5183
  %5452 = vmatpush.msra.mxu0 %v5182
  %5453 = vmatpush.msra.mxu0 %v5181
  %5454 = vmatpush.msra.mxu0 %v5180
  %5455 = vmatpush.msra.mxu0 %v5179
  %5456 = vmatpush.msra.mxu0 %v5178
  %5457 = vmatpush.msra.mxu0 %v5177
  %5458 = vmatpush.msra.mxu0 %v5176
  %5459 = vmatpush.msra.mxu0 %v5175
  %5460 = vmatpush.msra.mxu0 %v5174
  %5461 = vmatmul.f32.gmra.mxu0 %v5111
  %v5462 = vpop.f32.mrf.mxu0
  %v5463 = vadd.f32 %v5440, %v5462
  %5464 = vmatmul.f32.gmra.mxu0 %v5127
  %v5465 = vpop.f32.mrf.mxu0
  %v5466 = vadd.f32 %v5443, %v5465
  %5467 = vdwg.mxu0
  %5468 = vmatpush.msra.mxu0 %v5205
  %5469 = vmatpush.msra.mxu0 %v5204
  %5470 = vmatpush.msra.mxu0 %v5203
  %5471 = vmatpush.msra.mxu0 %v5202
  %5472 = vmatpush.msra.mxu0 %v5201
  %5473 = vmatpush.msra.mxu0 %v5200
  %5474 = vmatpush.msra.mxu0 %v5199
  %5475 = vmatpush.msra.mxu0 %v5198
  %5476 = vmatpush.msra.mxu0 %v5197
  %5477 = vmatpush.msra.mxu0 %v5196
  %5478 = vmatpush.msra.mxu0 %v5195
  %5479 = vmatpush.msra.mxu0 %v5194
  %5480 = vmatpush.msra.mxu0 %v5193
  %5481 = vmatpush.msra.mxu0 %v5192
  %5482 = vmatpush.msra.mxu0 %v5191
  %5483 = vmatpush.msra.mxu0 %v5190
  %5484 = vmatmul.f32.gmra.mxu0 %v5112
  %v5485 = vpop.f32.mrf.mxu0
  %v5486 = vadd.f32 %v5463, %v5485
  %5487 = vmatmul.f32.gmra.mxu0 %v5128
  %v5488 = vpop.f32.mrf.mxu0
  %v5489 = vadd.f32 %v5466, %v5488
  %5490 = vdwg.mxu0
  %5491 = vmatpush.msra.mxu0 %v5221
  %5492 = vmatpush.msra.mxu0 %v5220
  %5493 = vmatpush.msra.mxu0 %v5219
  %5494 = vmatpush.msra.mxu0 %v5218
  %5495 = vmatpush.msra.mxu0 %v5217
  %5496 = vmatpush.msra.mxu0 %v5216
  %5497 = vmatpush.msra.mxu0 %v5215
  %5498 = vmatpush.msra.mxu0 %v5214
  %5499 = vmatpush.msra.mxu0 %v5213
  %5500 = vmatpush.msra.mxu0 %v5212
  %5501 = vmatpush.msra.mxu0 %v5211
  %5502 = vmatpush.msra.mxu0 %v5210
  %5503 = vmatpush.msra.mxu0 %v5209
  %5504 = vmatpush.msra.mxu0 %v5208
  %5505 = vmatpush.msra.mxu0 %v5207
  %5506 = vmatpush.msra.mxu0 %v5206
  %5507 = vmatmul.f32.gmra.mxu0 %v5113
  %v5508 = vpop.f32.mrf.mxu0
  %v5509 = vadd.f32 %v5486, %v5508
  %5510 = vmatmul.f32.gmra.mxu0 %v5129
  %v5511 = vpop.f32.mrf.mxu0
  %v5512 = vadd.f32 %v5489, %v5511
  %5513 = vdwg.mxu0
  %5514 = vmatpush.msra.mxu0 %v5237
  %5515 = vmatpush.msra.mxu0 %v5236
  %5516 = vmatpush.msra.mxu0 %v5235
  %5517 = vmatpush.msra.mxu0 %v5234
  %5518 = vmatpush.msra.mxu0 %v5233
  %5519 = vmatpush.msra.mxu0 %v5232
  %5520 = vmatpush.msra.mxu0 %v5231
  %5521 = vmatpush.msra.mxu0 %v5230
  %5522 = vmatpush.msra.mxu0 %v5229
  %5523 = vmatpush.msra.mxu0 %v5228
  %5524 = vmatpush.msra.mxu0 %v5227
  %5525 = vmatpush.msra.mxu0 %v5226
  %5526 = vmatpush.msra.mxu0 %v5225
  %5527 = vmatpush.msra.mxu0 %v5224
  %5528 = vmatpush.msra.mxu0 %v5223
  %5529 = vmatpush.msra.mxu0 %v5222
  %5530 = vmatmul.f32.gmra.mxu0 %v5114
  %v5531 = vpop.f32.mrf.mxu0
  %v5532 = vadd.f32 %v5509, %v5531
  %5533 = vmatmul.f32.gmra.mxu0 %v5130
  %v5534 = vpop.f32.mrf.mxu0
  %v5535 = vadd.f32 %v5512, %v5534
  %5536 = vdwg.mxu0
  %5537 = vmatpush.msra.mxu0 %v5253
  %5538 = vmatpush.msra.mxu0 %v5252
  %5539 = vmatpush.msra.mxu0 %v5251
  %5540 = vmatpush.msra.mxu0 %v5250
  %5541 = vmatpush.msra.mxu0 %v5249
  %5542 = vmatpush.msra.mxu0 %v5248
  %5543 = vmatpush.msra.mxu0 %v5247
  %5544 = vmatpush.msra.mxu0 %v5246
  %5545 = vmatpush.msra.mxu0 %v5245
  %5546 = vmatpush.msra.mxu0 %v5244
  %5547 = vmatpush.msra.mxu0 %v5243
  %5548 = vmatpush.msra.mxu0 %v5242
  %5549 = vmatpush.msra.mxu0 %v5241
  %5550 = vmatpush.msra.mxu0 %v5240
  %5551 = vmatpush.msra.mxu0 %v5239
  %5552 = vmatpush.msra.mxu0 %v5238
  %5553 = vmatmul.f32.gmra.mxu0 %v5115
  %v5554 = vpop.f32.mrf.mxu0
  %v5555 = vadd.f32 %v5532, %v5554
  %5556 = vmatmul.f32.gmra.mxu0 %v5131
  %v5557 = vpop.f32.mrf.mxu0
  %v5558 = vadd.f32 %v5535, %v5557
  %5559 = vdwg.mxu0
  %5560 = vmatpush.msra.mxu0 %v5269
  %5561 = vmatpush.msra.mxu0 %v5268
  %5562 = vmatpush.msra.mxu0 %v5267
  %5563 = vmatpush.msra.mxu0 %v5266
  %5564 = vmatpush.msra.mxu0 %v5265
  %5565 = vmatpush.msra.mxu0 %v5264
  %5566 = vmatpush.msra.mxu0 %v5263
  %5567 = vmatpush.msra.mxu0 %v5262
  %5568 = vmatpush.msra.mxu0 %v5261
  %5569 = vmatpush.msra.mxu0 %v5260
  %5570 = vmatpush.msra.mxu0 %v5259
  %5571 = vmatpush.msra.mxu0 %v5258
  %5572 = vmatpush.msra.mxu0 %v5257
  %5573 = vmatpush.msra.mxu0 %v5256
  %5574 = vmatpush.msra.mxu0 %v5255
  %5575 = vmatpush.msra.mxu0 %v5254
  %5576 = vmatmul.f32.gmra.mxu0 %v5116
  %v5577 = vpop.f32.mrf.mxu0
  %v5578 = vadd.f32 %v5555, %v5577
  %5579 = vmatmul.f32.gmra.mxu0 %v5132
  %v5580 = vpop.f32.mrf.mxu0
  %v5581 = vadd.f32 %v5558, %v5580
  %5582 = vdwg.mxu0
  %5583 = vmatpush.msra.mxu0 %v5285
  %5584 = vmatpush.msra.mxu0 %v5284
  %5585 = vmatpush.msra.mxu0 %v5283
  %5586 = vmatpush.msra.mxu0 %v5282
  %5587 = vmatpush.msra.mxu0 %v5281
  %5588 = vmatpush.msra.mxu0 %v5280
  %5589 = vmatpush.msra.mxu0 %v5279
  %5590 = vmatpush.msra.mxu0 %v5278
  %5591 = vmatpush.msra.mxu0 %v5277
  %5592 = vmatpush.msra.mxu0 %v5276
  %5593 = vmatpush.msra.mxu0 %v5275
  %5594 = vmatpush.msra.mxu0 %v5274
  %5595 = vmatpush.msra.mxu0 %v5273
  %5596 = vmatpush.msra.mxu0 %v5272
  %5597 = vmatpush.msra.mxu0 %v5271
  %5598 = vmatpush.msra.mxu0 %v5270
  %5599 = vmatmul.f32.gmra.mxu0 %v5117
  %v5600 = vpop.f32.mrf.mxu0
  %v5601 = vadd.f32 %v5578, %v5600
  %5602 = vmatmul.f32.gmra.mxu0 %v5133
  %v5603 = vpop.f32.mrf.mxu0
  %v5604 = vadd.f32 %v5581, %v5603
  %5605 = vdwg.mxu0
  %5606 = vmatpush.msra.mxu0 %v5301
  %5607 = vmatpush.msra.mxu0 %v5300
  %5608 = vmatpush.msra.mxu0 %v5299
  %5609 = vmatpush.msra.mxu0 %v5298
  %5610 = vmatpush.msra.mxu0 %v5297
  %5611 = vmatpush.msra.mxu0 %v5296
  %5612 = vmatpush.msra.mxu0 %v5295
  %5613 = vmatpush.msra.mxu0 %v5294
  %5614 = vmatpush.msra.mxu0 %v5293
  %5615 = vmatpush.msra.mxu0 %v5292
  %5616 = vmatpush.msra.mxu0 %v5291
  %5617 = vmatpush.msra.mxu0 %v5290
  %5618 = vmatpush.msra.mxu0 %v5289
  %5619 = vmatpush.msra.mxu0 %v5288
  %5620 = vmatpush.msra.mxu0 %v5287
  %5621 = vmatpush.msra.mxu0 %v5286
  %5622 = vmatmul.f32.gmra.mxu0 %v5118
  %v5623 = vpop.f32.mrf.mxu0
  %v5624 = vadd.f32 %v5601, %v5623
  %5625 = vmatmul.f32.gmra.mxu0 %v5134
  %v5626 = vpop.f32.mrf.mxu0
  %v5627 = vadd.f32 %v5604, %v5626
  %5628 = vdwg.mxu0
  %5629 = vmatpush.msra.mxu0 %v5317
  %5630 = vmatpush.msra.mxu0 %v5316
  %5631 = vmatpush.msra.mxu0 %v5315
  %5632 = vmatpush.msra.mxu0 %v5314
  %5633 = vmatpush.msra.mxu0 %v5313
  %5634 = vmatpush.msra.mxu0 %v5312
  %5635 = vmatpush.msra.mxu0 %v5311
  %5636 = vmatpush.msra.mxu0 %v5310
  %5637 = vmatpush.msra.mxu0 %v5309
  %5638 = vmatpush.msra.mxu0 %v5308
  %5639 = vmatpush.msra.mxu0 %v5307
  %5640 = vmatpush.msra.mxu0 %v5306
  %5641 = vmatpush.msra.mxu0 %v5305
  %5642 = vmatpush.msra.mxu0 %v5304
  %5643 = vmatpush.msra.mxu0 %v5303
  %5644 = vmatpush.msra.mxu0 %v5302
  %5645 = vmatmul.f32.gmra.mxu0 %v5119
  %v5646 = vpop.f32.mrf.mxu0
  %v5647 = vadd.f32 %v5624, %v5646
  %5648 = vmatmul.f32.gmra.mxu0 %v5135
  %v5649 = vpop.f32.mrf.mxu0
  %v5650 = vadd.f32 %v5627, %v5649
  %5651 = vdwg.mxu0
  %5652 = vmatpush.msra.mxu0 %v5333
  %5653 = vmatpush.msra.mxu0 %v5332
  %5654 = vmatpush.msra.mxu0 %v5331
  %5655 = vmatpush.msra.mxu0 %v5330
  %5656 = vmatpush.msra.mxu0 %v5329
  %5657 = vmatpush.msra.mxu0 %v5328
  %5658 = vmatpush.msra.mxu0 %v5327
  %5659 = vmatpush.msra.mxu0 %v5326
  %5660 = vmatpush.msra.mxu0 %v5325
  %5661 = vmatpush.msra.mxu0 %v5324
  %5662 = vmatpush.msra.mxu0 %v5323
  %5663 = vmatpush.msra.mxu0 %v5322
  %5664 = vmatpush.msra.mxu0 %v5321
  %5665 = vmatpush.msra.mxu0 %v5320
  %5666 = vmatpush.msra.mxu0 %v5319
  %5667 = vmatpush.msra.mxu0 %v5318
  %5668 = vmatmul.f32.gmra.mxu0 %v5120
  %v5669 = vpop.f32.mrf.mxu0
  %v5670 = vadd.f32 %v5647, %v5669
  %5671 = vmatmul.f32.gmra.mxu0 %v5136
  %v5672 = vpop.f32.mrf.mxu0
  %v5673 = vadd.f32 %v5650, %v5672
  %5674 = vdwg.mxu0
  %5675 = vmatpush.msra.mxu0 %v5349
  %5676 = vmatpush.msra.mxu0 %v5348
  %5677 = vmatpush.msra.mxu0 %v5347
  %5678 = vmatpush.msra.mxu0 %v5346
  %5679 = vmatpush.msra.mxu0 %v5345
  %5680 = vmatpush.msra.mxu0 %v5344
  %5681 = vmatpush.msra.mxu0 %v5343
  %5682 = vmatpush.msra.mxu0 %v5342
  %5683 = vmatpush.msra.mxu0 %v5341
  %5684 = vmatpush.msra.mxu0 %v5340
  %5685 = vmatpush.msra.mxu0 %v5339
  %5686 = vmatpush.msra.mxu0 %v5338
  %5687 = vmatpush.msra.mxu0 %v5337
  %5688 = vmatpush.msra.mxu0 %v5336
  %5689 = vmatpush.msra.mxu0 %v5335
  %5690 = vmatpush.msra.mxu0 %v5334
  %5691 = vmatmul.f32.gmra.mxu0 %v5121
  %v5692 = vpop.f32.mrf.mxu0
  %v5693 = vadd.f32 %v5670, %v5692
  %5694 = vmatmul.f32.gmra.mxu0 %v5137
  %v5695 = vpop.f32.mrf.mxu0
  %v5696 = vadd.f32 %v5673, %v5695
  %5697 = vdwg.mxu0
  %5698 = vmatpush.msra.mxu0 %v5365
  %5699 = vmatpush.msra.mxu0 %v5364
  %5700 = vmatpush.msra.mxu0 %v5363
  %5701 = vmatpush.msra.mxu0 %v5362
  %5702 = vmatpush.msra.mxu0 %v5361
  %5703 = vmatpush.msra.mxu0 %v5360
  %5704 = vmatpush.msra.mxu0 %v5359
  %5705 = vmatpush.msra.mxu0 %v5358
  %5706 = vmatpush.msra.mxu0 %v5357
  %5707 = vmatpush.msra.mxu0 %v5356
  %5708 = vmatpush.msra.mxu0 %v5355
  %5709 = vmatpush.msra.mxu0 %v5354
  %5710 = vmatpush.msra.mxu0 %v5353
  %5711 = vmatpush.msra.mxu0 %v5352
  %5712 = vmatpush.msra.mxu0 %v5351
  %5713 = vmatpush.msra.mxu0 %v5350
  %5714 = vmatmul.f32.gmra.mxu0 %v5122
  %v5715 = vpop.f32.mrf.mxu0
  %v5716 = vadd.f32 %v5693, %v5715
  %5717 = vmatmul.f32.gmra.mxu0 %v5138
  %v5718 = vpop.f32.mrf.mxu0
  %v5719 = vadd.f32 %v5696, %v5718
  %5720 = vdwg.mxu0
  %5721 = vmatpush.msra.mxu0 %v5381
  %5722 = vmatpush.msra.mxu0 %v5380
  %5723 = vmatpush.msra.mxu0 %v5379
  %5724 = vmatpush.msra.mxu0 %v5378
  %5725 = vmatpush.msra.mxu0 %v5377
  %5726 = vmatpush.msra.mxu0 %v5376
  %5727 = vmatpush.msra.mxu0 %v5375
  %5728 = vmatpush.msra.mxu0 %v5374
  %5729 = vmatpush.msra.mxu0 %v5373
  %5730 = vmatpush.msra.mxu0 %v5372
  %5731 = vmatpush.msra.mxu0 %v5371
  %5732 = vmatpush.msra.mxu0 %v5370
  %5733 = vmatpush.msra.mxu0 %v5369
  %5734 = vmatpush.msra.mxu0 %v5368
  %5735 = vmatpush.msra.mxu0 %v5367
  %5736 = vmatpush.msra.mxu0 %v5366
  %5737 = vmatmul.f32.gmra.mxu0 %v5123
  %v5738 = vpop.f32.mrf.mxu0
  %v5739 = vadd.f32 %v5716, %v5738
  %5740 = vmatmul.f32.gmra.mxu0 %v5139
  %v5741 = vpop.f32.mrf.mxu0
  %v5742 = vadd.f32 %v5719, %v5741
  %5743 = vdwg.mxu0
  %5744 = vmatpush.msra.mxu0 %v5397
  %5745 = vmatpush.msra.mxu0 %v5396
  %5746 = vmatpush.msra.mxu0 %v5395
  %5747 = vmatpush.msra.mxu0 %v5394
  %5748 = vmatpush.msra.mxu0 %v5393
  %5749 = vmatpush.msra.mxu0 %v5392
  %5750 = vmatpush.msra.mxu0 %v5391
  %5751 = vmatpush.msra.mxu0 %v5390
  %5752 = vmatpush.msra.mxu0 %v5389
  %5753 = vmatpush.msra.mxu0 %v5388
  %5754 = vmatpush.msra.mxu0 %v5387
  %5755 = vmatpush.msra.mxu0 %v5386
  %5756 = vmatpush.msra.mxu0 %v5385
  %5757 = vmatpush.msra.mxu0 %v5384
  %5758 = vmatpush.msra.mxu0 %v5383
  %5759 = vmatpush.msra.mxu0 %v5382
  %5760 = vmatmul.f32.gmra.mxu0 %v5124
  %v5761 = vpop.f32.mrf.mxu0
  %v5762 = vadd.f32 %v5739, %v5761
  %5763 = vmatmul.f32.gmra.mxu0 %v5140
  %v5764 = vpop.f32.mrf.mxu0
  %v5765 = vadd.f32 %v5742, %v5764
  %5766 = vdwg.mxu0
  %v5767 = vadd.f32 %v4631, %v5762
  %v5768 = vadd.f32 %v4632, %v5765
  %v5769 = vsel %vm2017, %v5767, 0.0
  %5770 = vadd.xlane.f32.xlu0 %v5769
  %v5771 = vpop.xlane.xlu0 %5770
  %v5772 = vsel %vm2681, %v5768, 0.0
  %5773 = vadd.xlane.f32.xlu0 %v5772
  %v5774 = vpop.xlane.xlu0 %5773
  %v5775 = vmul.f32 %v5771, %v2691
  %v5776 = vmul.f32 %v5774, %v2691
  %v5777 = vsub.f32 %v5767, %v5775
  %v5778 = vsub.f32 %v5768, %v5776
  %v5779 = vmul.f32 %v5777, %v5777
  %v5780 = vmul.f32 %v5778, %v5778
  %v5781 = vsel %vm2017, %v5779, 0.0
  %5782 = vadd.xlane.f32.xlu0 %v5781
  %v5783 = vpop.xlane.xlu0 %5782
  %v5784 = vsel %vm2681, %v5780, 0.0
  %5785 = vadd.xlane.f32.xlu0 %v5784
  %v5786 = vpop.xlane.xlu0 %5785
  %v5787 = vmul.f32 %v5783, %v2691
  %v5788 = vmul.f32 %v5786, %v2691
  %v5789 = vadd.f32 %v5787, 1e-05
  %v5790 = vadd.f32 %v5788, 1e-05
  %v5791 = vrsqrt.pop %v5789
  %v5792 = vmul.f32 %v5791, %v5789
  %v5793 = vmul.f32 %v5792, %v5791
  %v5794 = vmul.f32 0.5, %v5793
  %v5795 = vsub.f32 1.5, %v5794
  %v5796 = vmul.f32 %v5791, %v5795
  %vm5797 = vweird.f32 %v5789
  %vm5798 = vweird.f32 %v5791
  %vm5799 = vmor %vm5797, %vm5798
  %v5800 = vsel %vm5799, %v5791, %v5796
  %v5801 = vrsqrt.pop %v5790
  %v5802 = vmul.f32 %v5801, %v5790
  %v5803 = vmul.f32 %v5802, %v5801
  %v5804 = vmul.f32 0.5, %v5803
  %v5805 = vsub.f32 1.5, %v5804
  %v5806 = vmul.f32 %v5801, %v5805
  %vm5807 = vweird.f32 %v5790
  %vm5808 = vweird.f32 %v5801
  %vm5809 = vmor %vm5807, %vm5808
  %v5810 = vsel %vm5809, %v5801, %v5806
  %v5811 = vmul.f32 %v5777, %v5800
  %v5812 = vmul.f32 %v5778, %v5810
  %v5813 = vperm.slane %v3920, 6
  %v5814 = vmul.f32 %v5811, %v5813
  %v5815 = vmul.f32 %v5812, %v5813
  %v5816 = vperm.slane %v3920, 7
  %v5817 = vadd.f32 %v5814, %v5816
  %v5818 = vadd.f32 %v5815, %v5816
  %5819 = vst.msk [vmem:[%s11] sm:$0xff] %vm2017, %v5817
  %5820 = vst.msk [vmem:[%s11 + $0x8] sm:$0x3] %vm2681, %v5818
  // Predicated region
  $region46: #{eeg_conformer_forward.1} parent=0 // pred_check
    _
  $region47: #{eeg_conformer_forward.1} parent=0 // pred_check_branch
    %5822 = sbr.rel (0) target = $region49
  $region48: #{eeg_conformer_forward.1} parent=0 // pred_region
    _
  $region49: #{eeg_conformer_forward.1} parent=0 // pred_fallthru
    _
  // Predicated region
  $region50: #{eeg_conformer_forward.1} parent=0 // pred_check
    _
  $region51: #{eeg_conformer_forward.1} parent=0 // pred_check_branch
    %5824 = sbr.rel (0) target = $region53
  $region52: #{eeg_conformer_forward.1} parent=0 // pred_region
    _
  $region53: #{eeg_conformer_forward.1} parent=0 // pred_fallthru
    _

</llo_original>
